<compile_context>
chip_gen: v5e
topology: v5e:2x2
jax: 0.10.0
libtpu: 0.0.40
codegen_flags: <defaults>
</compile_context>

<pallas_src>
import functools

import numpy as np
import jax
import jax.numpy as jnp
from jax import lax
from jax.experimental import pallas as pl
from jax.experimental.pallas import tpu as pltpu

EPS = 1e-5                                   # BatchNorm2d default eps
MATMUL_PRECISION = lax.Precision.HIGHEST     # see header note on the 1e-3 gate


def _dot(a, b):
    return jnp.dot(a, b, preferred_element_type=jnp.float32,
                   precision=MATMUL_PRECISION)


# ---------------- in-kernel helpers (traced inside the Pallas kernel) -------

def _rows_reflect_up_down(a3):
    """Row h-1 / h+1 views of (N, H, L), reflected at the H boundary."""
    up = jnp.concatenate([a3[:, 1:2], a3[:, :-1]], axis=1)
    down = jnp.concatenate([a3[:, 1:], a3[:, -2:-1]], axis=1)
    return up, down


def _rows_shift_zero(a3, dh):
    """(N, H, L) rows shifted by dh with zero fill (7x7 zero-padded conv)."""
    if dh == 0:
        return a3
    n, h, l = a3.shape
    z = jnp.zeros((n, abs(dh), l), a3.dtype)
    if dh > 0:
        return jnp.concatenate([a3[:, dh:], z], axis=1)
    return jnp.concatenate([z, a3[:, :h + dh]], axis=1)


def _conv3x3_banded(x3, b_ref):
    """3x3 reflect-pad conv on the lane-folded layout.

    x3: (N, H, W*Ci); b_ref: (3, W*Ci, W*Co) banded slabs (one per kernel row,
    W-direction taps + reflect boundary folded in).  Returns (N*H, W*Co)."""
    n, h, _ = x3.shape
    up, down = _rows_reflect_up_down(x3)
    y = _dot(up.reshape(n * h, -1), b_ref[0])
    y = y + _dot(x3.reshape(n * h, -1), b_ref[1])
    y = y + _dot(down.reshape(n * h, -1), b_ref[2])
    return y


def _bn_fused(y2, gamma_fold, beta_fold, bnpool):
    """Training-mode BatchNorm2d on the lane-folded (R, W*C) layout.

    Per-channel batch stats (biased variance) via one 0/1 pooling matmul that
    also broadcasts them back to the folded lane order; the affine is fused
    into a single y*scale + shift elementwise pass."""
    s1 = jnp.sum(y2, axis=0, keepdims=True)            # (1, W*C)
    s2 = jnp.sum(y2 * y2, axis=0, keepdims=True)       # (1, W*C)
    mean = _dot(s1, bnpool)                             # per-channel mean, folded
    ex2 = _dot(s2, bnpool)                              # per-channel E[x^2], folded
    var = ex2 - mean * mean                             # biased variance
    scale = gamma_fold * lax.rsqrt(var + EPS)
    shift = beta_fold - mean * scale
    return y2 * scale + shift


# ----------------------------- Pallas kernel --------------------------------

def sresblock_kernel(x_ref, b1_ref, b2_ref, bd_ref, bsa_ref, csel_ref,
                     exp_ref, bnpool_ref, g1_ref, be1_ref, g2_ref, be2_ref,
                     gd_ref, bed_ref, o_ref, *, n, h, w, cin, cout):
    r = n * h
    x3 = x_ref[...].astype(jnp.float32)                 # (N, H, W*Cin)
    x2 = x3.reshape(r, w * cin)
    bnpool = bnpool_ref[...]

    # residual = BN(1x1 conv(x))   (downsample path: inplanes != planes)
    res2 = _dot(x2, bd_ref[...])                        # (R, W*Cout)
    res2 = _bn_fused(res2, gd_ref[...], bed_ref[...], bnpool)

    # conv1 -> bn1 -> relu
    y2 = _conv3x3_banded(x3, b1_ref)                    # (R, W*Cout)
    y2 = _bn_fused(y2, g1_ref[...], be1_ref[...], bnpool)
    y2 = jnp.maximum(y2, 0.0)

    # conv2 -> bn2
    y2 = _conv3x3_banded(y2.reshape(n, h, w * cout), b2_ref)
    y2 = _bn_fused(y2, g2_ref[...], be2_ref[...], bnpool)

    # SpatialAttention: per-pixel channel mean/max -> 7x7 conv (zero pad 3)
    # -> sigmoid.  Channel planes are pulled out with 0/1 selection matmuls.
    avg = None
    mx = None
    for c in range(cout):
        plane = _dot(y2, csel_ref[c])                   # (R, W): channel c
        avg = plane if avg is None else avg + plane
        mx = plane if mx is None else jnp.maximum(mx, plane)
    avg = avg * (1.0 / cout)
    sm3 = jnp.concatenate([avg, mx], axis=-1).reshape(n, h, 2 * w)

    att = None
    for t in range(7):                                  # kernel rows dh = -3..3
        smt = _rows_shift_zero(sm3, t - 3).reshape(r, 2 * w)
        term = _dot(smt, bsa_ref[t])                    # (R, W)
        att = term if att is None else att + term
    att = 0.5 * (1.0 + jnp.tanh(0.5 * att))             # sigmoid on the EUP

    # gate (broadcast over each channel block via a 0/1 expander), residual
    # add, final relu
    gate = _dot(att, exp_ref[...])                      # (R, W*Cout)
    out2 = jnp.maximum(y2 * gate + res2, 0.0)
    o_ref[...] = out2.reshape(n, h, w * cout).astype(o_ref.dtype)


# -------------------- wrapper-side weight/layout packing --------------------

def _shift_matrix(wdim, ktaps, mode):
    """T[t, wi, wo] = 1 iff input column wi feeds output column wo for tap t
    (tap offset = t - ktaps//2), with reflect or zero boundary handling."""
    half = ktaps // 2
    t = np.zeros((ktaps, wdim, wdim), np.float32)
    for k in range(ktaps):
        dwi = k - half
        for wo in range(wdim):
            wi = wo + dwi
            if mode == "reflect":
                if wi < 0:
                    wi = -wi
                elif wi > wdim - 1:
                    wi = 2 * (wdim - 1) - wi
            else:                                       # zero padding: drop tap
                if wi < 0 or wi > wdim - 1:
                    continue
            t[k, wi, wo] = 1.0
    return t


def _banded_conv_weights(w_hwio, wdim, mode):
    """Fold the W-direction taps + boundary of a KHxKW conv into per-kernel-row
    banded slabs for the channel-minor lane-folded layout: (KH, W*Ci, W*Co)."""
    kh, kw, ci, co = w_hwio.shape
    t = _shift_matrix(wdim, kw, mode)                   # (KW, W, W)
    b = jnp.einsum("xab,yxio->yaibo", t, w_hwio.astype(jnp.float32))
    return b.reshape(kh, wdim * ci, wdim * co)


def _banded_sa_weights(w_sa, wdim):
    """7x7 zero-pad conv (2 -> 1 channels) folded for the channel-major
    (.., 2*W) attention operand: (7, 2*W, W)."""
    kh, kw, ci, _ = w_sa.shape
    t = _shift_matrix(wdim, kw, "zero")
    b = jnp.einsum("xab,yxi->yiab", t, w_sa[..., 0].astype(jnp.float32))
    return b.reshape(kh, ci * wdim, wdim)


# ------------------------------- wrapper -------------------------------------

def sresblock_forward(x_nchw, p):
    n, cin, h, w = x_nchw.shape
    cout = p["w1"].shape[-1]
    n_px = float(n * h * w)

    x = jnp.transpose(x_nchw, (0, 2, 3, 1)).astype(jnp.float32)   # NCHW -> NHWC
    x_fold = x.reshape(n, h, w * cin)                             # (N, H, W*Cin)

    # one-time layout plumbing (tiny, outside the kernel)
    b1 = _banded_conv_weights(p["w1"], w, "reflect")    # (3, W*Cin,  W*Cout)
    b2 = _banded_conv_weights(p["w2"], w, "reflect")    # (3, W*Cout, W*Cout)
    bd = jnp.kron(jnp.eye(w, dtype=jnp.float32),
                  p["wd"].astype(jnp.float32))          # (W*Cin, W*Cout)
    bsa = _banded_sa_weights(p["wsa"], w)               # (7, 2*W, W)

    eye_c = np.eye(cout, dtype=np.float32)
    pool = np.tile(eye_c, (w, 1))                       # (W*Cout, Cout)
    bnpool = jnp.asarray((pool @ pool.T) / n_px)        # (W*Cout, W*Cout)
    expand = jnp.asarray(np.repeat(np.eye(w, dtype=np.float32), cout, axis=1))
    csel = np.zeros((cout, w * cout, w), np.float32)    # channel selectors
    for c in range(cout):
        for wi in range(w):
            csel[c, wi * cout + c, wi] = 1.0
    csel = jnp.asarray(csel)

    def fold_row(v):                                    # (C,) -> (1, W*C) tiled
        return jnp.tile(v.astype(jnp.float32), w).reshape(1, -1)

    kern = functools.partial(sresblock_kernel, n=n, h=h, w=w, cin=cin,
                             cout=cout)
    vmem = pl.BlockSpec(memory_space=pltpu.MemorySpace.VMEM)

    out_fold = pl.pallas_call(
        kern,
        out_shape=jax.ShapeDtypeStruct((n, h, w * cout), jnp.float32),
        in_specs=[vmem] * 14,
        out_specs=vmem,
    )(x_fold, b1, b2, bd, bsa, csel, expand, bnpool,
      fold_row(p["g1"]), fold_row(p["b1"]),
      fold_row(p["g2"]), fold_row(p["b2"]),
      fold_row(p["gd"]), fold_row(p["bd"]))

    out = out_fold.reshape(n, h, w, cout)
    return jnp.transpose(out, (0, 3, 1, 2))             # NHWC -> NCHW


# ------------------------- plain-JAX reference -------------------------------

def sresblock_ref(x_nchw, p):
    x = jnp.transpose(x_nchw, (0, 2, 3, 1)).astype(jnp.float32)

    def conv(xin, wgt, pad, mode):
        xp = jnp.pad(xin, ((0, 0), (pad, pad), (pad, pad), (0, 0)), mode=mode)
        return lax.conv_general_dilated(
            xp, wgt, window_strides=(1, 1), padding="VALID",
            dimension_numbers=("NHWC", "HWIO", "NHWC"),
            precision=lax.Precision.HIGHEST)

    def bn(y, g, b):
        m = jnp.mean(y, axis=(0, 1, 2), keepdims=True)
        v = jnp.mean((y - m) ** 2, axis=(0, 1, 2), keepdims=True)
        return ((y - m) * lax.rsqrt(v + EPS) * g.reshape(1, 1, 1, -1)
                + b.reshape(1, 1, 1, -1))

    residual = jnp.einsum("nhwi,io->nhwo", x, p["wd"],
                          precision=lax.Precision.HIGHEST)
    residual = bn(residual, p["gd"], p["bd"])

    out = conv(x, p["w1"], 1, "reflect")
    out = bn(out, p["g1"], p["b1"])
    out = jnp.maximum(out, 0.0)
    out = conv(out, p["w2"], 1, "reflect")
    out = bn(out, p["g2"], p["b2"])

    avg = jnp.mean(out, axis=-1, keepdims=True)
    mx = jnp.max(out, axis=-1, keepdims=True)
    att = conv(jnp.concatenate([avg, mx], axis=-1), p["wsa"], 3, "constant")
    att = 1.0 / (1.0 + jnp.exp(-att))

    out = att * out + residual
    out = jnp.maximum(out, 0.0)
    return jnp.transpose(out, (0, 3, 1, 2))


# --------------------------------- main ---------------------------------------

if __name__ == "__main__":
    N, Cin, H, W = 2, 4, 16, 16
    Cout = 8   # inplanes != planes -> exercises the 1x1-conv+BN downsample path

    key = jax.random.PRNGKey(0)
    ks = jax.random.split(key, 12)
    params = {
        "w1": 0.2 * jax.random.normal(ks[0], (3, 3, Cin, Cout), jnp.float32),
        "g1": 1.0 + 0.1 * jax.random.normal(ks[1], (Cout,), jnp.float32),
        "b1": 0.1 * jax.random.normal(ks[2], (Cout,), jnp.float32),
        "w2": 0.2 * jax.random.normal(ks[3], (3, 3, Cout, Cout), jnp.float32),
        "g2": 1.0 + 0.1 * jax.random.normal(ks[4], (Cout,), jnp.float32),
        "b2": 0.1 * jax.random.normal(ks[5], (Cout,), jnp.float32),
        "wd": 0.2 * jax.random.normal(ks[6], (Cin, Cout), jnp.float32),
        "gd": 1.0 + 0.1 * jax.random.normal(ks[7], (Cout,), jnp.float32),
        "bd": 0.1 * jax.random.normal(ks[8], (Cout,), jnp.float32),
        "wsa": 0.1 * jax.random.normal(ks[9], (7, 7, 2, 1), jnp.float32),
    }
    x = jax.random.normal(ks[10], (N, Cin, H, W), jnp.float32)

    out = jax.block_until_ready(sresblock_forward(x, params))
    ref = jax.block_until_ready(sresblock_ref(x, params))

    assert out.shape == (N, Cout, H, W), out.shape
    assert jnp.allclose(out, ref, rtol=1e-3, atol=1e-3), \
        f"max abs diff {float(jnp.max(jnp.abs(out - ref)))}"
    print("KERNEL_OK")
</pallas_src>

<mosaic_0001>
module attributes {stable_mosaic.version = 11 : i64} {
  func.func @sresblock_kernel(%arg0: memref<2x16x64xf32, #tpu.memory_space<vmem>>, %arg1: memref<3x64x128xf32, #tpu.memory_space<vmem>>, %arg2: memref<3x128x128xf32, #tpu.memory_space<vmem>>, %arg3: memref<64x128xf32, #tpu.memory_space<vmem>>, %arg4: memref<7x32x16xf32, #tpu.memory_space<vmem>>, %arg5: memref<8x128x16xf32, #tpu.memory_space<vmem>>, %arg6: memref<16x128xf32, #tpu.memory_space<vmem>>, %arg7: memref<128x128xf32, #tpu.memory_space<vmem>>, %arg8: memref<1x128xf32, #tpu.memory_space<vmem>>, %arg9: memref<1x128xf32, #tpu.memory_space<vmem>>, %arg10: memref<1x128xf32, #tpu.memory_space<vmem>>, %arg11: memref<1x128xf32, #tpu.memory_space<vmem>>, %arg12: memref<1x128xf32, #tpu.memory_space<vmem>>, %arg13: memref<1x128xf32, #tpu.memory_space<vmem>>, %arg14: memref<2x16x128xf32, #tpu.memory_space<vmem>>) attributes {dimension_semantics = [], scalar_prefetch = 0 : i64, scratch_operands = 0 : i64, tpu.core_type = #tpu.core_type<tc>} {
    %c0 = arith.constant 0 : index
    %c0_0 = arith.constant 0 : index
    %c0_1 = arith.constant 0 : index
    %0 = vector.load %arg0[%c0, %c0_0, %c0_1] : memref<2x16x64xf32, #tpu.memory_space<vmem>>, vector<2x16x64xf32>
    %1 = vector.shape_cast %0 : vector<2x16x64xf32> to vector<32x64xf32>
    %c0_2 = arith.constant 0 : index
    %c0_3 = arith.constant 0 : index
    %2 = vector.load %arg7[%c0_2, %c0_3] : memref<128x128xf32, #tpu.memory_space<vmem>>, vector<128x128xf32>
    %c0_4 = arith.constant 0 : index
    %c0_5 = arith.constant 0 : index
    %3 = vector.load %arg3[%c0_4, %c0_5] : memref<64x128xf32, #tpu.memory_space<vmem>>, vector<64x128xf32>
    %cst = arith.constant dense<0.000000e+00> : vector<32x128xf32>
    %4 = tpu.matmul %1, %3, %cst {dimension_numbers = #tpu.dot_dimension_numbers<[1], [0], [0], [1], [0, 0, 1, 1], [], []>, precision = #tpu.contract_precision<fp32>} : vector<32x64xf32>, vector<64x128xf32>, vector<32x128xf32> -> vector<32x128xf32>
    %c0_6 = arith.constant 0 : index
    %c0_7 = arith.constant 0 : index
    %5 = vector.load %arg12[%c0_6, %c0_7] : memref<1x128xf32, #tpu.memory_space<vmem>>, vector<1x128xf32>
    %c0_8 = arith.constant 0 : index
    %c0_9 = arith.constant 0 : index
    %6 = vector.load %arg13[%c0_8, %c0_9] : memref<1x128xf32, #tpu.memory_space<vmem>>, vector<1x128xf32>
    %cst_10 = arith.constant dense<0.000000e+00> : vector<128xf32>
    %7 = vector.multi_reduction <add>, %4, %cst_10 [0] : vector<32x128xf32> to vector<128xf32>
    %8 = vector.shape_cast %7 : vector<128xf32> to vector<1x128xf32>
    %9 = arith.mulf %4, %4 : vector<32x128xf32>
    %cst_11 = arith.constant dense<0.000000e+00> : vector<128xf32>
    %10 = vector.multi_reduction <add>, %9, %cst_11 [0] : vector<32x128xf32> to vector<128xf32>
    %11 = vector.shape_cast %10 : vector<128xf32> to vector<1x128xf32>
    %cst_12 = arith.constant dense<0.000000e+00> : vector<1x128xf32>
    %12 = tpu.matmul %8, %2, %cst_12 {dimension_numbers = #tpu.dot_dimension_numbers<[1], [0], [0], [1], [0, 0, 1, 1], [], []>, precision = #tpu.contract_precision<fp32>} : vector<1x128xf32>, vector<128x128xf32>, vector<1x128xf32> -> vector<1x128xf32>
    %cst_13 = arith.constant dense<0.000000e+00> : vector<1x128xf32>
    %13 = tpu.matmul %11, %2, %cst_13 {dimension_numbers = #tpu.dot_dimension_numbers<[1], [0], [0], [1], [0, 0, 1, 1], [], []>, precision = #tpu.contract_precision<fp32>} : vector<1x128xf32>, vector<128x128xf32>, vector<1x128xf32> -> vector<1x128xf32>
    %14 = arith.mulf %12, %12 : vector<1x128xf32>
    %15 = arith.subf %13, %14 : vector<1x128xf32>
    %cst_14 = arith.constant 9.99999974E-6 : f32
    %16 = vector.broadcast %cst_14 : f32 to vector<1x128xf32>
    %17 = arith.addf %15, %16 : vector<1x128xf32>
    %18 = math.rsqrt %17 : vector<1x128xf32>
    %19 = arith.mulf %5, %18 : vector<1x128xf32>
    %20 = arith.mulf %12, %19 : vector<1x128xf32>
    %21 = arith.subf %6, %20 : vector<1x128xf32>
    %22 = vector.broadcast %19 : vector<1x128xf32> to vector<32x128xf32>
    %23 = arith.mulf %4, %22 : vector<32x128xf32>
    %24 = vector.broadcast %21 : vector<1x128xf32> to vector<32x128xf32>
    %25 = arith.addf %23, %24 : vector<32x128xf32>
    %26 = vector.extract_strided_slice %0 {offsets = [0, 1, 0], sizes = [2, 1, 64], strides = [1, 1, 1]} : vector<2x16x64xf32> to vector<2x1x64xf32>
    %27 = vector.extract_strided_slice %0 {offsets = [0, 0, 0], sizes = [2, 15, 64], strides = [1, 1, 1]} : vector<2x16x64xf32> to vector<2x15x64xf32>
    %28 = tpu.concatenate %26, %27 in 1 : vector<2x1x64xf32>, vector<2x15x64xf32> -> vector<2x16x64xf32>
    %29 = vector.extract_strided_slice %0 {offsets = [0, 1, 0], sizes = [2, 15, 64], strides = [1, 1, 1]} : vector<2x16x64xf32> to vector<2x15x64xf32>
    %30 = vector.extract_strided_slice %0 {offsets = [0, 14, 0], sizes = [2, 1, 64], strides = [1, 1, 1]} : vector<2x16x64xf32> to vector<2x1x64xf32>
    %31 = tpu.concatenate %29, %30 in 1 : vector<2x15x64xf32>, vector<2x1x64xf32> -> vector<2x16x64xf32>
    %32 = vector.shape_cast %28 : vector<2x16x64xf32> to vector<32x64xf32>
    %c0_15 = arith.constant 0 : index
    %c0_16 = arith.constant 0 : index
    %c0_17 = arith.constant 0 : index
    %33 = vector.load %arg1[%c0_15, %c0_16, %c0_17] : memref<3x64x128xf32, #tpu.memory_space<vmem>>, vector<1x64x128xf32>
    %34 = vector.shape_cast %33 : vector<1x64x128xf32> to vector<64x128xf32>
    %cst_18 = arith.constant dense<0.000000e+00> : vector<32x128xf32>
    %35 = tpu.matmul %32, %34, %cst_18 {dimension_numbers = #tpu.dot_dimension_numbers<[1], [0], [0], [1], [0, 0, 1, 1], [], []>, precision = #tpu.contract_precision<fp32>} : vector<32x64xf32>, vector<64x128xf32>, vector<32x128xf32> -> vector<32x128xf32>
    %36 = vector.shape_cast %0 : vector<2x16x64xf32> to vector<32x64xf32>
    %c1 = arith.constant 1 : index
    %c0_19 = arith.constant 0 : index
    %c0_20 = arith.constant 0 : index
    %37 = vector.load %arg1[%c1, %c0_19, %c0_20] : memref<3x64x128xf32, #tpu.memory_space<vmem>>, vector<1x64x128xf32>
    %38 = vector.shape_cast %37 : vector<1x64x128xf32> to vector<64x128xf32>
    %cst_21 = arith.constant dense<0.000000e+00> : vector<32x128xf32>
    %39 = tpu.matmul %36, %38, %cst_21 {dimension_numbers = #tpu.dot_dimension_numbers<[1], [0], [0], [1], [0, 0, 1, 1], [], []>, precision = #tpu.contract_precision<fp32>} : vector<32x64xf32>, vector<64x128xf32>, vector<32x128xf32> -> vector<32x128xf32>
    %40 = arith.addf %35, %39 : vector<32x128xf32>
    %41 = vector.shape_cast %31 : vector<2x16x64xf32> to vector<32x64xf32>
    %c2 = arith.constant 2 : index
    %c0_22 = arith.constant 0 : index
    %c0_23 = arith.constant 0 : index
    %42 = vector.load %arg1[%c2, %c0_22, %c0_23] : memref<3x64x128xf32, #tpu.memory_space<vmem>>, vector<1x64x128xf32>
    %43 = vector.shape_cast %42 : vector<1x64x128xf32> to vector<64x128xf32>
    %cst_24 = arith.constant dense<0.000000e+00> : vector<32x128xf32>
    %44 = tpu.matmul %41, %43, %cst_24 {dimension_numbers = #tpu.dot_dimension_numbers<[1], [0], [0], [1], [0, 0, 1, 1], [], []>, precision = #tpu.contract_precision<fp32>} : vector<32x64xf32>, vector<64x128xf32>, vector<32x128xf32> -> vector<32x128xf32>
    %45 = arith.addf %40, %44 : vector<32x128xf32>
    %c0_25 = arith.constant 0 : index
    %c0_26 = arith.constant 0 : index
    %46 = vector.load %arg8[%c0_25, %c0_26] : memref<1x128xf32, #tpu.memory_space<vmem>>, vector<1x128xf32>
    %c0_27 = arith.constant 0 : index
    %c0_28 = arith.constant 0 : index
    %47 = vector.load %arg9[%c0_27, %c0_28] : memref<1x128xf32, #tpu.memory_space<vmem>>, vector<1x128xf32>
    %cst_29 = arith.constant dense<0.000000e+00> : vector<128xf32>
    %48 = vector.multi_reduction <add>, %45, %cst_29 [0] : vector<32x128xf32> to vector<128xf32>
    %49 = vector.shape_cast %48 : vector<128xf32> to vector<1x128xf32>
    %50 = arith.mulf %45, %45 : vector<32x128xf32>
    %cst_30 = arith.constant dense<0.000000e+00> : vector<128xf32>
    %51 = vector.multi_reduction <add>, %50, %cst_30 [0] : vector<32x128xf32> to vector<128xf32>
    %52 = vector.shape_cast %51 : vector<128xf32> to vector<1x128xf32>
    %cst_31 = arith.constant dense<0.000000e+00> : vector<1x128xf32>
    %53 = tpu.matmul %49, %2, %cst_31 {dimension_numbers = #tpu.dot_dimension_numbers<[1], [0], [0], [1], [0, 0, 1, 1], [], []>, precision = #tpu.contract_precision<fp32>} : vector<1x128xf32>, vector<128x128xf32>, vector<1x128xf32> -> vector<1x128xf32>
    %cst_32 = arith.constant dense<0.000000e+00> : vector<1x128xf32>
    %54 = tpu.matmul %52, %2, %cst_32 {dimension_numbers = #tpu.dot_dimension_numbers<[1], [0], [0], [1], [0, 0, 1, 1], [], []>, precision = #tpu.contract_precision<fp32>} : vector<1x128xf32>, vector<128x128xf32>, vector<1x128xf32> -> vector<1x128xf32>
    %55 = arith.mulf %53, %53 : vector<1x128xf32>
    %56 = arith.subf %54, %55 : vector<1x128xf32>
    %cst_33 = arith.constant 9.99999974E-6 : f32
    %57 = vector.broadcast %cst_33 : f32 to vector<1x128xf32>
    %58 = arith.addf %56, %57 : vector<1x128xf32>
    %59 = math.rsqrt %58 : vector<1x128xf32>
    %60 = arith.mulf %46, %59 : vector<1x128xf32>
    %61 = arith.mulf %53, %60 : vector<1x128xf32>
    %62 = arith.subf %47, %61 : vector<1x128xf32>
    %63 = vector.broadcast %60 : vector<1x128xf32> to vector<32x128xf32>
    %64 = arith.mulf %45, %63 : vector<32x128xf32>
    %65 = vector.broadcast %62 : vector<1x128xf32> to vector<32x128xf32>
    %66 = arith.addf %64, %65 : vector<32x128xf32>
    %cst_34 = arith.constant 0.000000e+00 : f32
    %67 = vector.broadcast %cst_34 : f32 to vector<32x128xf32>
    %68 = arith.maximumf %66, %67 : vector<32x128xf32>
    %69 = vector.shape_cast %68 : vector<32x128xf32> to vector<2x16x128xf32>
    %70 = vector.extract_strided_slice %69 {offsets = [0, 1, 0], sizes = [2, 1, 128], strides = [1, 1, 1]} : vector<2x16x128xf32> to vector<2x1x128xf32>
    %71 = vector.extract_strided_slice %69 {offsets = [0, 0, 0], sizes = [2, 15, 128], strides = [1, 1, 1]} : vector<2x16x128xf32> to vector<2x15x128xf32>
    %72 = tpu.concatenate %70, %71 in 1 : vector<2x1x128xf32>, vector<2x15x128xf32> -> vector<2x16x128xf32>
    %73 = vector.extract_strided_slice %69 {offsets = [0, 1, 0], sizes = [2, 15, 128], strides = [1, 1, 1]} : vector<2x16x128xf32> to vector<2x15x128xf32>
    %74 = vector.extract_strided_slice %69 {offsets = [0, 14, 0], sizes = [2, 1, 128], strides = [1, 1, 1]} : vector<2x16x128xf32> to vector<2x1x128xf32>
    %75 = tpu.concatenate %73, %74 in 1 : vector<2x15x128xf32>, vector<2x1x128xf32> -> vector<2x16x128xf32>
    %76 = vector.shape_cast %72 : vector<2x16x128xf32> to vector<32x128xf32>
    %c0_35 = arith.constant 0 : index
    %c0_36 = arith.constant 0 : index
    %c0_37 = arith.constant 0 : index
    %77 = vector.load %arg2[%c0_35, %c0_36, %c0_37] : memref<3x128x128xf32, #tpu.memory_space<vmem>>, vector<1x128x128xf32>
    %78 = vector.shape_cast %77 : vector<1x128x128xf32> to vector<128x128xf32>
    %cst_38 = arith.constant dense<0.000000e+00> : vector<32x128xf32>
    %79 = tpu.matmul %76, %78, %cst_38 {dimension_numbers = #tpu.dot_dimension_numbers<[1], [0], [0], [1], [0, 0, 1, 1], [], []>, precision = #tpu.contract_precision<fp32>} : vector<32x128xf32>, vector<128x128xf32>, vector<32x128xf32> -> vector<32x128xf32>
    %80 = vector.shape_cast %69 : vector<2x16x128xf32> to vector<32x128xf32>
    %c1_39 = arith.constant 1 : index
    %c0_40 = arith.constant 0 : index
    %c0_41 = arith.constant 0 : index
    %81 = vector.load %arg2[%c1_39, %c0_40, %c0_41] : memref<3x128x128xf32, #tpu.memory_space<vmem>>, vector<1x128x128xf32>
    %82 = vector.shape_cast %81 : vector<1x128x128xf32> to vector<128x128xf32>
    %cst_42 = arith.constant dense<0.000000e+00> : vector<32x128xf32>
    %83 = tpu.matmul %80, %82, %cst_42 {dimension_numbers = #tpu.dot_dimension_numbers<[1], [0], [0], [1], [0, 0, 1, 1], [], []>, precision = #tpu.contract_precision<fp32>} : vector<32x128xf32>, vector<128x128xf32>, vector<32x128xf32> -> vector<32x128xf32>
    %84 = arith.addf %79, %83 : vector<32x128xf32>
    %85 = vector.shape_cast %75 : vector<2x16x128xf32> to vector<32x128xf32>
    %c2_43 = arith.constant 2 : index
    %c0_44 = arith.constant 0 : index
    %c0_45 = arith.constant 0 : index
    %86 = vector.load %arg2[%c2_43, %c0_44, %c0_45] : memref<3x128x128xf32, #tpu.memory_space<vmem>>, vector<1x128x128xf32>
    %87 = vector.shape_cast %86 : vector<1x128x128xf32> to vector<128x128xf32>
    %cst_46 = arith.constant dense<0.000000e+00> : vector<32x128xf32>
    %88 = tpu.matmul %85, %87, %cst_46 {dimension_numbers = #tpu.dot_dimension_numbers<[1], [0], [0], [1], [0, 0, 1, 1], [], []>, precision = #tpu.contract_precision<fp32>} : vector<32x128xf32>, vector<128x128xf32>, vector<32x128xf32> -> vector<32x128xf32>
    %89 = arith.addf %84, %88 : vector<32x128xf32>
    %c0_47 = arith.constant 0 : index
    %c0_48 = arith.constant 0 : index
    %90 = vector.load %arg10[%c0_47, %c0_48] : memref<1x128xf32, #tpu.memory_space<vmem>>, vector<1x128xf32>
    %c0_49 = arith.constant 0 : index
    %c0_50 = arith.constant 0 : index
    %91 = vector.load %arg11[%c0_49, %c0_50] : memref<1x128xf32, #tpu.memory_space<vmem>>, vector<1x128xf32>
    %cst_51 = arith.constant dense<0.000000e+00> : vector<128xf32>
    %92 = vector.multi_reduction <add>, %89, %cst_51 [0] : vector<32x128xf32> to vector<128xf32>
    %93 = vector.shape_cast %92 : vector<128xf32> to vector<1x128xf32>
    %94 = arith.mulf %89, %89 : vector<32x128xf32>
    %cst_52 = arith.constant dense<0.000000e+00> : vector<128xf32>
    %95 = vector.multi_reduction <add>, %94, %cst_52 [0] : vector<32x128xf32> to vector<128xf32>
    %96 = vector.shape_cast %95 : vector<128xf32> to vector<1x128xf32>
    %cst_53 = arith.constant dense<0.000000e+00> : vector<1x128xf32>
    %97 = tpu.matmul %93, %2, %cst_53 {dimension_numbers = #tpu.dot_dimension_numbers<[1], [0], [0], [1], [0, 0, 1, 1], [], []>, precision = #tpu.contract_precision<fp32>} : vector<1x128xf32>, vector<128x128xf32>, vector<1x128xf32> -> vector<1x128xf32>
    %cst_54 = arith.constant dense<0.000000e+00> : vector<1x128xf32>
    %98 = tpu.matmul %96, %2, %cst_54 {dimension_numbers = #tpu.dot_dimension_numbers<[1], [0], [0], [1], [0, 0, 1, 1], [], []>, precision = #tpu.contract_precision<fp32>} : vector<1x128xf32>, vector<128x128xf32>, vector<1x128xf32> -> vector<1x128xf32>
    %99 = arith.mulf %97, %97 : vector<1x128xf32>
    %100 = arith.subf %98, %99 : vector<1x128xf32>
    %cst_55 = arith.constant 9.99999974E-6 : f32
    %101 = vector.broadcast %cst_55 : f32 to vector<1x128xf32>
    %102 = arith.addf %100, %101 : vector<1x128xf32>
    %103 = math.rsqrt %102 : vector<1x128xf32>
    %104 = arith.mulf %90, %103 : vector<1x128xf32>
    %105 = arith.mulf %97, %104 : vector<1x128xf32>
    %106 = arith.subf %91, %105 : vector<1x128xf32>
    %107 = vector.broadcast %104 : vector<1x128xf32> to vector<32x128xf32>
    %108 = arith.mulf %89, %107 : vector<32x128xf32>
    %109 = vector.broadcast %106 : vector<1x128xf32> to vector<32x128xf32>
    %110 = arith.addf %108, %109 : vector<32x128xf32>
    %c0_56 = arith.constant 0 : index
    %c0_57 = arith.constant 0 : index
    %c0_58 = arith.constant 0 : index
    %111 = vector.load %arg5[%c0_56, %c0_57, %c0_58] : memref<8x128x16xf32, #tpu.memory_space<vmem>>, vector<1x128x16xf32>
    %112 = vector.shape_cast %111 : vector<1x128x16xf32> to vector<128x16xf32>
    %cst_59 = arith.constant dense<0.000000e+00> : vector<32x16xf32>
    %113 = tpu.matmul %110, %112, %cst_59 {dimension_numbers = #tpu.dot_dimension_numbers<[1], [0], [0], [1], [0, 0, 1, 1], [], []>, precision = #tpu.contract_precision<fp32>} : vector<32x128xf32>, vector<128x16xf32>, vector<32x16xf32> -> vector<32x16xf32>
    %c1_60 = arith.constant 1 : index
    %c0_61 = arith.constant 0 : index
    %c0_62 = arith.constant 0 : index
    %114 = vector.load %arg5[%c1_60, %c0_61, %c0_62] : memref<8x128x16xf32, #tpu.memory_space<vmem>>, vector<1x128x16xf32>
    %115 = vector.shape_cast %114 : vector<1x128x16xf32> to vector<128x16xf32>
    %cst_63 = arith.constant dense<0.000000e+00> : vector<32x16xf32>
    %116 = tpu.matmul %110, %115, %cst_63 {dimension_numbers = #tpu.dot_dimension_numbers<[1], [0], [0], [1], [0, 0, 1, 1], [], []>, precision = #tpu.contract_precision<fp32>} : vector<32x128xf32>, vector<128x16xf32>, vector<32x16xf32> -> vector<32x16xf32>
    %117 = arith.addf %113, %116 : vector<32x16xf32>
    %118 = arith.maximumf %113, %116 : vector<32x16xf32>
    %c2_64 = arith.constant 2 : index
    %c0_65 = arith.constant 0 : index
    %c0_66 = arith.constant 0 : index
    %119 = vector.load %arg5[%c2_64, %c0_65, %c0_66] : memref<8x128x16xf32, #tpu.memory_space<vmem>>, vector<1x128x16xf32>
    %120 = vector.shape_cast %119 : vector<1x128x16xf32> to vector<128x16xf32>
    %cst_67 = arith.constant dense<0.000000e+00> : vector<32x16xf32>
    %121 = tpu.matmul %110, %120, %cst_67 {dimension_numbers = #tpu.dot_dimension_numbers<[1], [0], [0], [1], [0, 0, 1, 1], [], []>, precision = #tpu.contract_precision<fp32>} : vector<32x128xf32>, vector<128x16xf32>, vector<32x16xf32> -> vector<32x16xf32>
    %122 = arith.addf %117, %121 : vector<32x16xf32>
    %123 = arith.maximumf %118, %121 : vector<32x16xf32>
    %c3 = arith.constant 3 : index
    %c0_68 = arith.constant 0 : index
    %c0_69 = arith.constant 0 : index
    %124 = vector.load %arg5[%c3, %c0_68, %c0_69] : memref<8x128x16xf32, #tpu.memory_space<vmem>>, vector<1x128x16xf32>
    %125 = vector.shape_cast %124 : vector<1x128x16xf32> to vector<128x16xf32>
    %cst_70 = arith.constant dense<0.000000e+00> : vector<32x16xf32>
    %126 = tpu.matmul %110, %125, %cst_70 {dimension_numbers = #tpu.dot_dimension_numbers<[1], [0], [0], [1], [0, 0, 1, 1], [], []>, precision = #tpu.contract_precision<fp32>} : vector<32x128xf32>, vector<128x16xf32>, vector<32x16xf32> -> vector<32x16xf32>
    %127 = arith.addf %122, %126 : vector<32x16xf32>
    %128 = arith.maximumf %123, %126 : vector<32x16xf32>
    %c4 = arith.constant 4 : index
    %c0_71 = arith.constant 0 : index
    %c0_72 = arith.constant 0 : index
    %129 = vector.load %arg5[%c4, %c0_71, %c0_72] : memref<8x128x16xf32, #tpu.memory_space<vmem>>, vector<1x128x16xf32>
    %130 = vector.shape_cast %129 : vector<1x128x16xf32> to vector<128x16xf32>
    %cst_73 = arith.constant dense<0.000000e+00> : vector<32x16xf32>
    %131 = tpu.matmul %110, %130, %cst_73 {dimension_numbers = #tpu.dot_dimension_numbers<[1], [0], [0], [1], [0, 0, 1, 1], [], []>, precision = #tpu.contract_precision<fp32>} : vector<32x128xf32>, vector<128x16xf32>, vector<32x16xf32> -> vector<32x16xf32>
    %132 = arith.addf %127, %131 : vector<32x16xf32>
    %133 = arith.maximumf %128, %131 : vector<32x16xf32>
    %c5 = arith.constant 5 : index
    %c0_74 = arith.constant 0 : index
    %c0_75 = arith.constant 0 : index
    %134 = vector.load %arg5[%c5, %c0_74, %c0_75] : memref<8x128x16xf32, #tpu.memory_space<vmem>>, vector<1x128x16xf32>
    %135 = vector.shape_cast %134 : vector<1x128x16xf32> to vector<128x16xf32>
    %cst_76 = arith.constant dense<0.000000e+00> : vector<32x16xf32>
    %136 = tpu.matmul %110, %135, %cst_76 {dimension_numbers = #tpu.dot_dimension_numbers<[1], [0], [0], [1], [0, 0, 1, 1], [], []>, precision = #tpu.contract_precision<fp32>} : vector<32x128xf32>, vector<128x16xf32>, vector<32x16xf32> -> vector<32x16xf32>
    %137 = arith.addf %132, %136 : vector<32x16xf32>
    %138 = arith.maximumf %133, %136 : vector<32x16xf32>
    %c6 = arith.constant 6 : index
    %c0_77 = arith.constant 0 : index
    %c0_78 = arith.constant 0 : index
    %139 = vector.load %arg5[%c6, %c0_77, %c0_78] : memref<8x128x16xf32, #tpu.memory_space<vmem>>, vector<1x128x16xf32>
    %140 = vector.shape_cast %139 : vector<1x128x16xf32> to vector<128x16xf32>
    %cst_79 = arith.constant dense<0.000000e+00> : vector<32x16xf32>
    %141 = tpu.matmul %110, %140, %cst_79 {dimension_numbers = #tpu.dot_dimension_numbers<[1], [0], [0], [1], [0, 0, 1, 1], [], []>, precision = #tpu.contract_precision<fp32>} : vector<32x128xf32>, vector<128x16xf32>, vector<32x16xf32> -> vector<32x16xf32>
    %142 = arith.addf %137, %141 : vector<32x16xf32>
    %143 = arith.maximumf %138, %141 : vector<32x16xf32>
    %c7 = arith.constant 7 : index
    %c0_80 = arith.constant 0 : index
    %c0_81 = arith.constant 0 : index
    %144 = vector.load %arg5[%c7, %c0_80, %c0_81] : memref<8x128x16xf32, #tpu.memory_space<vmem>>, vector<1x128x16xf32>
    %145 = vector.shape_cast %144 : vector<1x128x16xf32> to vector<128x16xf32>
    %cst_82 = arith.constant dense<0.000000e+00> : vector<32x16xf32>
    %146 = tpu.matmul %110, %145, %cst_82 {dimension_numbers = #tpu.dot_dimension_numbers<[1], [0], [0], [1], [0, 0, 1, 1], [], []>, precision = #tpu.contract_precision<fp32>} : vector<32x128xf32>, vector<128x16xf32>, vector<32x16xf32> -> vector<32x16xf32>
    %147 = arith.addf %142, %146 : vector<32x16xf32>
    %148 = arith.maximumf %143, %146 : vector<32x16xf32>
    %cst_83 = arith.constant 1.250000e-01 : f32
    %149 = vector.broadcast %cst_83 : f32 to vector<32x16xf32>
    %150 = arith.mulf %147, %149 : vector<32x16xf32>
    %151 = tpu.concatenate %150, %148 in 1 : vector<32x16xf32>, vector<32x16xf32> -> vector<32x32xf32>
    %152 = vector.shape_cast %151 : vector<32x32xf32> to vector<2x16x32xf32>
    %cst_84 = arith.constant 0.000000e+00 : f32
    %153 = vector.broadcast %cst_84 : f32 to vector<2x3x32xf32>
    %154 = vector.extract_strided_slice %152 {offsets = [0, 0, 0], sizes = [2, 13, 32], strides = [1, 1, 1]} : vector<2x16x32xf32> to vector<2x13x32xf32>
    %155 = tpu.concatenate %153, %154 in 1 : vector<2x3x32xf32>, vector<2x13x32xf32> -> vector<2x16x32xf32>
    %156 = vector.shape_cast %155 : vector<2x16x32xf32> to vector<32x32xf32>
    %c0_85 = arith.constant 0 : index
    %c0_86 = arith.constant 0 : index
    %c0_87 = arith.constant 0 : index
    %157 = vector.load %arg4[%c0_85, %c0_86, %c0_87] : memref<7x32x16xf32, #tpu.memory_space<vmem>>, vector<1x32x16xf32>
    %158 = vector.shape_cast %157 : vector<1x32x16xf32> to vector<32x16xf32>
    %cst_88 = arith.constant dense<0.000000e+00> : vector<32x16xf32>
    %159 = tpu.matmul %156, %158, %cst_88 {dimension_numbers = #tpu.dot_dimension_numbers<[1], [0], [0], [1], [0, 0, 1, 1], [], []>, precision = #tpu.contract_precision<fp32>} : vector<32x32xf32>, vector<32x16xf32>, vector<32x16xf32> -> vector<32x16xf32>
    %cst_89 = arith.constant 0.000000e+00 : f32
    %160 = vector.broadcast %cst_89 : f32 to vector<2x2x32xf32>
    %161 = vector.extract_strided_slice %152 {offsets = [0, 0, 0], sizes = [2, 14, 32], strides = [1, 1, 1]} : vector<2x16x32xf32> to vector<2x14x32xf32>
    %162 = tpu.concatenate %160, %161 in 1 : vector<2x2x32xf32>, vector<2x14x32xf32> -> vector<2x16x32xf32>
    %163 = vector.shape_cast %162 : vector<2x16x32xf32> to vector<32x32xf32>
    %c1_90 = arith.constant 1 : index
    %c0_91 = arith.constant 0 : index
    %c0_92 = arith.constant 0 : index
    %164 = vector.load %arg4[%c1_90, %c0_91, %c0_92] : memref<7x32x16xf32, #tpu.memory_space<vmem>>, vector<1x32x16xf32>
    %165 = vector.shape_cast %164 : vector<1x32x16xf32> to vector<32x16xf32>
    %cst_93 = arith.constant dense<0.000000e+00> : vector<32x16xf32>
    %166 = tpu.matmul %163, %165, %cst_93 {dimension_numbers = #tpu.dot_dimension_numbers<[1], [0], [0], [1], [0, 0, 1, 1], [], []>, precision = #tpu.contract_precision<fp32>} : vector<32x32xf32>, vector<32x16xf32>, vector<32x16xf32> -> vector<32x16xf32>
    %167 = arith.addf %159, %166 : vector<32x16xf32>
    %cst_94 = arith.constant 0.000000e+00 : f32
    %168 = vector.broadcast %cst_94 : f32 to vector<2x1x32xf32>
    %169 = vector.extract_strided_slice %152 {offsets = [0, 0, 0], sizes = [2, 15, 32], strides = [1, 1, 1]} : vector<2x16x32xf32> to vector<2x15x32xf32>
    %170 = tpu.concatenate %168, %169 in 1 : vector<2x1x32xf32>, vector<2x15x32xf32> -> vector<2x16x32xf32>
    %171 = vector.shape_cast %170 : vector<2x16x32xf32> to vector<32x32xf32>
    %c2_95 = arith.constant 2 : index
    %c0_96 = arith.constant 0 : index
    %c0_97 = arith.constant 0 : index
    %172 = vector.load %arg4[%c2_95, %c0_96, %c0_97] : memref<7x32x16xf32, #tpu.memory_space<vmem>>, vector<1x32x16xf32>
    %173 = vector.shape_cast %172 : vector<1x32x16xf32> to vector<32x16xf32>
    %cst_98 = arith.constant dense<0.000000e+00> : vector<32x16xf32>
    %174 = tpu.matmul %171, %173, %cst_98 {dimension_numbers = #tpu.dot_dimension_numbers<[1], [0], [0], [1], [0, 0, 1, 1], [], []>, precision = #tpu.contract_precision<fp32>} : vector<32x32xf32>, vector<32x16xf32>, vector<32x16xf32> -> vector<32x16xf32>
    %175 = arith.addf %167, %174 : vector<32x16xf32>
    %176 = vector.shape_cast %152 : vector<2x16x32xf32> to vector<32x32xf32>
    %c3_99 = arith.constant 3 : index
    %c0_100 = arith.constant 0 : index
    %c0_101 = arith.constant 0 : index
    %177 = vector.load %arg4[%c3_99, %c0_100, %c0_101] : memref<7x32x16xf32, #tpu.memory_space<vmem>>, vector<1x32x16xf32>
    %178 = vector.shape_cast %177 : vector<1x32x16xf32> to vector<32x16xf32>
    %cst_102 = arith.constant dense<0.000000e+00> : vector<32x16xf32>
    %179 = tpu.matmul %176, %178, %cst_102 {dimension_numbers = #tpu.dot_dimension_numbers<[1], [0], [0], [1], [0, 0, 1, 1], [], []>, precision = #tpu.contract_precision<fp32>} : vector<32x32xf32>, vector<32x16xf32>, vector<32x16xf32> -> vector<32x16xf32>
    %180 = arith.addf %175, %179 : vector<32x16xf32>
    %cst_103 = arith.constant 0.000000e+00 : f32
    %181 = vector.broadcast %cst_103 : f32 to vector<2x1x32xf32>
    %182 = vector.extract_strided_slice %152 {offsets = [0, 1, 0], sizes = [2, 15, 32], strides = [1, 1, 1]} : vector<2x16x32xf32> to vector<2x15x32xf32>
    %183 = tpu.concatenate %182, %181 in 1 : vector<2x15x32xf32>, vector<2x1x32xf32> -> vector<2x16x32xf32>
    %184 = vector.shape_cast %183 : vector<2x16x32xf32> to vector<32x32xf32>
    %c4_104 = arith.constant 4 : index
    %c0_105 = arith.constant 0 : index
    %c0_106 = arith.constant 0 : index
    %185 = vector.load %arg4[%c4_104, %c0_105, %c0_106] : memref<7x32x16xf32, #tpu.memory_space<vmem>>, vector<1x32x16xf32>
    %186 = vector.shape_cast %185 : vector<1x32x16xf32> to vector<32x16xf32>
    %cst_107 = arith.constant dense<0.000000e+00> : vector<32x16xf32>
    %187 = tpu.matmul %184, %186, %cst_107 {dimension_numbers = #tpu.dot_dimension_numbers<[1], [0], [0], [1], [0, 0, 1, 1], [], []>, precision = #tpu.contract_precision<fp32>} : vector<32x32xf32>, vector<32x16xf32>, vector<32x16xf32> -> vector<32x16xf32>
    %188 = arith.addf %180, %187 : vector<32x16xf32>
    %cst_108 = arith.constant 0.000000e+00 : f32
    %189 = vector.broadcast %cst_108 : f32 to vector<2x2x32xf32>
    %190 = vector.extract_strided_slice %152 {offsets = [0, 2, 0], sizes = [2, 14, 32], strides = [1, 1, 1]} : vector<2x16x32xf32> to vector<2x14x32xf32>
    %191 = tpu.concatenate %190, %189 in 1 : vector<2x14x32xf32>, vector<2x2x32xf32> -> vector<2x16x32xf32>
    %192 = vector.shape_cast %191 : vector<2x16x32xf32> to vector<32x32xf32>
    %c5_109 = arith.constant 5 : index
    %c0_110 = arith.constant 0 : index
    %c0_111 = arith.constant 0 : index
    %193 = vector.load %arg4[%c5_109, %c0_110, %c0_111] : memref<7x32x16xf32, #tpu.memory_space<vmem>>, vector<1x32x16xf32>
    %194 = vector.shape_cast %193 : vector<1x32x16xf32> to vector<32x16xf32>
    %cst_112 = arith.constant dense<0.000000e+00> : vector<32x16xf32>
    %195 = tpu.matmul %192, %194, %cst_112 {dimension_numbers = #tpu.dot_dimension_numbers<[1], [0], [0], [1], [0, 0, 1, 1], [], []>, precision = #tpu.contract_precision<fp32>} : vector<32x32xf32>, vector<32x16xf32>, vector<32x16xf32> -> vector<32x16xf32>
    %196 = arith.addf %188, %195 : vector<32x16xf32>
    %cst_113 = arith.constant 0.000000e+00 : f32
    %197 = vector.broadcast %cst_113 : f32 to vector<2x3x32xf32>
    %198 = vector.extract_strided_slice %152 {offsets = [0, 3, 0], sizes = [2, 13, 32], strides = [1, 1, 1]} : vector<2x16x32xf32> to vector<2x13x32xf32>
    %199 = tpu.concatenate %198, %197 in 1 : vector<2x13x32xf32>, vector<2x3x32xf32> -> vector<2x16x32xf32>
    %200 = vector.shape_cast %199 : vector<2x16x32xf32> to vector<32x32xf32>
    %c6_114 = arith.constant 6 : index
    %c0_115 = arith.constant 0 : index
    %c0_116 = arith.constant 0 : index
    %201 = vector.load %arg4[%c6_114, %c0_115, %c0_116] : memref<7x32x16xf32, #tpu.memory_space<vmem>>, vector<1x32x16xf32>
    %202 = vector.shape_cast %201 : vector<1x32x16xf32> to vector<32x16xf32>
    %cst_117 = arith.constant dense<0.000000e+00> : vector<32x16xf32>
    %203 = tpu.matmul %200, %202, %cst_117 {dimension_numbers = #tpu.dot_dimension_numbers<[1], [0], [0], [1], [0, 0, 1, 1], [], []>, precision = #tpu.contract_precision<fp32>} : vector<32x32xf32>, vector<32x16xf32>, vector<32x16xf32> -> vector<32x16xf32>
    %204 = arith.addf %196, %203 : vector<32x16xf32>
    %cst_118 = arith.constant 5.000000e-01 : f32
    %205 = vector.broadcast %cst_118 : f32 to vector<32x16xf32>
    %206 = arith.mulf %205, %204 : vector<32x16xf32>
    %207 = math.tanh %206 : vector<32x16xf32>
    %cst_119 = arith.constant 1.000000e+00 : f32
    %208 = vector.broadcast %cst_119 : f32 to vector<32x16xf32>
    %209 = arith.addf %208, %207 : vector<32x16xf32>
    %cst_120 = arith.constant 5.000000e-01 : f32
    %210 = vector.broadcast %cst_120 : f32 to vector<32x16xf32>
    %211 = arith.mulf %210, %209 : vector<32x16xf32>
    %c0_121 = arith.constant 0 : index
    %c0_122 = arith.constant 0 : index
    %212 = vector.load %arg6[%c0_121, %c0_122] : memref<16x128xf32, #tpu.memory_space<vmem>>, vector<16x128xf32>
    %cst_123 = arith.constant dense<0.000000e+00> : vector<32x128xf32>
    %213 = tpu.matmul %211, %212, %cst_123 {dimension_numbers = #tpu.dot_dimension_numbers<[1], [0], [0], [1], [0, 0, 1, 1], [], []>, precision = #tpu.contract_precision<fp32>} : vector<32x16xf32>, vector<16x128xf32>, vector<32x128xf32> -> vector<32x128xf32>
    %214 = arith.mulf %110, %213 : vector<32x128xf32>
    %215 = arith.addf %214, %25 : vector<32x128xf32>
    %cst_124 = arith.constant 0.000000e+00 : f32
    %216 = vector.broadcast %cst_124 : f32 to vector<32x128xf32>
    %217 = arith.maximumf %215, %216 : vector<32x128xf32>
    %218 = vector.shape_cast %217 : vector<32x128xf32> to vector<2x16x128xf32>
    %c0_125 = arith.constant 0 : index
    %c0_126 = arith.constant 0 : index
    %c0_127 = arith.constant 0 : index
    %219 = vector.load %arg14[%c0_125, %c0_126, %c0_127] : memref<2x16x128xf32, #tpu.memory_space<vmem>>, vector<2x16x128xf32>
    tpu.vector_store %arg14[%c0_125, %c0_126, %c0_127], %218 {strides = array<i32>} : memref<2x16x128xf32, #tpu.memory_space<vmem>>, vector<2x16x128xf32>,
    return
  }
}

</mosaic_0001>

<llo_original>
// kernel: tpu_custom_call.1
$region0: #{tpu_custom_call.1}
  #allocation0 [shape = 'u32[]', space=smem, size = 0x4, offset = 0x4, fixed_abs, tag = 'smem constant byte address 0x4 - core index']
  #allocation1 [shape = 'u32[72,128]{1,0:T(1,128)}', space=vmem, size = 0x9000, scoped, tag = 'internal scratch']
  %s0 = inlined_call_operand.vmem [shape: f32[2,16,64], index: 0, kind: input, shape index: {}]
  %s1 = inlined_call_operand.vmem [shape: f32[3,64,128], index: 1, kind: input, shape index: {}]
  %s2 = inlined_call_operand.vmem [shape: f32[3,128,128], index: 2, kind: input, shape index: {}]
  %s3 = inlined_call_operand.vmem [shape: f32[64,128], index: 3, kind: input, shape index: {}]
  %s4 = inlined_call_operand.vmem [shape: f32[7,32,16], index: 4, kind: input, shape index: {}]
  %s5 = inlined_call_operand.vmem [shape: f32[8,128,16], index: 5, kind: input, shape index: {}]
  %s6 = inlined_call_operand.vmem [shape: f32[16,128], index: 6, kind: input, shape index: {}]
  %s7 = inlined_call_operand.vmem [shape: f32[128,128], index: 7, kind: input, shape index: {}]
  %s8 = inlined_call_operand.vmem [shape: f32[1,128], index: 8, kind: input, shape index: {}]
  %s9 = inlined_call_operand.vmem [shape: f32[1,128], index: 9, kind: input, shape index: {}]
  %s10 = inlined_call_operand.vmem [shape: f32[1,128], index: 10, kind: input, shape index: {}]
  %s11 = inlined_call_operand.vmem [shape: f32[1,128], index: 11, kind: input, shape index: {}]
  %s12 = inlined_call_operand.vmem [shape: f32[1,128], index: 12, kind: input, shape index: {}]
  %s13 = inlined_call_operand.vmem [shape: f32[1,128], index: 13, kind: input, shape index: {}]
  %s14 = inlined_call_operand.hbm [shape: f32[2,16,128], index: 14, kind: output, shape index: {}]
  %s15 = sld [smem:[#allocation0]]
  $region66: #{tpu_custom_call.1} parent=0
    _
  %s17 = ssub.s32 1, %s15
  %s18 = scalar_select 0, %s17, %s15
  $region1: #{tpu_custom_call.1} parent=0
    #allocation2 [shape = 'u8[16384]{0}', space=vmem, size = 0x4000, scoped, tag = 'output window, operand 0, single buffered']
    #allocation3 [shape = 's32[1]{0}', space=sflag, size = 0x4, scoped, tag = 'scoped memory for tpu_custom_call.1']
    %19 = vsyncpa [#allocation3], 0
    // Predicated region
    $region2: #{tpu_custom_call.1} parent=1 // pred_check
      _
    $region3: #{tpu_custom_call.1} parent=1 // pred_check_branch
      %21 = sbr.rel (0) target = $region5
    $region4: #{tpu_custom_call.1} parent=1 // pred_region
      _
    $region5: #{tpu_custom_call.1} parent=1 // pred_fallthru
      _
    // Predicated region
    $region6: #{tpu_custom_call.1} parent=1 // pred_check
      _
    $region7: #{tpu_custom_call.1} parent=1 // pred_check_branch
      %23 = sbr.rel (0) target = $region9
    $region8: #{tpu_custom_call.1} parent=1 // pred_region
      _
    $region9: #{tpu_custom_call.1} parent=1 // pred_fallthru
      _
    // Predicated region
    $region10: #{tpu_custom_call.1} parent=1 // pred_check
      _
    $region11: #{tpu_custom_call.1} parent=1 // pred_check_branch
      %25 = sbr.rel (0) target = $region13
    $region12: #{tpu_custom_call.1} parent=1 // pred_region
      _
    $region13: #{tpu_custom_call.1} parent=1 // pred_fallthru
      _
    // Predicated region
    $region14: #{tpu_custom_call.1} parent=1 // pred_check
      _
    $region15: #{tpu_custom_call.1} parent=1 // pred_check_branch
      %27 = sbr.rel (0) target = $region17
    $region16: #{tpu_custom_call.1} parent=1 // pred_region
      _
    $region17: #{tpu_custom_call.1} parent=1 // pred_fallthru
      _
    // Predicated region
    $region18: #{tpu_custom_call.1} parent=1 // pred_check
      _
    $region19: #{tpu_custom_call.1} parent=1 // pred_check_branch
      %29 = sbr.rel (0) target = $region21
    $region20: #{tpu_custom_call.1} parent=1 // pred_region
      _
    $region21: #{tpu_custom_call.1} parent=1 // pred_fallthru
      _
    // Predicated region
    $region22: #{tpu_custom_call.1} parent=1 // pred_check
      _
    $region23: #{tpu_custom_call.1} parent=1 // pred_check_branch
      %31 = sbr.rel (0) target = $region25
    $region24: #{tpu_custom_call.1} parent=1 // pred_region
      _
    $region25: #{tpu_custom_call.1} parent=1 // pred_fallthru
      _
    // Predicated region
    $region26: #{tpu_custom_call.1} parent=1 // pred_check
      _
    $region27: #{tpu_custom_call.1} parent=1 // pred_check_branch
      %33 = sbr.rel (0) target = $region29
    $region28: #{tpu_custom_call.1} parent=1 // pred_region
      _
    $region29: #{tpu_custom_call.1} parent=1 // pred_fallthru
      _
    // Predicated region
    $region30: #{tpu_custom_call.1} parent=1 // pred_check
      _
    $region31: #{tpu_custom_call.1} parent=1 // pred_check_branch
      %35 = sbr.rel (0) target = $region33
    $region32: #{tpu_custom_call.1} parent=1 // pred_region
      _
    $region33: #{tpu_custom_call.1} parent=1 // pred_fallthru
      _
    // Predicated region
    $region34: #{tpu_custom_call.1} parent=1 // pred_check
      _
    $region35: #{tpu_custom_call.1} parent=1 // pred_check_branch
      %37 = sbr.rel (0) target = $region37
    $region36: #{tpu_custom_call.1} parent=1 // pred_region
      _
    $region37: #{tpu_custom_call.1} parent=1 // pred_fallthru
      _
    // Predicated region
    $region38: #{tpu_custom_call.1} parent=1 // pred_check
      _
    $region39: #{tpu_custom_call.1} parent=1 // pred_check_branch
      %39 = sbr.rel (0) target = $region41
    $region40: #{tpu_custom_call.1} parent=1 // pred_region
      _
    $region41: #{tpu_custom_call.1} parent=1 // pred_fallthru
      _
    // Predicated region
    $region42: #{tpu_custom_call.1} parent=1 // pred_check
      _
    $region43: #{tpu_custom_call.1} parent=1 // pred_check_branch
      %41 = sbr.rel (0) target = $region45
    $region44: #{tpu_custom_call.1} parent=1 // pred_region
      _
    $region45: #{tpu_custom_call.1} parent=1 // pred_fallthru
      _
    // Predicated region
    $region46: #{tpu_custom_call.1} parent=1 // pred_check
      _
    $region47: #{tpu_custom_call.1} parent=1 // pred_check_branch
      %43 = sbr.rel (0) target = $region49
    $region48: #{tpu_custom_call.1} parent=1 // pred_region
      _
    $region49: #{tpu_custom_call.1} parent=1 // pred_fallthru
      _
    // Predicated region
    $region50: #{tpu_custom_call.1} parent=1 // pred_check
      _
    $region51: #{tpu_custom_call.1} parent=1 // pred_check_branch
      %45 = sbr.rel (0) target = $region53
    $region52: #{tpu_custom_call.1} parent=1 // pred_region
      _
    $region53: #{tpu_custom_call.1} parent=1 // pred_fallthru
      _
    // Predicated region
    $region54: #{tpu_custom_call.1} parent=1 // pred_check
      _
    $region55: #{tpu_custom_call.1} parent=1 // pred_check_branch
      %47 = sbr.rel (0) target = $region57
    $region56: #{tpu_custom_call.1} parent=1 // pred_region
      _
    $region57: #{tpu_custom_call.1} parent=1 // pred_fallthru
      _
    %v48 = vld [vmem:[%s0] sm:$0xff]
    %v49 = vld [vmem:[%s0 + $0x8] sm:$0xff]
    %v50 = vld [vmem:[%s0 + $0x10] sm:$0xff]
    %v51 = vld [vmem:[%s0 + $0x18] sm:$0xff]
    %v52 = vld [vmem:[%s7] sm:$0xff]
    %v53 = vld [vmem:[%s7 + $0x8] sm:$0xff]
    %v54 = vld [vmem:[%s7 + $0x10] sm:$0xff]
    %v55 = vld [vmem:[%s7 + $0x18] sm:$0xff]
    %v56 = vld [vmem:[%s7 + $0x20] sm:$0xff]
    %v57 = vld [vmem:[%s7 + $0x28] sm:$0xff]
    %v58 = vld [vmem:[%s7 + $0x30] sm:$0xff]
    %v59 = vld [vmem:[%s7 + $0x38] sm:$0xff]
    %v60 = vld [vmem:[%s7 + $0x40] sm:$0xff]
    %v61 = vld [vmem:[%s7 + $0x48] sm:$0xff]
    %v62 = vld [vmem:[%s7 + $0x50] sm:$0xff]
    %v63 = vld [vmem:[%s7 + $0x58] sm:$0xff]
    %v64 = vld [vmem:[%s7 + $0x60] sm:$0xff]
    %v65 = vld [vmem:[%s7 + $0x68] sm:$0xff]
    %v66 = vld [vmem:[%s7 + $0x70] sm:$0xff]
    %v67 = vld [vmem:[%s7 + $0x78] sm:$0xff]
    %v68 = vld [vmem:[%s3] sm:$0xff]
    %v69 = vld [vmem:[%s3 + $0x8] sm:$0xff]
    %v70 = vld [vmem:[%s3 + $0x10] sm:$0xff]
    %v71 = vld [vmem:[%s3 + $0x18] sm:$0xff]
    %v72 = vld [vmem:[%s3 + $0x20] sm:$0xff]
    %v73 = vld [vmem:[%s3 + $0x28] sm:$0xff]
    %v74 = vld [vmem:[%s3 + $0x30] sm:$0xff]
    %v75 = vld [vmem:[%s3 + $0x38] sm:$0xff]
    %vm76 = vcmask 523264
    %v78 = vsel %vm76, %v48, 0
    %v81 = vsel %vm76, %v49, 0
    %v84 = vsel %vm76, %v50, 0
    %v87 = vsel %vm76, %v51, 0
    %89 = vmatpush.msra.mxu0 0.0
    %90 = vmatpush.msra.mxu0 0.0
    %91 = vmatpush.msra.mxu0 0.0
    %92 = vmatpush.msra.mxu0 0.0
    %93 = vmatpush.msra.mxu0 0.0
    %94 = vmatpush.msra.mxu0 0.0
    %95 = vmatpush.msra.mxu0 0.0
    %96 = vmatpush.msra.mxu0 0.0
    %v97 = vand.u32 %v75, 4294901760
    %98 = vmatpush.msra.mxu0 %v97
    %v99 = vand.u32 %v74, 4294901760
    %100 = vmatpush.msra.mxu0 %v99
    %v101 = vand.u32 %v73, 4294901760
    %102 = vmatpush.msra.mxu0 %v101
    %v103 = vand.u32 %v72, 4294901760
    %104 = vmatpush.msra.mxu0 %v103
    %v105 = vand.u32 %v71, 4294901760
    %106 = vmatpush.msra.mxu0 %v105
    %v107 = vand.u32 %v70, 4294901760
    %108 = vmatpush.msra.mxu0 %v107
    %v109 = vand.u32 %v69, 4294901760
    %110 = vmatpush.msra.mxu0 %v109
    %v111 = vand.u32 %v68, 4294901760
    %112 = vmatpush.msra.mxu0 %v111
    %v113 = vand.u32 %v78, 4294901760
    %v114 = vsub.f32 %v78, %v113
    %v115 = vand.u32 %v114, 4294901760
    %v116 = vsub.f32 %v114, %v115
    %v117 = vand.u32 %v116, 4294901760
    %118 = vmatmul.f32.gmra.mxu0 %v117
    %v119 = vpop.f32.mrf.mxu0
    %v120 = vadd.f32 0.0, %v119
    %v121 = vand.u32 %v81, 4294901760
    %v122 = vsub.f32 %v81, %v121
    %v123 = vand.u32 %v122, 4294901760
    %v124 = vsub.f32 %v122, %v123
    %v125 = vand.u32 %v124, 4294901760
    %126 = vmatmul.f32.gmra.mxu0 %v125
    %v127 = vpop.f32.mrf.mxu0
    %v128 = vadd.f32 0.0, %v127
    %v129 = vand.u32 %v84, 4294901760
    %v130 = vsub.f32 %v84, %v129
    %v131 = vand.u32 %v130, 4294901760
    %v132 = vsub.f32 %v130, %v131
    %v133 = vand.u32 %v132, 4294901760
    %134 = vmatmul.f32.gmra.mxu0 %v133
    %v135 = vpop.f32.mrf.mxu0
    %v136 = vadd.f32 0.0, %v135
    %v137 = vand.u32 %v87, 4294901760
    %v138 = vsub.f32 %v87, %v137
    %v139 = vand.u32 %v138, 4294901760
    %v140 = vsub.f32 %v138, %v139
    %v141 = vand.u32 %v140, 4294901760
    %142 = vmatmul.f32.gmra.mxu0 %v141
    %v143 = vpop.f32.mrf.mxu0
    %v144 = vadd.f32 0.0, %v143
    %145 = vdwg.mxu0
    %146 = vmatpush.msra.mxu0 0.0
    %147 = vmatpush.msra.mxu0 0.0
    %148 = vmatpush.msra.mxu0 0.0
    %149 = vmatpush.msra.mxu0 0.0
    %150 = vmatpush.msra.mxu0 0.0
    %151 = vmatpush.msra.mxu0 0.0
    %152 = vmatpush.msra.mxu0 0.0
    %153 = vmatpush.msra.mxu0 0.0
    %v154 = vand.u32 %v75, 4294901760
    %v155 = vsub.f32 %v75, %v154
    %v156 = vand.u32 %v155, 4294901760
    %v157 = vsub.f32 %v155, %v156
    %v158 = vand.u32 %v157, 4294901760
    %159 = vmatpush.msra.mxu0 %v158
    %v160 = vand.u32 %v74, 4294901760
    %v161 = vsub.f32 %v74, %v160
    %v162 = vand.u32 %v161, 4294901760
    %v163 = vsub.f32 %v161, %v162
    %v164 = vand.u32 %v163, 4294901760
    %165 = vmatpush.msra.mxu0 %v164
    %v166 = vand.u32 %v73, 4294901760
    %v167 = vsub.f32 %v73, %v166
    %v168 = vand.u32 %v167, 4294901760
    %v169 = vsub.f32 %v167, %v168
    %v170 = vand.u32 %v169, 4294901760
    %171 = vmatpush.msra.mxu0 %v170
    %v172 = vand.u32 %v72, 4294901760
    %v173 = vsub.f32 %v72, %v172
    %v174 = vand.u32 %v173, 4294901760
    %v175 = vsub.f32 %v173, %v174
    %v176 = vand.u32 %v175, 4294901760
    %177 = vmatpush.msra.mxu0 %v176
    %v178 = vand.u32 %v71, 4294901760
    %v179 = vsub.f32 %v71, %v178
    %v180 = vand.u32 %v179, 4294901760
    %v181 = vsub.f32 %v179, %v180
    %v182 = vand.u32 %v181, 4294901760
    %183 = vmatpush.msra.mxu0 %v182
    %v184 = vand.u32 %v70, 4294901760
    %v185 = vsub.f32 %v70, %v184
    %v186 = vand.u32 %v185, 4294901760
    %v187 = vsub.f32 %v185, %v186
    %v188 = vand.u32 %v187, 4294901760
    %189 = vmatpush.msra.mxu0 %v188
    %v190 = vand.u32 %v69, 4294901760
    %v191 = vsub.f32 %v69, %v190
    %v192 = vand.u32 %v191, 4294901760
    %v193 = vsub.f32 %v191, %v192
    %v194 = vand.u32 %v193, 4294901760
    %195 = vmatpush.msra.mxu0 %v194
    %v196 = vand.u32 %v68, 4294901760
    %v197 = vsub.f32 %v68, %v196
    %v198 = vand.u32 %v197, 4294901760
    %v199 = vsub.f32 %v197, %v198
    %v200 = vand.u32 %v199, 4294901760
    %201 = vmatpush.msra.mxu0 %v200
    %v202 = vand.u32 %v78, 4294901760
    %203 = vmatmul.f32.gmra.mxu0 %v202
    %v204 = vpop.f32.mrf.mxu0
    %v205 = vadd.f32 %v120, %v204
    %v206 = vand.u32 %v81, 4294901760
    %207 = vmatmul.f32.gmra.mxu0 %v206
    %v208 = vpop.f32.mrf.mxu0
    %v209 = vadd.f32 %v128, %v208
    %v210 = vand.u32 %v84, 4294901760
    %211 = vmatmul.f32.gmra.mxu0 %v210
    %v212 = vpop.f32.mrf.mxu0
    %v213 = vadd.f32 %v136, %v212
    %v214 = vand.u32 %v87, 4294901760
    %215 = vmatmul.f32.gmra.mxu0 %v214
    %v216 = vpop.f32.mrf.mxu0
    %v217 = vadd.f32 %v144, %v216
    %218 = vdwg.mxu0
    %219 = vmatpush.msra.mxu0 0.0
    %220 = vmatpush.msra.mxu0 0.0
    %221 = vmatpush.msra.mxu0 0.0
    %222 = vmatpush.msra.mxu0 0.0
    %223 = vmatpush.msra.mxu0 0.0
    %224 = vmatpush.msra.mxu0 0.0
    %225 = vmatpush.msra.mxu0 0.0
    %226 = vmatpush.msra.mxu0 0.0
    %v227 = vand.u32 %v75, 4294901760
    %v228 = vsub.f32 %v75, %v227
    %229 = vmatpush.msra.mxu0 %v228
    %v230 = vand.u32 %v74, 4294901760
    %v231 = vsub.f32 %v74, %v230
    %232 = vmatpush.msra.mxu0 %v231
    %v233 = vand.u32 %v73, 4294901760
    %v234 = vsub.f32 %v73, %v233
    %235 = vmatpush.msra.mxu0 %v234
    %v236 = vand.u32 %v72, 4294901760
    %v237 = vsub.f32 %v72, %v236
    %238 = vmatpush.msra.mxu0 %v237
    %v239 = vand.u32 %v71, 4294901760
    %v240 = vsub.f32 %v71, %v239
    %241 = vmatpush.msra.mxu0 %v240
    %v242 = vand.u32 %v70, 4294901760
    %v243 = vsub.f32 %v70, %v242
    %244 = vmatpush.msra.mxu0 %v243
    %v245 = vand.u32 %v69, 4294901760
    %v246 = vsub.f32 %v69, %v245
    %247 = vmatpush.msra.mxu0 %v246
    %v248 = vand.u32 %v68, 4294901760
    %v249 = vsub.f32 %v68, %v248
    %250 = vmatpush.msra.mxu0 %v249
    %v251 = vand.u32 %v78, 4294901760
    %v252 = vsub.f32 %v78, %v251
    %253 = vmatmul.f32.gmra.mxu0 %v252
    %v254 = vpop.f32.mrf.mxu0
    %v255 = vadd.f32 %v205, %v254
    %v256 = vand.u32 %v81, 4294901760
    %v257 = vsub.f32 %v81, %v256
    %258 = vmatmul.f32.gmra.mxu0 %v257
    %v259 = vpop.f32.mrf.mxu0
    %v260 = vadd.f32 %v209, %v259
    %v261 = vand.u32 %v84, 4294901760
    %v262 = vsub.f32 %v84, %v261
    %263 = vmatmul.f32.gmra.mxu0 %v262
    %v264 = vpop.f32.mrf.mxu0
    %v265 = vadd.f32 %v213, %v264
    %v266 = vand.u32 %v87, 4294901760
    %v267 = vsub.f32 %v87, %v266
    %268 = vmatmul.f32.gmra.mxu0 %v267
    %v269 = vpop.f32.mrf.mxu0
    %v270 = vadd.f32 %v217, %v269
    %271 = vdwg.mxu0
    %272 = vmatpush.msra.mxu0 0.0
    %273 = vmatpush.msra.mxu0 0.0
    %274 = vmatpush.msra.mxu0 0.0
    %275 = vmatpush.msra.mxu0 0.0
    %276 = vmatpush.msra.mxu0 0.0
    %277 = vmatpush.msra.mxu0 0.0
    %278 = vmatpush.msra.mxu0 0.0
    %279 = vmatpush.msra.mxu0 0.0
    %v280 = vand.u32 %v75, 4294901760
    %281 = vmatpush.msra.mxu0 %v280
    %v282 = vand.u32 %v74, 4294901760
    %283 = vmatpush.msra.mxu0 %v282
    %v284 = vand.u32 %v73, 4294901760
    %285 = vmatpush.msra.mxu0 %v284
    %v286 = vand.u32 %v72, 4294901760
    %287 = vmatpush.msra.mxu0 %v286
    %v288 = vand.u32 %v71, 4294901760
    %289 = vmatpush.msra.mxu0 %v288
    %v290 = vand.u32 %v70, 4294901760
    %291 = vmatpush.msra.mxu0 %v290
    %v292 = vand.u32 %v69, 4294901760
    %293 = vmatpush.msra.mxu0 %v292
    %v294 = vand.u32 %v68, 4294901760
    %295 = vmatpush.msra.mxu0 %v294
    %v296 = vand.u32 %v78, 4294901760
    %v297 = vsub.f32 %v78, %v296
    %v298 = vand.u32 %v297, 4294901760
    %299 = vmatmul.f32.gmra.mxu0 %v298
    %v300 = vpop.f32.mrf.mxu0
    %v301 = vadd.f32 %v255, %v300
    %v302 = vand.u32 %v81, 4294901760
    %v303 = vsub.f32 %v81, %v302
    %v304 = vand.u32 %v303, 4294901760
    %305 = vmatmul.f32.gmra.mxu0 %v304
    %v306 = vpop.f32.mrf.mxu0
    %v307 = vadd.f32 %v260, %v306
    %v308 = vand.u32 %v84, 4294901760
    %v309 = vsub.f32 %v84, %v308
    %v310 = vand.u32 %v309, 4294901760
    %311 = vmatmul.f32.gmra.mxu0 %v310
    %v312 = vpop.f32.mrf.mxu0
    %v313 = vadd.f32 %v265, %v312
    %v314 = vand.u32 %v87, 4294901760
    %v315 = vsub.f32 %v87, %v314
    %v316 = vand.u32 %v315, 4294901760
    %317 = vmatmul.f32.gmra.mxu0 %v316
    %v318 = vpop.f32.mrf.mxu0
    %v319 = vadd.f32 %v270, %v318
    %320 = vdwg.mxu0
    %321 = vmatpush.msra.mxu0 0.0
    %322 = vmatpush.msra.mxu0 0.0
    %323 = vmatpush.msra.mxu0 0.0
    %324 = vmatpush.msra.mxu0 0.0
    %325 = vmatpush.msra.mxu0 0.0
    %326 = vmatpush.msra.mxu0 0.0
    %327 = vmatpush.msra.mxu0 0.0
    %328 = vmatpush.msra.mxu0 0.0
    %v329 = vand.u32 %v75, 4294901760
    %v330 = vsub.f32 %v75, %v329
    %v331 = vand.u32 %v330, 4294901760
    %332 = vmatpush.msra.mxu0 %v331
    %v333 = vand.u32 %v74, 4294901760
    %v334 = vsub.f32 %v74, %v333
    %v335 = vand.u32 %v334, 4294901760
    %336 = vmatpush.msra.mxu0 %v335
    %v337 = vand.u32 %v73, 4294901760
    %v338 = vsub.f32 %v73, %v337
    %v339 = vand.u32 %v338, 4294901760
    %340 = vmatpush.msra.mxu0 %v339
    %v341 = vand.u32 %v72, 4294901760
    %v342 = vsub.f32 %v72, %v341
    %v343 = vand.u32 %v342, 4294901760
    %344 = vmatpush.msra.mxu0 %v343
    %v345 = vand.u32 %v71, 4294901760
    %v346 = vsub.f32 %v71, %v345
    %v347 = vand.u32 %v346, 4294901760
    %348 = vmatpush.msra.mxu0 %v347
    %v349 = vand.u32 %v70, 4294901760
    %v350 = vsub.f32 %v70, %v349
    %v351 = vand.u32 %v350, 4294901760
    %352 = vmatpush.msra.mxu0 %v351
    %v353 = vand.u32 %v69, 4294901760
    %v354 = vsub.f32 %v69, %v353
    %v355 = vand.u32 %v354, 4294901760
    %356 = vmatpush.msra.mxu0 %v355
    %v357 = vand.u32 %v68, 4294901760
    %v358 = vsub.f32 %v68, %v357
    %v359 = vand.u32 %v358, 4294901760
    %360 = vmatpush.msra.mxu0 %v359
    %v361 = vand.u32 %v78, 4294901760
    %362 = vmatmul.f32.gmra.mxu0 %v361
    %v363 = vpop.f32.mrf.mxu0
    %v364 = vadd.f32 %v301, %v363
    %v365 = vand.u32 %v81, 4294901760
    %366 = vmatmul.f32.gmra.mxu0 %v365
    %v367 = vpop.f32.mrf.mxu0
    %v368 = vadd.f32 %v307, %v367
    %v369 = vand.u32 %v84, 4294901760
    %370 = vmatmul.f32.gmra.mxu0 %v369
    %v371 = vpop.f32.mrf.mxu0
    %v372 = vadd.f32 %v313, %v371
    %v373 = vand.u32 %v87, 4294901760
    %374 = vmatmul.f32.gmra.mxu0 %v373
    %v375 = vpop.f32.mrf.mxu0
    %v376 = vadd.f32 %v319, %v375
    %377 = vdwg.mxu0
    %378 = vmatpush.msra.mxu0 0.0
    %379 = vmatpush.msra.mxu0 0.0
    %380 = vmatpush.msra.mxu0 0.0
    %381 = vmatpush.msra.mxu0 0.0
    %382 = vmatpush.msra.mxu0 0.0
    %383 = vmatpush.msra.mxu0 0.0
    %384 = vmatpush.msra.mxu0 0.0
    %385 = vmatpush.msra.mxu0 0.0
    %v386 = vand.u32 %v75, 4294901760
    %387 = vmatpush.msra.mxu0 %v386
    %v388 = vand.u32 %v74, 4294901760
    %389 = vmatpush.msra.mxu0 %v388
    %v390 = vand.u32 %v73, 4294901760
    %391 = vmatpush.msra.mxu0 %v390
    %v392 = vand.u32 %v72, 4294901760
    %393 = vmatpush.msra.mxu0 %v392
    %v394 = vand.u32 %v71, 4294901760
    %395 = vmatpush.msra.mxu0 %v394
    %v396 = vand.u32 %v70, 4294901760
    %397 = vmatpush.msra.mxu0 %v396
    %v398 = vand.u32 %v69, 4294901760
    %399 = vmatpush.msra.mxu0 %v398
    %v400 = vand.u32 %v68, 4294901760
    %401 = vmatpush.msra.mxu0 %v400
    %v402 = vand.u32 %v78, 4294901760
    %403 = vmatmul.f32.gmra.mxu0 %v402
    %v404 = vpop.f32.mrf.mxu0
    %v405 = vadd.f32 %v364, %v404
    %v406 = vand.u32 %v81, 4294901760
    %407 = vmatmul.f32.gmra.mxu0 %v406
    %v408 = vpop.f32.mrf.mxu0
    %v409 = vadd.f32 %v368, %v408
    %v410 = vand.u32 %v84, 4294901760
    %411 = vmatmul.f32.gmra.mxu0 %v410
    %v412 = vpop.f32.mrf.mxu0
    %v413 = vadd.f32 %v372, %v412
    %v414 = vand.u32 %v87, 4294901760
    %415 = vmatmul.f32.gmra.mxu0 %v414
    %v416 = vpop.f32.mrf.mxu0
    %v417 = vadd.f32 %v376, %v416
    %418 = vdwg.mxu0
    %v419 = vld [vmem:[%s12] sm:$0x1]
    %v420 = vld [vmem:[%s13] sm:$0x1]
    %v421 = vadd.f32 %v405, %v409
    %v422 = vadd.f32 %v421, %v413
    %v423 = vadd.f32 %v422, %v417
    %v424 = vrot.slane %v423, 4
    %v425 = vadd.f32 %v423, %v424
    %v426 = vrot.slane %v425, 2
    %v427 = vadd.f32 %v425, %v426
    %v428 = vrot.slane %v427, 1
    %v429 = vadd.f32 %v427, %v428
    %v430 = vmul.f32 %v405, %v405
    %v431 = vmul.f32 %v409, %v409
    %v432 = vmul.f32 %v413, %v413
    %v433 = vmul.f32 %v417, %v417
    %v434 = vadd.f32 %v430, %v431
    %v435 = vadd.f32 %v434, %v432
    %v436 = vadd.f32 %v435, %v433
    %v437 = vrot.slane %v436, 4
    %v438 = vadd.f32 %v436, %v437
    %v439 = vrot.slane %v438, 2
    %v440 = vadd.f32 %v438, %v439
    %v441 = vrot.slane %v440, 1
    %v442 = vadd.f32 %v440, %v441
    %v443 = vand.u32 %v67, 4294901760
    %444 = vmatpush.msra.mxu0 %v443
    %v445 = vand.u32 %v66, 4294901760
    %446 = vmatpush.msra.mxu0 %v445
    %v447 = vand.u32 %v65, 4294901760
    %448 = vmatpush.msra.mxu0 %v447
    %v449 = vand.u32 %v64, 4294901760
    %450 = vmatpush.msra.mxu0 %v449
    %v451 = vand.u32 %v63, 4294901760
    %452 = vmatpush.msra.mxu0 %v451
    %v453 = vand.u32 %v62, 4294901760
    %454 = vmatpush.msra.mxu0 %v453
    %v455 = vand.u32 %v61, 4294901760
    %456 = vmatpush.msra.mxu0 %v455
    %v457 = vand.u32 %v60, 4294901760
    %458 = vmatpush.msra.mxu0 %v457
    %v459 = vand.u32 %v59, 4294901760
    %460 = vmatpush.msra.mxu0 %v459
    %v461 = vand.u32 %v58, 4294901760
    %462 = vmatpush.msra.mxu0 %v461
    %v463 = vand.u32 %v57, 4294901760
    %464 = vmatpush.msra.mxu0 %v463
    %v465 = vand.u32 %v56, 4294901760
    %466 = vmatpush.msra.mxu0 %v465
    %v467 = vand.u32 %v55, 4294901760
    %468 = vmatpush.msra.mxu0 %v467
    %v469 = vand.u32 %v54, 4294901760
    %470 = vmatpush.msra.mxu0 %v469
    %v471 = vand.u32 %v53, 4294901760
    %472 = vmatpush.msra.mxu0 %v471
    %v473 = vand.u32 %v52, 4294901760
    %474 = vmatpush.msra.mxu0 %v473
    %v475 = vand.u32 %v429, 4294901760
    %v476 = vsub.f32 %v429, %v475
    %v477 = vand.u32 %v476, 4294901760
    %v478 = vsub.f32 %v476, %v477
    %v479 = vand.u32 %v478, 4294901760
    %480 = vmatmul.f32.gmra.mxu0 %v479
    %v481 = vpop.f32.mrf.mxu0
    %v482 = vadd.f32 0.0, %v481
    %483 = vdwg.mxu0
    %v484 = vand.u32 %v67, 4294901760
    %v485 = vsub.f32 %v67, %v484
    %v486 = vand.u32 %v485, 4294901760
    %v487 = vsub.f32 %v485, %v486
    %v488 = vand.u32 %v487, 4294901760
    %489 = vmatpush.msra.mxu0 %v488
    %v490 = vand.u32 %v66, 4294901760
    %v491 = vsub.f32 %v66, %v490
    %v492 = vand.u32 %v491, 4294901760
    %v493 = vsub.f32 %v491, %v492
    %v494 = vand.u32 %v493, 4294901760
    %495 = vmatpush.msra.mxu0 %v494
    %v496 = vand.u32 %v65, 4294901760
    %v497 = vsub.f32 %v65, %v496
    %v498 = vand.u32 %v497, 4294901760
    %v499 = vsub.f32 %v497, %v498
    %v500 = vand.u32 %v499, 4294901760
    %501 = vmatpush.msra.mxu0 %v500
    %v502 = vand.u32 %v64, 4294901760
    %v503 = vsub.f32 %v64, %v502
    %v504 = vand.u32 %v503, 4294901760
    %v505 = vsub.f32 %v503, %v504
    %v506 = vand.u32 %v505, 4294901760
    %507 = vmatpush.msra.mxu0 %v506
    %v508 = vand.u32 %v63, 4294901760
    %v509 = vsub.f32 %v63, %v508
    %v510 = vand.u32 %v509, 4294901760
    %v511 = vsub.f32 %v509, %v510
    %v512 = vand.u32 %v511, 4294901760
    %513 = vmatpush.msra.mxu0 %v512
    %v514 = vand.u32 %v62, 4294901760
    %v515 = vsub.f32 %v62, %v514
    %v516 = vand.u32 %v515, 4294901760
    %v517 = vsub.f32 %v515, %v516
    %v518 = vand.u32 %v517, 4294901760
    %519 = vmatpush.msra.mxu0 %v518
    %v520 = vand.u32 %v61, 4294901760
    %v521 = vsub.f32 %v61, %v520
    %v522 = vand.u32 %v521, 4294901760
    %v523 = vsub.f32 %v521, %v522
    %v524 = vand.u32 %v523, 4294901760
    %525 = vmatpush.msra.mxu0 %v524
    %v526 = vand.u32 %v60, 4294901760
    %v527 = vsub.f32 %v60, %v526
    %v528 = vand.u32 %v527, 4294901760
    %v529 = vsub.f32 %v527, %v528
    %v530 = vand.u32 %v529, 4294901760
    %531 = vmatpush.msra.mxu0 %v530
    %v532 = vand.u32 %v59, 4294901760
    %v533 = vsub.f32 %v59, %v532
    %v534 = vand.u32 %v533, 4294901760
    %v535 = vsub.f32 %v533, %v534
    %v536 = vand.u32 %v535, 4294901760
    %537 = vmatpush.msra.mxu0 %v536
    %v538 = vand.u32 %v58, 4294901760
    %v539 = vsub.f32 %v58, %v538
    %v540 = vand.u32 %v539, 4294901760
    %v541 = vsub.f32 %v539, %v540
    %v542 = vand.u32 %v541, 4294901760
    %543 = vmatpush.msra.mxu0 %v542
    %v544 = vand.u32 %v57, 4294901760
    %v545 = vsub.f32 %v57, %v544
    %v546 = vand.u32 %v545, 4294901760
    %v547 = vsub.f32 %v545, %v546
    %v548 = vand.u32 %v547, 4294901760
    %549 = vmatpush.msra.mxu0 %v548
    %v550 = vand.u32 %v56, 4294901760
    %v551 = vsub.f32 %v56, %v550
    %v552 = vand.u32 %v551, 4294901760
    %v553 = vsub.f32 %v551, %v552
    %v554 = vand.u32 %v553, 4294901760
    %555 = vmatpush.msra.mxu0 %v554
    %v556 = vand.u32 %v55, 4294901760
    %v557 = vsub.f32 %v55, %v556
    %v558 = vand.u32 %v557, 4294901760
    %v559 = vsub.f32 %v557, %v558
    %v560 = vand.u32 %v559, 4294901760
    %561 = vmatpush.msra.mxu0 %v560
    %v562 = vand.u32 %v54, 4294901760
    %v563 = vsub.f32 %v54, %v562
    %v564 = vand.u32 %v563, 4294901760
    %v565 = vsub.f32 %v563, %v564
    %v566 = vand.u32 %v565, 4294901760
    %567 = vmatpush.msra.mxu0 %v566
    %v568 = vand.u32 %v53, 4294901760
    %v569 = vsub.f32 %v53, %v568
    %v570 = vand.u32 %v569, 4294901760
    %v571 = vsub.f32 %v569, %v570
    %v572 = vand.u32 %v571, 4294901760
    %573 = vmatpush.msra.mxu0 %v572
    %v574 = vand.u32 %v52, 4294901760
    %v575 = vsub.f32 %v52, %v574
    %v576 = vand.u32 %v575, 4294901760
    %v577 = vsub.f32 %v575, %v576
    %v578 = vand.u32 %v577, 4294901760
    %579 = vmatpush.msra.mxu0 %v578
    %v580 = vand.u32 %v429, 4294901760
    %581 = vmatmul.f32.gmra.mxu0 %v580
    %v582 = vpop.f32.mrf.mxu0
    %v583 = vadd.f32 %v482, %v582
    %584 = vdwg.mxu0
    %v585 = vand.u32 %v67, 4294901760
    %v586 = vsub.f32 %v67, %v585
    %587 = vmatpush.msra.mxu0 %v586
    %v588 = vand.u32 %v66, 4294901760
    %v589 = vsub.f32 %v66, %v588
    %590 = vmatpush.msra.mxu0 %v589
    %v591 = vand.u32 %v65, 4294901760
    %v592 = vsub.f32 %v65, %v591
    %593 = vmatpush.msra.mxu0 %v592
    %v594 = vand.u32 %v64, 4294901760
    %v595 = vsub.f32 %v64, %v594
    %596 = vmatpush.msra.mxu0 %v595
    %v597 = vand.u32 %v63, 4294901760
    %v598 = vsub.f32 %v63, %v597
    %599 = vmatpush.msra.mxu0 %v598
    %v600 = vand.u32 %v62, 4294901760
    %v601 = vsub.f32 %v62, %v600
    %602 = vmatpush.msra.mxu0 %v601
    %v603 = vand.u32 %v61, 4294901760
    %v604 = vsub.f32 %v61, %v603
    %605 = vmatpush.msra.mxu0 %v604
    %v606 = vand.u32 %v60, 4294901760
    %v607 = vsub.f32 %v60, %v606
    %608 = vmatpush.msra.mxu0 %v607
    %v609 = vand.u32 %v59, 4294901760
    %v610 = vsub.f32 %v59, %v609
    %611 = vmatpush.msra.mxu0 %v610
    %v612 = vand.u32 %v58, 4294901760
    %v613 = vsub.f32 %v58, %v612
    %614 = vmatpush.msra.mxu0 %v613
    %v615 = vand.u32 %v57, 4294901760
    %v616 = vsub.f32 %v57, %v615
    %617 = vmatpush.msra.mxu0 %v616
    %v618 = vand.u32 %v56, 4294901760
    %v619 = vsub.f32 %v56, %v618
    %620 = vmatpush.msra.mxu0 %v619
    %v621 = vand.u32 %v55, 4294901760
    %v622 = vsub.f32 %v55, %v621
    %623 = vmatpush.msra.mxu0 %v622
    %v624 = vand.u32 %v54, 4294901760
    %v625 = vsub.f32 %v54, %v624
    %626 = vmatpush.msra.mxu0 %v625
    %v627 = vand.u32 %v53, 4294901760
    %v628 = vsub.f32 %v53, %v627
    %629 = vmatpush.msra.mxu0 %v628
    %v630 = vand.u32 %v52, 4294901760
    %v631 = vsub.f32 %v52, %v630
    %632 = vmatpush.msra.mxu0 %v631
    %v633 = vand.u32 %v429, 4294901760
    %v634 = vsub.f32 %v429, %v633
    %635 = vmatmul.f32.gmra.mxu0 %v634
    %v636 = vpop.f32.mrf.mxu0
    %v637 = vadd.f32 %v583, %v636
    %638 = vdwg.mxu0
    %v639 = vand.u32 %v67, 4294901760
    %640 = vmatpush.msra.mxu0 %v639
    %v641 = vand.u32 %v66, 4294901760
    %642 = vmatpush.msra.mxu0 %v641
    %v643 = vand.u32 %v65, 4294901760
    %644 = vmatpush.msra.mxu0 %v643
    %v645 = vand.u32 %v64, 4294901760
    %646 = vmatpush.msra.mxu0 %v645
    %v647 = vand.u32 %v63, 4294901760
    %648 = vmatpush.msra.mxu0 %v647
    %v649 = vand.u32 %v62, 4294901760
    %650 = vmatpush.msra.mxu0 %v649
    %v651 = vand.u32 %v61, 4294901760
    %652 = vmatpush.msra.mxu0 %v651
    %v653 = vand.u32 %v60, 4294901760
    %654 = vmatpush.msra.mxu0 %v653
    %v655 = vand.u32 %v59, 4294901760
    %656 = vmatpush.msra.mxu0 %v655
    %v657 = vand.u32 %v58, 4294901760
    %658 = vmatpush.msra.mxu0 %v657
    %v659 = vand.u32 %v57, 4294901760
    %660 = vmatpush.msra.mxu0 %v659
    %v661 = vand.u32 %v56, 4294901760
    %662 = vmatpush.msra.mxu0 %v661
    %v663 = vand.u32 %v55, 4294901760
    %664 = vmatpush.msra.mxu0 %v663
    %v665 = vand.u32 %v54, 4294901760
    %666 = vmatpush.msra.mxu0 %v665
    %v667 = vand.u32 %v53, 4294901760
    %668 = vmatpush.msra.mxu0 %v667
    %v669 = vand.u32 %v52, 4294901760
    %670 = vmatpush.msra.mxu0 %v669
    %v671 = vand.u32 %v429, 4294901760
    %v672 = vsub.f32 %v429, %v671
    %v673 = vand.u32 %v672, 4294901760
    %674 = vmatmul.f32.gmra.mxu0 %v673
    %v675 = vpop.f32.mrf.mxu0
    %v676 = vadd.f32 %v637, %v675
    %677 = vdwg.mxu0
    %v678 = vand.u32 %v67, 4294901760
    %v679 = vsub.f32 %v67, %v678
    %v680 = vand.u32 %v679, 4294901760
    %681 = vmatpush.msra.mxu0 %v680
    %v682 = vand.u32 %v66, 4294901760
    %v683 = vsub.f32 %v66, %v682
    %v684 = vand.u32 %v683, 4294901760
    %685 = vmatpush.msra.mxu0 %v684
    %v686 = vand.u32 %v65, 4294901760
    %v687 = vsub.f32 %v65, %v686
    %v688 = vand.u32 %v687, 4294901760
    %689 = vmatpush.msra.mxu0 %v688
    %v690 = vand.u32 %v64, 4294901760
    %v691 = vsub.f32 %v64, %v690
    %v692 = vand.u32 %v691, 4294901760
    %693 = vmatpush.msra.mxu0 %v692
    %v694 = vand.u32 %v63, 4294901760
    %v695 = vsub.f32 %v63, %v694
    %v696 = vand.u32 %v695, 4294901760
    %697 = vmatpush.msra.mxu0 %v696
    %v698 = vand.u32 %v62, 4294901760
    %v699 = vsub.f32 %v62, %v698
    %v700 = vand.u32 %v699, 4294901760
    %701 = vmatpush.msra.mxu0 %v700
    %v702 = vand.u32 %v61, 4294901760
    %v703 = vsub.f32 %v61, %v702
    %v704 = vand.u32 %v703, 4294901760
    %705 = vmatpush.msra.mxu0 %v704
    %v706 = vand.u32 %v60, 4294901760
    %v707 = vsub.f32 %v60, %v706
    %v708 = vand.u32 %v707, 4294901760
    %709 = vmatpush.msra.mxu0 %v708
    %v710 = vand.u32 %v59, 4294901760
    %v711 = vsub.f32 %v59, %v710
    %v712 = vand.u32 %v711, 4294901760
    %713 = vmatpush.msra.mxu0 %v712
    %v714 = vand.u32 %v58, 4294901760
    %v715 = vsub.f32 %v58, %v714
    %v716 = vand.u32 %v715, 4294901760
    %717 = vmatpush.msra.mxu0 %v716
    %v718 = vand.u32 %v57, 4294901760
    %v719 = vsub.f32 %v57, %v718
    %v720 = vand.u32 %v719, 4294901760
    %721 = vmatpush.msra.mxu0 %v720
    %v722 = vand.u32 %v56, 4294901760
    %v723 = vsub.f32 %v56, %v722
    %v724 = vand.u32 %v723, 4294901760
    %725 = vmatpush.msra.mxu0 %v724
    %v726 = vand.u32 %v55, 4294901760
    %v727 = vsub.f32 %v55, %v726
    %v728 = vand.u32 %v727, 4294901760
    %729 = vmatpush.msra.mxu0 %v728
    %v730 = vand.u32 %v54, 4294901760
    %v731 = vsub.f32 %v54, %v730
    %v732 = vand.u32 %v731, 4294901760
    %733 = vmatpush.msra.mxu0 %v732
    %v734 = vand.u32 %v53, 4294901760
    %v735 = vsub.f32 %v53, %v734
    %v736 = vand.u32 %v735, 4294901760
    %737 = vmatpush.msra.mxu0 %v736
    %v738 = vand.u32 %v52, 4294901760
    %v739 = vsub.f32 %v52, %v738
    %v740 = vand.u32 %v739, 4294901760
    %741 = vmatpush.msra.mxu0 %v740
    %v742 = vand.u32 %v429, 4294901760
    %743 = vmatmul.f32.gmra.mxu0 %v742
    %v744 = vpop.f32.mrf.mxu0
    %v745 = vadd.f32 %v676, %v744
    %746 = vdwg.mxu0
    %v747 = vand.u32 %v67, 4294901760
    %748 = vmatpush.msra.mxu0 %v747
    %v749 = vand.u32 %v66, 4294901760
    %750 = vmatpush.msra.mxu0 %v749
    %v751 = vand.u32 %v65, 4294901760
    %752 = vmatpush.msra.mxu0 %v751
    %v753 = vand.u32 %v64, 4294901760
    %754 = vmatpush.msra.mxu0 %v753
    %v755 = vand.u32 %v63, 4294901760
    %756 = vmatpush.msra.mxu0 %v755
    %v757 = vand.u32 %v62, 4294901760
    %758 = vmatpush.msra.mxu0 %v757
    %v759 = vand.u32 %v61, 4294901760
    %760 = vmatpush.msra.mxu0 %v759
    %v761 = vand.u32 %v60, 4294901760
    %762 = vmatpush.msra.mxu0 %v761
    %v763 = vand.u32 %v59, 4294901760
    %764 = vmatpush.msra.mxu0 %v763
    %v765 = vand.u32 %v58, 4294901760
    %766 = vmatpush.msra.mxu0 %v765
    %v767 = vand.u32 %v57, 4294901760
    %768 = vmatpush.msra.mxu0 %v767
    %v769 = vand.u32 %v56, 4294901760
    %770 = vmatpush.msra.mxu0 %v769
    %v771 = vand.u32 %v55, 4294901760
    %772 = vmatpush.msra.mxu0 %v771
    %v773 = vand.u32 %v54, 4294901760
    %774 = vmatpush.msra.mxu0 %v773
    %v775 = vand.u32 %v53, 4294901760
    %776 = vmatpush.msra.mxu0 %v775
    %v777 = vand.u32 %v52, 4294901760
    %778 = vmatpush.msra.mxu0 %v777
    %v779 = vand.u32 %v429, 4294901760
    %780 = vmatmul.f32.gmra.mxu0 %v779
    %v781 = vpop.f32.mrf.mxu0
    %v782 = vadd.f32 %v745, %v781
    %783 = vdwg.mxu0
    %v784 = vand.u32 %v67, 4294901760
    %785 = vmatpush.msra.mxu0 %v784
    %v786 = vand.u32 %v66, 4294901760
    %787 = vmatpush.msra.mxu0 %v786
    %v788 = vand.u32 %v65, 4294901760
    %789 = vmatpush.msra.mxu0 %v788
    %v790 = vand.u32 %v64, 4294901760
    %791 = vmatpush.msra.mxu0 %v790
    %v792 = vand.u32 %v63, 4294901760
    %793 = vmatpush.msra.mxu0 %v792
    %v794 = vand.u32 %v62, 4294901760
    %795 = vmatpush.msra.mxu0 %v794
    %v796 = vand.u32 %v61, 4294901760
    %797 = vmatpush.msra.mxu0 %v796
    %v798 = vand.u32 %v60, 4294901760
    %799 = vmatpush.msra.mxu0 %v798
    %v800 = vand.u32 %v59, 4294901760
    %801 = vmatpush.msra.mxu0 %v800
    %v802 = vand.u32 %v58, 4294901760
    %803 = vmatpush.msra.mxu0 %v802
    %v804 = vand.u32 %v57, 4294901760
    %805 = vmatpush.msra.mxu0 %v804
    %v806 = vand.u32 %v56, 4294901760
    %807 = vmatpush.msra.mxu0 %v806
    %v808 = vand.u32 %v55, 4294901760
    %809 = vmatpush.msra.mxu0 %v808
    %v810 = vand.u32 %v54, 4294901760
    %811 = vmatpush.msra.mxu0 %v810
    %v812 = vand.u32 %v53, 4294901760
    %813 = vmatpush.msra.mxu0 %v812
    %v814 = vand.u32 %v52, 4294901760
    %815 = vmatpush.msra.mxu0 %v814
    %v816 = vand.u32 %v442, 4294901760
    %v817 = vsub.f32 %v442, %v816
    %v818 = vand.u32 %v817, 4294901760
    %v819 = vsub.f32 %v817, %v818
    %v820 = vand.u32 %v819, 4294901760
    %821 = vmatmul.f32.gmra.mxu0 %v820
    %v822 = vpop.f32.mrf.mxu0
    %v823 = vadd.f32 0.0, %v822
    %824 = vdwg.mxu0
    %v825 = vand.u32 %v67, 4294901760
    %v826 = vsub.f32 %v67, %v825
    %v827 = vand.u32 %v826, 4294901760
    %v828 = vsub.f32 %v826, %v827
    %v829 = vand.u32 %v828, 4294901760
    %830 = vmatpush.msra.mxu0 %v829
    %v831 = vand.u32 %v66, 4294901760
    %v832 = vsub.f32 %v66, %v831
    %v833 = vand.u32 %v832, 4294901760
    %v834 = vsub.f32 %v832, %v833
    %v835 = vand.u32 %v834, 4294901760
    %836 = vmatpush.msra.mxu0 %v835
    %v837 = vand.u32 %v65, 4294901760
    %v838 = vsub.f32 %v65, %v837
    %v839 = vand.u32 %v838, 4294901760
    %v840 = vsub.f32 %v838, %v839
    %v841 = vand.u32 %v840, 4294901760
    %842 = vmatpush.msra.mxu0 %v841
    %v843 = vand.u32 %v64, 4294901760
    %v844 = vsub.f32 %v64, %v843
    %v845 = vand.u32 %v844, 4294901760
    %v846 = vsub.f32 %v844, %v845
    %v847 = vand.u32 %v846, 4294901760
    %848 = vmatpush.msra.mxu0 %v847
    %v849 = vand.u32 %v63, 4294901760
    %v850 = vsub.f32 %v63, %v849
    %v851 = vand.u32 %v850, 4294901760
    %v852 = vsub.f32 %v850, %v851
    %v853 = vand.u32 %v852, 4294901760
    %854 = vmatpush.msra.mxu0 %v853
    %v855 = vand.u32 %v62, 4294901760
    %v856 = vsub.f32 %v62, %v855
    %v857 = vand.u32 %v856, 4294901760
    %v858 = vsub.f32 %v856, %v857
    %v859 = vand.u32 %v858, 4294901760
    %860 = vmatpush.msra.mxu0 %v859
    %v861 = vand.u32 %v61, 4294901760
    %v862 = vsub.f32 %v61, %v861
    %v863 = vand.u32 %v862, 4294901760
    %v864 = vsub.f32 %v862, %v863
    %v865 = vand.u32 %v864, 4294901760
    %866 = vmatpush.msra.mxu0 %v865
    %v867 = vand.u32 %v60, 4294901760
    %v868 = vsub.f32 %v60, %v867
    %v869 = vand.u32 %v868, 4294901760
    %v870 = vsub.f32 %v868, %v869
    %v871 = vand.u32 %v870, 4294901760
    %872 = vmatpush.msra.mxu0 %v871
    %v873 = vand.u32 %v59, 4294901760
    %v874 = vsub.f32 %v59, %v873
    %v875 = vand.u32 %v874, 4294901760
    %v876 = vsub.f32 %v874, %v875
    %v877 = vand.u32 %v876, 4294901760
    %878 = vmatpush.msra.mxu0 %v877
    %v879 = vand.u32 %v58, 4294901760
    %v880 = vsub.f32 %v58, %v879
    %v881 = vand.u32 %v880, 4294901760
    %v882 = vsub.f32 %v880, %v881
    %v883 = vand.u32 %v882, 4294901760
    %884 = vmatpush.msra.mxu0 %v883
    %v885 = vand.u32 %v57, 4294901760
    %v886 = vsub.f32 %v57, %v885
    %v887 = vand.u32 %v886, 4294901760
    %v888 = vsub.f32 %v886, %v887
    %v889 = vand.u32 %v888, 4294901760
    %890 = vmatpush.msra.mxu0 %v889
    %v891 = vand.u32 %v56, 4294901760
    %v892 = vsub.f32 %v56, %v891
    %v893 = vand.u32 %v892, 4294901760
    %v894 = vsub.f32 %v892, %v893
    %v895 = vand.u32 %v894, 4294901760
    %896 = vmatpush.msra.mxu0 %v895
    %v897 = vand.u32 %v55, 4294901760
    %v898 = vsub.f32 %v55, %v897
    %v899 = vand.u32 %v898, 4294901760
    %v900 = vsub.f32 %v898, %v899
    %v901 = vand.u32 %v900, 4294901760
    %902 = vmatpush.msra.mxu0 %v901
    %v903 = vand.u32 %v54, 4294901760
    %v904 = vsub.f32 %v54, %v903
    %v905 = vand.u32 %v904, 4294901760
    %v906 = vsub.f32 %v904, %v905
    %v907 = vand.u32 %v906, 4294901760
    %908 = vmatpush.msra.mxu0 %v907
    %v909 = vand.u32 %v53, 4294901760
    %v910 = vsub.f32 %v53, %v909
    %v911 = vand.u32 %v910, 4294901760
    %v912 = vsub.f32 %v910, %v911
    %v913 = vand.u32 %v912, 4294901760
    %914 = vmatpush.msra.mxu0 %v913
    %v915 = vand.u32 %v52, 4294901760
    %v916 = vsub.f32 %v52, %v915
    %v917 = vand.u32 %v916, 4294901760
    %v918 = vsub.f32 %v916, %v917
    %v919 = vand.u32 %v918, 4294901760
    %920 = vmatpush.msra.mxu0 %v919
    %v921 = vand.u32 %v442, 4294901760
    %922 = vmatmul.f32.gmra.mxu0 %v921
    %v923 = vpop.f32.mrf.mxu0
    %v924 = vadd.f32 %v823, %v923
    %925 = vdwg.mxu0
    %v926 = vand.u32 %v67, 4294901760
    %v927 = vsub.f32 %v67, %v926
    %928 = vmatpush.msra.mxu0 %v927
    %v929 = vand.u32 %v66, 4294901760
    %v930 = vsub.f32 %v66, %v929
    %931 = vmatpush.msra.mxu0 %v930
    %v932 = vand.u32 %v65, 4294901760
    %v933 = vsub.f32 %v65, %v932
    %934 = vmatpush.msra.mxu0 %v933
    %v935 = vand.u32 %v64, 4294901760
    %v936 = vsub.f32 %v64, %v935
    %937 = vmatpush.msra.mxu0 %v936
    %v938 = vand.u32 %v63, 4294901760
    %v939 = vsub.f32 %v63, %v938
    %940 = vmatpush.msra.mxu0 %v939
    %v941 = vand.u32 %v62, 4294901760
    %v942 = vsub.f32 %v62, %v941
    %943 = vmatpush.msra.mxu0 %v942
    %v944 = vand.u32 %v61, 4294901760
    %v945 = vsub.f32 %v61, %v944
    %946 = vmatpush.msra.mxu0 %v945
    %v947 = vand.u32 %v60, 4294901760
    %v948 = vsub.f32 %v60, %v947
    %949 = vmatpush.msra.mxu0 %v948
    %v950 = vand.u32 %v59, 4294901760
    %v951 = vsub.f32 %v59, %v950
    %952 = vmatpush.msra.mxu0 %v951
    %v953 = vand.u32 %v58, 4294901760
    %v954 = vsub.f32 %v58, %v953
    %955 = vmatpush.msra.mxu0 %v954
    %v956 = vand.u32 %v57, 4294901760
    %v957 = vsub.f32 %v57, %v956
    %958 = vmatpush.msra.mxu0 %v957
    %v959 = vand.u32 %v56, 4294901760
    %v960 = vsub.f32 %v56, %v959
    %961 = vmatpush.msra.mxu0 %v960
    %v962 = vand.u32 %v55, 4294901760
    %v963 = vsub.f32 %v55, %v962
    %964 = vmatpush.msra.mxu0 %v963
    %v965 = vand.u32 %v54, 4294901760
    %v966 = vsub.f32 %v54, %v965
    %967 = vmatpush.msra.mxu0 %v966
    %v968 = vand.u32 %v53, 4294901760
    %v969 = vsub.f32 %v53, %v968
    %970 = vmatpush.msra.mxu0 %v969
    %v971 = vand.u32 %v52, 4294901760
    %v972 = vsub.f32 %v52, %v971
    %973 = vmatpush.msra.mxu0 %v972
    %v974 = vand.u32 %v442, 4294901760
    %v975 = vsub.f32 %v442, %v974
    %976 = vmatmul.f32.gmra.mxu0 %v975
    %v977 = vpop.f32.mrf.mxu0
    %v978 = vadd.f32 %v924, %v977
    %979 = vdwg.mxu0
    %v980 = vand.u32 %v67, 4294901760
    %981 = vmatpush.msra.mxu0 %v980
    %v982 = vand.u32 %v66, 4294901760
    %983 = vmatpush.msra.mxu0 %v982
    %v984 = vand.u32 %v65, 4294901760
    %985 = vmatpush.msra.mxu0 %v984
    %v986 = vand.u32 %v64, 4294901760
    %987 = vmatpush.msra.mxu0 %v986
    %v988 = vand.u32 %v63, 4294901760
    %989 = vmatpush.msra.mxu0 %v988
    %v990 = vand.u32 %v62, 4294901760
    %991 = vmatpush.msra.mxu0 %v990
    %v992 = vand.u32 %v61, 4294901760
    %993 = vmatpush.msra.mxu0 %v992
    %v994 = vand.u32 %v60, 4294901760
    %995 = vmatpush.msra.mxu0 %v994
    %v996 = vand.u32 %v59, 4294901760
    %997 = vmatpush.msra.mxu0 %v996
    %v998 = vand.u32 %v58, 4294901760
    %999 = vmatpush.msra.mxu0 %v998
    %v1000 = vand.u32 %v57, 4294901760
    %1001 = vmatpush.msra.mxu0 %v1000
    %v1002 = vand.u32 %v56, 4294901760
    %1003 = vmatpush.msra.mxu0 %v1002
    %v1004 = vand.u32 %v55, 4294901760
    %1005 = vmatpush.msra.mxu0 %v1004
    %v1006 = vand.u32 %v54, 4294901760
    %1007 = vmatpush.msra.mxu0 %v1006
    %v1008 = vand.u32 %v53, 4294901760
    %1009 = vmatpush.msra.mxu0 %v1008
    %v1010 = vand.u32 %v52, 4294901760
    %1011 = vmatpush.msra.mxu0 %v1010
    %v1012 = vand.u32 %v442, 4294901760
    %v1013 = vsub.f32 %v442, %v1012
    %v1014 = vand.u32 %v1013, 4294901760
    %1015 = vmatmul.f32.gmra.mxu0 %v1014
    %v1016 = vpop.f32.mrf.mxu0
    %v1017 = vadd.f32 %v978, %v1016
    %1018 = vdwg.mxu0
    %v1019 = vand.u32 %v67, 4294901760
    %v1020 = vsub.f32 %v67, %v1019
    %v1021 = vand.u32 %v1020, 4294901760
    %1022 = vmatpush.msra.mxu0 %v1021
    %v1023 = vand.u32 %v66, 4294901760
    %v1024 = vsub.f32 %v66, %v1023
    %v1025 = vand.u32 %v1024, 4294901760
    %1026 = vmatpush.msra.mxu0 %v1025
    %v1027 = vand.u32 %v65, 4294901760
    %v1028 = vsub.f32 %v65, %v1027
    %v1029 = vand.u32 %v1028, 4294901760
    %1030 = vmatpush.msra.mxu0 %v1029
    %v1031 = vand.u32 %v64, 4294901760
    %v1032 = vsub.f32 %v64, %v1031
    %v1033 = vand.u32 %v1032, 4294901760
    %1034 = vmatpush.msra.mxu0 %v1033
    %v1035 = vand.u32 %v63, 4294901760
    %v1036 = vsub.f32 %v63, %v1035
    %v1037 = vand.u32 %v1036, 4294901760
    %1038 = vmatpush.msra.mxu0 %v1037
    %v1039 = vand.u32 %v62, 4294901760
    %v1040 = vsub.f32 %v62, %v1039
    %v1041 = vand.u32 %v1040, 4294901760
    %1042 = vmatpush.msra.mxu0 %v1041
    %v1043 = vand.u32 %v61, 4294901760
    %v1044 = vsub.f32 %v61, %v1043
    %v1045 = vand.u32 %v1044, 4294901760
    %1046 = vmatpush.msra.mxu0 %v1045
    %v1047 = vand.u32 %v60, 4294901760
    %v1048 = vsub.f32 %v60, %v1047
    %v1049 = vand.u32 %v1048, 4294901760
    %1050 = vmatpush.msra.mxu0 %v1049
    %v1051 = vand.u32 %v59, 4294901760
    %v1052 = vsub.f32 %v59, %v1051
    %v1053 = vand.u32 %v1052, 4294901760
    %1054 = vmatpush.msra.mxu0 %v1053
    %v1055 = vand.u32 %v58, 4294901760
    %v1056 = vsub.f32 %v58, %v1055
    %v1057 = vand.u32 %v1056, 4294901760
    %1058 = vmatpush.msra.mxu0 %v1057
    %v1059 = vand.u32 %v57, 4294901760
    %v1060 = vsub.f32 %v57, %v1059
    %v1061 = vand.u32 %v1060, 4294901760
    %1062 = vmatpush.msra.mxu0 %v1061
    %v1063 = vand.u32 %v56, 4294901760
    %v1064 = vsub.f32 %v56, %v1063
    %v1065 = vand.u32 %v1064, 4294901760
    %1066 = vmatpush.msra.mxu0 %v1065
    %v1067 = vand.u32 %v55, 4294901760
    %v1068 = vsub.f32 %v55, %v1067
    %v1069 = vand.u32 %v1068, 4294901760
    %1070 = vmatpush.msra.mxu0 %v1069
    %v1071 = vand.u32 %v54, 4294901760
    %v1072 = vsub.f32 %v54, %v1071
    %v1073 = vand.u32 %v1072, 4294901760
    %1074 = vmatpush.msra.mxu0 %v1073
    %v1075 = vand.u32 %v53, 4294901760
    %v1076 = vsub.f32 %v53, %v1075
    %v1077 = vand.u32 %v1076, 4294901760
    %1078 = vmatpush.msra.mxu0 %v1077
    %v1079 = vand.u32 %v52, 4294901760
    %v1080 = vsub.f32 %v52, %v1079
    %v1081 = vand.u32 %v1080, 4294901760
    %1082 = vmatpush.msra.mxu0 %v1081
    %v1083 = vand.u32 %v442, 4294901760
    %1084 = vmatmul.f32.gmra.mxu0 %v1083
    %v1085 = vpop.f32.mrf.mxu0
    %v1086 = vadd.f32 %v1017, %v1085
    %1087 = vdwg.mxu0
    %v1088 = vand.u32 %v67, 4294901760
    %1089 = vmatpush.msra.mxu0 %v1088
    %v1090 = vand.u32 %v66, 4294901760
    %1091 = vmatpush.msra.mxu0 %v1090
    %v1092 = vand.u32 %v65, 4294901760
    %1093 = vmatpush.msra.mxu0 %v1092
    %v1094 = vand.u32 %v64, 4294901760
    %1095 = vmatpush.msra.mxu0 %v1094
    %v1096 = vand.u32 %v63, 4294901760
    %1097 = vmatpush.msra.mxu0 %v1096
    %v1098 = vand.u32 %v62, 4294901760
    %1099 = vmatpush.msra.mxu0 %v1098
    %v1100 = vand.u32 %v61, 4294901760
    %1101 = vmatpush.msra.mxu0 %v1100
    %v1102 = vand.u32 %v60, 4294901760
    %1103 = vmatpush.msra.mxu0 %v1102
    %v1104 = vand.u32 %v59, 4294901760
    %1105 = vmatpush.msra.mxu0 %v1104
    %v1106 = vand.u32 %v58, 4294901760
    %1107 = vmatpush.msra.mxu0 %v1106
    %v1108 = vand.u32 %v57, 4294901760
    %1109 = vmatpush.msra.mxu0 %v1108
    %v1110 = vand.u32 %v56, 4294901760
    %1111 = vmatpush.msra.mxu0 %v1110
    %v1112 = vand.u32 %v55, 4294901760
    %1113 = vmatpush.msra.mxu0 %v1112
    %v1114 = vand.u32 %v54, 4294901760
    %1115 = vmatpush.msra.mxu0 %v1114
    %v1116 = vand.u32 %v53, 4294901760
    %1117 = vmatpush.msra.mxu0 %v1116
    %v1118 = vand.u32 %v52, 4294901760
    %1119 = vmatpush.msra.mxu0 %v1118
    %v1120 = vand.u32 %v442, 4294901760
    %1121 = vmatmul.f32.gmra.mxu0 %v1120
    %v1122 = vpop.f32.mrf.mxu0
    %v1123 = vadd.f32 %v1086, %v1122
    %1124 = vdwg.mxu0
    %v1125 = vmul.f32 %v782, %v782
    %v1126 = vsub.f32 %v1123, %v1125
    %v1127 = vadd.f32 %v1126, 1e-05
    %v1128 = vrsqrt.pop %v1127
    %v1129 = vmul.f32 %v1128, %v1127
    %v1130 = vmul.f32 %v1129, %v1128
    %v1131 = vmul.f32 0.5, %v1130
    %v1132 = vsub.f32 1.5, %v1131
    %v1133 = vmul.f32 %v1128, %v1132
    %vm1134 = vweird.f32 %v1127
    %vm1135 = vweird.f32 %v1128
    %vm1136 = vmor %vm1134, %vm1135
    %v1137 = vsel %vm1136, %v1128, %v1133
    %v1138 = vmul.f32 %v419, %v1137
    %v1139 = vmul.f32 %v782, %v1138
    %v1140 = vsub.f32 %v420, %v1139
    %v1142 = vperm.slane %v1138, 0
    %v1144 = vmul.f32 %v405, %v1142
    %v1145 = vmul.f32 %v409, %v1142
    %v1146 = vmul.f32 %v413, %v1142
    %v1147 = vmul.f32 %v417, %v1142
    %v1149 = vperm.slane %v1140, 0
    %v1151 = vadd.f32 %v1144, %v1149
    %v1152 = vadd.f32 %v1145, %v1149
    %v1153 = vadd.f32 %v1146, %v1149
    %v1154 = vadd.f32 %v1147, %v1149
    %v1155 = vrot.slane %v48, 1
    %v1156 = vrot.slane %v50, 1
    %vm1159 = vcmask 1040384
    %v1160 = vrot.slane %v48, 7
    %v1161 = vrot.slane %v49, 7
    %v1162 = vsel %vm1159, %v1160, %v1161
    %v1163 = vrot.slane %v50, 7
    %v1164 = vrot.slane %v51, 7
    %v1165 = vsel %vm1159, %v1163, %v1164
    %v1168 = vsel %vm1159, %v1155, %v1160
    %v1169 = vsel %vm1159, %v1156, %v1163
    %vm1170 = vcmask 1046528
    %v1171 = vrot.slane %v49, 1
    %v1172 = vsel %vm1170, %v1155, %v1171
    %v1173 = vrot.slane %v51, 1
    %v1174 = vsel %vm1170, %v1156, %v1173
    %v1179 = vsel %vm1170, %v1171, %v1161
    %v1180 = vsel %vm1170, %v1173, %v1164
    %v1181 = vld [vmem:[%s1] sm:$0xff]
    %v1182 = vld [vmem:[%s1 + $0x8] sm:$0xff]
    %v1183 = vld [vmem:[%s1 + $0x10] sm:$0xff]
    %v1184 = vld [vmem:[%s1 + $0x18] sm:$0xff]
    %v1185 = vld [vmem:[%s1 + $0x20] sm:$0xff]
    %v1186 = vld [vmem:[%s1 + $0x28] sm:$0xff]
    %v1187 = vld [vmem:[%s1 + $0x30] sm:$0xff]
    %v1188 = vld [vmem:[%s1 + $0x38] sm:$0xff]
    %s1189 = scalar_lea.vmem %s1, 64
    %v1190 = vld [vmem:[%s1189] sm:$0xff]
    %v1191 = vld [vmem:[%s1189 + $0x8] sm:$0xff]
    %v1192 = vld [vmem:[%s1189 + $0x10] sm:$0xff]
    %v1193 = vld [vmem:[%s1189 + $0x18] sm:$0xff]
    %v1194 = vld [vmem:[%s1189 + $0x20] sm:$0xff]
    %v1195 = vld [vmem:[%s1189 + $0x28] sm:$0xff]
    %v1196 = vld [vmem:[%s1189 + $0x30] sm:$0xff]
    %v1197 = vld [vmem:[%s1189 + $0x38] sm:$0xff]
    %1198 = vmatpush.msra.mxu0 0.0
    %1199 = vmatpush.msra.mxu0 0.0
    %1200 = vmatpush.msra.mxu0 0.0
    %1201 = vmatpush.msra.mxu0 0.0
    %1202 = vmatpush.msra.mxu0 0.0
    %1203 = vmatpush.msra.mxu0 0.0
    %1204 = vmatpush.msra.mxu0 0.0
    %1205 = vmatpush.msra.mxu0 0.0
    %v1206 = vand.u32 %v1197, 4294901760
    %1207 = vmatpush.msra.mxu0 %v1206
    %v1208 = vand.u32 %v1196, 4294901760
    %1209 = vmatpush.msra.mxu0 %v1208
    %v1210 = vand.u32 %v1195, 4294901760
    %1211 = vmatpush.msra.mxu0 %v1210
    %v1212 = vand.u32 %v1194, 4294901760
    %1213 = vmatpush.msra.mxu0 %v1212
    %v1214 = vand.u32 %v1193, 4294901760
    %1215 = vmatpush.msra.mxu0 %v1214
    %v1216 = vand.u32 %v1192, 4294901760
    %1217 = vmatpush.msra.mxu0 %v1216
    %v1218 = vand.u32 %v1191, 4294901760
    %1219 = vmatpush.msra.mxu0 %v1218
    %v1220 = vand.u32 %v1190, 4294901760
    %1221 = vmatpush.msra.mxu0 %v1220
    %v1222 = vand.u32 %v78, 4294901760
    %v1223 = vsub.f32 %v78, %v1222
    %v1224 = vand.u32 %v1223, 4294901760
    %v1225 = vsub.f32 %v1223, %v1224
    %v1226 = vand.u32 %v1225, 4294901760
    %1227 = vmatmul.f32.gmra.mxu0 %v1226
    %v1228 = vpop.f32.mrf.mxu0
    %v1229 = vadd.f32 0.0, %v1228
    %v1230 = vand.u32 %v81, 4294901760
    %v1231 = vsub.f32 %v81, %v1230
    %v1232 = vand.u32 %v1231, 4294901760
    %v1233 = vsub.f32 %v1231, %v1232
    %v1234 = vand.u32 %v1233, 4294901760
    %1235 = vmatmul.f32.gmra.mxu0 %v1234
    %v1236 = vpop.f32.mrf.mxu0
    %v1237 = vadd.f32 0.0, %v1236
    %v1238 = vand.u32 %v84, 4294901760
    %v1239 = vsub.f32 %v84, %v1238
    %v1240 = vand.u32 %v1239, 4294901760
    %v1241 = vsub.f32 %v1239, %v1240
    %v1242 = vand.u32 %v1241, 4294901760
    %1243 = vmatmul.f32.gmra.mxu0 %v1242
    %v1244 = vpop.f32.mrf.mxu0
    %v1245 = vadd.f32 0.0, %v1244
    %v1246 = vand.u32 %v87, 4294901760
    %v1247 = vsub.f32 %v87, %v1246
    %v1248 = vand.u32 %v1247, 4294901760
    %v1249 = vsub.f32 %v1247, %v1248
    %v1250 = vand.u32 %v1249, 4294901760
    %1251 = vmatmul.f32.gmra.mxu0 %v1250
    %v1252 = vpop.f32.mrf.mxu0
    %v1253 = vadd.f32 0.0, %v1252
    %1254 = vdwg.mxu0
    %1255 = vmatpush.msra.mxu0 0.0
    %1256 = vmatpush.msra.mxu0 0.0
    %1257 = vmatpush.msra.mxu0 0.0
    %1258 = vmatpush.msra.mxu0 0.0
    %1259 = vmatpush.msra.mxu0 0.0
    %1260 = vmatpush.msra.mxu0 0.0
    %1261 = vmatpush.msra.mxu0 0.0
    %1262 = vmatpush.msra.mxu0 0.0
    %v1263 = vand.u32 %v1197, 4294901760
    %v1264 = vsub.f32 %v1197, %v1263
    %v1265 = vand.u32 %v1264, 4294901760
    %v1266 = vsub.f32 %v1264, %v1265
    %v1267 = vand.u32 %v1266, 4294901760
    %1268 = vmatpush.msra.mxu0 %v1267
    %v1269 = vand.u32 %v1196, 4294901760
    %v1270 = vsub.f32 %v1196, %v1269
    %v1271 = vand.u32 %v1270, 4294901760
    %v1272 = vsub.f32 %v1270, %v1271
    %v1273 = vand.u32 %v1272, 4294901760
    %1274 = vmatpush.msra.mxu0 %v1273
    %v1275 = vand.u32 %v1195, 4294901760
    %v1276 = vsub.f32 %v1195, %v1275
    %v1277 = vand.u32 %v1276, 4294901760
    %v1278 = vsub.f32 %v1276, %v1277
    %v1279 = vand.u32 %v1278, 4294901760
    %1280 = vmatpush.msra.mxu0 %v1279
    %v1281 = vand.u32 %v1194, 4294901760
    %v1282 = vsub.f32 %v1194, %v1281
    %v1283 = vand.u32 %v1282, 4294901760
    %v1284 = vsub.f32 %v1282, %v1283
    %v1285 = vand.u32 %v1284, 4294901760
    %1286 = vmatpush.msra.mxu0 %v1285
    %v1287 = vand.u32 %v1193, 4294901760
    %v1288 = vsub.f32 %v1193, %v1287
    %v1289 = vand.u32 %v1288, 4294901760
    %v1290 = vsub.f32 %v1288, %v1289
    %v1291 = vand.u32 %v1290, 4294901760
    %1292 = vmatpush.msra.mxu0 %v1291
    %v1293 = vand.u32 %v1192, 4294901760
    %v1294 = vsub.f32 %v1192, %v1293
    %v1295 = vand.u32 %v1294, 4294901760
    %v1296 = vsub.f32 %v1294, %v1295
    %v1297 = vand.u32 %v1296, 4294901760
    %1298 = vmatpush.msra.mxu0 %v1297
    %v1299 = vand.u32 %v1191, 4294901760
    %v1300 = vsub.f32 %v1191, %v1299
    %v1301 = vand.u32 %v1300, 4294901760
    %v1302 = vsub.f32 %v1300, %v1301
    %v1303 = vand.u32 %v1302, 4294901760
    %1304 = vmatpush.msra.mxu0 %v1303
    %v1305 = vand.u32 %v1190, 4294901760
    %v1306 = vsub.f32 %v1190, %v1305
    %v1307 = vand.u32 %v1306, 4294901760
    %v1308 = vsub.f32 %v1306, %v1307
    %v1309 = vand.u32 %v1308, 4294901760
    %1310 = vmatpush.msra.mxu0 %v1309
    %v1311 = vand.u32 %v78, 4294901760
    %1312 = vmatmul.f32.gmra.mxu0 %v1311
    %v1313 = vpop.f32.mrf.mxu0
    %v1314 = vadd.f32 %v1229, %v1313
    %v1315 = vand.u32 %v81, 4294901760
    %1316 = vmatmul.f32.gmra.mxu0 %v1315
    %v1317 = vpop.f32.mrf.mxu0
    %v1318 = vadd.f32 %v1237, %v1317
    %v1319 = vand.u32 %v84, 4294901760
    %1320 = vmatmul.f32.gmra.mxu0 %v1319
    %v1321 = vpop.f32.mrf.mxu0
    %v1322 = vadd.f32 %v1245, %v1321
    %v1323 = vand.u32 %v87, 4294901760
    %1324 = vmatmul.f32.gmra.mxu0 %v1323
    %v1325 = vpop.f32.mrf.mxu0
    %v1326 = vadd.f32 %v1253, %v1325
    %1327 = vdwg.mxu0
    %1328 = vmatpush.msra.mxu0 0.0
    %1329 = vmatpush.msra.mxu0 0.0
    %1330 = vmatpush.msra.mxu0 0.0
    %1331 = vmatpush.msra.mxu0 0.0
    %1332 = vmatpush.msra.mxu0 0.0
    %1333 = vmatpush.msra.mxu0 0.0
    %1334 = vmatpush.msra.mxu0 0.0
    %1335 = vmatpush.msra.mxu0 0.0
    %v1336 = vand.u32 %v1197, 4294901760
    %v1337 = vsub.f32 %v1197, %v1336
    %1338 = vmatpush.msra.mxu0 %v1337
    %v1339 = vand.u32 %v1196, 4294901760
    %v1340 = vsub.f32 %v1196, %v1339
    %1341 = vmatpush.msra.mxu0 %v1340
    %v1342 = vand.u32 %v1195, 4294901760
    %v1343 = vsub.f32 %v1195, %v1342
    %1344 = vmatpush.msra.mxu0 %v1343
    %v1345 = vand.u32 %v1194, 4294901760
    %v1346 = vsub.f32 %v1194, %v1345
    %1347 = vmatpush.msra.mxu0 %v1346
    %v1348 = vand.u32 %v1193, 4294901760
    %v1349 = vsub.f32 %v1193, %v1348
    %1350 = vmatpush.msra.mxu0 %v1349
    %v1351 = vand.u32 %v1192, 4294901760
    %v1352 = vsub.f32 %v1192, %v1351
    %1353 = vmatpush.msra.mxu0 %v1352
    %v1354 = vand.u32 %v1191, 4294901760
    %v1355 = vsub.f32 %v1191, %v1354
    %1356 = vmatpush.msra.mxu0 %v1355
    %v1357 = vand.u32 %v1190, 4294901760
    %v1358 = vsub.f32 %v1190, %v1357
    %1359 = vmatpush.msra.mxu0 %v1358
    %v1360 = vand.u32 %v78, 4294901760
    %v1361 = vsub.f32 %v78, %v1360
    %1362 = vmatmul.f32.gmra.mxu0 %v1361
    %v1363 = vpop.f32.mrf.mxu0
    %v1364 = vadd.f32 %v1314, %v1363
    %v1365 = vand.u32 %v81, 4294901760
    %v1366 = vsub.f32 %v81, %v1365
    %1367 = vmatmul.f32.gmra.mxu0 %v1366
    %v1368 = vpop.f32.mrf.mxu0
    %v1369 = vadd.f32 %v1318, %v1368
    %v1370 = vand.u32 %v84, 4294901760
    %v1371 = vsub.f32 %v84, %v1370
    %1372 = vmatmul.f32.gmra.mxu0 %v1371
    %v1373 = vpop.f32.mrf.mxu0
    %v1374 = vadd.f32 %v1322, %v1373
    %v1375 = vand.u32 %v87, 4294901760
    %v1376 = vsub.f32 %v87, %v1375
    %1377 = vmatmul.f32.gmra.mxu0 %v1376
    %v1378 = vpop.f32.mrf.mxu0
    %v1379 = vadd.f32 %v1326, %v1378
    %1380 = vdwg.mxu0
    %1381 = vmatpush.msra.mxu0 0.0
    %1382 = vmatpush.msra.mxu0 0.0
    %1383 = vmatpush.msra.mxu0 0.0
    %1384 = vmatpush.msra.mxu0 0.0
    %1385 = vmatpush.msra.mxu0 0.0
    %1386 = vmatpush.msra.mxu0 0.0
    %1387 = vmatpush.msra.mxu0 0.0
    %1388 = vmatpush.msra.mxu0 0.0
    %v1389 = vand.u32 %v1197, 4294901760
    %1390 = vmatpush.msra.mxu0 %v1389
    %v1391 = vand.u32 %v1196, 4294901760
    %1392 = vmatpush.msra.mxu0 %v1391
    %v1393 = vand.u32 %v1195, 4294901760
    %1394 = vmatpush.msra.mxu0 %v1393
    %v1395 = vand.u32 %v1194, 4294901760
    %1396 = vmatpush.msra.mxu0 %v1395
    %v1397 = vand.u32 %v1193, 4294901760
    %1398 = vmatpush.msra.mxu0 %v1397
    %v1399 = vand.u32 %v1192, 4294901760
    %1400 = vmatpush.msra.mxu0 %v1399
    %v1401 = vand.u32 %v1191, 4294901760
    %1402 = vmatpush.msra.mxu0 %v1401
    %v1403 = vand.u32 %v1190, 4294901760
    %1404 = vmatpush.msra.mxu0 %v1403
    %v1405 = vand.u32 %v78, 4294901760
    %v1406 = vsub.f32 %v78, %v1405
    %v1407 = vand.u32 %v1406, 4294901760
    %1408 = vmatmul.f32.gmra.mxu0 %v1407
    %v1409 = vpop.f32.mrf.mxu0
    %v1410 = vadd.f32 %v1364, %v1409
    %v1411 = vand.u32 %v81, 4294901760
    %v1412 = vsub.f32 %v81, %v1411
    %v1413 = vand.u32 %v1412, 4294901760
    %1414 = vmatmul.f32.gmra.mxu0 %v1413
    %v1415 = vpop.f32.mrf.mxu0
    %v1416 = vadd.f32 %v1369, %v1415
    %v1417 = vand.u32 %v84, 4294901760
    %v1418 = vsub.f32 %v84, %v1417
    %v1419 = vand.u32 %v1418, 4294901760
    %1420 = vmatmul.f32.gmra.mxu0 %v1419
    %v1421 = vpop.f32.mrf.mxu0
    %v1422 = vadd.f32 %v1374, %v1421
    %v1423 = vand.u32 %v87, 4294901760
    %v1424 = vsub.f32 %v87, %v1423
    %v1425 = vand.u32 %v1424, 4294901760
    %1426 = vmatmul.f32.gmra.mxu0 %v1425
    %v1427 = vpop.f32.mrf.mxu0
    %v1428 = vadd.f32 %v1379, %v1427
    %1429 = vdwg.mxu0
    %1430 = vmatpush.msra.mxu0 0.0
    %1431 = vmatpush.msra.mxu0 0.0
    %1432 = vmatpush.msra.mxu0 0.0
    %1433 = vmatpush.msra.mxu0 0.0
    %1434 = vmatpush.msra.mxu0 0.0
    %1435 = vmatpush.msra.mxu0 0.0
    %1436 = vmatpush.msra.mxu0 0.0
    %1437 = vmatpush.msra.mxu0 0.0
    %v1438 = vand.u32 %v1197, 4294901760
    %v1439 = vsub.f32 %v1197, %v1438
    %v1440 = vand.u32 %v1439, 4294901760
    %1441 = vmatpush.msra.mxu0 %v1440
    %v1442 = vand.u32 %v1196, 4294901760
    %v1443 = vsub.f32 %v1196, %v1442
    %v1444 = vand.u32 %v1443, 4294901760
    %1445 = vmatpush.msra.mxu0 %v1444
    %v1446 = vand.u32 %v1195, 4294901760
    %v1447 = vsub.f32 %v1195, %v1446
    %v1448 = vand.u32 %v1447, 4294901760
    %1449 = vmatpush.msra.mxu0 %v1448
    %v1450 = vand.u32 %v1194, 4294901760
    %v1451 = vsub.f32 %v1194, %v1450
    %v1452 = vand.u32 %v1451, 4294901760
    %1453 = vmatpush.msra.mxu0 %v1452
    %v1454 = vand.u32 %v1193, 4294901760
    %v1455 = vsub.f32 %v1193, %v1454
    %v1456 = vand.u32 %v1455, 4294901760
    %1457 = vmatpush.msra.mxu0 %v1456
    %v1458 = vand.u32 %v1192, 4294901760
    %v1459 = vsub.f32 %v1192, %v1458
    %v1460 = vand.u32 %v1459, 4294901760
    %1461 = vmatpush.msra.mxu0 %v1460
    %v1462 = vand.u32 %v1191, 4294901760
    %v1463 = vsub.f32 %v1191, %v1462
    %v1464 = vand.u32 %v1463, 4294901760
    %1465 = vmatpush.msra.mxu0 %v1464
    %v1466 = vand.u32 %v1190, 4294901760
    %v1467 = vsub.f32 %v1190, %v1466
    %v1468 = vand.u32 %v1467, 4294901760
    %1469 = vmatpush.msra.mxu0 %v1468
    %v1470 = vand.u32 %v78, 4294901760
    %1471 = vmatmul.f32.gmra.mxu0 %v1470
    %v1472 = vpop.f32.mrf.mxu0
    %v1473 = vadd.f32 %v1410, %v1472
    %v1474 = vand.u32 %v81, 4294901760
    %1475 = vmatmul.f32.gmra.mxu0 %v1474
    %v1476 = vpop.f32.mrf.mxu0
    %v1477 = vadd.f32 %v1416, %v1476
    %v1478 = vand.u32 %v84, 4294901760
    %1479 = vmatmul.f32.gmra.mxu0 %v1478
    %v1480 = vpop.f32.mrf.mxu0
    %v1481 = vadd.f32 %v1422, %v1480
    %v1482 = vand.u32 %v87, 4294901760
    %1483 = vmatmul.f32.gmra.mxu0 %v1482
    %v1484 = vpop.f32.mrf.mxu0
    %v1485 = vadd.f32 %v1428, %v1484
    %1486 = vdwg.mxu0
    %1487 = vmatpush.msra.mxu0 0.0
    %1488 = vmatpush.msra.mxu0 0.0
    %1489 = vmatpush.msra.mxu0 0.0
    %1490 = vmatpush.msra.mxu0 0.0
    %1491 = vmatpush.msra.mxu0 0.0
    %1492 = vmatpush.msra.mxu0 0.0
    %1493 = vmatpush.msra.mxu0 0.0
    %1494 = vmatpush.msra.mxu0 0.0
    %v1495 = vand.u32 %v1197, 4294901760
    %1496 = vmatpush.msra.mxu0 %v1495
    %v1497 = vand.u32 %v1196, 4294901760
    %1498 = vmatpush.msra.mxu0 %v1497
    %v1499 = vand.u32 %v1195, 4294901760
    %1500 = vmatpush.msra.mxu0 %v1499
    %v1501 = vand.u32 %v1194, 4294901760
    %1502 = vmatpush.msra.mxu0 %v1501
    %v1503 = vand.u32 %v1193, 4294901760
    %1504 = vmatpush.msra.mxu0 %v1503
    %v1505 = vand.u32 %v1192, 4294901760
    %1506 = vmatpush.msra.mxu0 %v1505
    %v1507 = vand.u32 %v1191, 4294901760
    %1508 = vmatpush.msra.mxu0 %v1507
    %v1509 = vand.u32 %v1190, 4294901760
    %1510 = vmatpush.msra.mxu0 %v1509
    %v1511 = vand.u32 %v78, 4294901760
    %1512 = vmatmul.f32.gmra.mxu0 %v1511
    %v1513 = vpop.f32.mrf.mxu0
    %v1514 = vadd.f32 %v1473, %v1513
    %v1515 = vand.u32 %v81, 4294901760
    %1516 = vmatmul.f32.gmra.mxu0 %v1515
    %v1517 = vpop.f32.mrf.mxu0
    %v1518 = vadd.f32 %v1477, %v1517
    %v1519 = vand.u32 %v84, 4294901760
    %1520 = vmatmul.f32.gmra.mxu0 %v1519
    %v1521 = vpop.f32.mrf.mxu0
    %v1522 = vadd.f32 %v1481, %v1521
    %v1523 = vand.u32 %v87, 4294901760
    %1524 = vmatmul.f32.gmra.mxu0 %v1523
    %v1525 = vpop.f32.mrf.mxu0
    %v1526 = vadd.f32 %v1485, %v1525
    %1527 = vdwg.mxu0
    %v1529 = vsel %vm76, %v1168, 0
    %v1531 = vsel %vm76, %v1162, 0
    %v1534 = vsel %vm76, %v1169, 0
    %v1536 = vsel %vm76, %v1165, 0
    %1538 = vmatpush.msra.mxu0 0.0
    %1539 = vmatpush.msra.mxu0 0.0
    %1540 = vmatpush.msra.mxu0 0.0
    %1541 = vmatpush.msra.mxu0 0.0
    %1542 = vmatpush.msra.mxu0 0.0
    %1543 = vmatpush.msra.mxu0 0.0
    %1544 = vmatpush.msra.mxu0 0.0
    %1545 = vmatpush.msra.mxu0 0.0
    %v1546 = vand.u32 %v1188, 4294901760
    %1547 = vmatpush.msra.mxu0 %v1546
    %v1548 = vand.u32 %v1187, 4294901760
    %1549 = vmatpush.msra.mxu0 %v1548
    %v1550 = vand.u32 %v1186, 4294901760
    %1551 = vmatpush.msra.mxu0 %v1550
    %v1552 = vand.u32 %v1185, 4294901760
    %1553 = vmatpush.msra.mxu0 %v1552
    %v1554 = vand.u32 %v1184, 4294901760
    %1555 = vmatpush.msra.mxu0 %v1554
    %v1556 = vand.u32 %v1183, 4294901760
    %1557 = vmatpush.msra.mxu0 %v1556
    %v1558 = vand.u32 %v1182, 4294901760
    %1559 = vmatpush.msra.mxu0 %v1558
    %v1560 = vand.u32 %v1181, 4294901760
    %1561 = vmatpush.msra.mxu0 %v1560
    %v1562 = vand.u32 %v1529, 4294901760
    %v1563 = vsub.f32 %v1529, %v1562
    %v1564 = vand.u32 %v1563, 4294901760
    %v1565 = vsub.f32 %v1563, %v1564
    %v1566 = vand.u32 %v1565, 4294901760
    %1567 = vmatmul.f32.gmra.mxu0 %v1566
    %v1568 = vpop.f32.mrf.mxu0
    %v1569 = vadd.f32 %v1514, %v1568
    %v1570 = vand.u32 %v1531, 4294901760
    %v1571 = vsub.f32 %v1531, %v1570
    %v1572 = vand.u32 %v1571, 4294901760
    %v1573 = vsub.f32 %v1571, %v1572
    %v1574 = vand.u32 %v1573, 4294901760
    %1575 = vmatmul.f32.gmra.mxu0 %v1574
    %v1576 = vpop.f32.mrf.mxu0
    %v1577 = vadd.f32 %v1518, %v1576
    %v1578 = vand.u32 %v1534, 4294901760
    %v1579 = vsub.f32 %v1534, %v1578
    %v1580 = vand.u32 %v1579, 4294901760
    %v1581 = vsub.f32 %v1579, %v1580
    %v1582 = vand.u32 %v1581, 4294901760
    %1583 = vmatmul.f32.gmra.mxu0 %v1582
    %v1584 = vpop.f32.mrf.mxu0
    %v1585 = vadd.f32 %v1522, %v1584
    %v1586 = vand.u32 %v1536, 4294901760
    %v1587 = vsub.f32 %v1536, %v1586
    %v1588 = vand.u32 %v1587, 4294901760
    %v1589 = vsub.f32 %v1587, %v1588
    %v1590 = vand.u32 %v1589, 4294901760
    %1591 = vmatmul.f32.gmra.mxu0 %v1590
    %v1592 = vpop.f32.mrf.mxu0
    %v1593 = vadd.f32 %v1526, %v1592
    %1594 = vdwg.mxu0
    %1595 = vmatpush.msra.mxu0 0.0
    %1596 = vmatpush.msra.mxu0 0.0
    %1597 = vmatpush.msra.mxu0 0.0
    %1598 = vmatpush.msra.mxu0 0.0
    %1599 = vmatpush.msra.mxu0 0.0
    %1600 = vmatpush.msra.mxu0 0.0
    %1601 = vmatpush.msra.mxu0 0.0
    %1602 = vmatpush.msra.mxu0 0.0
    %v1603 = vand.u32 %v1188, 4294901760
    %v1604 = vsub.f32 %v1188, %v1603
    %v1605 = vand.u32 %v1604, 4294901760
    %v1606 = vsub.f32 %v1604, %v1605
    %v1607 = vand.u32 %v1606, 4294901760
    %1608 = vmatpush.msra.mxu0 %v1607
    %v1609 = vand.u32 %v1187, 4294901760
    %v1610 = vsub.f32 %v1187, %v1609
    %v1611 = vand.u32 %v1610, 4294901760
    %v1612 = vsub.f32 %v1610, %v1611
    %v1613 = vand.u32 %v1612, 4294901760
    %1614 = vmatpush.msra.mxu0 %v1613
    %v1615 = vand.u32 %v1186, 4294901760
    %v1616 = vsub.f32 %v1186, %v1615
    %v1617 = vand.u32 %v1616, 4294901760
    %v1618 = vsub.f32 %v1616, %v1617
    %v1619 = vand.u32 %v1618, 4294901760
    %1620 = vmatpush.msra.mxu0 %v1619
    %v1621 = vand.u32 %v1185, 4294901760
    %v1622 = vsub.f32 %v1185, %v1621
    %v1623 = vand.u32 %v1622, 4294901760
    %v1624 = vsub.f32 %v1622, %v1623
    %v1625 = vand.u32 %v1624, 4294901760
    %1626 = vmatpush.msra.mxu0 %v1625
    %v1627 = vand.u32 %v1184, 4294901760
    %v1628 = vsub.f32 %v1184, %v1627
    %v1629 = vand.u32 %v1628, 4294901760
    %v1630 = vsub.f32 %v1628, %v1629
    %v1631 = vand.u32 %v1630, 4294901760
    %1632 = vmatpush.msra.mxu0 %v1631
    %v1633 = vand.u32 %v1183, 4294901760
    %v1634 = vsub.f32 %v1183, %v1633
    %v1635 = vand.u32 %v1634, 4294901760
    %v1636 = vsub.f32 %v1634, %v1635
    %v1637 = vand.u32 %v1636, 4294901760
    %1638 = vmatpush.msra.mxu0 %v1637
    %v1639 = vand.u32 %v1182, 4294901760
    %v1640 = vsub.f32 %v1182, %v1639
    %v1641 = vand.u32 %v1640, 4294901760
    %v1642 = vsub.f32 %v1640, %v1641
    %v1643 = vand.u32 %v1642, 4294901760
    %1644 = vmatpush.msra.mxu0 %v1643
    %v1645 = vand.u32 %v1181, 4294901760
    %v1646 = vsub.f32 %v1181, %v1645
    %v1647 = vand.u32 %v1646, 4294901760
    %v1648 = vsub.f32 %v1646, %v1647
    %v1649 = vand.u32 %v1648, 4294901760
    %1650 = vmatpush.msra.mxu0 %v1649
    %v1651 = vand.u32 %v1529, 4294901760
    %1652 = vmatmul.f32.gmra.mxu0 %v1651
    %v1653 = vpop.f32.mrf.mxu0
    %v1654 = vadd.f32 %v1569, %v1653
    %v1655 = vand.u32 %v1531, 4294901760
    %1656 = vmatmul.f32.gmra.mxu0 %v1655
    %v1657 = vpop.f32.mrf.mxu0
    %v1658 = vadd.f32 %v1577, %v1657
    %v1659 = vand.u32 %v1534, 4294901760
    %1660 = vmatmul.f32.gmra.mxu0 %v1659
    %v1661 = vpop.f32.mrf.mxu0
    %v1662 = vadd.f32 %v1585, %v1661
    %v1663 = vand.u32 %v1536, 4294901760
    %1664 = vmatmul.f32.gmra.mxu0 %v1663
    %v1665 = vpop.f32.mrf.mxu0
    %v1666 = vadd.f32 %v1593, %v1665
    %1667 = vdwg.mxu0
    %1668 = vmatpush.msra.mxu0 0.0
    %1669 = vmatpush.msra.mxu0 0.0
    %1670 = vmatpush.msra.mxu0 0.0
    %1671 = vmatpush.msra.mxu0 0.0
    %1672 = vmatpush.msra.mxu0 0.0
    %1673 = vmatpush.msra.mxu0 0.0
    %1674 = vmatpush.msra.mxu0 0.0
    %1675 = vmatpush.msra.mxu0 0.0
    %v1676 = vand.u32 %v1188, 4294901760
    %v1677 = vsub.f32 %v1188, %v1676
    %1678 = vmatpush.msra.mxu0 %v1677
    %v1679 = vand.u32 %v1187, 4294901760
    %v1680 = vsub.f32 %v1187, %v1679
    %1681 = vmatpush.msra.mxu0 %v1680
    %v1682 = vand.u32 %v1186, 4294901760
    %v1683 = vsub.f32 %v1186, %v1682
    %1684 = vmatpush.msra.mxu0 %v1683
    %v1685 = vand.u32 %v1185, 4294901760
    %v1686 = vsub.f32 %v1185, %v1685
    %1687 = vmatpush.msra.mxu0 %v1686
    %v1688 = vand.u32 %v1184, 4294901760
    %v1689 = vsub.f32 %v1184, %v1688
    %1690 = vmatpush.msra.mxu0 %v1689
    %v1691 = vand.u32 %v1183, 4294901760
    %v1692 = vsub.f32 %v1183, %v1691
    %1693 = vmatpush.msra.mxu0 %v1692
    %v1694 = vand.u32 %v1182, 4294901760
    %v1695 = vsub.f32 %v1182, %v1694
    %1696 = vmatpush.msra.mxu0 %v1695
    %v1697 = vand.u32 %v1181, 4294901760
    %v1698 = vsub.f32 %v1181, %v1697
    %1699 = vmatpush.msra.mxu0 %v1698
    %v1700 = vand.u32 %v1529, 4294901760
    %v1701 = vsub.f32 %v1529, %v1700
    %1702 = vmatmul.f32.gmra.mxu0 %v1701
    %v1703 = vpop.f32.mrf.mxu0
    %v1704 = vadd.f32 %v1654, %v1703
    %v1705 = vand.u32 %v1531, 4294901760
    %v1706 = vsub.f32 %v1531, %v1705
    %1707 = vmatmul.f32.gmra.mxu0 %v1706
    %v1708 = vpop.f32.mrf.mxu0
    %v1709 = vadd.f32 %v1658, %v1708
    %v1710 = vand.u32 %v1534, 4294901760
    %v1711 = vsub.f32 %v1534, %v1710
    %1712 = vmatmul.f32.gmra.mxu0 %v1711
    %v1713 = vpop.f32.mrf.mxu0
    %v1714 = vadd.f32 %v1662, %v1713
    %v1715 = vand.u32 %v1536, 4294901760
    %v1716 = vsub.f32 %v1536, %v1715
    %1717 = vmatmul.f32.gmra.mxu0 %v1716
    %v1718 = vpop.f32.mrf.mxu0
    %v1719 = vadd.f32 %v1666, %v1718
    %1720 = vdwg.mxu0
    %1721 = vmatpush.msra.mxu0 0.0
    %1722 = vmatpush.msra.mxu0 0.0
    %1723 = vmatpush.msra.mxu0 0.0
    %1724 = vmatpush.msra.mxu0 0.0
    %1725 = vmatpush.msra.mxu0 0.0
    %1726 = vmatpush.msra.mxu0 0.0
    %1727 = vmatpush.msra.mxu0 0.0
    %1728 = vmatpush.msra.mxu0 0.0
    %v1729 = vand.u32 %v1188, 4294901760
    %1730 = vmatpush.msra.mxu0 %v1729
    %v1731 = vand.u32 %v1187, 4294901760
    %1732 = vmatpush.msra.mxu0 %v1731
    %v1733 = vand.u32 %v1186, 4294901760
    %1734 = vmatpush.msra.mxu0 %v1733
    %v1735 = vand.u32 %v1185, 4294901760
    %1736 = vmatpush.msra.mxu0 %v1735
    %v1737 = vand.u32 %v1184, 4294901760
    %1738 = vmatpush.msra.mxu0 %v1737
    %v1739 = vand.u32 %v1183, 4294901760
    %1740 = vmatpush.msra.mxu0 %v1739
    %v1741 = vand.u32 %v1182, 4294901760
    %1742 = vmatpush.msra.mxu0 %v1741
    %v1743 = vand.u32 %v1181, 4294901760
    %1744 = vmatpush.msra.mxu0 %v1743
    %v1745 = vand.u32 %v1529, 4294901760
    %v1746 = vsub.f32 %v1529, %v1745
    %v1747 = vand.u32 %v1746, 4294901760
    %1748 = vmatmul.f32.gmra.mxu0 %v1747
    %v1749 = vpop.f32.mrf.mxu0
    %v1750 = vadd.f32 %v1704, %v1749
    %v1751 = vand.u32 %v1531, 4294901760
    %v1752 = vsub.f32 %v1531, %v1751
    %v1753 = vand.u32 %v1752, 4294901760
    %1754 = vmatmul.f32.gmra.mxu0 %v1753
    %v1755 = vpop.f32.mrf.mxu0
    %v1756 = vadd.f32 %v1709, %v1755
    %v1757 = vand.u32 %v1534, 4294901760
    %v1758 = vsub.f32 %v1534, %v1757
    %v1759 = vand.u32 %v1758, 4294901760
    %1760 = vmatmul.f32.gmra.mxu0 %v1759
    %v1761 = vpop.f32.mrf.mxu0
    %v1762 = vadd.f32 %v1714, %v1761
    %v1763 = vand.u32 %v1536, 4294901760
    %v1764 = vsub.f32 %v1536, %v1763
    %v1765 = vand.u32 %v1764, 4294901760
    %1766 = vmatmul.f32.gmra.mxu0 %v1765
    %v1767 = vpop.f32.mrf.mxu0
    %v1768 = vadd.f32 %v1719, %v1767
    %1769 = vdwg.mxu0
    %1770 = vmatpush.msra.mxu0 0.0
    %1771 = vmatpush.msra.mxu0 0.0
    %1772 = vmatpush.msra.mxu0 0.0
    %1773 = vmatpush.msra.mxu0 0.0
    %1774 = vmatpush.msra.mxu0 0.0
    %1775 = vmatpush.msra.mxu0 0.0
    %1776 = vmatpush.msra.mxu0 0.0
    %1777 = vmatpush.msra.mxu0 0.0
    %v1778 = vand.u32 %v1188, 4294901760
    %v1779 = vsub.f32 %v1188, %v1778
    %v1780 = vand.u32 %v1779, 4294901760
    %1781 = vmatpush.msra.mxu0 %v1780
    %v1782 = vand.u32 %v1187, 4294901760
    %v1783 = vsub.f32 %v1187, %v1782
    %v1784 = vand.u32 %v1783, 4294901760
    %1785 = vmatpush.msra.mxu0 %v1784
    %v1786 = vand.u32 %v1186, 4294901760
    %v1787 = vsub.f32 %v1186, %v1786
    %v1788 = vand.u32 %v1787, 4294901760
    %1789 = vmatpush.msra.mxu0 %v1788
    %v1790 = vand.u32 %v1185, 4294901760
    %v1791 = vsub.f32 %v1185, %v1790
    %v1792 = vand.u32 %v1791, 4294901760
    %1793 = vmatpush.msra.mxu0 %v1792
    %v1794 = vand.u32 %v1184, 4294901760
    %v1795 = vsub.f32 %v1184, %v1794
    %v1796 = vand.u32 %v1795, 4294901760
    %1797 = vmatpush.msra.mxu0 %v1796
    %v1798 = vand.u32 %v1183, 4294901760
    %v1799 = vsub.f32 %v1183, %v1798
    %v1800 = vand.u32 %v1799, 4294901760
    %1801 = vmatpush.msra.mxu0 %v1800
    %v1802 = vand.u32 %v1182, 4294901760
    %v1803 = vsub.f32 %v1182, %v1802
    %v1804 = vand.u32 %v1803, 4294901760
    %1805 = vmatpush.msra.mxu0 %v1804
    %v1806 = vand.u32 %v1181, 4294901760
    %v1807 = vsub.f32 %v1181, %v1806
    %v1808 = vand.u32 %v1807, 4294901760
    %1809 = vmatpush.msra.mxu0 %v1808
    %v1810 = vand.u32 %v1529, 4294901760
    %1811 = vmatmul.f32.gmra.mxu0 %v1810
    %v1812 = vpop.f32.mrf.mxu0
    %v1813 = vadd.f32 %v1750, %v1812
    %v1814 = vand.u32 %v1531, 4294901760
    %1815 = vmatmul.f32.gmra.mxu0 %v1814
    %v1816 = vpop.f32.mrf.mxu0
    %v1817 = vadd.f32 %v1756, %v1816
    %v1818 = vand.u32 %v1534, 4294901760
    %1819 = vmatmul.f32.gmra.mxu0 %v1818
    %v1820 = vpop.f32.mrf.mxu0
    %v1821 = vadd.f32 %v1762, %v1820
    %v1822 = vand.u32 %v1536, 4294901760
    %1823 = vmatmul.f32.gmra.mxu0 %v1822
    %v1824 = vpop.f32.mrf.mxu0
    %v1825 = vadd.f32 %v1768, %v1824
    %1826 = vdwg.mxu0
    %1827 = vmatpush.msra.mxu0 0.0
    %1828 = vmatpush.msra.mxu0 0.0
    %1829 = vmatpush.msra.mxu0 0.0
    %1830 = vmatpush.msra.mxu0 0.0
    %1831 = vmatpush.msra.mxu0 0.0
    %1832 = vmatpush.msra.mxu0 0.0
    %1833 = vmatpush.msra.mxu0 0.0
    %1834 = vmatpush.msra.mxu0 0.0
    %v1835 = vand.u32 %v1188, 4294901760
    %1836 = vmatpush.msra.mxu0 %v1835
    %v1837 = vand.u32 %v1187, 4294901760
    %1838 = vmatpush.msra.mxu0 %v1837
    %v1839 = vand.u32 %v1186, 4294901760
    %1840 = vmatpush.msra.mxu0 %v1839
    %v1841 = vand.u32 %v1185, 4294901760
    %1842 = vmatpush.msra.mxu0 %v1841
    %v1843 = vand.u32 %v1184, 4294901760
    %1844 = vmatpush.msra.mxu0 %v1843
    %v1845 = vand.u32 %v1183, 4294901760
    %1846 = vmatpush.msra.mxu0 %v1845
    %v1847 = vand.u32 %v1182, 4294901760
    %1848 = vmatpush.msra.mxu0 %v1847
    %v1849 = vand.u32 %v1181, 4294901760
    %1850 = vmatpush.msra.mxu0 %v1849
    %v1851 = vand.u32 %v1529, 4294901760
    %1852 = vmatmul.f32.gmra.mxu0 %v1851
    %v1853 = vpop.f32.mrf.mxu0
    %v1854 = vadd.f32 %v1813, %v1853
    %v1855 = vand.u32 %v1531, 4294901760
    %1856 = vmatmul.f32.gmra.mxu0 %v1855
    %v1857 = vpop.f32.mrf.mxu0
    %v1858 = vadd.f32 %v1817, %v1857
    %v1859 = vand.u32 %v1534, 4294901760
    %1860 = vmatmul.f32.gmra.mxu0 %v1859
    %v1861 = vpop.f32.mrf.mxu0
    %v1862 = vadd.f32 %v1821, %v1861
    %v1863 = vand.u32 %v1536, 4294901760
    %1864 = vmatmul.f32.gmra.mxu0 %v1863
    %v1865 = vpop.f32.mrf.mxu0
    %v1866 = vadd.f32 %v1825, %v1865
    %1867 = vdwg.mxu0
    %s1868 = scalar_lea.vmem %s1, 128
    %v1869 = vld [vmem:[%s1868] sm:$0xff]
    %v1870 = vld [vmem:[%s1868 + $0x8] sm:$0xff]
    %v1871 = vld [vmem:[%s1868 + $0x10] sm:$0xff]
    %v1872 = vld [vmem:[%s1868 + $0x18] sm:$0xff]
    %v1873 = vld [vmem:[%s1868 + $0x20] sm:$0xff]
    %v1874 = vld [vmem:[%s1868 + $0x28] sm:$0xff]
    %v1875 = vld [vmem:[%s1868 + $0x30] sm:$0xff]
    %v1876 = vld [vmem:[%s1868 + $0x38] sm:$0xff]
    %v1877 = vsel %vm76, %v1172, 0
    %v1880 = vsel %vm76, %v1179, 0
    %v1882 = vsel %vm76, %v1174, 0
    %v1885 = vsel %vm76, %v1180, 0
    %1887 = vmatpush.msra.mxu0 0.0
    %1888 = vmatpush.msra.mxu0 0.0
    %1889 = vmatpush.msra.mxu0 0.0
    %1890 = vmatpush.msra.mxu0 0.0
    %1891 = vmatpush.msra.mxu0 0.0
    %1892 = vmatpush.msra.mxu0 0.0
    %1893 = vmatpush.msra.mxu0 0.0
    %1894 = vmatpush.msra.mxu0 0.0
    %v1895 = vand.u32 %v1876, 4294901760
    %1896 = vmatpush.msra.mxu0 %v1895
    %v1897 = vand.u32 %v1875, 4294901760
    %1898 = vmatpush.msra.mxu0 %v1897
    %v1899 = vand.u32 %v1874, 4294901760
    %1900 = vmatpush.msra.mxu0 %v1899
    %v1901 = vand.u32 %v1873, 4294901760
    %1902 = vmatpush.msra.mxu0 %v1901
    %v1903 = vand.u32 %v1872, 4294901760
    %1904 = vmatpush.msra.mxu0 %v1903
    %v1905 = vand.u32 %v1871, 4294901760
    %1906 = vmatpush.msra.mxu0 %v1905
    %v1907 = vand.u32 %v1870, 4294901760
    %1908 = vmatpush.msra.mxu0 %v1907
    %v1909 = vand.u32 %v1869, 4294901760
    %1910 = vmatpush.msra.mxu0 %v1909
    %v1911 = vand.u32 %v1877, 4294901760
    %v1912 = vsub.f32 %v1877, %v1911
    %v1913 = vand.u32 %v1912, 4294901760
    %v1914 = vsub.f32 %v1912, %v1913
    %v1915 = vand.u32 %v1914, 4294901760
    %1916 = vmatmul.f32.gmra.mxu0 %v1915
    %v1917 = vpop.f32.mrf.mxu0
    %v1918 = vadd.f32 0.0, %v1917
    %v1919 = vand.u32 %v1880, 4294901760
    %v1920 = vsub.f32 %v1880, %v1919
    %v1921 = vand.u32 %v1920, 4294901760
    %v1922 = vsub.f32 %v1920, %v1921
    %v1923 = vand.u32 %v1922, 4294901760
    %1924 = vmatmul.f32.gmra.mxu0 %v1923
    %v1925 = vpop.f32.mrf.mxu0
    %v1926 = vadd.f32 0.0, %v1925
    %v1927 = vand.u32 %v1882, 4294901760
    %v1928 = vsub.f32 %v1882, %v1927
    %v1929 = vand.u32 %v1928, 4294901760
    %v1930 = vsub.f32 %v1928, %v1929
    %v1931 = vand.u32 %v1930, 4294901760
    %1932 = vmatmul.f32.gmra.mxu0 %v1931
    %v1933 = vpop.f32.mrf.mxu0
    %v1934 = vadd.f32 0.0, %v1933
    %v1935 = vand.u32 %v1885, 4294901760
    %v1936 = vsub.f32 %v1885, %v1935
    %v1937 = vand.u32 %v1936, 4294901760
    %v1938 = vsub.f32 %v1936, %v1937
    %v1939 = vand.u32 %v1938, 4294901760
    %1940 = vmatmul.f32.gmra.mxu0 %v1939
    %v1941 = vpop.f32.mrf.mxu0
    %v1942 = vadd.f32 0.0, %v1941
    %1943 = vdwg.mxu0
    %1944 = vmatpush.msra.mxu0 0.0
    %1945 = vmatpush.msra.mxu0 0.0
    %1946 = vmatpush.msra.mxu0 0.0
    %1947 = vmatpush.msra.mxu0 0.0
    %1948 = vmatpush.msra.mxu0 0.0
    %1949 = vmatpush.msra.mxu0 0.0
    %1950 = vmatpush.msra.mxu0 0.0
    %1951 = vmatpush.msra.mxu0 0.0
    %v1952 = vand.u32 %v1876, 4294901760
    %v1953 = vsub.f32 %v1876, %v1952
    %v1954 = vand.u32 %v1953, 4294901760
    %v1955 = vsub.f32 %v1953, %v1954
    %v1956 = vand.u32 %v1955, 4294901760
    %1957 = vmatpush.msra.mxu0 %v1956
    %v1958 = vand.u32 %v1875, 4294901760
    %v1959 = vsub.f32 %v1875, %v1958
    %v1960 = vand.u32 %v1959, 4294901760
    %v1961 = vsub.f32 %v1959, %v1960
    %v1962 = vand.u32 %v1961, 4294901760
    %1963 = vmatpush.msra.mxu0 %v1962
    %v1964 = vand.u32 %v1874, 4294901760
    %v1965 = vsub.f32 %v1874, %v1964
    %v1966 = vand.u32 %v1965, 4294901760
    %v1967 = vsub.f32 %v1965, %v1966
    %v1968 = vand.u32 %v1967, 4294901760
    %1969 = vmatpush.msra.mxu0 %v1968
    %v1970 = vand.u32 %v1873, 4294901760
    %v1971 = vsub.f32 %v1873, %v1970
    %v1972 = vand.u32 %v1971, 4294901760
    %v1973 = vsub.f32 %v1971, %v1972
    %v1974 = vand.u32 %v1973, 4294901760
    %1975 = vmatpush.msra.mxu0 %v1974
    %v1976 = vand.u32 %v1872, 4294901760
    %v1977 = vsub.f32 %v1872, %v1976
    %v1978 = vand.u32 %v1977, 4294901760
    %v1979 = vsub.f32 %v1977, %v1978
    %v1980 = vand.u32 %v1979, 4294901760
    %1981 = vmatpush.msra.mxu0 %v1980
    %v1982 = vand.u32 %v1871, 4294901760
    %v1983 = vsub.f32 %v1871, %v1982
    %v1984 = vand.u32 %v1983, 4294901760
    %v1985 = vsub.f32 %v1983, %v1984
    %v1986 = vand.u32 %v1985, 4294901760
    %1987 = vmatpush.msra.mxu0 %v1986
    %v1988 = vand.u32 %v1870, 4294901760
    %v1989 = vsub.f32 %v1870, %v1988
    %v1990 = vand.u32 %v1989, 4294901760
    %v1991 = vsub.f32 %v1989, %v1990
    %v1992 = vand.u32 %v1991, 4294901760
    %1993 = vmatpush.msra.mxu0 %v1992
    %v1994 = vand.u32 %v1869, 4294901760
    %v1995 = vsub.f32 %v1869, %v1994
    %v1996 = vand.u32 %v1995, 4294901760
    %v1997 = vsub.f32 %v1995, %v1996
    %v1998 = vand.u32 %v1997, 4294901760
    %1999 = vmatpush.msra.mxu0 %v1998
    %v2000 = vand.u32 %v1877, 4294901760
    %2001 = vmatmul.f32.gmra.mxu0 %v2000
    %v2002 = vpop.f32.mrf.mxu0
    %v2003 = vadd.f32 %v1918, %v2002
    %v2004 = vand.u32 %v1880, 4294901760
    %2005 = vmatmul.f32.gmra.mxu0 %v2004
    %v2006 = vpop.f32.mrf.mxu0
    %v2007 = vadd.f32 %v1926, %v2006
    %v2008 = vand.u32 %v1882, 4294901760
    %2009 = vmatmul.f32.gmra.mxu0 %v2008
    %v2010 = vpop.f32.mrf.mxu0
    %v2011 = vadd.f32 %v1934, %v2010
    %v2012 = vand.u32 %v1885, 4294901760
    %2013 = vmatmul.f32.gmra.mxu0 %v2012
    %v2014 = vpop.f32.mrf.mxu0
    %v2015 = vadd.f32 %v1942, %v2014
    %2016 = vdwg.mxu0
    %2017 = vmatpush.msra.mxu0 0.0
    %2018 = vmatpush.msra.mxu0 0.0
    %2019 = vmatpush.msra.mxu0 0.0
    %2020 = vmatpush.msra.mxu0 0.0
    %2021 = vmatpush.msra.mxu0 0.0
    %2022 = vmatpush.msra.mxu0 0.0
    %2023 = vmatpush.msra.mxu0 0.0
    %2024 = vmatpush.msra.mxu0 0.0
    %v2025 = vand.u32 %v1876, 4294901760
    %v2026 = vsub.f32 %v1876, %v2025
    %2027 = vmatpush.msra.mxu0 %v2026
    %v2028 = vand.u32 %v1875, 4294901760
    %v2029 = vsub.f32 %v1875, %v2028
    %2030 = vmatpush.msra.mxu0 %v2029
    %v2031 = vand.u32 %v1874, 4294901760
    %v2032 = vsub.f32 %v1874, %v2031
    %2033 = vmatpush.msra.mxu0 %v2032
    %v2034 = vand.u32 %v1873, 4294901760
    %v2035 = vsub.f32 %v1873, %v2034
    %2036 = vmatpush.msra.mxu0 %v2035
    %v2037 = vand.u32 %v1872, 4294901760
    %v2038 = vsub.f32 %v1872, %v2037
    %2039 = vmatpush.msra.mxu0 %v2038
    %v2040 = vand.u32 %v1871, 4294901760
    %v2041 = vsub.f32 %v1871, %v2040
    %2042 = vmatpush.msra.mxu0 %v2041
    %v2043 = vand.u32 %v1870, 4294901760
    %v2044 = vsub.f32 %v1870, %v2043
    %2045 = vmatpush.msra.mxu0 %v2044
    %v2046 = vand.u32 %v1869, 4294901760
    %v2047 = vsub.f32 %v1869, %v2046
    %2048 = vmatpush.msra.mxu0 %v2047
    %v2049 = vand.u32 %v1877, 4294901760
    %v2050 = vsub.f32 %v1877, %v2049
    %2051 = vmatmul.f32.gmra.mxu0 %v2050
    %v2052 = vpop.f32.mrf.mxu0
    %v2053 = vadd.f32 %v2003, %v2052
    %v2054 = vand.u32 %v1880, 4294901760
    %v2055 = vsub.f32 %v1880, %v2054
    %2056 = vmatmul.f32.gmra.mxu0 %v2055
    %v2057 = vpop.f32.mrf.mxu0
    %v2058 = vadd.f32 %v2007, %v2057
    %v2059 = vand.u32 %v1882, 4294901760
    %v2060 = vsub.f32 %v1882, %v2059
    %2061 = vmatmul.f32.gmra.mxu0 %v2060
    %v2062 = vpop.f32.mrf.mxu0
    %v2063 = vadd.f32 %v2011, %v2062
    %v2064 = vand.u32 %v1885, 4294901760
    %v2065 = vsub.f32 %v1885, %v2064
    %2066 = vmatmul.f32.gmra.mxu0 %v2065
    %v2067 = vpop.f32.mrf.mxu0
    %v2068 = vadd.f32 %v2015, %v2067
    %2069 = vdwg.mxu0
    %2070 = vmatpush.msra.mxu0 0.0
    %2071 = vmatpush.msra.mxu0 0.0
    %2072 = vmatpush.msra.mxu0 0.0
    %2073 = vmatpush.msra.mxu0 0.0
    %2074 = vmatpush.msra.mxu0 0.0
    %2075 = vmatpush.msra.mxu0 0.0
    %2076 = vmatpush.msra.mxu0 0.0
    %2077 = vmatpush.msra.mxu0 0.0
    %v2078 = vand.u32 %v1876, 4294901760
    %2079 = vmatpush.msra.mxu0 %v2078
    %v2080 = vand.u32 %v1875, 4294901760
    %2081 = vmatpush.msra.mxu0 %v2080
    %v2082 = vand.u32 %v1874, 4294901760
    %2083 = vmatpush.msra.mxu0 %v2082
    %v2084 = vand.u32 %v1873, 4294901760
    %2085 = vmatpush.msra.mxu0 %v2084
    %v2086 = vand.u32 %v1872, 4294901760
    %2087 = vmatpush.msra.mxu0 %v2086
    %v2088 = vand.u32 %v1871, 4294901760
    %2089 = vmatpush.msra.mxu0 %v2088
    %v2090 = vand.u32 %v1870, 4294901760
    %2091 = vmatpush.msra.mxu0 %v2090
    %v2092 = vand.u32 %v1869, 4294901760
    %2093 = vmatpush.msra.mxu0 %v2092
    %v2094 = vand.u32 %v1877, 4294901760
    %v2095 = vsub.f32 %v1877, %v2094
    %v2096 = vand.u32 %v2095, 4294901760
    %2097 = vmatmul.f32.gmra.mxu0 %v2096
    %v2098 = vpop.f32.mrf.mxu0
    %v2099 = vadd.f32 %v2053, %v2098
    %v2100 = vand.u32 %v1880, 4294901760
    %v2101 = vsub.f32 %v1880, %v2100
    %v2102 = vand.u32 %v2101, 4294901760
    %2103 = vmatmul.f32.gmra.mxu0 %v2102
    %v2104 = vpop.f32.mrf.mxu0
    %v2105 = vadd.f32 %v2058, %v2104
    %v2106 = vand.u32 %v1882, 4294901760
    %v2107 = vsub.f32 %v1882, %v2106
    %v2108 = vand.u32 %v2107, 4294901760
    %2109 = vmatmul.f32.gmra.mxu0 %v2108
    %v2110 = vpop.f32.mrf.mxu0
    %v2111 = vadd.f32 %v2063, %v2110
    %v2112 = vand.u32 %v1885, 4294901760
    %v2113 = vsub.f32 %v1885, %v2112
    %v2114 = vand.u32 %v2113, 4294901760
    %2115 = vmatmul.f32.gmra.mxu0 %v2114
    %v2116 = vpop.f32.mrf.mxu0
    %v2117 = vadd.f32 %v2068, %v2116
    %2118 = vdwg.mxu0
    %2119 = vmatpush.msra.mxu0 0.0
    %2120 = vmatpush.msra.mxu0 0.0
    %2121 = vmatpush.msra.mxu0 0.0
    %2122 = vmatpush.msra.mxu0 0.0
    %2123 = vmatpush.msra.mxu0 0.0
    %2124 = vmatpush.msra.mxu0 0.0
    %2125 = vmatpush.msra.mxu0 0.0
    %2126 = vmatpush.msra.mxu0 0.0
    %v2127 = vand.u32 %v1876, 4294901760
    %v2128 = vsub.f32 %v1876, %v2127
    %v2129 = vand.u32 %v2128, 4294901760
    %2130 = vmatpush.msra.mxu0 %v2129
    %v2131 = vand.u32 %v1875, 4294901760
    %v2132 = vsub.f32 %v1875, %v2131
    %v2133 = vand.u32 %v2132, 4294901760
    %2134 = vmatpush.msra.mxu0 %v2133
    %v2135 = vand.u32 %v1874, 4294901760
    %v2136 = vsub.f32 %v1874, %v2135
    %v2137 = vand.u32 %v2136, 4294901760
    %2138 = vmatpush.msra.mxu0 %v2137
    %v2139 = vand.u32 %v1873, 4294901760
    %v2140 = vsub.f32 %v1873, %v2139
    %v2141 = vand.u32 %v2140, 4294901760
    %2142 = vmatpush.msra.mxu0 %v2141
    %v2143 = vand.u32 %v1872, 4294901760
    %v2144 = vsub.f32 %v1872, %v2143
    %v2145 = vand.u32 %v2144, 4294901760
    %2146 = vmatpush.msra.mxu0 %v2145
    %v2147 = vand.u32 %v1871, 4294901760
    %v2148 = vsub.f32 %v1871, %v2147
    %v2149 = vand.u32 %v2148, 4294901760
    %2150 = vmatpush.msra.mxu0 %v2149
    %v2151 = vand.u32 %v1870, 4294901760
    %v2152 = vsub.f32 %v1870, %v2151
    %v2153 = vand.u32 %v2152, 4294901760
    %2154 = vmatpush.msra.mxu0 %v2153
    %v2155 = vand.u32 %v1869, 4294901760
    %v2156 = vsub.f32 %v1869, %v2155
    %v2157 = vand.u32 %v2156, 4294901760
    %2158 = vmatpush.msra.mxu0 %v2157
    %v2159 = vand.u32 %v1877, 4294901760
    %2160 = vmatmul.f32.gmra.mxu0 %v2159
    %v2161 = vpop.f32.mrf.mxu0
    %v2162 = vadd.f32 %v2099, %v2161
    %v2163 = vand.u32 %v1880, 4294901760
    %2164 = vmatmul.f32.gmra.mxu0 %v2163
    %v2165 = vpop.f32.mrf.mxu0
    %v2166 = vadd.f32 %v2105, %v2165
    %v2167 = vand.u32 %v1882, 4294901760
    %2168 = vmatmul.f32.gmra.mxu0 %v2167
    %v2169 = vpop.f32.mrf.mxu0
    %v2170 = vadd.f32 %v2111, %v2169
    %v2171 = vand.u32 %v1885, 4294901760
    %2172 = vmatmul.f32.gmra.mxu0 %v2171
    %v2173 = vpop.f32.mrf.mxu0
    %v2174 = vadd.f32 %v2117, %v2173
    %2175 = vdwg.mxu0
    %2176 = vmatpush.msra.mxu0 0.0
    %2177 = vmatpush.msra.mxu0 0.0
    %2178 = vmatpush.msra.mxu0 0.0
    %2179 = vmatpush.msra.mxu0 0.0
    %2180 = vmatpush.msra.mxu0 0.0
    %2181 = vmatpush.msra.mxu0 0.0
    %2182 = vmatpush.msra.mxu0 0.0
    %2183 = vmatpush.msra.mxu0 0.0
    %v2184 = vand.u32 %v1876, 4294901760
    %2185 = vmatpush.msra.mxu0 %v2184
    %v2186 = vand.u32 %v1875, 4294901760
    %2187 = vmatpush.msra.mxu0 %v2186
    %v2188 = vand.u32 %v1874, 4294901760
    %2189 = vmatpush.msra.mxu0 %v2188
    %v2190 = vand.u32 %v1873, 4294901760
    %2191 = vmatpush.msra.mxu0 %v2190
    %v2192 = vand.u32 %v1872, 4294901760
    %2193 = vmatpush.msra.mxu0 %v2192
    %v2194 = vand.u32 %v1871, 4294901760
    %2195 = vmatpush.msra.mxu0 %v2194
    %v2196 = vand.u32 %v1870, 4294901760
    %2197 = vmatpush.msra.mxu0 %v2196
    %v2198 = vand.u32 %v1869, 4294901760
    %2199 = vmatpush.msra.mxu0 %v2198
    %v2200 = vand.u32 %v1877, 4294901760
    %2201 = vmatmul.f32.gmra.mxu0 %v2200
    %v2202 = vpop.f32.mrf.mxu0
    %v2203 = vadd.f32 %v2162, %v2202
    %v2204 = vand.u32 %v1880, 4294901760
    %2205 = vmatmul.f32.gmra.mxu0 %v2204
    %v2206 = vpop.f32.mrf.mxu0
    %v2207 = vadd.f32 %v2166, %v2206
    %v2208 = vand.u32 %v1882, 4294901760
    %2209 = vmatmul.f32.gmra.mxu0 %v2208
    %v2210 = vpop.f32.mrf.mxu0
    %v2211 = vadd.f32 %v2170, %v2210
    %v2212 = vand.u32 %v1885, 4294901760
    %2213 = vmatmul.f32.gmra.mxu0 %v2212
    %v2214 = vpop.f32.mrf.mxu0
    %v2215 = vadd.f32 %v2174, %v2214
    %2216 = vdwg.mxu0
    %v2217 = vadd.f32 %v1854, %v2203
    %v2218 = vadd.f32 %v1858, %v2207
    %v2219 = vadd.f32 %v1862, %v2211
    %v2220 = vadd.f32 %v1866, %v2215
    %v2221 = vld [vmem:[%s8] sm:$0x1]
    %v2222 = vld [vmem:[%s9] sm:$0x1]
    %v2223 = vadd.f32 %v2217, %v2218
    %v2224 = vadd.f32 %v2223, %v2219
    %v2225 = vadd.f32 %v2224, %v2220
    %v2226 = vrot.slane %v2225, 4
    %v2227 = vadd.f32 %v2225, %v2226
    %v2228 = vrot.slane %v2227, 2
    %v2229 = vadd.f32 %v2227, %v2228
    %v2230 = vrot.slane %v2229, 1
    %v2231 = vadd.f32 %v2229, %v2230
    %v2232 = vmul.f32 %v2217, %v2217
    %v2233 = vmul.f32 %v2218, %v2218
    %v2234 = vmul.f32 %v2219, %v2219
    %v2235 = vmul.f32 %v2220, %v2220
    %v2236 = vadd.f32 %v2232, %v2233
    %v2237 = vadd.f32 %v2236, %v2234
    %v2238 = vadd.f32 %v2237, %v2235
    %v2239 = vrot.slane %v2238, 4
    %v2240 = vadd.f32 %v2238, %v2239
    %v2241 = vrot.slane %v2240, 2
    %v2242 = vadd.f32 %v2240, %v2241
    %v2243 = vrot.slane %v2242, 1
    %v2244 = vadd.f32 %v2242, %v2243
    %v2245 = vand.u32 %v67, 4294901760
    %2246 = vmatpush.msra.mxu0 %v2245
    %v2247 = vand.u32 %v66, 4294901760
    %2248 = vmatpush.msra.mxu0 %v2247
    %v2249 = vand.u32 %v65, 4294901760
    %2250 = vmatpush.msra.mxu0 %v2249
    %v2251 = vand.u32 %v64, 4294901760
    %2252 = vmatpush.msra.mxu0 %v2251
    %v2253 = vand.u32 %v63, 4294901760
    %2254 = vmatpush.msra.mxu0 %v2253
    %v2255 = vand.u32 %v62, 4294901760
    %2256 = vmatpush.msra.mxu0 %v2255
    %v2257 = vand.u32 %v61, 4294901760
    %2258 = vmatpush.msra.mxu0 %v2257
    %v2259 = vand.u32 %v60, 4294901760
    %2260 = vmatpush.msra.mxu0 %v2259
    %v2261 = vand.u32 %v59, 4294901760
    %2262 = vmatpush.msra.mxu0 %v2261
    %v2263 = vand.u32 %v58, 4294901760
    %2264 = vmatpush.msra.mxu0 %v2263
    %v2265 = vand.u32 %v57, 4294901760
    %2266 = vmatpush.msra.mxu0 %v2265
    %v2267 = vand.u32 %v56, 4294901760
    %2268 = vmatpush.msra.mxu0 %v2267
    %v2269 = vand.u32 %v55, 4294901760
    %2270 = vmatpush.msra.mxu0 %v2269
    %v2271 = vand.u32 %v54, 4294901760
    %2272 = vmatpush.msra.mxu0 %v2271
    %v2273 = vand.u32 %v53, 4294901760
    %2274 = vmatpush.msra.mxu0 %v2273
    %v2275 = vand.u32 %v52, 4294901760
    %2276 = vmatpush.msra.mxu0 %v2275
    %v2277 = vand.u32 %v2231, 4294901760
    %v2278 = vsub.f32 %v2231, %v2277
    %v2279 = vand.u32 %v2278, 4294901760
    %v2280 = vsub.f32 %v2278, %v2279
    %v2281 = vand.u32 %v2280, 4294901760
    %2282 = vmatmul.f32.gmra.mxu0 %v2281
    %v2283 = vpop.f32.mrf.mxu0
    %v2284 = vadd.f32 0.0, %v2283
    %2285 = vdwg.mxu0
    %v2286 = vand.u32 %v67, 4294901760
    %v2287 = vsub.f32 %v67, %v2286
    %v2288 = vand.u32 %v2287, 4294901760
    %v2289 = vsub.f32 %v2287, %v2288
    %v2290 = vand.u32 %v2289, 4294901760
    %2291 = vmatpush.msra.mxu0 %v2290
    %v2292 = vand.u32 %v66, 4294901760
    %v2293 = vsub.f32 %v66, %v2292
    %v2294 = vand.u32 %v2293, 4294901760
    %v2295 = vsub.f32 %v2293, %v2294
    %v2296 = vand.u32 %v2295, 4294901760
    %2297 = vmatpush.msra.mxu0 %v2296
    %v2298 = vand.u32 %v65, 4294901760
    %v2299 = vsub.f32 %v65, %v2298
    %v2300 = vand.u32 %v2299, 4294901760
    %v2301 = vsub.f32 %v2299, %v2300
    %v2302 = vand.u32 %v2301, 4294901760
    %2303 = vmatpush.msra.mxu0 %v2302
    %v2304 = vand.u32 %v64, 4294901760
    %v2305 = vsub.f32 %v64, %v2304
    %v2306 = vand.u32 %v2305, 4294901760
    %v2307 = vsub.f32 %v2305, %v2306
    %v2308 = vand.u32 %v2307, 4294901760
    %2309 = vmatpush.msra.mxu0 %v2308
    %v2310 = vand.u32 %v63, 4294901760
    %v2311 = vsub.f32 %v63, %v2310
    %v2312 = vand.u32 %v2311, 4294901760
    %v2313 = vsub.f32 %v2311, %v2312
    %v2314 = vand.u32 %v2313, 4294901760
    %2315 = vmatpush.msra.mxu0 %v2314
    %v2316 = vand.u32 %v62, 4294901760
    %v2317 = vsub.f32 %v62, %v2316
    %v2318 = vand.u32 %v2317, 4294901760
    %v2319 = vsub.f32 %v2317, %v2318
    %v2320 = vand.u32 %v2319, 4294901760
    %2321 = vmatpush.msra.mxu0 %v2320
    %v2322 = vand.u32 %v61, 4294901760
    %v2323 = vsub.f32 %v61, %v2322
    %v2324 = vand.u32 %v2323, 4294901760
    %v2325 = vsub.f32 %v2323, %v2324
    %v2326 = vand.u32 %v2325, 4294901760
    %2327 = vmatpush.msra.mxu0 %v2326
    %v2328 = vand.u32 %v60, 4294901760
    %v2329 = vsub.f32 %v60, %v2328
    %v2330 = vand.u32 %v2329, 4294901760
    %v2331 = vsub.f32 %v2329, %v2330
    %v2332 = vand.u32 %v2331, 4294901760
    %2333 = vmatpush.msra.mxu0 %v2332
    %v2334 = vand.u32 %v59, 4294901760
    %v2335 = vsub.f32 %v59, %v2334
    %v2336 = vand.u32 %v2335, 4294901760
    %v2337 = vsub.f32 %v2335, %v2336
    %v2338 = vand.u32 %v2337, 4294901760
    %2339 = vmatpush.msra.mxu0 %v2338
    %v2340 = vand.u32 %v58, 4294901760
    %v2341 = vsub.f32 %v58, %v2340
    %v2342 = vand.u32 %v2341, 4294901760
    %v2343 = vsub.f32 %v2341, %v2342
    %v2344 = vand.u32 %v2343, 4294901760
    %2345 = vmatpush.msra.mxu0 %v2344
    %v2346 = vand.u32 %v57, 4294901760
    %v2347 = vsub.f32 %v57, %v2346
    %v2348 = vand.u32 %v2347, 4294901760
    %v2349 = vsub.f32 %v2347, %v2348
    %v2350 = vand.u32 %v2349, 4294901760
    %2351 = vmatpush.msra.mxu0 %v2350
    %v2352 = vand.u32 %v56, 4294901760
    %v2353 = vsub.f32 %v56, %v2352
    %v2354 = vand.u32 %v2353, 4294901760
    %v2355 = vsub.f32 %v2353, %v2354
    %v2356 = vand.u32 %v2355, 4294901760
    %2357 = vmatpush.msra.mxu0 %v2356
    %v2358 = vand.u32 %v55, 4294901760
    %v2359 = vsub.f32 %v55, %v2358
    %v2360 = vand.u32 %v2359, 4294901760
    %v2361 = vsub.f32 %v2359, %v2360
    %v2362 = vand.u32 %v2361, 4294901760
    %2363 = vmatpush.msra.mxu0 %v2362
    %v2364 = vand.u32 %v54, 4294901760
    %v2365 = vsub.f32 %v54, %v2364
    %v2366 = vand.u32 %v2365, 4294901760
    %v2367 = vsub.f32 %v2365, %v2366
    %v2368 = vand.u32 %v2367, 4294901760
    %2369 = vmatpush.msra.mxu0 %v2368
    %v2370 = vand.u32 %v53, 4294901760
    %v2371 = vsub.f32 %v53, %v2370
    %v2372 = vand.u32 %v2371, 4294901760
    %v2373 = vsub.f32 %v2371, %v2372
    %v2374 = vand.u32 %v2373, 4294901760
    %2375 = vmatpush.msra.mxu0 %v2374
    %v2376 = vand.u32 %v52, 4294901760
    %v2377 = vsub.f32 %v52, %v2376
    %v2378 = vand.u32 %v2377, 4294901760
    %v2379 = vsub.f32 %v2377, %v2378
    %v2380 = vand.u32 %v2379, 4294901760
    %2381 = vmatpush.msra.mxu0 %v2380
    %v2382 = vand.u32 %v2231, 4294901760
    %2383 = vmatmul.f32.gmra.mxu0 %v2382
    %v2384 = vpop.f32.mrf.mxu0
    %v2385 = vadd.f32 %v2284, %v2384
    %2386 = vdwg.mxu0
    %v2387 = vand.u32 %v67, 4294901760
    %v2388 = vsub.f32 %v67, %v2387
    %2389 = vmatpush.msra.mxu0 %v2388
    %v2390 = vand.u32 %v66, 4294901760
    %v2391 = vsub.f32 %v66, %v2390
    %2392 = vmatpush.msra.mxu0 %v2391
    %v2393 = vand.u32 %v65, 4294901760
    %v2394 = vsub.f32 %v65, %v2393
    %2395 = vmatpush.msra.mxu0 %v2394
    %v2396 = vand.u32 %v64, 4294901760
    %v2397 = vsub.f32 %v64, %v2396
    %2398 = vmatpush.msra.mxu0 %v2397
    %v2399 = vand.u32 %v63, 4294901760
    %v2400 = vsub.f32 %v63, %v2399
    %2401 = vmatpush.msra.mxu0 %v2400
    %v2402 = vand.u32 %v62, 4294901760
    %v2403 = vsub.f32 %v62, %v2402
    %2404 = vmatpush.msra.mxu0 %v2403
    %v2405 = vand.u32 %v61, 4294901760
    %v2406 = vsub.f32 %v61, %v2405
    %2407 = vmatpush.msra.mxu0 %v2406
    %v2408 = vand.u32 %v60, 4294901760
    %v2409 = vsub.f32 %v60, %v2408
    %2410 = vmatpush.msra.mxu0 %v2409
    %v2411 = vand.u32 %v59, 4294901760
    %v2412 = vsub.f32 %v59, %v2411
    %2413 = vmatpush.msra.mxu0 %v2412
    %v2414 = vand.u32 %v58, 4294901760
    %v2415 = vsub.f32 %v58, %v2414
    %2416 = vmatpush.msra.mxu0 %v2415
    %v2417 = vand.u32 %v57, 4294901760
    %v2418 = vsub.f32 %v57, %v2417
    %2419 = vmatpush.msra.mxu0 %v2418
    %v2420 = vand.u32 %v56, 4294901760
    %v2421 = vsub.f32 %v56, %v2420
    %2422 = vmatpush.msra.mxu0 %v2421
    %v2423 = vand.u32 %v55, 4294901760
    %v2424 = vsub.f32 %v55, %v2423
    %2425 = vmatpush.msra.mxu0 %v2424
    %v2426 = vand.u32 %v54, 4294901760
    %v2427 = vsub.f32 %v54, %v2426
    %2428 = vmatpush.msra.mxu0 %v2427
    %v2429 = vand.u32 %v53, 4294901760
    %v2430 = vsub.f32 %v53, %v2429
    %2431 = vmatpush.msra.mxu0 %v2430
    %v2432 = vand.u32 %v52, 4294901760
    %v2433 = vsub.f32 %v52, %v2432
    %2434 = vmatpush.msra.mxu0 %v2433
    %v2435 = vand.u32 %v2231, 4294901760
    %v2436 = vsub.f32 %v2231, %v2435
    %2437 = vmatmul.f32.gmra.mxu0 %v2436
    %v2438 = vpop.f32.mrf.mxu0
    %v2439 = vadd.f32 %v2385, %v2438
    %2440 = vdwg.mxu0
    %v2441 = vand.u32 %v67, 4294901760
    %2442 = vmatpush.msra.mxu0 %v2441
    %v2443 = vand.u32 %v66, 4294901760
    %2444 = vmatpush.msra.mxu0 %v2443
    %v2445 = vand.u32 %v65, 4294901760
    %2446 = vmatpush.msra.mxu0 %v2445
    %v2447 = vand.u32 %v64, 4294901760
    %2448 = vmatpush.msra.mxu0 %v2447
    %v2449 = vand.u32 %v63, 4294901760
    %2450 = vmatpush.msra.mxu0 %v2449
    %v2451 = vand.u32 %v62, 4294901760
    %2452 = vmatpush.msra.mxu0 %v2451
    %v2453 = vand.u32 %v61, 4294901760
    %2454 = vmatpush.msra.mxu0 %v2453
    %v2455 = vand.u32 %v60, 4294901760
    %2456 = vmatpush.msra.mxu0 %v2455
    %v2457 = vand.u32 %v59, 4294901760
    %2458 = vmatpush.msra.mxu0 %v2457
    %v2459 = vand.u32 %v58, 4294901760
    %2460 = vmatpush.msra.mxu0 %v2459
    %v2461 = vand.u32 %v57, 4294901760
    %2462 = vmatpush.msra.mxu0 %v2461
    %v2463 = vand.u32 %v56, 4294901760
    %2464 = vmatpush.msra.mxu0 %v2463
    %v2465 = vand.u32 %v55, 4294901760
    %2466 = vmatpush.msra.mxu0 %v2465
    %v2467 = vand.u32 %v54, 4294901760
    %2468 = vmatpush.msra.mxu0 %v2467
    %v2469 = vand.u32 %v53, 4294901760
    %2470 = vmatpush.msra.mxu0 %v2469
    %v2471 = vand.u32 %v52, 4294901760
    %2472 = vmatpush.msra.mxu0 %v2471
    %v2473 = vand.u32 %v2231, 4294901760
    %v2474 = vsub.f32 %v2231, %v2473
    %v2475 = vand.u32 %v2474, 4294901760
    %2476 = vmatmul.f32.gmra.mxu0 %v2475
    %v2477 = vpop.f32.mrf.mxu0
    %v2478 = vadd.f32 %v2439, %v2477
    %2479 = vdwg.mxu0
    %v2480 = vand.u32 %v67, 4294901760
    %v2481 = vsub.f32 %v67, %v2480
    %v2482 = vand.u32 %v2481, 4294901760
    %2483 = vmatpush.msra.mxu0 %v2482
    %v2484 = vand.u32 %v66, 4294901760
    %v2485 = vsub.f32 %v66, %v2484
    %v2486 = vand.u32 %v2485, 4294901760
    %2487 = vmatpush.msra.mxu0 %v2486
    %v2488 = vand.u32 %v65, 4294901760
    %v2489 = vsub.f32 %v65, %v2488
    %v2490 = vand.u32 %v2489, 4294901760
    %2491 = vmatpush.msra.mxu0 %v2490
    %v2492 = vand.u32 %v64, 4294901760
    %v2493 = vsub.f32 %v64, %v2492
    %v2494 = vand.u32 %v2493, 4294901760
    %2495 = vmatpush.msra.mxu0 %v2494
    %v2496 = vand.u32 %v63, 4294901760
    %v2497 = vsub.f32 %v63, %v2496
    %v2498 = vand.u32 %v2497, 4294901760
    %2499 = vmatpush.msra.mxu0 %v2498
    %v2500 = vand.u32 %v62, 4294901760
    %v2501 = vsub.f32 %v62, %v2500
    %v2502 = vand.u32 %v2501, 4294901760
    %2503 = vmatpush.msra.mxu0 %v2502
    %v2504 = vand.u32 %v61, 4294901760
    %v2505 = vsub.f32 %v61, %v2504
    %v2506 = vand.u32 %v2505, 4294901760
    %2507 = vmatpush.msra.mxu0 %v2506
    %v2508 = vand.u32 %v60, 4294901760
    %v2509 = vsub.f32 %v60, %v2508
    %v2510 = vand.u32 %v2509, 4294901760
    %2511 = vmatpush.msra.mxu0 %v2510
    %v2512 = vand.u32 %v59, 4294901760
    %v2513 = vsub.f32 %v59, %v2512
    %v2514 = vand.u32 %v2513, 4294901760
    %2515 = vmatpush.msra.mxu0 %v2514
    %v2516 = vand.u32 %v58, 4294901760
    %v2517 = vsub.f32 %v58, %v2516
    %v2518 = vand.u32 %v2517, 4294901760
    %2519 = vmatpush.msra.mxu0 %v2518
    %v2520 = vand.u32 %v57, 4294901760
    %v2521 = vsub.f32 %v57, %v2520
    %v2522 = vand.u32 %v2521, 4294901760
    %2523 = vmatpush.msra.mxu0 %v2522
    %v2524 = vand.u32 %v56, 4294901760
    %v2525 = vsub.f32 %v56, %v2524
    %v2526 = vand.u32 %v2525, 4294901760
    %2527 = vmatpush.msra.mxu0 %v2526
    %v2528 = vand.u32 %v55, 4294901760
    %v2529 = vsub.f32 %v55, %v2528
    %v2530 = vand.u32 %v2529, 4294901760
    %2531 = vmatpush.msra.mxu0 %v2530
    %v2532 = vand.u32 %v54, 4294901760
    %v2533 = vsub.f32 %v54, %v2532
    %v2534 = vand.u32 %v2533, 4294901760
    %2535 = vmatpush.msra.mxu0 %v2534
    %v2536 = vand.u32 %v53, 4294901760
    %v2537 = vsub.f32 %v53, %v2536
    %v2538 = vand.u32 %v2537, 4294901760
    %2539 = vmatpush.msra.mxu0 %v2538
    %v2540 = vand.u32 %v52, 4294901760
    %v2541 = vsub.f32 %v52, %v2540
    %v2542 = vand.u32 %v2541, 4294901760
    %2543 = vmatpush.msra.mxu0 %v2542
    %v2544 = vand.u32 %v2231, 4294901760
    %2545 = vmatmul.f32.gmra.mxu0 %v2544
    %v2546 = vpop.f32.mrf.mxu0
    %v2547 = vadd.f32 %v2478, %v2546
    %2548 = vdwg.mxu0
    %v2549 = vand.u32 %v67, 4294901760
    %2550 = vmatpush.msra.mxu0 %v2549
    %v2551 = vand.u32 %v66, 4294901760
    %2552 = vmatpush.msra.mxu0 %v2551
    %v2553 = vand.u32 %v65, 4294901760
    %2554 = vmatpush.msra.mxu0 %v2553
    %v2555 = vand.u32 %v64, 4294901760
    %2556 = vmatpush.msra.mxu0 %v2555
    %v2557 = vand.u32 %v63, 4294901760
    %2558 = vmatpush.msra.mxu0 %v2557
    %v2559 = vand.u32 %v62, 4294901760
    %2560 = vmatpush.msra.mxu0 %v2559
    %v2561 = vand.u32 %v61, 4294901760
    %2562 = vmatpush.msra.mxu0 %v2561
    %v2563 = vand.u32 %v60, 4294901760
    %2564 = vmatpush.msra.mxu0 %v2563
    %v2565 = vand.u32 %v59, 4294901760
    %2566 = vmatpush.msra.mxu0 %v2565
    %v2567 = vand.u32 %v58, 4294901760
    %2568 = vmatpush.msra.mxu0 %v2567
    %v2569 = vand.u32 %v57, 4294901760
    %2570 = vmatpush.msra.mxu0 %v2569
    %v2571 = vand.u32 %v56, 4294901760
    %2572 = vmatpush.msra.mxu0 %v2571
    %v2573 = vand.u32 %v55, 4294901760
    %2574 = vmatpush.msra.mxu0 %v2573
    %v2575 = vand.u32 %v54, 4294901760
    %2576 = vmatpush.msra.mxu0 %v2575
    %v2577 = vand.u32 %v53, 4294901760
    %2578 = vmatpush.msra.mxu0 %v2577
    %v2579 = vand.u32 %v52, 4294901760
    %2580 = vmatpush.msra.mxu0 %v2579
    %v2581 = vand.u32 %v2231, 4294901760
    %2582 = vmatmul.f32.gmra.mxu0 %v2581
    %v2583 = vpop.f32.mrf.mxu0
    %v2584 = vadd.f32 %v2547, %v2583
    %2585 = vdwg.mxu0
    %v2586 = vand.u32 %v67, 4294901760
    %2587 = vmatpush.msra.mxu0 %v2586
    %v2588 = vand.u32 %v66, 4294901760
    %2589 = vmatpush.msra.mxu0 %v2588
    %v2590 = vand.u32 %v65, 4294901760
    %2591 = vmatpush.msra.mxu0 %v2590
    %v2592 = vand.u32 %v64, 4294901760
    %2593 = vmatpush.msra.mxu0 %v2592
    %v2594 = vand.u32 %v63, 4294901760
    %2595 = vmatpush.msra.mxu0 %v2594
    %v2596 = vand.u32 %v62, 4294901760
    %2597 = vmatpush.msra.mxu0 %v2596
    %v2598 = vand.u32 %v61, 4294901760
    %2599 = vmatpush.msra.mxu0 %v2598
    %v2600 = vand.u32 %v60, 4294901760
    %2601 = vmatpush.msra.mxu0 %v2600
    %v2602 = vand.u32 %v59, 4294901760
    %2603 = vmatpush.msra.mxu0 %v2602
    %v2604 = vand.u32 %v58, 4294901760
    %2605 = vmatpush.msra.mxu0 %v2604
    %v2606 = vand.u32 %v57, 4294901760
    %2607 = vmatpush.msra.mxu0 %v2606
    %v2608 = vand.u32 %v56, 4294901760
    %2609 = vmatpush.msra.mxu0 %v2608
    %v2610 = vand.u32 %v55, 4294901760
    %2611 = vmatpush.msra.mxu0 %v2610
    %v2612 = vand.u32 %v54, 4294901760
    %2613 = vmatpush.msra.mxu0 %v2612
    %v2614 = vand.u32 %v53, 4294901760
    %2615 = vmatpush.msra.mxu0 %v2614
    %v2616 = vand.u32 %v52, 4294901760
    %2617 = vmatpush.msra.mxu0 %v2616
    %v2618 = vand.u32 %v2244, 4294901760
    %v2619 = vsub.f32 %v2244, %v2618
    %v2620 = vand.u32 %v2619, 4294901760
    %v2621 = vsub.f32 %v2619, %v2620
    %v2622 = vand.u32 %v2621, 4294901760
    %2623 = vmatmul.f32.gmra.mxu0 %v2622
    %v2624 = vpop.f32.mrf.mxu0
    %v2625 = vadd.f32 0.0, %v2624
    %2626 = vdwg.mxu0
    %v2627 = vand.u32 %v67, 4294901760
    %v2628 = vsub.f32 %v67, %v2627
    %v2629 = vand.u32 %v2628, 4294901760
    %v2630 = vsub.f32 %v2628, %v2629
    %v2631 = vand.u32 %v2630, 4294901760
    %2632 = vmatpush.msra.mxu0 %v2631
    %v2633 = vand.u32 %v66, 4294901760
    %v2634 = vsub.f32 %v66, %v2633
    %v2635 = vand.u32 %v2634, 4294901760
    %v2636 = vsub.f32 %v2634, %v2635
    %v2637 = vand.u32 %v2636, 4294901760
    %2638 = vmatpush.msra.mxu0 %v2637
    %v2639 = vand.u32 %v65, 4294901760
    %v2640 = vsub.f32 %v65, %v2639
    %v2641 = vand.u32 %v2640, 4294901760
    %v2642 = vsub.f32 %v2640, %v2641
    %v2643 = vand.u32 %v2642, 4294901760
    %2644 = vmatpush.msra.mxu0 %v2643
    %v2645 = vand.u32 %v64, 4294901760
    %v2646 = vsub.f32 %v64, %v2645
    %v2647 = vand.u32 %v2646, 4294901760
    %v2648 = vsub.f32 %v2646, %v2647
    %v2649 = vand.u32 %v2648, 4294901760
    %2650 = vmatpush.msra.mxu0 %v2649
    %v2651 = vand.u32 %v63, 4294901760
    %v2652 = vsub.f32 %v63, %v2651
    %v2653 = vand.u32 %v2652, 4294901760
    %v2654 = vsub.f32 %v2652, %v2653
    %v2655 = vand.u32 %v2654, 4294901760
    %2656 = vmatpush.msra.mxu0 %v2655
    %v2657 = vand.u32 %v62, 4294901760
    %v2658 = vsub.f32 %v62, %v2657
    %v2659 = vand.u32 %v2658, 4294901760
    %v2660 = vsub.f32 %v2658, %v2659
    %v2661 = vand.u32 %v2660, 4294901760
    %2662 = vmatpush.msra.mxu0 %v2661
    %v2663 = vand.u32 %v61, 4294901760
    %v2664 = vsub.f32 %v61, %v2663
    %v2665 = vand.u32 %v2664, 4294901760
    %v2666 = vsub.f32 %v2664, %v2665
    %v2667 = vand.u32 %v2666, 4294901760
    %2668 = vmatpush.msra.mxu0 %v2667
    %v2669 = vand.u32 %v60, 4294901760
    %v2670 = vsub.f32 %v60, %v2669
    %v2671 = vand.u32 %v2670, 4294901760
    %v2672 = vsub.f32 %v2670, %v2671
    %v2673 = vand.u32 %v2672, 4294901760
    %2674 = vmatpush.msra.mxu0 %v2673
    %v2675 = vand.u32 %v59, 4294901760
    %v2676 = vsub.f32 %v59, %v2675
    %v2677 = vand.u32 %v2676, 4294901760
    %v2678 = vsub.f32 %v2676, %v2677
    %v2679 = vand.u32 %v2678, 4294901760
    %2680 = vmatpush.msra.mxu0 %v2679
    %v2681 = vand.u32 %v58, 4294901760
    %v2682 = vsub.f32 %v58, %v2681
    %v2683 = vand.u32 %v2682, 4294901760
    %v2684 = vsub.f32 %v2682, %v2683
    %v2685 = vand.u32 %v2684, 4294901760
    %2686 = vmatpush.msra.mxu0 %v2685
    %v2687 = vand.u32 %v57, 4294901760
    %v2688 = vsub.f32 %v57, %v2687
    %v2689 = vand.u32 %v2688, 4294901760
    %v2690 = vsub.f32 %v2688, %v2689
    %v2691 = vand.u32 %v2690, 4294901760
    %2692 = vmatpush.msra.mxu0 %v2691
    %v2693 = vand.u32 %v56, 4294901760
    %v2694 = vsub.f32 %v56, %v2693
    %v2695 = vand.u32 %v2694, 4294901760
    %v2696 = vsub.f32 %v2694, %v2695
    %v2697 = vand.u32 %v2696, 4294901760
    %2698 = vmatpush.msra.mxu0 %v2697
    %v2699 = vand.u32 %v55, 4294901760
    %v2700 = vsub.f32 %v55, %v2699
    %v2701 = vand.u32 %v2700, 4294901760
    %v2702 = vsub.f32 %v2700, %v2701
    %v2703 = vand.u32 %v2702, 4294901760
    %2704 = vmatpush.msra.mxu0 %v2703
    %v2705 = vand.u32 %v54, 4294901760
    %v2706 = vsub.f32 %v54, %v2705
    %v2707 = vand.u32 %v2706, 4294901760
    %v2708 = vsub.f32 %v2706, %v2707
    %v2709 = vand.u32 %v2708, 4294901760
    %2710 = vmatpush.msra.mxu0 %v2709
    %v2711 = vand.u32 %v53, 4294901760
    %v2712 = vsub.f32 %v53, %v2711
    %v2713 = vand.u32 %v2712, 4294901760
    %v2714 = vsub.f32 %v2712, %v2713
    %v2715 = vand.u32 %v2714, 4294901760
    %2716 = vmatpush.msra.mxu0 %v2715
    %v2717 = vand.u32 %v52, 4294901760
    %v2718 = vsub.f32 %v52, %v2717
    %v2719 = vand.u32 %v2718, 4294901760
    %v2720 = vsub.f32 %v2718, %v2719
    %v2721 = vand.u32 %v2720, 4294901760
    %2722 = vmatpush.msra.mxu0 %v2721
    %v2723 = vand.u32 %v2244, 4294901760
    %2724 = vmatmul.f32.gmra.mxu0 %v2723
    %v2725 = vpop.f32.mrf.mxu0
    %v2726 = vadd.f32 %v2625, %v2725
    %2727 = vdwg.mxu0
    %v2728 = vand.u32 %v67, 4294901760
    %v2729 = vsub.f32 %v67, %v2728
    %2730 = vmatpush.msra.mxu0 %v2729
    %v2731 = vand.u32 %v66, 4294901760
    %v2732 = vsub.f32 %v66, %v2731
    %2733 = vmatpush.msra.mxu0 %v2732
    %v2734 = vand.u32 %v65, 4294901760
    %v2735 = vsub.f32 %v65, %v2734
    %2736 = vmatpush.msra.mxu0 %v2735
    %v2737 = vand.u32 %v64, 4294901760
    %v2738 = vsub.f32 %v64, %v2737
    %2739 = vmatpush.msra.mxu0 %v2738
    %v2740 = vand.u32 %v63, 4294901760
    %v2741 = vsub.f32 %v63, %v2740
    %2742 = vmatpush.msra.mxu0 %v2741
    %v2743 = vand.u32 %v62, 4294901760
    %v2744 = vsub.f32 %v62, %v2743
    %2745 = vmatpush.msra.mxu0 %v2744
    %v2746 = vand.u32 %v61, 4294901760
    %v2747 = vsub.f32 %v61, %v2746
    %2748 = vmatpush.msra.mxu0 %v2747
    %v2749 = vand.u32 %v60, 4294901760
    %v2750 = vsub.f32 %v60, %v2749
    %2751 = vmatpush.msra.mxu0 %v2750
    %v2752 = vand.u32 %v59, 4294901760
    %v2753 = vsub.f32 %v59, %v2752
    %2754 = vmatpush.msra.mxu0 %v2753
    %v2755 = vand.u32 %v58, 4294901760
    %v2756 = vsub.f32 %v58, %v2755
    %2757 = vmatpush.msra.mxu0 %v2756
    %v2758 = vand.u32 %v57, 4294901760
    %v2759 = vsub.f32 %v57, %v2758
    %2760 = vmatpush.msra.mxu0 %v2759
    %v2761 = vand.u32 %v56, 4294901760
    %v2762 = vsub.f32 %v56, %v2761
    %2763 = vmatpush.msra.mxu0 %v2762
    %v2764 = vand.u32 %v55, 4294901760
    %v2765 = vsub.f32 %v55, %v2764
    %2766 = vmatpush.msra.mxu0 %v2765
    %v2767 = vand.u32 %v54, 4294901760
    %v2768 = vsub.f32 %v54, %v2767
    %2769 = vmatpush.msra.mxu0 %v2768
    %v2770 = vand.u32 %v53, 4294901760
    %v2771 = vsub.f32 %v53, %v2770
    %2772 = vmatpush.msra.mxu0 %v2771
    %v2773 = vand.u32 %v52, 4294901760
    %v2774 = vsub.f32 %v52, %v2773
    %2775 = vmatpush.msra.mxu0 %v2774
    %v2776 = vand.u32 %v2244, 4294901760
    %v2777 = vsub.f32 %v2244, %v2776
    %2778 = vmatmul.f32.gmra.mxu0 %v2777
    %v2779 = vpop.f32.mrf.mxu0
    %v2780 = vadd.f32 %v2726, %v2779
    %2781 = vdwg.mxu0
    %v2782 = vand.u32 %v67, 4294901760
    %2783 = vmatpush.msra.mxu0 %v2782
    %v2784 = vand.u32 %v66, 4294901760
    %2785 = vmatpush.msra.mxu0 %v2784
    %v2786 = vand.u32 %v65, 4294901760
    %2787 = vmatpush.msra.mxu0 %v2786
    %v2788 = vand.u32 %v64, 4294901760
    %2789 = vmatpush.msra.mxu0 %v2788
    %v2790 = vand.u32 %v63, 4294901760
    %2791 = vmatpush.msra.mxu0 %v2790
    %v2792 = vand.u32 %v62, 4294901760
    %2793 = vmatpush.msra.mxu0 %v2792
    %v2794 = vand.u32 %v61, 4294901760
    %2795 = vmatpush.msra.mxu0 %v2794
    %v2796 = vand.u32 %v60, 4294901760
    %2797 = vmatpush.msra.mxu0 %v2796
    %v2798 = vand.u32 %v59, 4294901760
    %2799 = vmatpush.msra.mxu0 %v2798
    %v2800 = vand.u32 %v58, 4294901760
    %2801 = vmatpush.msra.mxu0 %v2800
    %v2802 = vand.u32 %v57, 4294901760
    %2803 = vmatpush.msra.mxu0 %v2802
    %v2804 = vand.u32 %v56, 4294901760
    %2805 = vmatpush.msra.mxu0 %v2804
    %v2806 = vand.u32 %v55, 4294901760
    %2807 = vmatpush.msra.mxu0 %v2806
    %v2808 = vand.u32 %v54, 4294901760
    %2809 = vmatpush.msra.mxu0 %v2808
    %v2810 = vand.u32 %v53, 4294901760
    %2811 = vmatpush.msra.mxu0 %v2810
    %v2812 = vand.u32 %v52, 4294901760
    %2813 = vmatpush.msra.mxu0 %v2812
    %v2814 = vand.u32 %v2244, 4294901760
    %v2815 = vsub.f32 %v2244, %v2814
    %v2816 = vand.u32 %v2815, 4294901760
    %2817 = vmatmul.f32.gmra.mxu0 %v2816
    %v2818 = vpop.f32.mrf.mxu0
    %v2819 = vadd.f32 %v2780, %v2818
    %2820 = vdwg.mxu0
    %v2821 = vand.u32 %v67, 4294901760
    %v2822 = vsub.f32 %v67, %v2821
    %v2823 = vand.u32 %v2822, 4294901760
    %2824 = vmatpush.msra.mxu0 %v2823
    %v2825 = vand.u32 %v66, 4294901760
    %v2826 = vsub.f32 %v66, %v2825
    %v2827 = vand.u32 %v2826, 4294901760
    %2828 = vmatpush.msra.mxu0 %v2827
    %v2829 = vand.u32 %v65, 4294901760
    %v2830 = vsub.f32 %v65, %v2829
    %v2831 = vand.u32 %v2830, 4294901760
    %2832 = vmatpush.msra.mxu0 %v2831
    %v2833 = vand.u32 %v64, 4294901760
    %v2834 = vsub.f32 %v64, %v2833
    %v2835 = vand.u32 %v2834, 4294901760
    %2836 = vmatpush.msra.mxu0 %v2835
    %v2837 = vand.u32 %v63, 4294901760
    %v2838 = vsub.f32 %v63, %v2837
    %v2839 = vand.u32 %v2838, 4294901760
    %2840 = vmatpush.msra.mxu0 %v2839
    %v2841 = vand.u32 %v62, 4294901760
    %v2842 = vsub.f32 %v62, %v2841
    %v2843 = vand.u32 %v2842, 4294901760
    %2844 = vmatpush.msra.mxu0 %v2843
    %v2845 = vand.u32 %v61, 4294901760
    %v2846 = vsub.f32 %v61, %v2845
    %v2847 = vand.u32 %v2846, 4294901760
    %2848 = vmatpush.msra.mxu0 %v2847
    %v2849 = vand.u32 %v60, 4294901760
    %v2850 = vsub.f32 %v60, %v2849
    %v2851 = vand.u32 %v2850, 4294901760
    %2852 = vmatpush.msra.mxu0 %v2851
    %v2853 = vand.u32 %v59, 4294901760
    %v2854 = vsub.f32 %v59, %v2853
    %v2855 = vand.u32 %v2854, 4294901760
    %2856 = vmatpush.msra.mxu0 %v2855
    %v2857 = vand.u32 %v58, 4294901760
    %v2858 = vsub.f32 %v58, %v2857
    %v2859 = vand.u32 %v2858, 4294901760
    %2860 = vmatpush.msra.mxu0 %v2859
    %v2861 = vand.u32 %v57, 4294901760
    %v2862 = vsub.f32 %v57, %v2861
    %v2863 = vand.u32 %v2862, 4294901760
    %2864 = vmatpush.msra.mxu0 %v2863
    %v2865 = vand.u32 %v56, 4294901760
    %v2866 = vsub.f32 %v56, %v2865
    %v2867 = vand.u32 %v2866, 4294901760
    %2868 = vmatpush.msra.mxu0 %v2867
    %v2869 = vand.u32 %v55, 4294901760
    %v2870 = vsub.f32 %v55, %v2869
    %v2871 = vand.u32 %v2870, 4294901760
    %2872 = vmatpush.msra.mxu0 %v2871
    %v2873 = vand.u32 %v54, 4294901760
    %v2874 = vsub.f32 %v54, %v2873
    %v2875 = vand.u32 %v2874, 4294901760
    %2876 = vmatpush.msra.mxu0 %v2875
    %v2877 = vand.u32 %v53, 4294901760
    %v2878 = vsub.f32 %v53, %v2877
    %v2879 = vand.u32 %v2878, 4294901760
    %2880 = vmatpush.msra.mxu0 %v2879
    %v2881 = vand.u32 %v52, 4294901760
    %v2882 = vsub.f32 %v52, %v2881
    %v2883 = vand.u32 %v2882, 4294901760
    %2884 = vmatpush.msra.mxu0 %v2883
    %v2885 = vand.u32 %v2244, 4294901760
    %2886 = vmatmul.f32.gmra.mxu0 %v2885
    %v2887 = vpop.f32.mrf.mxu0
    %v2888 = vadd.f32 %v2819, %v2887
    %2889 = vdwg.mxu0
    %v2890 = vand.u32 %v67, 4294901760
    %2891 = vmatpush.msra.mxu0 %v2890
    %v2892 = vand.u32 %v66, 4294901760
    %2893 = vmatpush.msra.mxu0 %v2892
    %v2894 = vand.u32 %v65, 4294901760
    %2895 = vmatpush.msra.mxu0 %v2894
    %v2896 = vand.u32 %v64, 4294901760
    %2897 = vmatpush.msra.mxu0 %v2896
    %v2898 = vand.u32 %v63, 4294901760
    %2899 = vmatpush.msra.mxu0 %v2898
    %v2900 = vand.u32 %v62, 4294901760
    %2901 = vmatpush.msra.mxu0 %v2900
    %v2902 = vand.u32 %v61, 4294901760
    %2903 = vmatpush.msra.mxu0 %v2902
    %v2904 = vand.u32 %v60, 4294901760
    %2905 = vmatpush.msra.mxu0 %v2904
    %v2906 = vand.u32 %v59, 4294901760
    %2907 = vmatpush.msra.mxu0 %v2906
    %v2908 = vand.u32 %v58, 4294901760
    %2909 = vmatpush.msra.mxu0 %v2908
    %v2910 = vand.u32 %v57, 4294901760
    %2911 = vmatpush.msra.mxu0 %v2910
    %v2912 = vand.u32 %v56, 4294901760
    %2913 = vmatpush.msra.mxu0 %v2912
    %v2914 = vand.u32 %v55, 4294901760
    %2915 = vmatpush.msra.mxu0 %v2914
    %v2916 = vand.u32 %v54, 4294901760
    %2917 = vmatpush.msra.mxu0 %v2916
    %v2918 = vand.u32 %v53, 4294901760
    %2919 = vmatpush.msra.mxu0 %v2918
    %v2920 = vand.u32 %v52, 4294901760
    %2921 = vmatpush.msra.mxu0 %v2920
    %v2922 = vand.u32 %v2244, 4294901760
    %2923 = vmatmul.f32.gmra.mxu0 %v2922
    %v2924 = vpop.f32.mrf.mxu0
    %v2925 = vadd.f32 %v2888, %v2924
    %2926 = vdwg.mxu0
    %v2927 = vmul.f32 %v2584, %v2584
    %v2928 = vsub.f32 %v2925, %v2927
    %v2929 = vadd.f32 %v2928, 1e-05
    %v2930 = vrsqrt.pop %v2929
    %v2931 = vmul.f32 %v2930, %v2929
    %v2932 = vmul.f32 %v2931, %v2930
    %v2933 = vmul.f32 0.5, %v2932
    %v2934 = vsub.f32 1.5, %v2933
    %v2935 = vmul.f32 %v2930, %v2934
    %vm2936 = vweird.f32 %v2929
    %vm2937 = vweird.f32 %v2930
    %vm2938 = vmor %vm2936, %vm2937
    %v2939 = vsel %vm2938, %v2930, %v2935
    %v2940 = vmul.f32 %v2221, %v2939
    %v2941 = vmul.f32 %v2584, %v2940
    %v2942 = vsub.f32 %v2222, %v2941
    %v2944 = vperm.slane %v2940, 0
    %v2946 = vmul.f32 %v2217, %v2944
    %v2947 = vmul.f32 %v2218, %v2944
    %v2948 = vmul.f32 %v2219, %v2944
    %v2949 = vmul.f32 %v2220, %v2944
    %v2951 = vperm.slane %v2942, 0
    %v2953 = vadd.f32 %v2946, %v2951
    %v2954 = vadd.f32 %v2947, %v2951
    %v2955 = vadd.f32 %v2948, %v2951
    %v2956 = vadd.f32 %v2949, %v2951
    %v2957 = vmax.f32 %v2953, 0.0
    %v2958 = vmax.f32 %v2954, 0.0
    %v2959 = vmax.f32 %v2955, 0.0
    %v2960 = vmax.f32 %v2956, 0.0
    %v2963 = vrot.slane %v2957, 1
    %v2964 = vrot.slane %v2959, 1
    %v2969 = vrot.slane %v2957, 7
    %v2970 = vrot.slane %v2958, 7
    %v2971 = vsel %vm1159, %v2969, %v2970
    %v2972 = vrot.slane %v2959, 7
    %v2973 = vrot.slane %v2960, 7
    %v2974 = vsel %vm1159, %v2972, %v2973
    %v2979 = vsel %vm1159, %v2963, %v2969
    %v2980 = vsel %vm1159, %v2964, %v2972
    %v2981 = vrot.slane %v2958, 1
    %v2982 = vsel %vm1170, %v2963, %v2981
    %v2983 = vrot.slane %v2960, 1
    %v2984 = vsel %vm1170, %v2964, %v2983
    %v2991 = vsel %vm1170, %v2981, %v2970
    %v2992 = vsel %vm1170, %v2983, %v2973
    %v2993 = vld [vmem:[%s2] sm:$0xff]
    %v2994 = vld [vmem:[%s2 + $0x8] sm:$0xff]
    %v2995 = vld [vmem:[%s2 + $0x10] sm:$0xff]
    %v2996 = vld [vmem:[%s2 + $0x18] sm:$0xff]
    %v2997 = vld [vmem:[%s2 + $0x20] sm:$0xff]
    %v2998 = vld [vmem:[%s2 + $0x28] sm:$0xff]
    %v2999 = vld [vmem:[%s2 + $0x30] sm:$0xff]
    %v3000 = vld [vmem:[%s2 + $0x38] sm:$0xff]
    %v3001 = vld [vmem:[%s2 + $0x40] sm:$0xff]
    %v3002 = vld [vmem:[%s2 + $0x48] sm:$0xff]
    %v3003 = vld [vmem:[%s2 + $0x50] sm:$0xff]
    %v3004 = vld [vmem:[%s2 + $0x58] sm:$0xff]
    %v3005 = vld [vmem:[%s2 + $0x60] sm:$0xff]
    %v3006 = vld [vmem:[%s2 + $0x68] sm:$0xff]
    %v3007 = vld [vmem:[%s2 + $0x70] sm:$0xff]
    %v3008 = vld [vmem:[%s2 + $0x78] sm:$0xff]
    %s3009 = scalar_lea.vmem %s2, 128
    %v3010 = vld [vmem:[%s3009] sm:$0xff]
    %v3011 = vld [vmem:[%s3009 + $0x8] sm:$0xff]
    %v3012 = vld [vmem:[%s3009 + $0x10] sm:$0xff]
    %v3013 = vld [vmem:[%s3009 + $0x18] sm:$0xff]
    %v3014 = vld [vmem:[%s3009 + $0x20] sm:$0xff]
    %v3015 = vld [vmem:[%s3009 + $0x28] sm:$0xff]
    %v3016 = vld [vmem:[%s3009 + $0x30] sm:$0xff]
    %v3017 = vld [vmem:[%s3009 + $0x38] sm:$0xff]
    %v3018 = vld [vmem:[%s3009 + $0x40] sm:$0xff]
    %v3019 = vld [vmem:[%s3009 + $0x48] sm:$0xff]
    %v3020 = vld [vmem:[%s3009 + $0x50] sm:$0xff]
    %v3021 = vld [vmem:[%s3009 + $0x58] sm:$0xff]
    %v3022 = vld [vmem:[%s3009 + $0x60] sm:$0xff]
    %v3023 = vld [vmem:[%s3009 + $0x68] sm:$0xff]
    %v3024 = vld [vmem:[%s3009 + $0x70] sm:$0xff]
    %v3025 = vld [vmem:[%s3009 + $0x78] sm:$0xff]
    %v3026 = vand.u32 %v3025, 4294901760
    %3027 = vmatpush.msra.mxu0 %v3026
    %v3028 = vand.u32 %v3024, 4294901760
    %3029 = vmatpush.msra.mxu0 %v3028
    %v3030 = vand.u32 %v3023, 4294901760
    %3031 = vmatpush.msra.mxu0 %v3030
    %v3032 = vand.u32 %v3022, 4294901760
    %3033 = vmatpush.msra.mxu0 %v3032
    %v3034 = vand.u32 %v3021, 4294901760
    %3035 = vmatpush.msra.mxu0 %v3034
    %v3036 = vand.u32 %v3020, 4294901760
    %3037 = vmatpush.msra.mxu0 %v3036
    %v3038 = vand.u32 %v3019, 4294901760
    %3039 = vmatpush.msra.mxu0 %v3038
    %v3040 = vand.u32 %v3018, 4294901760
    %3041 = vmatpush.msra.mxu0 %v3040
    %v3042 = vand.u32 %v3017, 4294901760
    %3043 = vmatpush.msra.mxu0 %v3042
    %v3044 = vand.u32 %v3016, 4294901760
    %3045 = vmatpush.msra.mxu0 %v3044
    %v3046 = vand.u32 %v3015, 4294901760
    %3047 = vmatpush.msra.mxu0 %v3046
    %v3048 = vand.u32 %v3014, 4294901760
    %3049 = vmatpush.msra.mxu0 %v3048
    %v3050 = vand.u32 %v3013, 4294901760
    %3051 = vmatpush.msra.mxu0 %v3050
    %v3052 = vand.u32 %v3012, 4294901760
    %3053 = vmatpush.msra.mxu0 %v3052
    %v3054 = vand.u32 %v3011, 4294901760
    %3055 = vmatpush.msra.mxu0 %v3054
    %v3056 = vand.u32 %v3010, 4294901760
    %3057 = vmatpush.msra.mxu0 %v3056
    %v3058 = vand.u32 %v2957, 4294901760
    %v3059 = vsub.f32 %v2957, %v3058
    %v3060 = vand.u32 %v3059, 4294901760
    %v3061 = vsub.f32 %v3059, %v3060
    %v3062 = vand.u32 %v3061, 4294901760
    %3063 = vmatmul.f32.gmra.mxu0 %v3062
    %v3064 = vpop.f32.mrf.mxu0
    %v3065 = vadd.f32 0.0, %v3064
    %v3066 = vand.u32 %v2958, 4294901760
    %v3067 = vsub.f32 %v2958, %v3066
    %v3068 = vand.u32 %v3067, 4294901760
    %v3069 = vsub.f32 %v3067, %v3068
    %v3070 = vand.u32 %v3069, 4294901760
    %3071 = vmatmul.f32.gmra.mxu0 %v3070
    %v3072 = vpop.f32.mrf.mxu0
    %v3073 = vadd.f32 0.0, %v3072
    %v3074 = vand.u32 %v2959, 4294901760
    %v3075 = vsub.f32 %v2959, %v3074
    %v3076 = vand.u32 %v3075, 4294901760
    %v3077 = vsub.f32 %v3075, %v3076
    %v3078 = vand.u32 %v3077, 4294901760
    %3079 = vmatmul.f32.gmra.mxu0 %v3078
    %v3080 = vpop.f32.mrf.mxu0
    %v3081 = vadd.f32 0.0, %v3080
    %v3082 = vand.u32 %v2960, 4294901760
    %v3083 = vsub.f32 %v2960, %v3082
    %v3084 = vand.u32 %v3083, 4294901760
    %v3085 = vsub.f32 %v3083, %v3084
    %v3086 = vand.u32 %v3085, 4294901760
    %3087 = vmatmul.f32.gmra.mxu0 %v3086
    %v3088 = vpop.f32.mrf.mxu0
    %v3089 = vadd.f32 0.0, %v3088
    %3090 = vdwg.mxu0
    %v3091 = vand.u32 %v3025, 4294901760
    %v3092 = vsub.f32 %v3025, %v3091
    %v3093 = vand.u32 %v3092, 4294901760
    %v3094 = vsub.f32 %v3092, %v3093
    %v3095 = vand.u32 %v3094, 4294901760
    %3096 = vmatpush.msra.mxu0 %v3095
    %v3097 = vand.u32 %v3024, 4294901760
    %v3098 = vsub.f32 %v3024, %v3097
    %v3099 = vand.u32 %v3098, 4294901760
    %v3100 = vsub.f32 %v3098, %v3099
    %v3101 = vand.u32 %v3100, 4294901760
    %3102 = vmatpush.msra.mxu0 %v3101
    %v3103 = vand.u32 %v3023, 4294901760
    %v3104 = vsub.f32 %v3023, %v3103
    %v3105 = vand.u32 %v3104, 4294901760
    %v3106 = vsub.f32 %v3104, %v3105
    %v3107 = vand.u32 %v3106, 4294901760
    %3108 = vmatpush.msra.mxu0 %v3107
    %v3109 = vand.u32 %v3022, 4294901760
    %v3110 = vsub.f32 %v3022, %v3109
    %v3111 = vand.u32 %v3110, 4294901760
    %v3112 = vsub.f32 %v3110, %v3111
    %v3113 = vand.u32 %v3112, 4294901760
    %3114 = vmatpush.msra.mxu0 %v3113
    %v3115 = vand.u32 %v3021, 4294901760
    %v3116 = vsub.f32 %v3021, %v3115
    %v3117 = vand.u32 %v3116, 4294901760
    %v3118 = vsub.f32 %v3116, %v3117
    %v3119 = vand.u32 %v3118, 4294901760
    %3120 = vmatpush.msra.mxu0 %v3119
    %v3121 = vand.u32 %v3020, 4294901760
    %v3122 = vsub.f32 %v3020, %v3121
    %v3123 = vand.u32 %v3122, 4294901760
    %v3124 = vsub.f32 %v3122, %v3123
    %v3125 = vand.u32 %v3124, 4294901760
    %3126 = vmatpush.msra.mxu0 %v3125
    %v3127 = vand.u32 %v3019, 4294901760
    %v3128 = vsub.f32 %v3019, %v3127
    %v3129 = vand.u32 %v3128, 4294901760
    %v3130 = vsub.f32 %v3128, %v3129
    %v3131 = vand.u32 %v3130, 4294901760
    %3132 = vmatpush.msra.mxu0 %v3131
    %v3133 = vand.u32 %v3018, 4294901760
    %v3134 = vsub.f32 %v3018, %v3133
    %v3135 = vand.u32 %v3134, 4294901760
    %v3136 = vsub.f32 %v3134, %v3135
    %v3137 = vand.u32 %v3136, 4294901760
    %3138 = vmatpush.msra.mxu0 %v3137
    %v3139 = vand.u32 %v3017, 4294901760
    %v3140 = vsub.f32 %v3017, %v3139
    %v3141 = vand.u32 %v3140, 4294901760
    %v3142 = vsub.f32 %v3140, %v3141
    %v3143 = vand.u32 %v3142, 4294901760
    %3144 = vmatpush.msra.mxu0 %v3143
    %v3145 = vand.u32 %v3016, 4294901760
    %v3146 = vsub.f32 %v3016, %v3145
    %v3147 = vand.u32 %v3146, 4294901760
    %v3148 = vsub.f32 %v3146, %v3147
    %v3149 = vand.u32 %v3148, 4294901760
    %3150 = vmatpush.msra.mxu0 %v3149
    %v3151 = vand.u32 %v3015, 4294901760
    %v3152 = vsub.f32 %v3015, %v3151
    %v3153 = vand.u32 %v3152, 4294901760
    %v3154 = vsub.f32 %v3152, %v3153
    %v3155 = vand.u32 %v3154, 4294901760
    %3156 = vmatpush.msra.mxu0 %v3155
    %v3157 = vand.u32 %v3014, 4294901760
    %v3158 = vsub.f32 %v3014, %v3157
    %v3159 = vand.u32 %v3158, 4294901760
    %v3160 = vsub.f32 %v3158, %v3159
    %v3161 = vand.u32 %v3160, 4294901760
    %3162 = vmatpush.msra.mxu0 %v3161
    %v3163 = vand.u32 %v3013, 4294901760
    %v3164 = vsub.f32 %v3013, %v3163
    %v3165 = vand.u32 %v3164, 4294901760
    %v3166 = vsub.f32 %v3164, %v3165
    %v3167 = vand.u32 %v3166, 4294901760
    %3168 = vmatpush.msra.mxu0 %v3167
    %v3169 = vand.u32 %v3012, 4294901760
    %v3170 = vsub.f32 %v3012, %v3169
    %v3171 = vand.u32 %v3170, 4294901760
    %v3172 = vsub.f32 %v3170, %v3171
    %v3173 = vand.u32 %v3172, 4294901760
    %3174 = vmatpush.msra.mxu0 %v3173
    %v3175 = vand.u32 %v3011, 4294901760
    %v3176 = vsub.f32 %v3011, %v3175
    %v3177 = vand.u32 %v3176, 4294901760
    %v3178 = vsub.f32 %v3176, %v3177
    %v3179 = vand.u32 %v3178, 4294901760
    %3180 = vmatpush.msra.mxu0 %v3179
    %v3181 = vand.u32 %v3010, 4294901760
    %v3182 = vsub.f32 %v3010, %v3181
    %v3183 = vand.u32 %v3182, 4294901760
    %v3184 = vsub.f32 %v3182, %v3183
    %v3185 = vand.u32 %v3184, 4294901760
    %3186 = vmatpush.msra.mxu0 %v3185
    %v3187 = vand.u32 %v2957, 4294901760
    %3188 = vmatmul.f32.gmra.mxu0 %v3187
    %v3189 = vpop.f32.mrf.mxu0
    %v3190 = vadd.f32 %v3065, %v3189
    %v3191 = vand.u32 %v2958, 4294901760
    %3192 = vmatmul.f32.gmra.mxu0 %v3191
    %v3193 = vpop.f32.mrf.mxu0
    %v3194 = vadd.f32 %v3073, %v3193
    %v3195 = vand.u32 %v2959, 4294901760
    %3196 = vmatmul.f32.gmra.mxu0 %v3195
    %v3197 = vpop.f32.mrf.mxu0
    %v3198 = vadd.f32 %v3081, %v3197
    %v3199 = vand.u32 %v2960, 4294901760
    %3200 = vmatmul.f32.gmra.mxu0 %v3199
    %v3201 = vpop.f32.mrf.mxu0
    %v3202 = vadd.f32 %v3089, %v3201
    %3203 = vdwg.mxu0
    %v3204 = vand.u32 %v3025, 4294901760
    %v3205 = vsub.f32 %v3025, %v3204
    %3206 = vmatpush.msra.mxu0 %v3205
    %v3207 = vand.u32 %v3024, 4294901760
    %v3208 = vsub.f32 %v3024, %v3207
    %3209 = vmatpush.msra.mxu0 %v3208
    %v3210 = vand.u32 %v3023, 4294901760
    %v3211 = vsub.f32 %v3023, %v3210
    %3212 = vmatpush.msra.mxu0 %v3211
    %v3213 = vand.u32 %v3022, 4294901760
    %v3214 = vsub.f32 %v3022, %v3213
    %3215 = vmatpush.msra.mxu0 %v3214
    %v3216 = vand.u32 %v3021, 4294901760
    %v3217 = vsub.f32 %v3021, %v3216
    %3218 = vmatpush.msra.mxu0 %v3217
    %v3219 = vand.u32 %v3020, 4294901760
    %v3220 = vsub.f32 %v3020, %v3219
    %3221 = vmatpush.msra.mxu0 %v3220
    %v3222 = vand.u32 %v3019, 4294901760
    %v3223 = vsub.f32 %v3019, %v3222
    %3224 = vmatpush.msra.mxu0 %v3223
    %v3225 = vand.u32 %v3018, 4294901760
    %v3226 = vsub.f32 %v3018, %v3225
    %3227 = vmatpush.msra.mxu0 %v3226
    %v3228 = vand.u32 %v3017, 4294901760
    %v3229 = vsub.f32 %v3017, %v3228
    %3230 = vmatpush.msra.mxu0 %v3229
    %v3231 = vand.u32 %v3016, 4294901760
    %v3232 = vsub.f32 %v3016, %v3231
    %3233 = vmatpush.msra.mxu0 %v3232
    %v3234 = vand.u32 %v3015, 4294901760
    %v3235 = vsub.f32 %v3015, %v3234
    %3236 = vmatpush.msra.mxu0 %v3235
    %v3237 = vand.u32 %v3014, 4294901760
    %v3238 = vsub.f32 %v3014, %v3237
    %3239 = vmatpush.msra.mxu0 %v3238
    %v3240 = vand.u32 %v3013, 4294901760
    %v3241 = vsub.f32 %v3013, %v3240
    %3242 = vmatpush.msra.mxu0 %v3241
    %v3243 = vand.u32 %v3012, 4294901760
    %v3244 = vsub.f32 %v3012, %v3243
    %3245 = vmatpush.msra.mxu0 %v3244
    %v3246 = vand.u32 %v3011, 4294901760
    %v3247 = vsub.f32 %v3011, %v3246
    %3248 = vmatpush.msra.mxu0 %v3247
    %v3249 = vand.u32 %v3010, 4294901760
    %v3250 = vsub.f32 %v3010, %v3249
    %3251 = vmatpush.msra.mxu0 %v3250
    %v3252 = vand.u32 %v2957, 4294901760
    %v3253 = vsub.f32 %v2957, %v3252
    %3254 = vmatmul.f32.gmra.mxu0 %v3253
    %v3255 = vpop.f32.mrf.mxu0
    %v3256 = vadd.f32 %v3190, %v3255
    %v3257 = vand.u32 %v2958, 4294901760
    %v3258 = vsub.f32 %v2958, %v3257
    %3259 = vmatmul.f32.gmra.mxu0 %v3258
    %v3260 = vpop.f32.mrf.mxu0
    %v3261 = vadd.f32 %v3194, %v3260
    %v3262 = vand.u32 %v2959, 4294901760
    %v3263 = vsub.f32 %v2959, %v3262
    %3264 = vmatmul.f32.gmra.mxu0 %v3263
    %v3265 = vpop.f32.mrf.mxu0
    %v3266 = vadd.f32 %v3198, %v3265
    %v3267 = vand.u32 %v2960, 4294901760
    %v3268 = vsub.f32 %v2960, %v3267
    %3269 = vmatmul.f32.gmra.mxu0 %v3268
    %v3270 = vpop.f32.mrf.mxu0
    %v3271 = vadd.f32 %v3202, %v3270
    %3272 = vdwg.mxu0
    %v3273 = vand.u32 %v3025, 4294901760
    %3274 = vmatpush.msra.mxu0 %v3273
    %v3275 = vand.u32 %v3024, 4294901760
    %3276 = vmatpush.msra.mxu0 %v3275
    %v3277 = vand.u32 %v3023, 4294901760
    %3278 = vmatpush.msra.mxu0 %v3277
    %v3279 = vand.u32 %v3022, 4294901760
    %3280 = vmatpush.msra.mxu0 %v3279
    %v3281 = vand.u32 %v3021, 4294901760
    %3282 = vmatpush.msra.mxu0 %v3281
    %v3283 = vand.u32 %v3020, 4294901760
    %3284 = vmatpush.msra.mxu0 %v3283
    %v3285 = vand.u32 %v3019, 4294901760
    %3286 = vmatpush.msra.mxu0 %v3285
    %v3287 = vand.u32 %v3018, 4294901760
    %3288 = vmatpush.msra.mxu0 %v3287
    %v3289 = vand.u32 %v3017, 4294901760
    %3290 = vmatpush.msra.mxu0 %v3289
    %v3291 = vand.u32 %v3016, 4294901760
    %3292 = vmatpush.msra.mxu0 %v3291
    %v3293 = vand.u32 %v3015, 4294901760
    %3294 = vmatpush.msra.mxu0 %v3293
    %v3295 = vand.u32 %v3014, 4294901760
    %3296 = vmatpush.msra.mxu0 %v3295
    %v3297 = vand.u32 %v3013, 4294901760
    %3298 = vmatpush.msra.mxu0 %v3297
    %v3299 = vand.u32 %v3012, 4294901760
    %3300 = vmatpush.msra.mxu0 %v3299
    %v3301 = vand.u32 %v3011, 4294901760
    %3302 = vmatpush.msra.mxu0 %v3301
    %v3303 = vand.u32 %v3010, 4294901760
    %3304 = vmatpush.msra.mxu0 %v3303
    %v3305 = vand.u32 %v2957, 4294901760
    %v3306 = vsub.f32 %v2957, %v3305
    %v3307 = vand.u32 %v3306, 4294901760
    %3308 = vmatmul.f32.gmra.mxu0 %v3307
    %v3309 = vpop.f32.mrf.mxu0
    %v3310 = vadd.f32 %v3256, %v3309
    %v3311 = vand.u32 %v2958, 4294901760
    %v3312 = vsub.f32 %v2958, %v3311
    %v3313 = vand.u32 %v3312, 4294901760
    %3314 = vmatmul.f32.gmra.mxu0 %v3313
    %v3315 = vpop.f32.mrf.mxu0
    %v3316 = vadd.f32 %v3261, %v3315
    %v3317 = vand.u32 %v2959, 4294901760
    %v3318 = vsub.f32 %v2959, %v3317
    %v3319 = vand.u32 %v3318, 4294901760
    %3320 = vmatmul.f32.gmra.mxu0 %v3319
    %v3321 = vpop.f32.mrf.mxu0
    %v3322 = vadd.f32 %v3266, %v3321
    %v3323 = vand.u32 %v2960, 4294901760
    %v3324 = vsub.f32 %v2960, %v3323
    %v3325 = vand.u32 %v3324, 4294901760
    %3326 = vmatmul.f32.gmra.mxu0 %v3325
    %v3327 = vpop.f32.mrf.mxu0
    %v3328 = vadd.f32 %v3271, %v3327
    %3329 = vdwg.mxu0
    %v3330 = vand.u32 %v3025, 4294901760
    %v3331 = vsub.f32 %v3025, %v3330
    %v3332 = vand.u32 %v3331, 4294901760
    %3333 = vmatpush.msra.mxu0 %v3332
    %v3334 = vand.u32 %v3024, 4294901760
    %v3335 = vsub.f32 %v3024, %v3334
    %v3336 = vand.u32 %v3335, 4294901760
    %3337 = vmatpush.msra.mxu0 %v3336
    %v3338 = vand.u32 %v3023, 4294901760
    %v3339 = vsub.f32 %v3023, %v3338
    %v3340 = vand.u32 %v3339, 4294901760
    %3341 = vmatpush.msra.mxu0 %v3340
    %v3342 = vand.u32 %v3022, 4294901760
    %v3343 = vsub.f32 %v3022, %v3342
    %v3344 = vand.u32 %v3343, 4294901760
    %3345 = vmatpush.msra.mxu0 %v3344
    %v3346 = vand.u32 %v3021, 4294901760
    %v3347 = vsub.f32 %v3021, %v3346
    %v3348 = vand.u32 %v3347, 4294901760
    %3349 = vmatpush.msra.mxu0 %v3348
    %v3350 = vand.u32 %v3020, 4294901760
    %v3351 = vsub.f32 %v3020, %v3350
    %v3352 = vand.u32 %v3351, 4294901760
    %3353 = vmatpush.msra.mxu0 %v3352
    %v3354 = vand.u32 %v3019, 4294901760
    %v3355 = vsub.f32 %v3019, %v3354
    %v3356 = vand.u32 %v3355, 4294901760
    %3357 = vmatpush.msra.mxu0 %v3356
    %v3358 = vand.u32 %v3018, 4294901760
    %v3359 = vsub.f32 %v3018, %v3358
    %v3360 = vand.u32 %v3359, 4294901760
    %3361 = vmatpush.msra.mxu0 %v3360
    %v3362 = vand.u32 %v3017, 4294901760
    %v3363 = vsub.f32 %v3017, %v3362
    %v3364 = vand.u32 %v3363, 4294901760
    %3365 = vmatpush.msra.mxu0 %v3364
    %v3366 = vand.u32 %v3016, 4294901760
    %v3367 = vsub.f32 %v3016, %v3366
    %v3368 = vand.u32 %v3367, 4294901760
    %3369 = vmatpush.msra.mxu0 %v3368
    %v3370 = vand.u32 %v3015, 4294901760
    %v3371 = vsub.f32 %v3015, %v3370
    %v3372 = vand.u32 %v3371, 4294901760
    %3373 = vmatpush.msra.mxu0 %v3372
    %v3374 = vand.u32 %v3014, 4294901760
    %v3375 = vsub.f32 %v3014, %v3374
    %v3376 = vand.u32 %v3375, 4294901760
    %3377 = vmatpush.msra.mxu0 %v3376
    %v3378 = vand.u32 %v3013, 4294901760
    %v3379 = vsub.f32 %v3013, %v3378
    %v3380 = vand.u32 %v3379, 4294901760
    %3381 = vmatpush.msra.mxu0 %v3380
    %v3382 = vand.u32 %v3012, 4294901760
    %v3383 = vsub.f32 %v3012, %v3382
    %v3384 = vand.u32 %v3383, 4294901760
    %3385 = vmatpush.msra.mxu0 %v3384
    %v3386 = vand.u32 %v3011, 4294901760
    %v3387 = vsub.f32 %v3011, %v3386
    %v3388 = vand.u32 %v3387, 4294901760
    %3389 = vmatpush.msra.mxu0 %v3388
    %v3390 = vand.u32 %v3010, 4294901760
    %v3391 = vsub.f32 %v3010, %v3390
    %v3392 = vand.u32 %v3391, 4294901760
    %3393 = vmatpush.msra.mxu0 %v3392
    %v3394 = vand.u32 %v2957, 4294901760
    %3395 = vmatmul.f32.gmra.mxu0 %v3394
    %v3396 = vpop.f32.mrf.mxu0
    %v3397 = vadd.f32 %v3310, %v3396
    %v3398 = vand.u32 %v2958, 4294901760
    %3399 = vmatmul.f32.gmra.mxu0 %v3398
    %v3400 = vpop.f32.mrf.mxu0
    %v3401 = vadd.f32 %v3316, %v3400
    %v3402 = vand.u32 %v2959, 4294901760
    %3403 = vmatmul.f32.gmra.mxu0 %v3402
    %v3404 = vpop.f32.mrf.mxu0
    %v3405 = vadd.f32 %v3322, %v3404
    %v3406 = vand.u32 %v2960, 4294901760
    %3407 = vmatmul.f32.gmra.mxu0 %v3406
    %v3408 = vpop.f32.mrf.mxu0
    %v3409 = vadd.f32 %v3328, %v3408
    %3410 = vdwg.mxu0
    %v3411 = vand.u32 %v3025, 4294901760
    %3412 = vmatpush.msra.mxu0 %v3411
    %v3413 = vand.u32 %v3024, 4294901760
    %3414 = vmatpush.msra.mxu0 %v3413
    %v3415 = vand.u32 %v3023, 4294901760
    %3416 = vmatpush.msra.mxu0 %v3415
    %v3417 = vand.u32 %v3022, 4294901760
    %3418 = vmatpush.msra.mxu0 %v3417
    %v3419 = vand.u32 %v3021, 4294901760
    %3420 = vmatpush.msra.mxu0 %v3419
    %v3421 = vand.u32 %v3020, 4294901760
    %3422 = vmatpush.msra.mxu0 %v3421
    %v3423 = vand.u32 %v3019, 4294901760
    %3424 = vmatpush.msra.mxu0 %v3423
    %v3425 = vand.u32 %v3018, 4294901760
    %3426 = vmatpush.msra.mxu0 %v3425
    %v3427 = vand.u32 %v3017, 4294901760
    %3428 = vmatpush.msra.mxu0 %v3427
    %v3429 = vand.u32 %v3016, 4294901760
    %3430 = vmatpush.msra.mxu0 %v3429
    %v3431 = vand.u32 %v3015, 4294901760
    %3432 = vmatpush.msra.mxu0 %v3431
    %v3433 = vand.u32 %v3014, 4294901760
    %3434 = vmatpush.msra.mxu0 %v3433
    %v3435 = vand.u32 %v3013, 4294901760
    %3436 = vmatpush.msra.mxu0 %v3435
    %v3437 = vand.u32 %v3012, 4294901760
    %3438 = vmatpush.msra.mxu0 %v3437
    %v3439 = vand.u32 %v3011, 4294901760
    %3440 = vmatpush.msra.mxu0 %v3439
    %v3441 = vand.u32 %v3010, 4294901760
    %3442 = vmatpush.msra.mxu0 %v3441
    %v3443 = vand.u32 %v2957, 4294901760
    %3444 = vmatmul.f32.gmra.mxu0 %v3443
    %v3445 = vpop.f32.mrf.mxu0
    %v3446 = vadd.f32 %v3397, %v3445
    %v3447 = vand.u32 %v2958, 4294901760
    %3448 = vmatmul.f32.gmra.mxu0 %v3447
    %v3449 = vpop.f32.mrf.mxu0
    %v3450 = vadd.f32 %v3401, %v3449
    %v3451 = vand.u32 %v2959, 4294901760
    %3452 = vmatmul.f32.gmra.mxu0 %v3451
    %v3453 = vpop.f32.mrf.mxu0
    %v3454 = vadd.f32 %v3405, %v3453
    %v3455 = vand.u32 %v2960, 4294901760
    %3456 = vmatmul.f32.gmra.mxu0 %v3455
    %v3457 = vpop.f32.mrf.mxu0
    %v3458 = vadd.f32 %v3409, %v3457
    %3459 = vdwg.mxu0
    %v3460 = vand.u32 %v3008, 4294901760
    %3461 = vmatpush.msra.mxu0 %v3460
    %v3462 = vand.u32 %v3007, 4294901760
    %3463 = vmatpush.msra.mxu0 %v3462
    %v3464 = vand.u32 %v3006, 4294901760
    %3465 = vmatpush.msra.mxu0 %v3464
    %v3466 = vand.u32 %v3005, 4294901760
    %3467 = vmatpush.msra.mxu0 %v3466
    %v3468 = vand.u32 %v3004, 4294901760
    %3469 = vmatpush.msra.mxu0 %v3468
    %v3470 = vand.u32 %v3003, 4294901760
    %3471 = vmatpush.msra.mxu0 %v3470
    %v3472 = vand.u32 %v3002, 4294901760
    %3473 = vmatpush.msra.mxu0 %v3472
    %v3474 = vand.u32 %v3001, 4294901760
    %3475 = vmatpush.msra.mxu0 %v3474
    %v3476 = vand.u32 %v3000, 4294901760
    %3477 = vmatpush.msra.mxu0 %v3476
    %v3478 = vand.u32 %v2999, 4294901760
    %3479 = vmatpush.msra.mxu0 %v3478
    %v3480 = vand.u32 %v2998, 4294901760
    %3481 = vmatpush.msra.mxu0 %v3480
    %v3482 = vand.u32 %v2997, 4294901760
    %3483 = vmatpush.msra.mxu0 %v3482
    %v3484 = vand.u32 %v2996, 4294901760
    %3485 = vmatpush.msra.mxu0 %v3484
    %v3486 = vand.u32 %v2995, 4294901760
    %3487 = vmatpush.msra.mxu0 %v3486
    %v3488 = vand.u32 %v2994, 4294901760
    %3489 = vmatpush.msra.mxu0 %v3488
    %v3490 = vand.u32 %v2993, 4294901760
    %3491 = vmatpush.msra.mxu0 %v3490
    %v3492 = vand.u32 %v2979, 4294901760
    %v3493 = vsub.f32 %v2979, %v3492
    %v3494 = vand.u32 %v3493, 4294901760
    %v3495 = vsub.f32 %v3493, %v3494
    %v3496 = vand.u32 %v3495, 4294901760
    %3497 = vmatmul.f32.gmra.mxu0 %v3496
    %v3498 = vpop.f32.mrf.mxu0
    %v3499 = vadd.f32 %v3446, %v3498
    %v3500 = vand.u32 %v2971, 4294901760
    %v3501 = vsub.f32 %v2971, %v3500
    %v3502 = vand.u32 %v3501, 4294901760
    %v3503 = vsub.f32 %v3501, %v3502
    %v3504 = vand.u32 %v3503, 4294901760
    %3505 = vmatmul.f32.gmra.mxu0 %v3504
    %v3506 = vpop.f32.mrf.mxu0
    %v3507 = vadd.f32 %v3450, %v3506
    %v3508 = vand.u32 %v2980, 4294901760
    %v3509 = vsub.f32 %v2980, %v3508
    %v3510 = vand.u32 %v3509, 4294901760
    %v3511 = vsub.f32 %v3509, %v3510
    %v3512 = vand.u32 %v3511, 4294901760
    %3513 = vmatmul.f32.gmra.mxu0 %v3512
    %v3514 = vpop.f32.mrf.mxu0
    %v3515 = vadd.f32 %v3454, %v3514
    %v3516 = vand.u32 %v2974, 4294901760
    %v3517 = vsub.f32 %v2974, %v3516
    %v3518 = vand.u32 %v3517, 4294901760
    %v3519 = vsub.f32 %v3517, %v3518
    %v3520 = vand.u32 %v3519, 4294901760
    %3521 = vmatmul.f32.gmra.mxu0 %v3520
    %v3522 = vpop.f32.mrf.mxu0
    %v3523 = vadd.f32 %v3458, %v3522
    %3524 = vdwg.mxu0
    %v3525 = vand.u32 %v3008, 4294901760
    %v3526 = vsub.f32 %v3008, %v3525
    %v3527 = vand.u32 %v3526, 4294901760
    %v3528 = vsub.f32 %v3526, %v3527
    %v3529 = vand.u32 %v3528, 4294901760
    %3530 = vmatpush.msra.mxu0 %v3529
    %v3531 = vand.u32 %v3007, 4294901760
    %v3532 = vsub.f32 %v3007, %v3531
    %v3533 = vand.u32 %v3532, 4294901760
    %v3534 = vsub.f32 %v3532, %v3533
    %v3535 = vand.u32 %v3534, 4294901760
    %3536 = vmatpush.msra.mxu0 %v3535
    %v3537 = vand.u32 %v3006, 4294901760
    %v3538 = vsub.f32 %v3006, %v3537
    %v3539 = vand.u32 %v3538, 4294901760
    %v3540 = vsub.f32 %v3538, %v3539
    %v3541 = vand.u32 %v3540, 4294901760
    %3542 = vmatpush.msra.mxu0 %v3541
    %v3543 = vand.u32 %v3005, 4294901760
    %v3544 = vsub.f32 %v3005, %v3543
    %v3545 = vand.u32 %v3544, 4294901760
    %v3546 = vsub.f32 %v3544, %v3545
    %v3547 = vand.u32 %v3546, 4294901760
    %3548 = vmatpush.msra.mxu0 %v3547
    %v3549 = vand.u32 %v3004, 4294901760
    %v3550 = vsub.f32 %v3004, %v3549
    %v3551 = vand.u32 %v3550, 4294901760
    %v3552 = vsub.f32 %v3550, %v3551
    %v3553 = vand.u32 %v3552, 4294901760
    %3554 = vmatpush.msra.mxu0 %v3553
    %v3555 = vand.u32 %v3003, 4294901760
    %v3556 = vsub.f32 %v3003, %v3555
    %v3557 = vand.u32 %v3556, 4294901760
    %v3558 = vsub.f32 %v3556, %v3557
    %v3559 = vand.u32 %v3558, 4294901760
    %3560 = vmatpush.msra.mxu0 %v3559
    %v3561 = vand.u32 %v3002, 4294901760
    %v3562 = vsub.f32 %v3002, %v3561
    %v3563 = vand.u32 %v3562, 4294901760
    %v3564 = vsub.f32 %v3562, %v3563
    %v3565 = vand.u32 %v3564, 4294901760
    %3566 = vmatpush.msra.mxu0 %v3565
    %v3567 = vand.u32 %v3001, 4294901760
    %v3568 = vsub.f32 %v3001, %v3567
    %v3569 = vand.u32 %v3568, 4294901760
    %v3570 = vsub.f32 %v3568, %v3569
    %v3571 = vand.u32 %v3570, 4294901760
    %3572 = vmatpush.msra.mxu0 %v3571
    %v3573 = vand.u32 %v3000, 4294901760
    %v3574 = vsub.f32 %v3000, %v3573
    %v3575 = vand.u32 %v3574, 4294901760
    %v3576 = vsub.f32 %v3574, %v3575
    %v3577 = vand.u32 %v3576, 4294901760
    %3578 = vmatpush.msra.mxu0 %v3577
    %v3579 = vand.u32 %v2999, 4294901760
    %v3580 = vsub.f32 %v2999, %v3579
    %v3581 = vand.u32 %v3580, 4294901760
    %v3582 = vsub.f32 %v3580, %v3581
    %v3583 = vand.u32 %v3582, 4294901760
    %3584 = vmatpush.msra.mxu0 %v3583
    %v3585 = vand.u32 %v2998, 4294901760
    %v3586 = vsub.f32 %v2998, %v3585
    %v3587 = vand.u32 %v3586, 4294901760
    %v3588 = vsub.f32 %v3586, %v3587
    %v3589 = vand.u32 %v3588, 4294901760
    %3590 = vmatpush.msra.mxu0 %v3589
    %v3591 = vand.u32 %v2997, 4294901760
    %v3592 = vsub.f32 %v2997, %v3591
    %v3593 = vand.u32 %v3592, 4294901760
    %v3594 = vsub.f32 %v3592, %v3593
    %v3595 = vand.u32 %v3594, 4294901760
    %3596 = vmatpush.msra.mxu0 %v3595
    %v3597 = vand.u32 %v2996, 4294901760
    %v3598 = vsub.f32 %v2996, %v3597
    %v3599 = vand.u32 %v3598, 4294901760
    %v3600 = vsub.f32 %v3598, %v3599
    %v3601 = vand.u32 %v3600, 4294901760
    %3602 = vmatpush.msra.mxu0 %v3601
    %v3603 = vand.u32 %v2995, 4294901760
    %v3604 = vsub.f32 %v2995, %v3603
    %v3605 = vand.u32 %v3604, 4294901760
    %v3606 = vsub.f32 %v3604, %v3605
    %v3607 = vand.u32 %v3606, 4294901760
    %3608 = vmatpush.msra.mxu0 %v3607
    %v3609 = vand.u32 %v2994, 4294901760
    %v3610 = vsub.f32 %v2994, %v3609
    %v3611 = vand.u32 %v3610, 4294901760
    %v3612 = vsub.f32 %v3610, %v3611
    %v3613 = vand.u32 %v3612, 4294901760
    %3614 = vmatpush.msra.mxu0 %v3613
    %v3615 = vand.u32 %v2993, 4294901760
    %v3616 = vsub.f32 %v2993, %v3615
    %v3617 = vand.u32 %v3616, 4294901760
    %v3618 = vsub.f32 %v3616, %v3617
    %v3619 = vand.u32 %v3618, 4294901760
    %3620 = vmatpush.msra.mxu0 %v3619
    %v3621 = vand.u32 %v2979, 4294901760
    %3622 = vmatmul.f32.gmra.mxu0 %v3621
    %v3623 = vpop.f32.mrf.mxu0
    %v3624 = vadd.f32 %v3499, %v3623
    %v3625 = vand.u32 %v2971, 4294901760
    %3626 = vmatmul.f32.gmra.mxu0 %v3625
    %v3627 = vpop.f32.mrf.mxu0
    %v3628 = vadd.f32 %v3507, %v3627
    %v3629 = vand.u32 %v2980, 4294901760
    %3630 = vmatmul.f32.gmra.mxu0 %v3629
    %v3631 = vpop.f32.mrf.mxu0
    %v3632 = vadd.f32 %v3515, %v3631
    %v3633 = vand.u32 %v2974, 4294901760
    %3634 = vmatmul.f32.gmra.mxu0 %v3633
    %v3635 = vpop.f32.mrf.mxu0
    %v3636 = vadd.f32 %v3523, %v3635
    %3637 = vdwg.mxu0
    %v3638 = vand.u32 %v3008, 4294901760
    %v3639 = vsub.f32 %v3008, %v3638
    %3640 = vmatpush.msra.mxu0 %v3639
    %v3641 = vand.u32 %v3007, 4294901760
    %v3642 = vsub.f32 %v3007, %v3641
    %3643 = vmatpush.msra.mxu0 %v3642
    %v3644 = vand.u32 %v3006, 4294901760
    %v3645 = vsub.f32 %v3006, %v3644
    %3646 = vmatpush.msra.mxu0 %v3645
    %v3647 = vand.u32 %v3005, 4294901760
    %v3648 = vsub.f32 %v3005, %v3647
    %3649 = vmatpush.msra.mxu0 %v3648
    %v3650 = vand.u32 %v3004, 4294901760
    %v3651 = vsub.f32 %v3004, %v3650
    %3652 = vmatpush.msra.mxu0 %v3651
    %v3653 = vand.u32 %v3003, 4294901760
    %v3654 = vsub.f32 %v3003, %v3653
    %3655 = vmatpush.msra.mxu0 %v3654
    %v3656 = vand.u32 %v3002, 4294901760
    %v3657 = vsub.f32 %v3002, %v3656
    %3658 = vmatpush.msra.mxu0 %v3657
    %v3659 = vand.u32 %v3001, 4294901760
    %v3660 = vsub.f32 %v3001, %v3659
    %3661 = vmatpush.msra.mxu0 %v3660
    %v3662 = vand.u32 %v3000, 4294901760
    %v3663 = vsub.f32 %v3000, %v3662
    %3664 = vmatpush.msra.mxu0 %v3663
    %v3665 = vand.u32 %v2999, 4294901760
    %v3666 = vsub.f32 %v2999, %v3665
    %3667 = vmatpush.msra.mxu0 %v3666
    %v3668 = vand.u32 %v2998, 4294901760
    %v3669 = vsub.f32 %v2998, %v3668
    %3670 = vmatpush.msra.mxu0 %v3669
    %v3671 = vand.u32 %v2997, 4294901760
    %v3672 = vsub.f32 %v2997, %v3671
    %3673 = vmatpush.msra.mxu0 %v3672
    %v3674 = vand.u32 %v2996, 4294901760
    %v3675 = vsub.f32 %v2996, %v3674
    %3676 = vmatpush.msra.mxu0 %v3675
    %v3677 = vand.u32 %v2995, 4294901760
    %v3678 = vsub.f32 %v2995, %v3677
    %3679 = vmatpush.msra.mxu0 %v3678
    %v3680 = vand.u32 %v2994, 4294901760
    %v3681 = vsub.f32 %v2994, %v3680
    %3682 = vmatpush.msra.mxu0 %v3681
    %v3683 = vand.u32 %v2993, 4294901760
    %v3684 = vsub.f32 %v2993, %v3683
    %3685 = vmatpush.msra.mxu0 %v3684
    %v3686 = vand.u32 %v2979, 4294901760
    %v3687 = vsub.f32 %v2979, %v3686
    %3688 = vmatmul.f32.gmra.mxu0 %v3687
    %v3689 = vpop.f32.mrf.mxu0
    %v3690 = vadd.f32 %v3624, %v3689
    %v3691 = vand.u32 %v2971, 4294901760
    %v3692 = vsub.f32 %v2971, %v3691
    %3693 = vmatmul.f32.gmra.mxu0 %v3692
    %v3694 = vpop.f32.mrf.mxu0
    %v3695 = vadd.f32 %v3628, %v3694
    %v3696 = vand.u32 %v2980, 4294901760
    %v3697 = vsub.f32 %v2980, %v3696
    %3698 = vmatmul.f32.gmra.mxu0 %v3697
    %v3699 = vpop.f32.mrf.mxu0
    %v3700 = vadd.f32 %v3632, %v3699
    %v3701 = vand.u32 %v2974, 4294901760
    %v3702 = vsub.f32 %v2974, %v3701
    %3703 = vmatmul.f32.gmra.mxu0 %v3702
    %v3704 = vpop.f32.mrf.mxu0
    %v3705 = vadd.f32 %v3636, %v3704
    %3706 = vdwg.mxu0
    %v3707 = vand.u32 %v3008, 4294901760
    %3708 = vmatpush.msra.mxu0 %v3707
    %v3709 = vand.u32 %v3007, 4294901760
    %3710 = vmatpush.msra.mxu0 %v3709
    %v3711 = vand.u32 %v3006, 4294901760
    %3712 = vmatpush.msra.mxu0 %v3711
    %v3713 = vand.u32 %v3005, 4294901760
    %3714 = vmatpush.msra.mxu0 %v3713
    %v3715 = vand.u32 %v3004, 4294901760
    %3716 = vmatpush.msra.mxu0 %v3715
    %v3717 = vand.u32 %v3003, 4294901760
    %3718 = vmatpush.msra.mxu0 %v3717
    %v3719 = vand.u32 %v3002, 4294901760
    %3720 = vmatpush.msra.mxu0 %v3719
    %v3721 = vand.u32 %v3001, 4294901760
    %3722 = vmatpush.msra.mxu0 %v3721
    %v3723 = vand.u32 %v3000, 4294901760
    %3724 = vmatpush.msra.mxu0 %v3723
    %v3725 = vand.u32 %v2999, 4294901760
    %3726 = vmatpush.msra.mxu0 %v3725
    %v3727 = vand.u32 %v2998, 4294901760
    %3728 = vmatpush.msra.mxu0 %v3727
    %v3729 = vand.u32 %v2997, 4294901760
    %3730 = vmatpush.msra.mxu0 %v3729
    %v3731 = vand.u32 %v2996, 4294901760
    %3732 = vmatpush.msra.mxu0 %v3731
    %v3733 = vand.u32 %v2995, 4294901760
    %3734 = vmatpush.msra.mxu0 %v3733
    %v3735 = vand.u32 %v2994, 4294901760
    %3736 = vmatpush.msra.mxu0 %v3735
    %v3737 = vand.u32 %v2993, 4294901760
    %3738 = vmatpush.msra.mxu0 %v3737
    %v3739 = vand.u32 %v2979, 4294901760
    %v3740 = vsub.f32 %v2979, %v3739
    %v3741 = vand.u32 %v3740, 4294901760
    %3742 = vmatmul.f32.gmra.mxu0 %v3741
    %v3743 = vpop.f32.mrf.mxu0
    %v3744 = vadd.f32 %v3690, %v3743
    %v3745 = vand.u32 %v2971, 4294901760
    %v3746 = vsub.f32 %v2971, %v3745
    %v3747 = vand.u32 %v3746, 4294901760
    %3748 = vmatmul.f32.gmra.mxu0 %v3747
    %v3749 = vpop.f32.mrf.mxu0
    %v3750 = vadd.f32 %v3695, %v3749
    %v3751 = vand.u32 %v2980, 4294901760
    %v3752 = vsub.f32 %v2980, %v3751
    %v3753 = vand.u32 %v3752, 4294901760
    %3754 = vmatmul.f32.gmra.mxu0 %v3753
    %v3755 = vpop.f32.mrf.mxu0
    %v3756 = vadd.f32 %v3700, %v3755
    %v3757 = vand.u32 %v2974, 4294901760
    %v3758 = vsub.f32 %v2974, %v3757
    %v3759 = vand.u32 %v3758, 4294901760
    %3760 = vmatmul.f32.gmra.mxu0 %v3759
    %v3761 = vpop.f32.mrf.mxu0
    %v3762 = vadd.f32 %v3705, %v3761
    %3763 = vdwg.mxu0
    %v3764 = vand.u32 %v3008, 4294901760
    %v3765 = vsub.f32 %v3008, %v3764
    %v3766 = vand.u32 %v3765, 4294901760
    %3767 = vmatpush.msra.mxu0 %v3766
    %v3768 = vand.u32 %v3007, 4294901760
    %v3769 = vsub.f32 %v3007, %v3768
    %v3770 = vand.u32 %v3769, 4294901760
    %3771 = vmatpush.msra.mxu0 %v3770
    %v3772 = vand.u32 %v3006, 4294901760
    %v3773 = vsub.f32 %v3006, %v3772
    %v3774 = vand.u32 %v3773, 4294901760
    %3775 = vmatpush.msra.mxu0 %v3774
    %v3776 = vand.u32 %v3005, 4294901760
    %v3777 = vsub.f32 %v3005, %v3776
    %v3778 = vand.u32 %v3777, 4294901760
    %3779 = vmatpush.msra.mxu0 %v3778
    %v3780 = vand.u32 %v3004, 4294901760
    %v3781 = vsub.f32 %v3004, %v3780
    %v3782 = vand.u32 %v3781, 4294901760
    %3783 = vmatpush.msra.mxu0 %v3782
    %v3784 = vand.u32 %v3003, 4294901760
    %v3785 = vsub.f32 %v3003, %v3784
    %v3786 = vand.u32 %v3785, 4294901760
    %3787 = vmatpush.msra.mxu0 %v3786
    %v3788 = vand.u32 %v3002, 4294901760
    %v3789 = vsub.f32 %v3002, %v3788
    %v3790 = vand.u32 %v3789, 4294901760
    %3791 = vmatpush.msra.mxu0 %v3790
    %v3792 = vand.u32 %v3001, 4294901760
    %v3793 = vsub.f32 %v3001, %v3792
    %v3794 = vand.u32 %v3793, 4294901760
    %3795 = vmatpush.msra.mxu0 %v3794
    %v3796 = vand.u32 %v3000, 4294901760
    %v3797 = vsub.f32 %v3000, %v3796
    %v3798 = vand.u32 %v3797, 4294901760
    %3799 = vmatpush.msra.mxu0 %v3798
    %v3800 = vand.u32 %v2999, 4294901760
    %v3801 = vsub.f32 %v2999, %v3800
    %v3802 = vand.u32 %v3801, 4294901760
    %3803 = vmatpush.msra.mxu0 %v3802
    %v3804 = vand.u32 %v2998, 4294901760
    %v3805 = vsub.f32 %v2998, %v3804
    %v3806 = vand.u32 %v3805, 4294901760
    %3807 = vmatpush.msra.mxu0 %v3806
    %v3808 = vand.u32 %v2997, 4294901760
    %v3809 = vsub.f32 %v2997, %v3808
    %v3810 = vand.u32 %v3809, 4294901760
    %3811 = vmatpush.msra.mxu0 %v3810
    %v3812 = vand.u32 %v2996, 4294901760
    %v3813 = vsub.f32 %v2996, %v3812
    %v3814 = vand.u32 %v3813, 4294901760
    %3815 = vmatpush.msra.mxu0 %v3814
    %v3816 = vand.u32 %v2995, 4294901760
    %v3817 = vsub.f32 %v2995, %v3816
    %v3818 = vand.u32 %v3817, 4294901760
    %3819 = vmatpush.msra.mxu0 %v3818
    %v3820 = vand.u32 %v2994, 4294901760
    %v3821 = vsub.f32 %v2994, %v3820
    %v3822 = vand.u32 %v3821, 4294901760
    %3823 = vmatpush.msra.mxu0 %v3822
    %v3824 = vand.u32 %v2993, 4294901760
    %v3825 = vsub.f32 %v2993, %v3824
    %v3826 = vand.u32 %v3825, 4294901760
    %3827 = vmatpush.msra.mxu0 %v3826
    %v3828 = vand.u32 %v2979, 4294901760
    %3829 = vmatmul.f32.gmra.mxu0 %v3828
    %v3830 = vpop.f32.mrf.mxu0
    %v3831 = vadd.f32 %v3744, %v3830
    %v3832 = vand.u32 %v2971, 4294901760
    %3833 = vmatmul.f32.gmra.mxu0 %v3832
    %v3834 = vpop.f32.mrf.mxu0
    %v3835 = vadd.f32 %v3750, %v3834
    %v3836 = vand.u32 %v2980, 4294901760
    %3837 = vmatmul.f32.gmra.mxu0 %v3836
    %v3838 = vpop.f32.mrf.mxu0
    %v3839 = vadd.f32 %v3756, %v3838
    %v3840 = vand.u32 %v2974, 4294901760
    %3841 = vmatmul.f32.gmra.mxu0 %v3840
    %v3842 = vpop.f32.mrf.mxu0
    %v3843 = vadd.f32 %v3762, %v3842
    %3844 = vdwg.mxu0
    %v3845 = vand.u32 %v3008, 4294901760
    %3846 = vmatpush.msra.mxu0 %v3845
    %v3847 = vand.u32 %v3007, 4294901760
    %3848 = vmatpush.msra.mxu0 %v3847
    %v3849 = vand.u32 %v3006, 4294901760
    %3850 = vmatpush.msra.mxu0 %v3849
    %v3851 = vand.u32 %v3005, 4294901760
    %3852 = vmatpush.msra.mxu0 %v3851
    %v3853 = vand.u32 %v3004, 4294901760
    %3854 = vmatpush.msra.mxu0 %v3853
    %v3855 = vand.u32 %v3003, 4294901760
    %3856 = vmatpush.msra.mxu0 %v3855
    %v3857 = vand.u32 %v3002, 4294901760
    %3858 = vmatpush.msra.mxu0 %v3857
    %v3859 = vand.u32 %v3001, 4294901760
    %3860 = vmatpush.msra.mxu0 %v3859
    %v3861 = vand.u32 %v3000, 4294901760
    %3862 = vmatpush.msra.mxu0 %v3861
    %v3863 = vand.u32 %v2999, 4294901760
    %3864 = vmatpush.msra.mxu0 %v3863
    %v3865 = vand.u32 %v2998, 4294901760
    %3866 = vmatpush.msra.mxu0 %v3865
    %v3867 = vand.u32 %v2997, 4294901760
    %3868 = vmatpush.msra.mxu0 %v3867
    %v3869 = vand.u32 %v2996, 4294901760
    %3870 = vmatpush.msra.mxu0 %v3869
    %v3871 = vand.u32 %v2995, 4294901760
    %3872 = vmatpush.msra.mxu0 %v3871
    %v3873 = vand.u32 %v2994, 4294901760
    %3874 = vmatpush.msra.mxu0 %v3873
    %v3875 = vand.u32 %v2993, 4294901760
    %3876 = vmatpush.msra.mxu0 %v3875
    %v3877 = vand.u32 %v2979, 4294901760
    %3878 = vmatmul.f32.gmra.mxu0 %v3877
    %v3879 = vpop.f32.mrf.mxu0
    %v3880 = vadd.f32 %v3831, %v3879
    %v3881 = vand.u32 %v2971, 4294901760
    %3882 = vmatmul.f32.gmra.mxu0 %v3881
    %v3883 = vpop.f32.mrf.mxu0
    %v3884 = vadd.f32 %v3835, %v3883
    %v3885 = vand.u32 %v2980, 4294901760
    %3886 = vmatmul.f32.gmra.mxu0 %v3885
    %v3887 = vpop.f32.mrf.mxu0
    %v3888 = vadd.f32 %v3839, %v3887
    %v3889 = vand.u32 %v2974, 4294901760
    %3890 = vmatmul.f32.gmra.mxu0 %v3889
    %v3891 = vpop.f32.mrf.mxu0
    %v3892 = vadd.f32 %v3843, %v3891
    %3893 = vdwg.mxu0
    %s3894 = scalar_lea.vmem %s2, 256
    %v3895 = vld [vmem:[%s3894] sm:$0xff]
    %v3896 = vld [vmem:[%s3894 + $0x8] sm:$0xff]
    %v3897 = vld [vmem:[%s3894 + $0x10] sm:$0xff]
    %v3898 = vld [vmem:[%s3894 + $0x18] sm:$0xff]
    %v3899 = vld [vmem:[%s3894 + $0x20] sm:$0xff]
    %v3900 = vld [vmem:[%s3894 + $0x28] sm:$0xff]
    %v3901 = vld [vmem:[%s3894 + $0x30] sm:$0xff]
    %v3902 = vld [vmem:[%s3894 + $0x38] sm:$0xff]
    %v3903 = vld [vmem:[%s3894 + $0x40] sm:$0xff]
    %v3904 = vld [vmem:[%s3894 + $0x48] sm:$0xff]
    %v3905 = vld [vmem:[%s3894 + $0x50] sm:$0xff]
    %v3906 = vld [vmem:[%s3894 + $0x58] sm:$0xff]
    %v3907 = vld [vmem:[%s3894 + $0x60] sm:$0xff]
    %v3908 = vld [vmem:[%s3894 + $0x68] sm:$0xff]
    %v3909 = vld [vmem:[%s3894 + $0x70] sm:$0xff]
    %v3910 = vld [vmem:[%s3894 + $0x78] sm:$0xff]
    %v3911 = vand.u32 %v3910, 4294901760
    %3912 = vmatpush.msra.mxu0 %v3911
    %v3913 = vand.u32 %v3909, 4294901760
    %3914 = vmatpush.msra.mxu0 %v3913
    %v3915 = vand.u32 %v3908, 4294901760
    %3916 = vmatpush.msra.mxu0 %v3915
    %v3917 = vand.u32 %v3907, 4294901760
    %3918 = vmatpush.msra.mxu0 %v3917
    %v3919 = vand.u32 %v3906, 4294901760
    %3920 = vmatpush.msra.mxu0 %v3919
    %v3921 = vand.u32 %v3905, 4294901760
    %3922 = vmatpush.msra.mxu0 %v3921
    %v3923 = vand.u32 %v3904, 4294901760
    %3924 = vmatpush.msra.mxu0 %v3923
    %v3925 = vand.u32 %v3903, 4294901760
    %3926 = vmatpush.msra.mxu0 %v3925
    %v3927 = vand.u32 %v3902, 4294901760
    %3928 = vmatpush.msra.mxu0 %v3927
    %v3929 = vand.u32 %v3901, 4294901760
    %3930 = vmatpush.msra.mxu0 %v3929
    %v3931 = vand.u32 %v3900, 4294901760
    %3932 = vmatpush.msra.mxu0 %v3931
    %v3933 = vand.u32 %v3899, 4294901760
    %3934 = vmatpush.msra.mxu0 %v3933
    %v3935 = vand.u32 %v3898, 4294901760
    %3936 = vmatpush.msra.mxu0 %v3935
    %v3937 = vand.u32 %v3897, 4294901760
    %3938 = vmatpush.msra.mxu0 %v3937
    %v3939 = vand.u32 %v3896, 4294901760
    %3940 = vmatpush.msra.mxu0 %v3939
    %v3941 = vand.u32 %v3895, 4294901760
    %3942 = vmatpush.msra.mxu0 %v3941
    %v3943 = vand.u32 %v2982, 4294901760
    %v3944 = vsub.f32 %v2982, %v3943
    %v3945 = vand.u32 %v3944, 4294901760
    %v3946 = vsub.f32 %v3944, %v3945
    %v3947 = vand.u32 %v3946, 4294901760
    %3948 = vmatmul.f32.gmra.mxu0 %v3947
    %v3949 = vpop.f32.mrf.mxu0
    %v3950 = vadd.f32 0.0, %v3949
    %v3951 = vand.u32 %v2991, 4294901760
    %v3952 = vsub.f32 %v2991, %v3951
    %v3953 = vand.u32 %v3952, 4294901760
    %v3954 = vsub.f32 %v3952, %v3953
    %v3955 = vand.u32 %v3954, 4294901760
    %3956 = vmatmul.f32.gmra.mxu0 %v3955
    %v3957 = vpop.f32.mrf.mxu0
    %v3958 = vadd.f32 0.0, %v3957
    %v3959 = vand.u32 %v2984, 4294901760
    %v3960 = vsub.f32 %v2984, %v3959
    %v3961 = vand.u32 %v3960, 4294901760
    %v3962 = vsub.f32 %v3960, %v3961
    %v3963 = vand.u32 %v3962, 4294901760
    %3964 = vmatmul.f32.gmra.mxu0 %v3963
    %v3965 = vpop.f32.mrf.mxu0
    %v3966 = vadd.f32 0.0, %v3965
    %v3967 = vand.u32 %v2992, 4294901760
    %v3968 = vsub.f32 %v2992, %v3967
    %v3969 = vand.u32 %v3968, 4294901760
    %v3970 = vsub.f32 %v3968, %v3969
    %v3971 = vand.u32 %v3970, 4294901760
    %3972 = vmatmul.f32.gmra.mxu0 %v3971
    %v3973 = vpop.f32.mrf.mxu0
    %v3974 = vadd.f32 0.0, %v3973
    %3975 = vdwg.mxu0
    %v3976 = vand.u32 %v3910, 4294901760
    %v3977 = vsub.f32 %v3910, %v3976
    %v3978 = vand.u32 %v3977, 4294901760
    %v3979 = vsub.f32 %v3977, %v3978
    %v3980 = vand.u32 %v3979, 4294901760
    %3981 = vmatpush.msra.mxu0 %v3980
    %v3982 = vand.u32 %v3909, 4294901760
    %v3983 = vsub.f32 %v3909, %v3982
    %v3984 = vand.u32 %v3983, 4294901760
    %v3985 = vsub.f32 %v3983, %v3984
    %v3986 = vand.u32 %v3985, 4294901760
    %3987 = vmatpush.msra.mxu0 %v3986
    %v3988 = vand.u32 %v3908, 4294901760
    %v3989 = vsub.f32 %v3908, %v3988
    %v3990 = vand.u32 %v3989, 4294901760
    %v3991 = vsub.f32 %v3989, %v3990
    %v3992 = vand.u32 %v3991, 4294901760
    %3993 = vmatpush.msra.mxu0 %v3992
    %v3994 = vand.u32 %v3907, 4294901760
    %v3995 = vsub.f32 %v3907, %v3994
    %v3996 = vand.u32 %v3995, 4294901760
    %v3997 = vsub.f32 %v3995, %v3996
    %v3998 = vand.u32 %v3997, 4294901760
    %3999 = vmatpush.msra.mxu0 %v3998
    %v4000 = vand.u32 %v3906, 4294901760
    %v4001 = vsub.f32 %v3906, %v4000
    %v4002 = vand.u32 %v4001, 4294901760
    %v4003 = vsub.f32 %v4001, %v4002
    %v4004 = vand.u32 %v4003, 4294901760
    %4005 = vmatpush.msra.mxu0 %v4004
    %v4006 = vand.u32 %v3905, 4294901760
    %v4007 = vsub.f32 %v3905, %v4006
    %v4008 = vand.u32 %v4007, 4294901760
    %v4009 = vsub.f32 %v4007, %v4008
    %v4010 = vand.u32 %v4009, 4294901760
    %4011 = vmatpush.msra.mxu0 %v4010
    %v4012 = vand.u32 %v3904, 4294901760
    %v4013 = vsub.f32 %v3904, %v4012
    %v4014 = vand.u32 %v4013, 4294901760
    %v4015 = vsub.f32 %v4013, %v4014
    %v4016 = vand.u32 %v4015, 4294901760
    %4017 = vmatpush.msra.mxu0 %v4016
    %v4018 = vand.u32 %v3903, 4294901760
    %v4019 = vsub.f32 %v3903, %v4018
    %v4020 = vand.u32 %v4019, 4294901760
    %v4021 = vsub.f32 %v4019, %v4020
    %v4022 = vand.u32 %v4021, 4294901760
    %4023 = vmatpush.msra.mxu0 %v4022
    %v4024 = vand.u32 %v3902, 4294901760
    %v4025 = vsub.f32 %v3902, %v4024
    %v4026 = vand.u32 %v4025, 4294901760
    %v4027 = vsub.f32 %v4025, %v4026
    %v4028 = vand.u32 %v4027, 4294901760
    %4029 = vmatpush.msra.mxu0 %v4028
    %v4030 = vand.u32 %v3901, 4294901760
    %v4031 = vsub.f32 %v3901, %v4030
    %v4032 = vand.u32 %v4031, 4294901760
    %v4033 = vsub.f32 %v4031, %v4032
    %v4034 = vand.u32 %v4033, 4294901760
    %4035 = vmatpush.msra.mxu0 %v4034
    %v4036 = vand.u32 %v3900, 4294901760
    %v4037 = vsub.f32 %v3900, %v4036
    %v4038 = vand.u32 %v4037, 4294901760
    %v4039 = vsub.f32 %v4037, %v4038
    %v4040 = vand.u32 %v4039, 4294901760
    %4041 = vmatpush.msra.mxu0 %v4040
    %v4042 = vand.u32 %v3899, 4294901760
    %v4043 = vsub.f32 %v3899, %v4042
    %v4044 = vand.u32 %v4043, 4294901760
    %v4045 = vsub.f32 %v4043, %v4044
    %v4046 = vand.u32 %v4045, 4294901760
    %4047 = vmatpush.msra.mxu0 %v4046
    %v4048 = vand.u32 %v3898, 4294901760
    %v4049 = vsub.f32 %v3898, %v4048
    %v4050 = vand.u32 %v4049, 4294901760
    %v4051 = vsub.f32 %v4049, %v4050
    %v4052 = vand.u32 %v4051, 4294901760
    %4053 = vmatpush.msra.mxu0 %v4052
    %v4054 = vand.u32 %v3897, 4294901760
    %v4055 = vsub.f32 %v3897, %v4054
    %v4056 = vand.u32 %v4055, 4294901760
    %v4057 = vsub.f32 %v4055, %v4056
    %v4058 = vand.u32 %v4057, 4294901760
    %4059 = vmatpush.msra.mxu0 %v4058
    %v4060 = vand.u32 %v3896, 4294901760
    %v4061 = vsub.f32 %v3896, %v4060
    %v4062 = vand.u32 %v4061, 4294901760
    %v4063 = vsub.f32 %v4061, %v4062
    %v4064 = vand.u32 %v4063, 4294901760
    %4065 = vmatpush.msra.mxu0 %v4064
    %v4066 = vand.u32 %v3895, 4294901760
    %v4067 = vsub.f32 %v3895, %v4066
    %v4068 = vand.u32 %v4067, 4294901760
    %v4069 = vsub.f32 %v4067, %v4068
    %v4070 = vand.u32 %v4069, 4294901760
    %4071 = vmatpush.msra.mxu0 %v4070
    %v4072 = vand.u32 %v2982, 4294901760
    %4073 = vmatmul.f32.gmra.mxu0 %v4072
    %v4074 = vpop.f32.mrf.mxu0
    %v4075 = vadd.f32 %v3950, %v4074
    %v4076 = vand.u32 %v2991, 4294901760
    %4077 = vmatmul.f32.gmra.mxu0 %v4076
    %v4078 = vpop.f32.mrf.mxu0
    %v4079 = vadd.f32 %v3958, %v4078
    %v4080 = vand.u32 %v2984, 4294901760
    %4081 = vmatmul.f32.gmra.mxu0 %v4080
    %v4082 = vpop.f32.mrf.mxu0
    %v4083 = vadd.f32 %v3966, %v4082
    %v4084 = vand.u32 %v2992, 4294901760
    %4085 = vmatmul.f32.gmra.mxu0 %v4084
    %v4086 = vpop.f32.mrf.mxu0
    %v4087 = vadd.f32 %v3974, %v4086
    %4088 = vdwg.mxu0
    %v4089 = vand.u32 %v3910, 4294901760
    %v4090 = vsub.f32 %v3910, %v4089
    %4091 = vmatpush.msra.mxu0 %v4090
    %v4092 = vand.u32 %v3909, 4294901760
    %v4093 = vsub.f32 %v3909, %v4092
    %4094 = vmatpush.msra.mxu0 %v4093
    %v4095 = vand.u32 %v3908, 4294901760
    %v4096 = vsub.f32 %v3908, %v4095
    %4097 = vmatpush.msra.mxu0 %v4096
    %v4098 = vand.u32 %v3907, 4294901760
    %v4099 = vsub.f32 %v3907, %v4098
    %4100 = vmatpush.msra.mxu0 %v4099
    %v4101 = vand.u32 %v3906, 4294901760
    %v4102 = vsub.f32 %v3906, %v4101
    %4103 = vmatpush.msra.mxu0 %v4102
    %v4104 = vand.u32 %v3905, 4294901760
    %v4105 = vsub.f32 %v3905, %v4104
    %4106 = vmatpush.msra.mxu0 %v4105
    %v4107 = vand.u32 %v3904, 4294901760
    %v4108 = vsub.f32 %v3904, %v4107
    %4109 = vmatpush.msra.mxu0 %v4108
    %v4110 = vand.u32 %v3903, 4294901760
    %v4111 = vsub.f32 %v3903, %v4110
    %4112 = vmatpush.msra.mxu0 %v4111
    %v4113 = vand.u32 %v3902, 4294901760
    %v4114 = vsub.f32 %v3902, %v4113
    %4115 = vmatpush.msra.mxu0 %v4114
    %v4116 = vand.u32 %v3901, 4294901760
    %v4117 = vsub.f32 %v3901, %v4116
    %4118 = vmatpush.msra.mxu0 %v4117
    %v4119 = vand.u32 %v3900, 4294901760
    %v4120 = vsub.f32 %v3900, %v4119
    %4121 = vmatpush.msra.mxu0 %v4120
    %v4122 = vand.u32 %v3899, 4294901760
    %v4123 = vsub.f32 %v3899, %v4122
    %4124 = vmatpush.msra.mxu0 %v4123
    %v4125 = vand.u32 %v3898, 4294901760
    %v4126 = vsub.f32 %v3898, %v4125
    %4127 = vmatpush.msra.mxu0 %v4126
    %v4128 = vand.u32 %v3897, 4294901760
    %v4129 = vsub.f32 %v3897, %v4128
    %4130 = vmatpush.msra.mxu0 %v4129
    %v4131 = vand.u32 %v3896, 4294901760
    %v4132 = vsub.f32 %v3896, %v4131
    %4133 = vmatpush.msra.mxu0 %v4132
    %v4134 = vand.u32 %v3895, 4294901760
    %v4135 = vsub.f32 %v3895, %v4134
    %4136 = vmatpush.msra.mxu0 %v4135
    %v4137 = vand.u32 %v2982, 4294901760
    %v4138 = vsub.f32 %v2982, %v4137
    %4139 = vmatmul.f32.gmra.mxu0 %v4138
    %v4140 = vpop.f32.mrf.mxu0
    %v4141 = vadd.f32 %v4075, %v4140
    %v4142 = vand.u32 %v2991, 4294901760
    %v4143 = vsub.f32 %v2991, %v4142
    %4144 = vmatmul.f32.gmra.mxu0 %v4143
    %v4145 = vpop.f32.mrf.mxu0
    %v4146 = vadd.f32 %v4079, %v4145
    %v4147 = vand.u32 %v2984, 4294901760
    %v4148 = vsub.f32 %v2984, %v4147
    %4149 = vmatmul.f32.gmra.mxu0 %v4148
    %v4150 = vpop.f32.mrf.mxu0
    %v4151 = vadd.f32 %v4083, %v4150
    %v4152 = vand.u32 %v2992, 4294901760
    %v4153 = vsub.f32 %v2992, %v4152
    %4154 = vmatmul.f32.gmra.mxu0 %v4153
    %v4155 = vpop.f32.mrf.mxu0
    %v4156 = vadd.f32 %v4087, %v4155
    %4157 = vdwg.mxu0
    %v4158 = vand.u32 %v3910, 4294901760
    %4159 = vmatpush.msra.mxu0 %v4158
    %v4160 = vand.u32 %v3909, 4294901760
    %4161 = vmatpush.msra.mxu0 %v4160
    %v4162 = vand.u32 %v3908, 4294901760
    %4163 = vmatpush.msra.mxu0 %v4162
    %v4164 = vand.u32 %v3907, 4294901760
    %4165 = vmatpush.msra.mxu0 %v4164
    %v4166 = vand.u32 %v3906, 4294901760
    %4167 = vmatpush.msra.mxu0 %v4166
    %v4168 = vand.u32 %v3905, 4294901760
    %4169 = vmatpush.msra.mxu0 %v4168
    %v4170 = vand.u32 %v3904, 4294901760
    %4171 = vmatpush.msra.mxu0 %v4170
    %v4172 = vand.u32 %v3903, 4294901760
    %4173 = vmatpush.msra.mxu0 %v4172
    %v4174 = vand.u32 %v3902, 4294901760
    %4175 = vmatpush.msra.mxu0 %v4174
    %v4176 = vand.u32 %v3901, 4294901760
    %4177 = vmatpush.msra.mxu0 %v4176
    %v4178 = vand.u32 %v3900, 4294901760
    %4179 = vmatpush.msra.mxu0 %v4178
    %v4180 = vand.u32 %v3899, 4294901760
    %4181 = vmatpush.msra.mxu0 %v4180
    %v4182 = vand.u32 %v3898, 4294901760
    %4183 = vmatpush.msra.mxu0 %v4182
    %v4184 = vand.u32 %v3897, 4294901760
    %4185 = vmatpush.msra.mxu0 %v4184
    %v4186 = vand.u32 %v3896, 4294901760
    %4187 = vmatpush.msra.mxu0 %v4186
    %v4188 = vand.u32 %v3895, 4294901760
    %4189 = vmatpush.msra.mxu0 %v4188
    %v4190 = vand.u32 %v2982, 4294901760
    %v4191 = vsub.f32 %v2982, %v4190
    %v4192 = vand.u32 %v4191, 4294901760
    %4193 = vmatmul.f32.gmra.mxu0 %v4192
    %v4194 = vpop.f32.mrf.mxu0
    %v4195 = vadd.f32 %v4141, %v4194
    %v4196 = vand.u32 %v2991, 4294901760
    %v4197 = vsub.f32 %v2991, %v4196
    %v4198 = vand.u32 %v4197, 4294901760
    %4199 = vmatmul.f32.gmra.mxu0 %v4198
    %v4200 = vpop.f32.mrf.mxu0
    %v4201 = vadd.f32 %v4146, %v4200
    %v4202 = vand.u32 %v2984, 4294901760
    %v4203 = vsub.f32 %v2984, %v4202
    %v4204 = vand.u32 %v4203, 4294901760
    %4205 = vmatmul.f32.gmra.mxu0 %v4204
    %v4206 = vpop.f32.mrf.mxu0
    %v4207 = vadd.f32 %v4151, %v4206
    %v4208 = vand.u32 %v2992, 4294901760
    %v4209 = vsub.f32 %v2992, %v4208
    %v4210 = vand.u32 %v4209, 4294901760
    %4211 = vmatmul.f32.gmra.mxu0 %v4210
    %v4212 = vpop.f32.mrf.mxu0
    %v4213 = vadd.f32 %v4156, %v4212
    %4214 = vdwg.mxu0
    %v4215 = vand.u32 %v3910, 4294901760
    %v4216 = vsub.f32 %v3910, %v4215
    %v4217 = vand.u32 %v4216, 4294901760
    %4218 = vmatpush.msra.mxu0 %v4217
    %v4219 = vand.u32 %v3909, 4294901760
    %v4220 = vsub.f32 %v3909, %v4219
    %v4221 = vand.u32 %v4220, 4294901760
    %4222 = vmatpush.msra.mxu0 %v4221
    %v4223 = vand.u32 %v3908, 4294901760
    %v4224 = vsub.f32 %v3908, %v4223
    %v4225 = vand.u32 %v4224, 4294901760
    %4226 = vmatpush.msra.mxu0 %v4225
    %v4227 = vand.u32 %v3907, 4294901760
    %v4228 = vsub.f32 %v3907, %v4227
    %v4229 = vand.u32 %v4228, 4294901760
    %4230 = vmatpush.msra.mxu0 %v4229
    %v4231 = vand.u32 %v3906, 4294901760
    %v4232 = vsub.f32 %v3906, %v4231
    %v4233 = vand.u32 %v4232, 4294901760
    %4234 = vmatpush.msra.mxu0 %v4233
    %v4235 = vand.u32 %v3905, 4294901760
    %v4236 = vsub.f32 %v3905, %v4235
    %v4237 = vand.u32 %v4236, 4294901760
    %4238 = vmatpush.msra.mxu0 %v4237
    %v4239 = vand.u32 %v3904, 4294901760
    %v4240 = vsub.f32 %v3904, %v4239
    %v4241 = vand.u32 %v4240, 4294901760
    %4242 = vmatpush.msra.mxu0 %v4241
    %v4243 = vand.u32 %v3903, 4294901760
    %v4244 = vsub.f32 %v3903, %v4243
    %v4245 = vand.u32 %v4244, 4294901760
    %4246 = vmatpush.msra.mxu0 %v4245
    %v4247 = vand.u32 %v3902, 4294901760
    %v4248 = vsub.f32 %v3902, %v4247
    %v4249 = vand.u32 %v4248, 4294901760
    %4250 = vmatpush.msra.mxu0 %v4249
    %v4251 = vand.u32 %v3901, 4294901760
    %v4252 = vsub.f32 %v3901, %v4251
    %v4253 = vand.u32 %v4252, 4294901760
    %4254 = vmatpush.msra.mxu0 %v4253
    %v4255 = vand.u32 %v3900, 4294901760
    %v4256 = vsub.f32 %v3900, %v4255
    %v4257 = vand.u32 %v4256, 4294901760
    %4258 = vmatpush.msra.mxu0 %v4257
    %v4259 = vand.u32 %v3899, 4294901760
    %v4260 = vsub.f32 %v3899, %v4259
    %v4261 = vand.u32 %v4260, 4294901760
    %4262 = vmatpush.msra.mxu0 %v4261
    %v4263 = vand.u32 %v3898, 4294901760
    %v4264 = vsub.f32 %v3898, %v4263
    %v4265 = vand.u32 %v4264, 4294901760
    %4266 = vmatpush.msra.mxu0 %v4265
    %v4267 = vand.u32 %v3897, 4294901760
    %v4268 = vsub.f32 %v3897, %v4267
    %v4269 = vand.u32 %v4268, 4294901760
    %4270 = vmatpush.msra.mxu0 %v4269
    %v4271 = vand.u32 %v3896, 4294901760
    %v4272 = vsub.f32 %v3896, %v4271
    %v4273 = vand.u32 %v4272, 4294901760
    %4274 = vmatpush.msra.mxu0 %v4273
    %v4275 = vand.u32 %v3895, 4294901760
    %v4276 = vsub.f32 %v3895, %v4275
    %v4277 = vand.u32 %v4276, 4294901760
    %4278 = vmatpush.msra.mxu0 %v4277
    %v4279 = vand.u32 %v2982, 4294901760
    %4280 = vmatmul.f32.gmra.mxu0 %v4279
    %v4281 = vpop.f32.mrf.mxu0
    %v4282 = vadd.f32 %v4195, %v4281
    %v4283 = vand.u32 %v2991, 4294901760
    %4284 = vmatmul.f32.gmra.mxu0 %v4283
    %v4285 = vpop.f32.mrf.mxu0
    %v4286 = vadd.f32 %v4201, %v4285
    %v4287 = vand.u32 %v2984, 4294901760
    %4288 = vmatmul.f32.gmra.mxu0 %v4287
    %v4289 = vpop.f32.mrf.mxu0
    %v4290 = vadd.f32 %v4207, %v4289
    %v4291 = vand.u32 %v2992, 4294901760
    %4292 = vmatmul.f32.gmra.mxu0 %v4291
    %v4293 = vpop.f32.mrf.mxu0
    %v4294 = vadd.f32 %v4213, %v4293
    %4295 = vdwg.mxu0
    %v4296 = vand.u32 %v3910, 4294901760
    %4297 = vmatpush.msra.mxu0 %v4296
    %v4298 = vand.u32 %v3909, 4294901760
    %4299 = vmatpush.msra.mxu0 %v4298
    %v4300 = vand.u32 %v3908, 4294901760
    %4301 = vmatpush.msra.mxu0 %v4300
    %v4302 = vand.u32 %v3907, 4294901760
    %4303 = vmatpush.msra.mxu0 %v4302
    %v4304 = vand.u32 %v3906, 4294901760
    %4305 = vmatpush.msra.mxu0 %v4304
    %v4306 = vand.u32 %v3905, 4294901760
    %4307 = vmatpush.msra.mxu0 %v4306
    %v4308 = vand.u32 %v3904, 4294901760
    %4309 = vmatpush.msra.mxu0 %v4308
    %v4310 = vand.u32 %v3903, 4294901760
    %4311 = vmatpush.msra.mxu0 %v4310
    %v4312 = vand.u32 %v3902, 4294901760
    %4313 = vmatpush.msra.mxu0 %v4312
    %v4314 = vand.u32 %v3901, 4294901760
    %4315 = vmatpush.msra.mxu0 %v4314
    %v4316 = vand.u32 %v3900, 4294901760
    %4317 = vmatpush.msra.mxu0 %v4316
    %v4318 = vand.u32 %v3899, 4294901760
    %4319 = vmatpush.msra.mxu0 %v4318
    %v4320 = vand.u32 %v3898, 4294901760
    %4321 = vmatpush.msra.mxu0 %v4320
    %v4322 = vand.u32 %v3897, 4294901760
    %4323 = vmatpush.msra.mxu0 %v4322
    %v4324 = vand.u32 %v3896, 4294901760
    %4325 = vmatpush.msra.mxu0 %v4324
    %v4326 = vand.u32 %v3895, 4294901760
    %4327 = vmatpush.msra.mxu0 %v4326
    %v4328 = vand.u32 %v2982, 4294901760
    %4329 = vmatmul.f32.gmra.mxu0 %v4328
    %v4330 = vpop.f32.mrf.mxu0
    %v4331 = vadd.f32 %v4282, %v4330
    %v4332 = vand.u32 %v2991, 4294901760
    %4333 = vmatmul.f32.gmra.mxu0 %v4332
    %v4334 = vpop.f32.mrf.mxu0
    %v4335 = vadd.f32 %v4286, %v4334
    %v4336 = vand.u32 %v2984, 4294901760
    %4337 = vmatmul.f32.gmra.mxu0 %v4336
    %v4338 = vpop.f32.mrf.mxu0
    %v4339 = vadd.f32 %v4290, %v4338
    %v4340 = vand.u32 %v2992, 4294901760
    %4341 = vmatmul.f32.gmra.mxu0 %v4340
    %v4342 = vpop.f32.mrf.mxu0
    %v4343 = vadd.f32 %v4294, %v4342
    %4344 = vdwg.mxu0
    %v4345 = vadd.f32 %v3880, %v4331
    %v4346 = vadd.f32 %v3884, %v4335
    %v4347 = vadd.f32 %v3888, %v4339
    %v4348 = vadd.f32 %v3892, %v4343
    %v4349 = vld [vmem:[%s10] sm:$0x1]
    %v4350 = vld [vmem:[%s11] sm:$0x1]
    %v4351 = vadd.f32 %v4345, %v4346
    %v4352 = vadd.f32 %v4351, %v4347
    %v4353 = vadd.f32 %v4352, %v4348
    %v4354 = vrot.slane %v4353, 4
    %v4355 = vadd.f32 %v4353, %v4354
    %v4356 = vrot.slane %v4355, 2
    %v4357 = vadd.f32 %v4355, %v4356
    %v4358 = vrot.slane %v4357, 1
    %v4359 = vadd.f32 %v4357, %v4358
    %v4360 = vmul.f32 %v4345, %v4345
    %v4361 = vmul.f32 %v4346, %v4346
    %v4362 = vmul.f32 %v4347, %v4347
    %v4363 = vmul.f32 %v4348, %v4348
    %v4364 = vadd.f32 %v4360, %v4361
    %v4365 = vadd.f32 %v4364, %v4362
    %v4366 = vadd.f32 %v4365, %v4363
    %v4367 = vrot.slane %v4366, 4
    %v4368 = vadd.f32 %v4366, %v4367
    %v4369 = vrot.slane %v4368, 2
    %v4370 = vadd.f32 %v4368, %v4369
    %v4371 = vrot.slane %v4370, 1
    %v4372 = vadd.f32 %v4370, %v4371
    %v4373 = vand.u32 %v67, 4294901760
    %4374 = vmatpush.msra.mxu0 %v4373
    %v4375 = vand.u32 %v66, 4294901760
    %4376 = vmatpush.msra.mxu0 %v4375
    %v4377 = vand.u32 %v65, 4294901760
    %4378 = vmatpush.msra.mxu0 %v4377
    %v4379 = vand.u32 %v64, 4294901760
    %4380 = vmatpush.msra.mxu0 %v4379
    %v4381 = vand.u32 %v63, 4294901760
    %4382 = vmatpush.msra.mxu0 %v4381
    %v4383 = vand.u32 %v62, 4294901760
    %4384 = vmatpush.msra.mxu0 %v4383
    %v4385 = vand.u32 %v61, 4294901760
    %4386 = vmatpush.msra.mxu0 %v4385
    %v4387 = vand.u32 %v60, 4294901760
    %4388 = vmatpush.msra.mxu0 %v4387
    %v4389 = vand.u32 %v59, 4294901760
    %4390 = vmatpush.msra.mxu0 %v4389
    %v4391 = vand.u32 %v58, 4294901760
    %4392 = vmatpush.msra.mxu0 %v4391
    %v4393 = vand.u32 %v57, 4294901760
    %4394 = vmatpush.msra.mxu0 %v4393
    %v4395 = vand.u32 %v56, 4294901760
    %4396 = vmatpush.msra.mxu0 %v4395
    %v4397 = vand.u32 %v55, 4294901760
    %4398 = vmatpush.msra.mxu0 %v4397
    %v4399 = vand.u32 %v54, 4294901760
    %4400 = vmatpush.msra.mxu0 %v4399
    %v4401 = vand.u32 %v53, 4294901760
    %4402 = vmatpush.msra.mxu0 %v4401
    %v4403 = vand.u32 %v52, 4294901760
    %4404 = vmatpush.msra.mxu0 %v4403
    %v4405 = vand.u32 %v4359, 4294901760
    %v4406 = vsub.f32 %v4359, %v4405
    %v4407 = vand.u32 %v4406, 4294901760
    %v4408 = vsub.f32 %v4406, %v4407
    %v4409 = vand.u32 %v4408, 4294901760
    %4410 = vmatmul.f32.gmra.mxu0 %v4409
    %v4411 = vpop.f32.mrf.mxu0
    %v4412 = vadd.f32 0.0, %v4411
    %4413 = vdwg.mxu0
    %v4414 = vand.u32 %v67, 4294901760
    %v4415 = vsub.f32 %v67, %v4414
    %v4416 = vand.u32 %v4415, 4294901760
    %v4417 = vsub.f32 %v4415, %v4416
    %v4418 = vand.u32 %v4417, 4294901760
    %4419 = vmatpush.msra.mxu0 %v4418
    %v4420 = vand.u32 %v66, 4294901760
    %v4421 = vsub.f32 %v66, %v4420
    %v4422 = vand.u32 %v4421, 4294901760
    %v4423 = vsub.f32 %v4421, %v4422
    %v4424 = vand.u32 %v4423, 4294901760
    %4425 = vmatpush.msra.mxu0 %v4424
    %v4426 = vand.u32 %v65, 4294901760
    %v4427 = vsub.f32 %v65, %v4426
    %v4428 = vand.u32 %v4427, 4294901760
    %v4429 = vsub.f32 %v4427, %v4428
    %v4430 = vand.u32 %v4429, 4294901760
    %4431 = vmatpush.msra.mxu0 %v4430
    %v4432 = vand.u32 %v64, 4294901760
    %v4433 = vsub.f32 %v64, %v4432
    %v4434 = vand.u32 %v4433, 4294901760
    %v4435 = vsub.f32 %v4433, %v4434
    %v4436 = vand.u32 %v4435, 4294901760
    %4437 = vmatpush.msra.mxu0 %v4436
    %v4438 = vand.u32 %v63, 4294901760
    %v4439 = vsub.f32 %v63, %v4438
    %v4440 = vand.u32 %v4439, 4294901760
    %v4441 = vsub.f32 %v4439, %v4440
    %v4442 = vand.u32 %v4441, 4294901760
    %4443 = vmatpush.msra.mxu0 %v4442
    %v4444 = vand.u32 %v62, 4294901760
    %v4445 = vsub.f32 %v62, %v4444
    %v4446 = vand.u32 %v4445, 4294901760
    %v4447 = vsub.f32 %v4445, %v4446
    %v4448 = vand.u32 %v4447, 4294901760
    %4449 = vmatpush.msra.mxu0 %v4448
    %v4450 = vand.u32 %v61, 4294901760
    %v4451 = vsub.f32 %v61, %v4450
    %v4452 = vand.u32 %v4451, 4294901760
    %v4453 = vsub.f32 %v4451, %v4452
    %v4454 = vand.u32 %v4453, 4294901760
    %4455 = vmatpush.msra.mxu0 %v4454
    %v4456 = vand.u32 %v60, 4294901760
    %v4457 = vsub.f32 %v60, %v4456
    %v4458 = vand.u32 %v4457, 4294901760
    %v4459 = vsub.f32 %v4457, %v4458
    %v4460 = vand.u32 %v4459, 4294901760
    %4461 = vmatpush.msra.mxu0 %v4460
    %v4462 = vand.u32 %v59, 4294901760
    %v4463 = vsub.f32 %v59, %v4462
    %v4464 = vand.u32 %v4463, 4294901760
    %v4465 = vsub.f32 %v4463, %v4464
    %v4466 = vand.u32 %v4465, 4294901760
    %4467 = vmatpush.msra.mxu0 %v4466
    %v4468 = vand.u32 %v58, 4294901760
    %v4469 = vsub.f32 %v58, %v4468
    %v4470 = vand.u32 %v4469, 4294901760
    %v4471 = vsub.f32 %v4469, %v4470
    %v4472 = vand.u32 %v4471, 4294901760
    %4473 = vmatpush.msra.mxu0 %v4472
    %v4474 = vand.u32 %v57, 4294901760
    %v4475 = vsub.f32 %v57, %v4474
    %v4476 = vand.u32 %v4475, 4294901760
    %v4477 = vsub.f32 %v4475, %v4476
    %v4478 = vand.u32 %v4477, 4294901760
    %4479 = vmatpush.msra.mxu0 %v4478
    %v4480 = vand.u32 %v56, 4294901760
    %v4481 = vsub.f32 %v56, %v4480
    %v4482 = vand.u32 %v4481, 4294901760
    %v4483 = vsub.f32 %v4481, %v4482
    %v4484 = vand.u32 %v4483, 4294901760
    %4485 = vmatpush.msra.mxu0 %v4484
    %v4486 = vand.u32 %v55, 4294901760
    %v4487 = vsub.f32 %v55, %v4486
    %v4488 = vand.u32 %v4487, 4294901760
    %v4489 = vsub.f32 %v4487, %v4488
    %v4490 = vand.u32 %v4489, 4294901760
    %4491 = vmatpush.msra.mxu0 %v4490
    %v4492 = vand.u32 %v54, 4294901760
    %v4493 = vsub.f32 %v54, %v4492
    %v4494 = vand.u32 %v4493, 4294901760
    %v4495 = vsub.f32 %v4493, %v4494
    %v4496 = vand.u32 %v4495, 4294901760
    %4497 = vmatpush.msra.mxu0 %v4496
    %v4498 = vand.u32 %v53, 4294901760
    %v4499 = vsub.f32 %v53, %v4498
    %v4500 = vand.u32 %v4499, 4294901760
    %v4501 = vsub.f32 %v4499, %v4500
    %v4502 = vand.u32 %v4501, 4294901760
    %4503 = vmatpush.msra.mxu0 %v4502
    %v4504 = vand.u32 %v52, 4294901760
    %v4505 = vsub.f32 %v52, %v4504
    %v4506 = vand.u32 %v4505, 4294901760
    %v4507 = vsub.f32 %v4505, %v4506
    %v4508 = vand.u32 %v4507, 4294901760
    %4509 = vmatpush.msra.mxu0 %v4508
    %v4510 = vand.u32 %v4359, 4294901760
    %4511 = vmatmul.f32.gmra.mxu0 %v4510
    %v4512 = vpop.f32.mrf.mxu0
    %v4513 = vadd.f32 %v4412, %v4512
    %4514 = vdwg.mxu0
    %v4515 = vand.u32 %v67, 4294901760
    %v4516 = vsub.f32 %v67, %v4515
    %4517 = vmatpush.msra.mxu0 %v4516
    %v4518 = vand.u32 %v66, 4294901760
    %v4519 = vsub.f32 %v66, %v4518
    %4520 = vmatpush.msra.mxu0 %v4519
    %v4521 = vand.u32 %v65, 4294901760
    %v4522 = vsub.f32 %v65, %v4521
    %4523 = vmatpush.msra.mxu0 %v4522
    %v4524 = vand.u32 %v64, 4294901760
    %v4525 = vsub.f32 %v64, %v4524
    %4526 = vmatpush.msra.mxu0 %v4525
    %v4527 = vand.u32 %v63, 4294901760
    %v4528 = vsub.f32 %v63, %v4527
    %4529 = vmatpush.msra.mxu0 %v4528
    %v4530 = vand.u32 %v62, 4294901760
    %v4531 = vsub.f32 %v62, %v4530
    %4532 = vmatpush.msra.mxu0 %v4531
    %v4533 = vand.u32 %v61, 4294901760
    %v4534 = vsub.f32 %v61, %v4533
    %4535 = vmatpush.msra.mxu0 %v4534
    %v4536 = vand.u32 %v60, 4294901760
    %v4537 = vsub.f32 %v60, %v4536
    %4538 = vmatpush.msra.mxu0 %v4537
    %v4539 = vand.u32 %v59, 4294901760
    %v4540 = vsub.f32 %v59, %v4539
    %4541 = vmatpush.msra.mxu0 %v4540
    %v4542 = vand.u32 %v58, 4294901760
    %v4543 = vsub.f32 %v58, %v4542
    %4544 = vmatpush.msra.mxu0 %v4543
    %v4545 = vand.u32 %v57, 4294901760
    %v4546 = vsub.f32 %v57, %v4545
    %4547 = vmatpush.msra.mxu0 %v4546
    %v4548 = vand.u32 %v56, 4294901760
    %v4549 = vsub.f32 %v56, %v4548
    %4550 = vmatpush.msra.mxu0 %v4549
    %v4551 = vand.u32 %v55, 4294901760
    %v4552 = vsub.f32 %v55, %v4551
    %4553 = vmatpush.msra.mxu0 %v4552
    %v4554 = vand.u32 %v54, 4294901760
    %v4555 = vsub.f32 %v54, %v4554
    %4556 = vmatpush.msra.mxu0 %v4555
    %v4557 = vand.u32 %v53, 4294901760
    %v4558 = vsub.f32 %v53, %v4557
    %4559 = vmatpush.msra.mxu0 %v4558
    %v4560 = vand.u32 %v52, 4294901760
    %v4561 = vsub.f32 %v52, %v4560
    %4562 = vmatpush.msra.mxu0 %v4561
    %v4563 = vand.u32 %v4359, 4294901760
    %v4564 = vsub.f32 %v4359, %v4563
    %4565 = vmatmul.f32.gmra.mxu0 %v4564
    %v4566 = vpop.f32.mrf.mxu0
    %v4567 = vadd.f32 %v4513, %v4566
    %4568 = vdwg.mxu0
    %v4569 = vand.u32 %v67, 4294901760
    %4570 = vmatpush.msra.mxu0 %v4569
    %v4571 = vand.u32 %v66, 4294901760
    %4572 = vmatpush.msra.mxu0 %v4571
    %v4573 = vand.u32 %v65, 4294901760
    %4574 = vmatpush.msra.mxu0 %v4573
    %v4575 = vand.u32 %v64, 4294901760
    %4576 = vmatpush.msra.mxu0 %v4575
    %v4577 = vand.u32 %v63, 4294901760
    %4578 = vmatpush.msra.mxu0 %v4577
    %v4579 = vand.u32 %v62, 4294901760
    %4580 = vmatpush.msra.mxu0 %v4579
    %v4581 = vand.u32 %v61, 4294901760
    %4582 = vmatpush.msra.mxu0 %v4581
    %v4583 = vand.u32 %v60, 4294901760
    %4584 = vmatpush.msra.mxu0 %v4583
    %v4585 = vand.u32 %v59, 4294901760
    %4586 = vmatpush.msra.mxu0 %v4585
    %v4587 = vand.u32 %v58, 4294901760
    %4588 = vmatpush.msra.mxu0 %v4587
    %v4589 = vand.u32 %v57, 4294901760
    %4590 = vmatpush.msra.mxu0 %v4589
    %v4591 = vand.u32 %v56, 4294901760
    %4592 = vmatpush.msra.mxu0 %v4591
    %v4593 = vand.u32 %v55, 4294901760
    %4594 = vmatpush.msra.mxu0 %v4593
    %v4595 = vand.u32 %v54, 4294901760
    %4596 = vmatpush.msra.mxu0 %v4595
    %v4597 = vand.u32 %v53, 4294901760
    %4598 = vmatpush.msra.mxu0 %v4597
    %v4599 = vand.u32 %v52, 4294901760
    %4600 = vmatpush.msra.mxu0 %v4599
    %v4601 = vand.u32 %v4359, 4294901760
    %v4602 = vsub.f32 %v4359, %v4601
    %v4603 = vand.u32 %v4602, 4294901760
    %4604 = vmatmul.f32.gmra.mxu0 %v4603
    %v4605 = vpop.f32.mrf.mxu0
    %v4606 = vadd.f32 %v4567, %v4605
    %4607 = vdwg.mxu0
    %v4608 = vand.u32 %v67, 4294901760
    %v4609 = vsub.f32 %v67, %v4608
    %v4610 = vand.u32 %v4609, 4294901760
    %4611 = vmatpush.msra.mxu0 %v4610
    %v4612 = vand.u32 %v66, 4294901760
    %v4613 = vsub.f32 %v66, %v4612
    %v4614 = vand.u32 %v4613, 4294901760
    %4615 = vmatpush.msra.mxu0 %v4614
    %v4616 = vand.u32 %v65, 4294901760
    %v4617 = vsub.f32 %v65, %v4616
    %v4618 = vand.u32 %v4617, 4294901760
    %4619 = vmatpush.msra.mxu0 %v4618
    %v4620 = vand.u32 %v64, 4294901760
    %v4621 = vsub.f32 %v64, %v4620
    %v4622 = vand.u32 %v4621, 4294901760
    %4623 = vmatpush.msra.mxu0 %v4622
    %v4624 = vand.u32 %v63, 4294901760
    %v4625 = vsub.f32 %v63, %v4624
    %v4626 = vand.u32 %v4625, 4294901760
    %4627 = vmatpush.msra.mxu0 %v4626
    %v4628 = vand.u32 %v62, 4294901760
    %v4629 = vsub.f32 %v62, %v4628
    %v4630 = vand.u32 %v4629, 4294901760
    %4631 = vmatpush.msra.mxu0 %v4630
    %v4632 = vand.u32 %v61, 4294901760
    %v4633 = vsub.f32 %v61, %v4632
    %v4634 = vand.u32 %v4633, 4294901760
    %4635 = vmatpush.msra.mxu0 %v4634
    %v4636 = vand.u32 %v60, 4294901760
    %v4637 = vsub.f32 %v60, %v4636
    %v4638 = vand.u32 %v4637, 4294901760
    %4639 = vmatpush.msra.mxu0 %v4638
    %v4640 = vand.u32 %v59, 4294901760
    %v4641 = vsub.f32 %v59, %v4640
    %v4642 = vand.u32 %v4641, 4294901760
    %4643 = vmatpush.msra.mxu0 %v4642
    %v4644 = vand.u32 %v58, 4294901760
    %v4645 = vsub.f32 %v58, %v4644
    %v4646 = vand.u32 %v4645, 4294901760
    %4647 = vmatpush.msra.mxu0 %v4646
    %v4648 = vand.u32 %v57, 4294901760
    %v4649 = vsub.f32 %v57, %v4648
    %v4650 = vand.u32 %v4649, 4294901760
    %4651 = vmatpush.msra.mxu0 %v4650
    %v4652 = vand.u32 %v56, 4294901760
    %v4653 = vsub.f32 %v56, %v4652
    %v4654 = vand.u32 %v4653, 4294901760
    %4655 = vmatpush.msra.mxu0 %v4654
    %v4656 = vand.u32 %v55, 4294901760
    %v4657 = vsub.f32 %v55, %v4656
    %v4658 = vand.u32 %v4657, 4294901760
    %4659 = vmatpush.msra.mxu0 %v4658
    %v4660 = vand.u32 %v54, 4294901760
    %v4661 = vsub.f32 %v54, %v4660
    %v4662 = vand.u32 %v4661, 4294901760
    %4663 = vmatpush.msra.mxu0 %v4662
    %v4664 = vand.u32 %v53, 4294901760
    %v4665 = vsub.f32 %v53, %v4664
    %v4666 = vand.u32 %v4665, 4294901760
    %4667 = vmatpush.msra.mxu0 %v4666
    %v4668 = vand.u32 %v52, 4294901760
    %v4669 = vsub.f32 %v52, %v4668
    %v4670 = vand.u32 %v4669, 4294901760
    %4671 = vmatpush.msra.mxu0 %v4670
    %v4672 = vand.u32 %v4359, 4294901760
    %4673 = vmatmul.f32.gmra.mxu0 %v4672
    %v4674 = vpop.f32.mrf.mxu0
    %v4675 = vadd.f32 %v4606, %v4674
    %4676 = vdwg.mxu0
    %v4677 = vand.u32 %v67, 4294901760
    %4678 = vmatpush.msra.mxu0 %v4677
    %v4679 = vand.u32 %v66, 4294901760
    %4680 = vmatpush.msra.mxu0 %v4679
    %v4681 = vand.u32 %v65, 4294901760
    %4682 = vmatpush.msra.mxu0 %v4681
    %v4683 = vand.u32 %v64, 4294901760
    %4684 = vmatpush.msra.mxu0 %v4683
    %v4685 = vand.u32 %v63, 4294901760
    %4686 = vmatpush.msra.mxu0 %v4685
    %v4687 = vand.u32 %v62, 4294901760
    %4688 = vmatpush.msra.mxu0 %v4687
    %v4689 = vand.u32 %v61, 4294901760
    %4690 = vmatpush.msra.mxu0 %v4689
    %v4691 = vand.u32 %v60, 4294901760
    %4692 = vmatpush.msra.mxu0 %v4691
    %v4693 = vand.u32 %v59, 4294901760
    %4694 = vmatpush.msra.mxu0 %v4693
    %v4695 = vand.u32 %v58, 4294901760
    %4696 = vmatpush.msra.mxu0 %v4695
    %v4697 = vand.u32 %v57, 4294901760
    %4698 = vmatpush.msra.mxu0 %v4697
    %v4699 = vand.u32 %v56, 4294901760
    %4700 = vmatpush.msra.mxu0 %v4699
    %v4701 = vand.u32 %v55, 4294901760
    %4702 = vmatpush.msra.mxu0 %v4701
    %v4703 = vand.u32 %v54, 4294901760
    %4704 = vmatpush.msra.mxu0 %v4703
    %v4705 = vand.u32 %v53, 4294901760
    %4706 = vmatpush.msra.mxu0 %v4705
    %v4707 = vand.u32 %v52, 4294901760
    %4708 = vmatpush.msra.mxu0 %v4707
    %v4709 = vand.u32 %v4359, 4294901760
    %4710 = vmatmul.f32.gmra.mxu0 %v4709
    %v4711 = vpop.f32.mrf.mxu0
    %v4712 = vadd.f32 %v4675, %v4711
    %4713 = vdwg.mxu0
    %v4714 = vand.u32 %v67, 4294901760
    %4715 = vmatpush.msra.mxu0 %v4714
    %v4716 = vand.u32 %v66, 4294901760
    %4717 = vmatpush.msra.mxu0 %v4716
    %v4718 = vand.u32 %v65, 4294901760
    %4719 = vmatpush.msra.mxu0 %v4718
    %v4720 = vand.u32 %v64, 4294901760
    %4721 = vmatpush.msra.mxu0 %v4720
    %v4722 = vand.u32 %v63, 4294901760
    %4723 = vmatpush.msra.mxu0 %v4722
    %v4724 = vand.u32 %v62, 4294901760
    %4725 = vmatpush.msra.mxu0 %v4724
    %v4726 = vand.u32 %v61, 4294901760
    %4727 = vmatpush.msra.mxu0 %v4726
    %v4728 = vand.u32 %v60, 4294901760
    %4729 = vmatpush.msra.mxu0 %v4728
    %v4730 = vand.u32 %v59, 4294901760
    %4731 = vmatpush.msra.mxu0 %v4730
    %v4732 = vand.u32 %v58, 4294901760
    %4733 = vmatpush.msra.mxu0 %v4732
    %v4734 = vand.u32 %v57, 4294901760
    %4735 = vmatpush.msra.mxu0 %v4734
    %v4736 = vand.u32 %v56, 4294901760
    %4737 = vmatpush.msra.mxu0 %v4736
    %v4738 = vand.u32 %v55, 4294901760
    %4739 = vmatpush.msra.mxu0 %v4738
    %v4740 = vand.u32 %v54, 4294901760
    %4741 = vmatpush.msra.mxu0 %v4740
    %v4742 = vand.u32 %v53, 4294901760
    %4743 = vmatpush.msra.mxu0 %v4742
    %v4744 = vand.u32 %v52, 4294901760
    %4745 = vmatpush.msra.mxu0 %v4744
    %v4746 = vand.u32 %v4372, 4294901760
    %v4747 = vsub.f32 %v4372, %v4746
    %v4748 = vand.u32 %v4747, 4294901760
    %v4749 = vsub.f32 %v4747, %v4748
    %v4750 = vand.u32 %v4749, 4294901760
    %4751 = vmatmul.f32.gmra.mxu0 %v4750
    %v4752 = vpop.f32.mrf.mxu0
    %v4753 = vadd.f32 0.0, %v4752
    %4754 = vdwg.mxu0
    %v4755 = vand.u32 %v67, 4294901760
    %v4756 = vsub.f32 %v67, %v4755
    %v4757 = vand.u32 %v4756, 4294901760
    %v4758 = vsub.f32 %v4756, %v4757
    %v4759 = vand.u32 %v4758, 4294901760
    %4760 = vmatpush.msra.mxu0 %v4759
    %v4761 = vand.u32 %v66, 4294901760
    %v4762 = vsub.f32 %v66, %v4761
    %v4763 = vand.u32 %v4762, 4294901760
    %v4764 = vsub.f32 %v4762, %v4763
    %v4765 = vand.u32 %v4764, 4294901760
    %4766 = vmatpush.msra.mxu0 %v4765
    %v4767 = vand.u32 %v65, 4294901760
    %v4768 = vsub.f32 %v65, %v4767
    %v4769 = vand.u32 %v4768, 4294901760
    %v4770 = vsub.f32 %v4768, %v4769
    %v4771 = vand.u32 %v4770, 4294901760
    %4772 = vmatpush.msra.mxu0 %v4771
    %v4773 = vand.u32 %v64, 4294901760
    %v4774 = vsub.f32 %v64, %v4773
    %v4775 = vand.u32 %v4774, 4294901760
    %v4776 = vsub.f32 %v4774, %v4775
    %v4777 = vand.u32 %v4776, 4294901760
    %4778 = vmatpush.msra.mxu0 %v4777
    %v4779 = vand.u32 %v63, 4294901760
    %v4780 = vsub.f32 %v63, %v4779
    %v4781 = vand.u32 %v4780, 4294901760
    %v4782 = vsub.f32 %v4780, %v4781
    %v4783 = vand.u32 %v4782, 4294901760
    %4784 = vmatpush.msra.mxu0 %v4783
    %v4785 = vand.u32 %v62, 4294901760
    %v4786 = vsub.f32 %v62, %v4785
    %v4787 = vand.u32 %v4786, 4294901760
    %v4788 = vsub.f32 %v4786, %v4787
    %v4789 = vand.u32 %v4788, 4294901760
    %4790 = vmatpush.msra.mxu0 %v4789
    %v4791 = vand.u32 %v61, 4294901760
    %v4792 = vsub.f32 %v61, %v4791
    %v4793 = vand.u32 %v4792, 4294901760
    %v4794 = vsub.f32 %v4792, %v4793
    %v4795 = vand.u32 %v4794, 4294901760
    %4796 = vmatpush.msra.mxu0 %v4795
    %v4797 = vand.u32 %v60, 4294901760
    %v4798 = vsub.f32 %v60, %v4797
    %v4799 = vand.u32 %v4798, 4294901760
    %v4800 = vsub.f32 %v4798, %v4799
    %v4801 = vand.u32 %v4800, 4294901760
    %4802 = vmatpush.msra.mxu0 %v4801
    %v4803 = vand.u32 %v59, 4294901760
    %v4804 = vsub.f32 %v59, %v4803
    %v4805 = vand.u32 %v4804, 4294901760
    %v4806 = vsub.f32 %v4804, %v4805
    %v4807 = vand.u32 %v4806, 4294901760
    %4808 = vmatpush.msra.mxu0 %v4807
    %v4809 = vand.u32 %v58, 4294901760
    %v4810 = vsub.f32 %v58, %v4809
    %v4811 = vand.u32 %v4810, 4294901760
    %v4812 = vsub.f32 %v4810, %v4811
    %v4813 = vand.u32 %v4812, 4294901760
    %4814 = vmatpush.msra.mxu0 %v4813
    %v4815 = vand.u32 %v57, 4294901760
    %v4816 = vsub.f32 %v57, %v4815
    %v4817 = vand.u32 %v4816, 4294901760
    %v4818 = vsub.f32 %v4816, %v4817
    %v4819 = vand.u32 %v4818, 4294901760
    %4820 = vmatpush.msra.mxu0 %v4819
    %v4821 = vand.u32 %v56, 4294901760
    %v4822 = vsub.f32 %v56, %v4821
    %v4823 = vand.u32 %v4822, 4294901760
    %v4824 = vsub.f32 %v4822, %v4823
    %v4825 = vand.u32 %v4824, 4294901760
    %4826 = vmatpush.msra.mxu0 %v4825
    %v4827 = vand.u32 %v55, 4294901760
    %v4828 = vsub.f32 %v55, %v4827
    %v4829 = vand.u32 %v4828, 4294901760
    %v4830 = vsub.f32 %v4828, %v4829
    %v4831 = vand.u32 %v4830, 4294901760
    %4832 = vmatpush.msra.mxu0 %v4831
    %v4833 = vand.u32 %v54, 4294901760
    %v4834 = vsub.f32 %v54, %v4833
    %v4835 = vand.u32 %v4834, 4294901760
    %v4836 = vsub.f32 %v4834, %v4835
    %v4837 = vand.u32 %v4836, 4294901760
    %4838 = vmatpush.msra.mxu0 %v4837
    %v4839 = vand.u32 %v53, 4294901760
    %v4840 = vsub.f32 %v53, %v4839
    %v4841 = vand.u32 %v4840, 4294901760
    %v4842 = vsub.f32 %v4840, %v4841
    %v4843 = vand.u32 %v4842, 4294901760
    %4844 = vmatpush.msra.mxu0 %v4843
    %v4845 = vand.u32 %v52, 4294901760
    %v4846 = vsub.f32 %v52, %v4845
    %v4847 = vand.u32 %v4846, 4294901760
    %v4848 = vsub.f32 %v4846, %v4847
    %v4849 = vand.u32 %v4848, 4294901760
    %4850 = vmatpush.msra.mxu0 %v4849
    %v4851 = vand.u32 %v4372, 4294901760
    %4852 = vmatmul.f32.gmra.mxu0 %v4851
    %v4853 = vpop.f32.mrf.mxu0
    %v4854 = vadd.f32 %v4753, %v4853
    %4855 = vdwg.mxu0
    %v4856 = vand.u32 %v67, 4294901760
    %v4857 = vsub.f32 %v67, %v4856
    %4858 = vmatpush.msra.mxu0 %v4857
    %v4859 = vand.u32 %v66, 4294901760
    %v4860 = vsub.f32 %v66, %v4859
    %4861 = vmatpush.msra.mxu0 %v4860
    %v4862 = vand.u32 %v65, 4294901760
    %v4863 = vsub.f32 %v65, %v4862
    %4864 = vmatpush.msra.mxu0 %v4863
    %v4865 = vand.u32 %v64, 4294901760
    %v4866 = vsub.f32 %v64, %v4865
    %4867 = vmatpush.msra.mxu0 %v4866
    %v4868 = vand.u32 %v63, 4294901760
    %v4869 = vsub.f32 %v63, %v4868
    %4870 = vmatpush.msra.mxu0 %v4869
    %v4871 = vand.u32 %v62, 4294901760
    %v4872 = vsub.f32 %v62, %v4871
    %4873 = vmatpush.msra.mxu0 %v4872
    %v4874 = vand.u32 %v61, 4294901760
    %v4875 = vsub.f32 %v61, %v4874
    %4876 = vmatpush.msra.mxu0 %v4875
    %v4877 = vand.u32 %v60, 4294901760
    %v4878 = vsub.f32 %v60, %v4877
    %4879 = vmatpush.msra.mxu0 %v4878
    %v4880 = vand.u32 %v59, 4294901760
    %v4881 = vsub.f32 %v59, %v4880
    %4882 = vmatpush.msra.mxu0 %v4881
    %v4883 = vand.u32 %v58, 4294901760
    %v4884 = vsub.f32 %v58, %v4883
    %4885 = vmatpush.msra.mxu0 %v4884
    %v4886 = vand.u32 %v57, 4294901760
    %v4887 = vsub.f32 %v57, %v4886
    %4888 = vmatpush.msra.mxu0 %v4887
    %v4889 = vand.u32 %v56, 4294901760
    %v4890 = vsub.f32 %v56, %v4889
    %4891 = vmatpush.msra.mxu0 %v4890
    %v4892 = vand.u32 %v55, 4294901760
    %v4893 = vsub.f32 %v55, %v4892
    %4894 = vmatpush.msra.mxu0 %v4893
    %v4895 = vand.u32 %v54, 4294901760
    %v4896 = vsub.f32 %v54, %v4895
    %4897 = vmatpush.msra.mxu0 %v4896
    %v4898 = vand.u32 %v53, 4294901760
    %v4899 = vsub.f32 %v53, %v4898
    %4900 = vmatpush.msra.mxu0 %v4899
    %v4901 = vand.u32 %v52, 4294901760
    %v4902 = vsub.f32 %v52, %v4901
    %4903 = vmatpush.msra.mxu0 %v4902
    %v4904 = vand.u32 %v4372, 4294901760
    %v4905 = vsub.f32 %v4372, %v4904
    %4906 = vmatmul.f32.gmra.mxu0 %v4905
    %v4907 = vpop.f32.mrf.mxu0
    %v4908 = vadd.f32 %v4854, %v4907
    %4909 = vdwg.mxu0
    %v4910 = vand.u32 %v67, 4294901760
    %4911 = vmatpush.msra.mxu0 %v4910
    %v4912 = vand.u32 %v66, 4294901760
    %4913 = vmatpush.msra.mxu0 %v4912
    %v4914 = vand.u32 %v65, 4294901760
    %4915 = vmatpush.msra.mxu0 %v4914
    %v4916 = vand.u32 %v64, 4294901760
    %4917 = vmatpush.msra.mxu0 %v4916
    %v4918 = vand.u32 %v63, 4294901760
    %4919 = vmatpush.msra.mxu0 %v4918
    %v4920 = vand.u32 %v62, 4294901760
    %4921 = vmatpush.msra.mxu0 %v4920
    %v4922 = vand.u32 %v61, 4294901760
    %4923 = vmatpush.msra.mxu0 %v4922
    %v4924 = vand.u32 %v60, 4294901760
    %4925 = vmatpush.msra.mxu0 %v4924
    %v4926 = vand.u32 %v59, 4294901760
    %4927 = vmatpush.msra.mxu0 %v4926
    %v4928 = vand.u32 %v58, 4294901760
    %4929 = vmatpush.msra.mxu0 %v4928
    %v4930 = vand.u32 %v57, 4294901760
    %4931 = vmatpush.msra.mxu0 %v4930
    %v4932 = vand.u32 %v56, 4294901760
    %4933 = vmatpush.msra.mxu0 %v4932
    %v4934 = vand.u32 %v55, 4294901760
    %4935 = vmatpush.msra.mxu0 %v4934
    %v4936 = vand.u32 %v54, 4294901760
    %4937 = vmatpush.msra.mxu0 %v4936
    %v4938 = vand.u32 %v53, 4294901760
    %4939 = vmatpush.msra.mxu0 %v4938
    %v4940 = vand.u32 %v52, 4294901760
    %4941 = vmatpush.msra.mxu0 %v4940
    %v4942 = vand.u32 %v4372, 4294901760
    %v4943 = vsub.f32 %v4372, %v4942
    %v4944 = vand.u32 %v4943, 4294901760
    %4945 = vmatmul.f32.gmra.mxu0 %v4944
    %v4946 = vpop.f32.mrf.mxu0
    %v4947 = vadd.f32 %v4908, %v4946
    %4948 = vdwg.mxu0
    %v4949 = vand.u32 %v67, 4294901760
    %v4950 = vsub.f32 %v67, %v4949
    %v4951 = vand.u32 %v4950, 4294901760
    %4952 = vmatpush.msra.mxu0 %v4951
    %v4953 = vand.u32 %v66, 4294901760
    %v4954 = vsub.f32 %v66, %v4953
    %v4955 = vand.u32 %v4954, 4294901760
    %4956 = vmatpush.msra.mxu0 %v4955
    %v4957 = vand.u32 %v65, 4294901760
    %v4958 = vsub.f32 %v65, %v4957
    %v4959 = vand.u32 %v4958, 4294901760
    %4960 = vmatpush.msra.mxu0 %v4959
    %v4961 = vand.u32 %v64, 4294901760
    %v4962 = vsub.f32 %v64, %v4961
    %v4963 = vand.u32 %v4962, 4294901760
    %4964 = vmatpush.msra.mxu0 %v4963
    %v4965 = vand.u32 %v63, 4294901760
    %v4966 = vsub.f32 %v63, %v4965
    %v4967 = vand.u32 %v4966, 4294901760
    %4968 = vmatpush.msra.mxu0 %v4967
    %v4969 = vand.u32 %v62, 4294901760
    %v4970 = vsub.f32 %v62, %v4969
    %v4971 = vand.u32 %v4970, 4294901760
    %4972 = vmatpush.msra.mxu0 %v4971
    %v4973 = vand.u32 %v61, 4294901760
    %v4974 = vsub.f32 %v61, %v4973
    %v4975 = vand.u32 %v4974, 4294901760
    %4976 = vmatpush.msra.mxu0 %v4975
    %v4977 = vand.u32 %v60, 4294901760
    %v4978 = vsub.f32 %v60, %v4977
    %v4979 = vand.u32 %v4978, 4294901760
    %4980 = vmatpush.msra.mxu0 %v4979
    %v4981 = vand.u32 %v59, 4294901760
    %v4982 = vsub.f32 %v59, %v4981
    %v4983 = vand.u32 %v4982, 4294901760
    %4984 = vmatpush.msra.mxu0 %v4983
    %v4985 = vand.u32 %v58, 4294901760
    %v4986 = vsub.f32 %v58, %v4985
    %v4987 = vand.u32 %v4986, 4294901760
    %4988 = vmatpush.msra.mxu0 %v4987
    %v4989 = vand.u32 %v57, 4294901760
    %v4990 = vsub.f32 %v57, %v4989
    %v4991 = vand.u32 %v4990, 4294901760
    %4992 = vmatpush.msra.mxu0 %v4991
    %v4993 = vand.u32 %v56, 4294901760
    %v4994 = vsub.f32 %v56, %v4993
    %v4995 = vand.u32 %v4994, 4294901760
    %4996 = vmatpush.msra.mxu0 %v4995
    %v4997 = vand.u32 %v55, 4294901760
    %v4998 = vsub.f32 %v55, %v4997
    %v4999 = vand.u32 %v4998, 4294901760
    %5000 = vmatpush.msra.mxu0 %v4999
    %v5001 = vand.u32 %v54, 4294901760
    %v5002 = vsub.f32 %v54, %v5001
    %v5003 = vand.u32 %v5002, 4294901760
    %5004 = vmatpush.msra.mxu0 %v5003
    %v5005 = vand.u32 %v53, 4294901760
    %v5006 = vsub.f32 %v53, %v5005
    %v5007 = vand.u32 %v5006, 4294901760
    %5008 = vmatpush.msra.mxu0 %v5007
    %v5009 = vand.u32 %v52, 4294901760
    %v5010 = vsub.f32 %v52, %v5009
    %v5011 = vand.u32 %v5010, 4294901760
    %5012 = vmatpush.msra.mxu0 %v5011
    %v5013 = vand.u32 %v4372, 4294901760
    %5014 = vmatmul.f32.gmra.mxu0 %v5013
    %v5015 = vpop.f32.mrf.mxu0
    %v5016 = vadd.f32 %v4947, %v5015
    %5017 = vdwg.mxu0
    %v5018 = vand.u32 %v67, 4294901760
    %5019 = vmatpush.msra.mxu0 %v5018
    %v5020 = vand.u32 %v66, 4294901760
    %5021 = vmatpush.msra.mxu0 %v5020
    %v5022 = vand.u32 %v65, 4294901760
    %5023 = vmatpush.msra.mxu0 %v5022
    %v5024 = vand.u32 %v64, 4294901760
    %5025 = vmatpush.msra.mxu0 %v5024
    %v5026 = vand.u32 %v63, 4294901760
    %5027 = vmatpush.msra.mxu0 %v5026
    %v5028 = vand.u32 %v62, 4294901760
    %5029 = vmatpush.msra.mxu0 %v5028
    %v5030 = vand.u32 %v61, 4294901760
    %5031 = vmatpush.msra.mxu0 %v5030
    %v5032 = vand.u32 %v60, 4294901760
    %5033 = vmatpush.msra.mxu0 %v5032
    %v5034 = vand.u32 %v59, 4294901760
    %5035 = vmatpush.msra.mxu0 %v5034
    %v5036 = vand.u32 %v58, 4294901760
    %5037 = vmatpush.msra.mxu0 %v5036
    %v5038 = vand.u32 %v57, 4294901760
    %5039 = vmatpush.msra.mxu0 %v5038
    %v5040 = vand.u32 %v56, 4294901760
    %5041 = vmatpush.msra.mxu0 %v5040
    %v5042 = vand.u32 %v55, 4294901760
    %5043 = vmatpush.msra.mxu0 %v5042
    %v5044 = vand.u32 %v54, 4294901760
    %5045 = vmatpush.msra.mxu0 %v5044
    %v5046 = vand.u32 %v53, 4294901760
    %5047 = vmatpush.msra.mxu0 %v5046
    %v5048 = vand.u32 %v52, 4294901760
    %5049 = vmatpush.msra.mxu0 %v5048
    %v5050 = vand.u32 %v4372, 4294901760
    %5051 = vmatmul.f32.gmra.mxu0 %v5050
    %v5052 = vpop.f32.mrf.mxu0
    %v5053 = vadd.f32 %v5016, %v5052
    %5054 = vdwg.mxu0
    %v5055 = vmul.f32 %v4712, %v4712
    %v5056 = vsub.f32 %v5053, %v5055
    %v5057 = vadd.f32 %v5056, 1e-05
    %v5058 = vrsqrt.pop %v5057
    %v5059 = vmul.f32 %v5058, %v5057
    %v5060 = vmul.f32 %v5059, %v5058
    %v5061 = vmul.f32 0.5, %v5060
    %v5062 = vsub.f32 1.5, %v5061
    %v5063 = vmul.f32 %v5058, %v5062
    %vm5064 = vweird.f32 %v5057
    %vm5065 = vweird.f32 %v5058
    %vm5066 = vmor %vm5064, %vm5065
    %v5067 = vsel %vm5066, %v5058, %v5063
    %v5068 = vmul.f32 %v4349, %v5067
    %v5069 = vmul.f32 %v4712, %v5068
    %v5070 = vsub.f32 %v4350, %v5069
    %v5072 = vperm.slane %v5068, 0
    %v5074 = vmul.f32 %v4345, %v5072
    %v5075 = vmul.f32 %v4346, %v5072
    %v5076 = vmul.f32 %v4347, %v5072
    %v5077 = vmul.f32 %v4348, %v5072
    %v5079 = vperm.slane %v5070, 0
    %v5081 = vadd.f32 %v5074, %v5079
    %v5082 = vadd.f32 %v5075, %v5079
    %v5083 = vadd.f32 %v5076, %v5079
    %v5084 = vadd.f32 %v5077, %v5079
    %v5085 = vld [vmem:[%s5] sm:$0xff]
    %v5086 = vld [vmem:[%s5 + $0x8] sm:$0xff]
    %v5087 = vld [vmem:[%s5 + $0x10] sm:$0xff]
    %v5088 = vld [vmem:[%s5 + $0x18] sm:$0xff]
    %v5089 = vld [vmem:[%s5 + $0x20] sm:$0xff]
    %v5090 = vld [vmem:[%s5 + $0x28] sm:$0xff]
    %v5091 = vld [vmem:[%s5 + $0x30] sm:$0xff]
    %v5092 = vld [vmem:[%s5 + $0x38] sm:$0xff]
    %v5093 = vld [vmem:[%s5 + $0x40] sm:$0xff]
    %v5094 = vld [vmem:[%s5 + $0x48] sm:$0xff]
    %v5095 = vld [vmem:[%s5 + $0x50] sm:$0xff]
    %v5096 = vld [vmem:[%s5 + $0x58] sm:$0xff]
    %v5097 = vld [vmem:[%s5 + $0x60] sm:$0xff]
    %v5098 = vld [vmem:[%s5 + $0x68] sm:$0xff]
    %v5099 = vld [vmem:[%s5 + $0x70] sm:$0xff]
    %v5100 = vld [vmem:[%s5 + $0x78] sm:$0xff]
    %v5101 = vand.u32 %v5100, 4294901760
    %5102 = vmatpush.msra.mxu0 %v5101
    %v5103 = vand.u32 %v5099, 4294901760
    %5104 = vmatpush.msra.mxu0 %v5103
    %v5105 = vand.u32 %v5098, 4294901760
    %5106 = vmatpush.msra.mxu0 %v5105
    %v5107 = vand.u32 %v5097, 4294901760
    %5108 = vmatpush.msra.mxu0 %v5107
    %v5109 = vand.u32 %v5096, 4294901760
    %5110 = vmatpush.msra.mxu0 %v5109
    %v5111 = vand.u32 %v5095, 4294901760
    %5112 = vmatpush.msra.mxu0 %v5111
    %v5113 = vand.u32 %v5094, 4294901760
    %5114 = vmatpush.msra.mxu0 %v5113
    %v5115 = vand.u32 %v5093, 4294901760
    %5116 = vmatpush.msra.mxu0 %v5115
    %v5117 = vand.u32 %v5092, 4294901760
    %5118 = vmatpush.msra.mxu0 %v5117
    %v5119 = vand.u32 %v5091, 4294901760
    %5120 = vmatpush.msra.mxu0 %v5119
    %v5121 = vand.u32 %v5090, 4294901760
    %5122 = vmatpush.msra.mxu0 %v5121
    %v5123 = vand.u32 %v5089, 4294901760
    %5124 = vmatpush.msra.mxu0 %v5123
    %v5125 = vand.u32 %v5088, 4294901760
    %5126 = vmatpush.msra.mxu0 %v5125
    %v5127 = vand.u32 %v5087, 4294901760
    %5128 = vmatpush.msra.mxu0 %v5127
    %v5129 = vand.u32 %v5086, 4294901760
    %5130 = vmatpush.msra.mxu0 %v5129
    %v5131 = vand.u32 %v5085, 4294901760
    %5132 = vmatpush.msra.mxu0 %v5131
    %v5133 = vand.u32 %v5081, 4294901760
    %v5134 = vsub.f32 %v5081, %v5133
    %v5135 = vand.u32 %v5134, 4294901760
    %v5136 = vsub.f32 %v5134, %v5135
    %v5137 = vand.u32 %v5136, 4294901760
    %5138 = vmatmul.f32.gmra.mxu0 %v5137
    %v5139 = vpop.f32.mrf.mxu0
    %v5140 = vadd.f32 0.0, %v5139
    %v5141 = vand.u32 %v5082, 4294901760
    %v5142 = vsub.f32 %v5082, %v5141
    %v5143 = vand.u32 %v5142, 4294901760
    %v5144 = vsub.f32 %v5142, %v5143
    %v5145 = vand.u32 %v5144, 4294901760
    %5146 = vmatmul.f32.gmra.mxu0 %v5145
    %v5147 = vpop.f32.mrf.mxu0
    %v5148 = vadd.f32 0.0, %v5147
    %v5149 = vand.u32 %v5083, 4294901760
    %v5150 = vsub.f32 %v5083, %v5149
    %v5151 = vand.u32 %v5150, 4294901760
    %v5152 = vsub.f32 %v5150, %v5151
    %v5153 = vand.u32 %v5152, 4294901760
    %5154 = vmatmul.f32.gmra.mxu0 %v5153
    %v5155 = vpop.f32.mrf.mxu0
    %v5156 = vadd.f32 0.0, %v5155
    %v5157 = vand.u32 %v5084, 4294901760
    %v5158 = vsub.f32 %v5084, %v5157
    %v5159 = vand.u32 %v5158, 4294901760
    %v5160 = vsub.f32 %v5158, %v5159
    %v5161 = vand.u32 %v5160, 4294901760
    %5162 = vmatmul.f32.gmra.mxu0 %v5161
    %v5163 = vpop.f32.mrf.mxu0
    %v5164 = vadd.f32 0.0, %v5163
    %5165 = vdwg.mxu0
    %v5166 = vand.u32 %v5100, 4294901760
    %v5167 = vsub.f32 %v5100, %v5166
    %v5168 = vand.u32 %v5167, 4294901760
    %v5169 = vsub.f32 %v5167, %v5168
    %v5170 = vand.u32 %v5169, 4294901760
    %5171 = vmatpush.msra.mxu0 %v5170
    %v5172 = vand.u32 %v5099, 4294901760
    %v5173 = vsub.f32 %v5099, %v5172
    %v5174 = vand.u32 %v5173, 4294901760
    %v5175 = vsub.f32 %v5173, %v5174
    %v5176 = vand.u32 %v5175, 4294901760
    %5177 = vmatpush.msra.mxu0 %v5176
    %v5178 = vand.u32 %v5098, 4294901760
    %v5179 = vsub.f32 %v5098, %v5178
    %v5180 = vand.u32 %v5179, 4294901760
    %v5181 = vsub.f32 %v5179, %v5180
    %v5182 = vand.u32 %v5181, 4294901760
    %5183 = vmatpush.msra.mxu0 %v5182
    %v5184 = vand.u32 %v5097, 4294901760
    %v5185 = vsub.f32 %v5097, %v5184
    %v5186 = vand.u32 %v5185, 4294901760
    %v5187 = vsub.f32 %v5185, %v5186
    %v5188 = vand.u32 %v5187, 4294901760
    %5189 = vmatpush.msra.mxu0 %v5188
    %v5190 = vand.u32 %v5096, 4294901760
    %v5191 = vsub.f32 %v5096, %v5190
    %v5192 = vand.u32 %v5191, 4294901760
    %v5193 = vsub.f32 %v5191, %v5192
    %v5194 = vand.u32 %v5193, 4294901760
    %5195 = vmatpush.msra.mxu0 %v5194
    %v5196 = vand.u32 %v5095, 4294901760
    %v5197 = vsub.f32 %v5095, %v5196
    %v5198 = vand.u32 %v5197, 4294901760
    %v5199 = vsub.f32 %v5197, %v5198
    %v5200 = vand.u32 %v5199, 4294901760
    %5201 = vmatpush.msra.mxu0 %v5200
    %v5202 = vand.u32 %v5094, 4294901760
    %v5203 = vsub.f32 %v5094, %v5202
    %v5204 = vand.u32 %v5203, 4294901760
    %v5205 = vsub.f32 %v5203, %v5204
    %v5206 = vand.u32 %v5205, 4294901760
    %5207 = vmatpush.msra.mxu0 %v5206
    %v5208 = vand.u32 %v5093, 4294901760
    %v5209 = vsub.f32 %v5093, %v5208
    %v5210 = vand.u32 %v5209, 4294901760
    %v5211 = vsub.f32 %v5209, %v5210
    %v5212 = vand.u32 %v5211, 4294901760
    %5213 = vmatpush.msra.mxu0 %v5212
    %v5214 = vand.u32 %v5092, 4294901760
    %v5215 = vsub.f32 %v5092, %v5214
    %v5216 = vand.u32 %v5215, 4294901760
    %v5217 = vsub.f32 %v5215, %v5216
    %v5218 = vand.u32 %v5217, 4294901760
    %5219 = vmatpush.msra.mxu0 %v5218
    %v5220 = vand.u32 %v5091, 4294901760
    %v5221 = vsub.f32 %v5091, %v5220
    %v5222 = vand.u32 %v5221, 4294901760
    %v5223 = vsub.f32 %v5221, %v5222
    %v5224 = vand.u32 %v5223, 4294901760
    %5225 = vmatpush.msra.mxu0 %v5224
    %v5226 = vand.u32 %v5090, 4294901760
    %v5227 = vsub.f32 %v5090, %v5226
    %v5228 = vand.u32 %v5227, 4294901760
    %v5229 = vsub.f32 %v5227, %v5228
    %v5230 = vand.u32 %v5229, 4294901760
    %5231 = vmatpush.msra.mxu0 %v5230
    %v5232 = vand.u32 %v5089, 4294901760
    %v5233 = vsub.f32 %v5089, %v5232
    %v5234 = vand.u32 %v5233, 4294901760
    %v5235 = vsub.f32 %v5233, %v5234
    %v5236 = vand.u32 %v5235, 4294901760
    %5237 = vmatpush.msra.mxu0 %v5236
    %v5238 = vand.u32 %v5088, 4294901760
    %v5239 = vsub.f32 %v5088, %v5238
    %v5240 = vand.u32 %v5239, 4294901760
    %v5241 = vsub.f32 %v5239, %v5240
    %v5242 = vand.u32 %v5241, 4294901760
    %5243 = vmatpush.msra.mxu0 %v5242
    %v5244 = vand.u32 %v5087, 4294901760
    %v5245 = vsub.f32 %v5087, %v5244
    %v5246 = vand.u32 %v5245, 4294901760
    %v5247 = vsub.f32 %v5245, %v5246
    %v5248 = vand.u32 %v5247, 4294901760
    %5249 = vmatpush.msra.mxu0 %v5248
    %v5250 = vand.u32 %v5086, 4294901760
    %v5251 = vsub.f32 %v5086, %v5250
    %v5252 = vand.u32 %v5251, 4294901760
    %v5253 = vsub.f32 %v5251, %v5252
    %v5254 = vand.u32 %v5253, 4294901760
    %5255 = vmatpush.msra.mxu0 %v5254
    %v5256 = vand.u32 %v5085, 4294901760
    %v5257 = vsub.f32 %v5085, %v5256
    %v5258 = vand.u32 %v5257, 4294901760
    %v5259 = vsub.f32 %v5257, %v5258
    %v5260 = vand.u32 %v5259, 4294901760
    %5261 = vmatpush.msra.mxu0 %v5260
    %v5262 = vand.u32 %v5081, 4294901760
    %5263 = vmatmul.f32.gmra.mxu0 %v5262
    %v5264 = vpop.f32.mrf.mxu0
    %v5265 = vadd.f32 %v5140, %v5264
    %v5266 = vand.u32 %v5082, 4294901760
    %5267 = vmatmul.f32.gmra.mxu0 %v5266
    %v5268 = vpop.f32.mrf.mxu0
    %v5269 = vadd.f32 %v5148, %v5268
    %v5270 = vand.u32 %v5083, 4294901760
    %5271 = vmatmul.f32.gmra.mxu0 %v5270
    %v5272 = vpop.f32.mrf.mxu0
    %v5273 = vadd.f32 %v5156, %v5272
    %v5274 = vand.u32 %v5084, 4294901760
    %5275 = vmatmul.f32.gmra.mxu0 %v5274
    %v5276 = vpop.f32.mrf.mxu0
    %v5277 = vadd.f32 %v5164, %v5276
    %5278 = vdwg.mxu0
    %v5279 = vand.u32 %v5100, 4294901760
    %v5280 = vsub.f32 %v5100, %v5279
    %5281 = vmatpush.msra.mxu0 %v5280
    %v5282 = vand.u32 %v5099, 4294901760
    %v5283 = vsub.f32 %v5099, %v5282
    %5284 = vmatpush.msra.mxu0 %v5283
    %v5285 = vand.u32 %v5098, 4294901760
    %v5286 = vsub.f32 %v5098, %v5285
    %5287 = vmatpush.msra.mxu0 %v5286
    %v5288 = vand.u32 %v5097, 4294901760
    %v5289 = vsub.f32 %v5097, %v5288
    %5290 = vmatpush.msra.mxu0 %v5289
    %v5291 = vand.u32 %v5096, 4294901760
    %v5292 = vsub.f32 %v5096, %v5291
    %5293 = vmatpush.msra.mxu0 %v5292
    %v5294 = vand.u32 %v5095, 4294901760
    %v5295 = vsub.f32 %v5095, %v5294
    %5296 = vmatpush.msra.mxu0 %v5295
    %v5297 = vand.u32 %v5094, 4294901760
    %v5298 = vsub.f32 %v5094, %v5297
    %5299 = vmatpush.msra.mxu0 %v5298
    %v5300 = vand.u32 %v5093, 4294901760
    %v5301 = vsub.f32 %v5093, %v5300
    %5302 = vmatpush.msra.mxu0 %v5301
    %v5303 = vand.u32 %v5092, 4294901760
    %v5304 = vsub.f32 %v5092, %v5303
    %5305 = vmatpush.msra.mxu0 %v5304
    %v5306 = vand.u32 %v5091, 4294901760
    %v5307 = vsub.f32 %v5091, %v5306
    %5308 = vmatpush.msra.mxu0 %v5307
    %v5309 = vand.u32 %v5090, 4294901760
    %v5310 = vsub.f32 %v5090, %v5309
    %5311 = vmatpush.msra.mxu0 %v5310
    %v5312 = vand.u32 %v5089, 4294901760
    %v5313 = vsub.f32 %v5089, %v5312
    %5314 = vmatpush.msra.mxu0 %v5313
    %v5315 = vand.u32 %v5088, 4294901760
    %v5316 = vsub.f32 %v5088, %v5315
    %5317 = vmatpush.msra.mxu0 %v5316
    %v5318 = vand.u32 %v5087, 4294901760
    %v5319 = vsub.f32 %v5087, %v5318
    %5320 = vmatpush.msra.mxu0 %v5319
    %v5321 = vand.u32 %v5086, 4294901760
    %v5322 = vsub.f32 %v5086, %v5321
    %5323 = vmatpush.msra.mxu0 %v5322
    %v5324 = vand.u32 %v5085, 4294901760
    %v5325 = vsub.f32 %v5085, %v5324
    %5326 = vmatpush.msra.mxu0 %v5325
    %v5327 = vand.u32 %v5081, 4294901760
    %v5328 = vsub.f32 %v5081, %v5327
    %5329 = vmatmul.f32.gmra.mxu0 %v5328
    %v5330 = vpop.f32.mrf.mxu0
    %v5331 = vadd.f32 %v5265, %v5330
    %v5332 = vand.u32 %v5082, 4294901760
    %v5333 = vsub.f32 %v5082, %v5332
    %5334 = vmatmul.f32.gmra.mxu0 %v5333
    %v5335 = vpop.f32.mrf.mxu0
    %v5336 = vadd.f32 %v5269, %v5335
    %v5337 = vand.u32 %v5083, 4294901760
    %v5338 = vsub.f32 %v5083, %v5337
    %5339 = vmatmul.f32.gmra.mxu0 %v5338
    %v5340 = vpop.f32.mrf.mxu0
    %v5341 = vadd.f32 %v5273, %v5340
    %v5342 = vand.u32 %v5084, 4294901760
    %v5343 = vsub.f32 %v5084, %v5342
    %5344 = vmatmul.f32.gmra.mxu0 %v5343
    %v5345 = vpop.f32.mrf.mxu0
    %v5346 = vadd.f32 %v5277, %v5345
    %5347 = vdwg.mxu0
    %v5348 = vand.u32 %v5100, 4294901760
    %5349 = vmatpush.msra.mxu0 %v5348
    %v5350 = vand.u32 %v5099, 4294901760
    %5351 = vmatpush.msra.mxu0 %v5350
    %v5352 = vand.u32 %v5098, 4294901760
    %5353 = vmatpush.msra.mxu0 %v5352
    %v5354 = vand.u32 %v5097, 4294901760
    %5355 = vmatpush.msra.mxu0 %v5354
    %v5356 = vand.u32 %v5096, 4294901760
    %5357 = vmatpush.msra.mxu0 %v5356
    %v5358 = vand.u32 %v5095, 4294901760
    %5359 = vmatpush.msra.mxu0 %v5358
    %v5360 = vand.u32 %v5094, 4294901760
    %5361 = vmatpush.msra.mxu0 %v5360
    %v5362 = vand.u32 %v5093, 4294901760
    %5363 = vmatpush.msra.mxu0 %v5362
    %v5364 = vand.u32 %v5092, 4294901760
    %5365 = vmatpush.msra.mxu0 %v5364
    %v5366 = vand.u32 %v5091, 4294901760
    %5367 = vmatpush.msra.mxu0 %v5366
    %v5368 = vand.u32 %v5090, 4294901760
    %5369 = vmatpush.msra.mxu0 %v5368
    %v5370 = vand.u32 %v5089, 4294901760
    %5371 = vmatpush.msra.mxu0 %v5370
    %v5372 = vand.u32 %v5088, 4294901760
    %5373 = vmatpush.msra.mxu0 %v5372
    %v5374 = vand.u32 %v5087, 4294901760
    %5375 = vmatpush.msra.mxu0 %v5374
    %v5376 = vand.u32 %v5086, 4294901760
    %5377 = vmatpush.msra.mxu0 %v5376
    %v5378 = vand.u32 %v5085, 4294901760
    %5379 = vmatpush.msra.mxu0 %v5378
    %v5380 = vand.u32 %v5081, 4294901760
    %v5381 = vsub.f32 %v5081, %v5380
    %v5382 = vand.u32 %v5381, 4294901760
    %5383 = vmatmul.f32.gmra.mxu0 %v5382
    %v5384 = vpop.f32.mrf.mxu0
    %v5385 = vadd.f32 %v5331, %v5384
    %v5386 = vand.u32 %v5082, 4294901760
    %v5387 = vsub.f32 %v5082, %v5386
    %v5388 = vand.u32 %v5387, 4294901760
    %5389 = vmatmul.f32.gmra.mxu0 %v5388
    %v5390 = vpop.f32.mrf.mxu0
    %v5391 = vadd.f32 %v5336, %v5390
    %v5392 = vand.u32 %v5083, 4294901760
    %v5393 = vsub.f32 %v5083, %v5392
    %v5394 = vand.u32 %v5393, 4294901760
    %5395 = vmatmul.f32.gmra.mxu0 %v5394
    %v5396 = vpop.f32.mrf.mxu0
    %v5397 = vadd.f32 %v5341, %v5396
    %v5398 = vand.u32 %v5084, 4294901760
    %v5399 = vsub.f32 %v5084, %v5398
    %v5400 = vand.u32 %v5399, 4294901760
    %5401 = vmatmul.f32.gmra.mxu0 %v5400
    %v5402 = vpop.f32.mrf.mxu0
    %v5403 = vadd.f32 %v5346, %v5402
    %5404 = vdwg.mxu0
    %v5405 = vand.u32 %v5100, 4294901760
    %v5406 = vsub.f32 %v5100, %v5405
    %v5407 = vand.u32 %v5406, 4294901760
    %5408 = vmatpush.msra.mxu0 %v5407
    %v5409 = vand.u32 %v5099, 4294901760
    %v5410 = vsub.f32 %v5099, %v5409
    %v5411 = vand.u32 %v5410, 4294901760
    %5412 = vmatpush.msra.mxu0 %v5411
    %v5413 = vand.u32 %v5098, 4294901760
    %v5414 = vsub.f32 %v5098, %v5413
    %v5415 = vand.u32 %v5414, 4294901760
    %5416 = vmatpush.msra.mxu0 %v5415
    %v5417 = vand.u32 %v5097, 4294901760
    %v5418 = vsub.f32 %v5097, %v5417
    %v5419 = vand.u32 %v5418, 4294901760
    %5420 = vmatpush.msra.mxu0 %v5419
    %v5421 = vand.u32 %v5096, 4294901760
    %v5422 = vsub.f32 %v5096, %v5421
    %v5423 = vand.u32 %v5422, 4294901760
    %5424 = vmatpush.msra.mxu0 %v5423
    %v5425 = vand.u32 %v5095, 4294901760
    %v5426 = vsub.f32 %v5095, %v5425
    %v5427 = vand.u32 %v5426, 4294901760
    %5428 = vmatpush.msra.mxu0 %v5427
    %v5429 = vand.u32 %v5094, 4294901760
    %v5430 = vsub.f32 %v5094, %v5429
    %v5431 = vand.u32 %v5430, 4294901760
    %5432 = vmatpush.msra.mxu0 %v5431
    %v5433 = vand.u32 %v5093, 4294901760
    %v5434 = vsub.f32 %v5093, %v5433
    %v5435 = vand.u32 %v5434, 4294901760
    %5436 = vmatpush.msra.mxu0 %v5435
    %v5437 = vand.u32 %v5092, 4294901760
    %v5438 = vsub.f32 %v5092, %v5437
    %v5439 = vand.u32 %v5438, 4294901760
    %5440 = vmatpush.msra.mxu0 %v5439
    %v5441 = vand.u32 %v5091, 4294901760
    %v5442 = vsub.f32 %v5091, %v5441
    %v5443 = vand.u32 %v5442, 4294901760
    %5444 = vmatpush.msra.mxu0 %v5443
    %v5445 = vand.u32 %v5090, 4294901760
    %v5446 = vsub.f32 %v5090, %v5445
    %v5447 = vand.u32 %v5446, 4294901760
    %5448 = vmatpush.msra.mxu0 %v5447
    %v5449 = vand.u32 %v5089, 4294901760
    %v5450 = vsub.f32 %v5089, %v5449
    %v5451 = vand.u32 %v5450, 4294901760
    %5452 = vmatpush.msra.mxu0 %v5451
    %v5453 = vand.u32 %v5088, 4294901760
    %v5454 = vsub.f32 %v5088, %v5453
    %v5455 = vand.u32 %v5454, 4294901760
    %5456 = vmatpush.msra.mxu0 %v5455
    %v5457 = vand.u32 %v5087, 4294901760
    %v5458 = vsub.f32 %v5087, %v5457
    %v5459 = vand.u32 %v5458, 4294901760
    %5460 = vmatpush.msra.mxu0 %v5459
    %v5461 = vand.u32 %v5086, 4294901760
    %v5462 = vsub.f32 %v5086, %v5461
    %v5463 = vand.u32 %v5462, 4294901760
    %5464 = vmatpush.msra.mxu0 %v5463
    %v5465 = vand.u32 %v5085, 4294901760
    %v5466 = vsub.f32 %v5085, %v5465
    %v5467 = vand.u32 %v5466, 4294901760
    %5468 = vmatpush.msra.mxu0 %v5467
    %v5469 = vand.u32 %v5081, 4294901760
    %5470 = vmatmul.f32.gmra.mxu0 %v5469
    %v5471 = vpop.f32.mrf.mxu0
    %v5472 = vadd.f32 %v5385, %v5471
    %v5473 = vand.u32 %v5082, 4294901760
    %5474 = vmatmul.f32.gmra.mxu0 %v5473
    %v5475 = vpop.f32.mrf.mxu0
    %v5476 = vadd.f32 %v5391, %v5475
    %v5477 = vand.u32 %v5083, 4294901760
    %5478 = vmatmul.f32.gmra.mxu0 %v5477
    %v5479 = vpop.f32.mrf.mxu0
    %v5480 = vadd.f32 %v5397, %v5479
    %v5481 = vand.u32 %v5084, 4294901760
    %5482 = vmatmul.f32.gmra.mxu0 %v5481
    %v5483 = vpop.f32.mrf.mxu0
    %v5484 = vadd.f32 %v5403, %v5483
    %5485 = vdwg.mxu0
    %v5486 = vand.u32 %v5100, 4294901760
    %5487 = vmatpush.msra.mxu0 %v5486
    %v5488 = vand.u32 %v5099, 4294901760
    %5489 = vmatpush.msra.mxu0 %v5488
    %v5490 = vand.u32 %v5098, 4294901760
    %5491 = vmatpush.msra.mxu0 %v5490
    %v5492 = vand.u32 %v5097, 4294901760
    %5493 = vmatpush.msra.mxu0 %v5492
    %v5494 = vand.u32 %v5096, 4294901760
    %5495 = vmatpush.msra.mxu0 %v5494
    %v5496 = vand.u32 %v5095, 4294901760
    %5497 = vmatpush.msra.mxu0 %v5496
    %v5498 = vand.u32 %v5094, 4294901760
    %5499 = vmatpush.msra.mxu0 %v5498
    %v5500 = vand.u32 %v5093, 4294901760
    %5501 = vmatpush.msra.mxu0 %v5500
    %v5502 = vand.u32 %v5092, 4294901760
    %5503 = vmatpush.msra.mxu0 %v5502
    %v5504 = vand.u32 %v5091, 4294901760
    %5505 = vmatpush.msra.mxu0 %v5504
    %v5506 = vand.u32 %v5090, 4294901760
    %5507 = vmatpush.msra.mxu0 %v5506
    %v5508 = vand.u32 %v5089, 4294901760
    %5509 = vmatpush.msra.mxu0 %v5508
    %v5510 = vand.u32 %v5088, 4294901760
    %5511 = vmatpush.msra.mxu0 %v5510
    %v5512 = vand.u32 %v5087, 4294901760
    %5513 = vmatpush.msra.mxu0 %v5512
    %v5514 = vand.u32 %v5086, 4294901760
    %5515 = vmatpush.msra.mxu0 %v5514
    %v5516 = vand.u32 %v5085, 4294901760
    %5517 = vmatpush.msra.mxu0 %v5516
    %v5518 = vand.u32 %v5081, 4294901760
    %5519 = vmatmul.f32.gmra.mxu0 %v5518
    %v5520 = vpop.f32.mrf.mxu0
    %v5521 = vadd.f32 %v5472, %v5520
    %v5522 = vand.u32 %v5082, 4294901760
    %5523 = vmatmul.f32.gmra.mxu0 %v5522
    %v5524 = vpop.f32.mrf.mxu0
    %v5525 = vadd.f32 %v5476, %v5524
    %v5526 = vand.u32 %v5083, 4294901760
    %5527 = vmatmul.f32.gmra.mxu0 %v5526
    %v5528 = vpop.f32.mrf.mxu0
    %v5529 = vadd.f32 %v5480, %v5528
    %v5530 = vand.u32 %v5084, 4294901760
    %5531 = vmatmul.f32.gmra.mxu0 %v5530
    %v5532 = vpop.f32.mrf.mxu0
    %v5533 = vadd.f32 %v5484, %v5532
    %5534 = vdwg.mxu0
    %s5535 = scalar_lea.vmem %s5, 128
    %v5536 = vld [vmem:[%s5535] sm:$0xff]
    %v5537 = vld [vmem:[%s5535 + $0x8] sm:$0xff]
    %v5538 = vld [vmem:[%s5535 + $0x10] sm:$0xff]
    %v5539 = vld [vmem:[%s5535 + $0x18] sm:$0xff]
    %v5540 = vld [vmem:[%s5535 + $0x20] sm:$0xff]
    %v5541 = vld [vmem:[%s5535 + $0x28] sm:$0xff]
    %v5542 = vld [vmem:[%s5535 + $0x30] sm:$0xff]
    %v5543 = vld [vmem:[%s5535 + $0x38] sm:$0xff]
    %v5544 = vld [vmem:[%s5535 + $0x40] sm:$0xff]
    %v5545 = vld [vmem:[%s5535 + $0x48] sm:$0xff]
    %v5546 = vld [vmem:[%s5535 + $0x50] sm:$0xff]
    %v5547 = vld [vmem:[%s5535 + $0x58] sm:$0xff]
    %v5548 = vld [vmem:[%s5535 + $0x60] sm:$0xff]
    %v5549 = vld [vmem:[%s5535 + $0x68] sm:$0xff]
    %v5550 = vld [vmem:[%s5535 + $0x70] sm:$0xff]
    %v5551 = vld [vmem:[%s5535 + $0x78] sm:$0xff]
    %v5552 = vand.u32 %v5551, 4294901760
    %5553 = vmatpush.msra.mxu0 %v5552
    %v5554 = vand.u32 %v5550, 4294901760
    %5555 = vmatpush.msra.mxu0 %v5554
    %v5556 = vand.u32 %v5549, 4294901760
    %5557 = vmatpush.msra.mxu0 %v5556
    %v5558 = vand.u32 %v5548, 4294901760
    %5559 = vmatpush.msra.mxu0 %v5558
    %v5560 = vand.u32 %v5547, 4294901760
    %5561 = vmatpush.msra.mxu0 %v5560
    %v5562 = vand.u32 %v5546, 4294901760
    %5563 = vmatpush.msra.mxu0 %v5562
    %v5564 = vand.u32 %v5545, 4294901760
    %5565 = vmatpush.msra.mxu0 %v5564
    %v5566 = vand.u32 %v5544, 4294901760
    %5567 = vmatpush.msra.mxu0 %v5566
    %v5568 = vand.u32 %v5543, 4294901760
    %5569 = vmatpush.msra.mxu0 %v5568
    %v5570 = vand.u32 %v5542, 4294901760
    %5571 = vmatpush.msra.mxu0 %v5570
    %v5572 = vand.u32 %v5541, 4294901760
    %5573 = vmatpush.msra.mxu0 %v5572
    %v5574 = vand.u32 %v5540, 4294901760
    %5575 = vmatpush.msra.mxu0 %v5574
    %v5576 = vand.u32 %v5539, 4294901760
    %5577 = vmatpush.msra.mxu0 %v5576
    %v5578 = vand.u32 %v5538, 4294901760
    %5579 = vmatpush.msra.mxu0 %v5578
    %v5580 = vand.u32 %v5537, 4294901760
    %5581 = vmatpush.msra.mxu0 %v5580
    %v5582 = vand.u32 %v5536, 4294901760
    %5583 = vmatpush.msra.mxu0 %v5582
    %v5584 = vand.u32 %v5081, 4294901760
    %v5585 = vsub.f32 %v5081, %v5584
    %v5586 = vand.u32 %v5585, 4294901760
    %v5587 = vsub.f32 %v5585, %v5586
    %v5588 = vand.u32 %v5587, 4294901760
    %5589 = vmatmul.f32.gmra.mxu0 %v5588
    %v5590 = vpop.f32.mrf.mxu0
    %v5591 = vadd.f32 0.0, %v5590
    %v5592 = vand.u32 %v5082, 4294901760
    %v5593 = vsub.f32 %v5082, %v5592
    %v5594 = vand.u32 %v5593, 4294901760
    %v5595 = vsub.f32 %v5593, %v5594
    %v5596 = vand.u32 %v5595, 4294901760
    %5597 = vmatmul.f32.gmra.mxu0 %v5596
    %v5598 = vpop.f32.mrf.mxu0
    %v5599 = vadd.f32 0.0, %v5598
    %v5600 = vand.u32 %v5083, 4294901760
    %v5601 = vsub.f32 %v5083, %v5600
    %v5602 = vand.u32 %v5601, 4294901760
    %v5603 = vsub.f32 %v5601, %v5602
    %v5604 = vand.u32 %v5603, 4294901760
    %5605 = vmatmul.f32.gmra.mxu0 %v5604
    %v5606 = vpop.f32.mrf.mxu0
    %v5607 = vadd.f32 0.0, %v5606
    %v5608 = vand.u32 %v5084, 4294901760
    %v5609 = vsub.f32 %v5084, %v5608
    %v5610 = vand.u32 %v5609, 4294901760
    %v5611 = vsub.f32 %v5609, %v5610
    %v5612 = vand.u32 %v5611, 4294901760
    %5613 = vmatmul.f32.gmra.mxu0 %v5612
    %v5614 = vpop.f32.mrf.mxu0
    %v5615 = vadd.f32 0.0, %v5614
    %5616 = vdwg.mxu0
    %v5617 = vand.u32 %v5551, 4294901760
    %v5618 = vsub.f32 %v5551, %v5617
    %v5619 = vand.u32 %v5618, 4294901760
    %v5620 = vsub.f32 %v5618, %v5619
    %v5621 = vand.u32 %v5620, 4294901760
    %5622 = vmatpush.msra.mxu0 %v5621
    %v5623 = vand.u32 %v5550, 4294901760
    %v5624 = vsub.f32 %v5550, %v5623
    %v5625 = vand.u32 %v5624, 4294901760
    %v5626 = vsub.f32 %v5624, %v5625
    %v5627 = vand.u32 %v5626, 4294901760
    %5628 = vmatpush.msra.mxu0 %v5627
    %v5629 = vand.u32 %v5549, 4294901760
    %v5630 = vsub.f32 %v5549, %v5629
    %v5631 = vand.u32 %v5630, 4294901760
    %v5632 = vsub.f32 %v5630, %v5631
    %v5633 = vand.u32 %v5632, 4294901760
    %5634 = vmatpush.msra.mxu0 %v5633
    %v5635 = vand.u32 %v5548, 4294901760
    %v5636 = vsub.f32 %v5548, %v5635
    %v5637 = vand.u32 %v5636, 4294901760
    %v5638 = vsub.f32 %v5636, %v5637
    %v5639 = vand.u32 %v5638, 4294901760
    %5640 = vmatpush.msra.mxu0 %v5639
    %v5641 = vand.u32 %v5547, 4294901760
    %v5642 = vsub.f32 %v5547, %v5641
    %v5643 = vand.u32 %v5642, 4294901760
    %v5644 = vsub.f32 %v5642, %v5643
    %v5645 = vand.u32 %v5644, 4294901760
    %5646 = vmatpush.msra.mxu0 %v5645
    %v5647 = vand.u32 %v5546, 4294901760
    %v5648 = vsub.f32 %v5546, %v5647
    %v5649 = vand.u32 %v5648, 4294901760
    %v5650 = vsub.f32 %v5648, %v5649
    %v5651 = vand.u32 %v5650, 4294901760
    %5652 = vmatpush.msra.mxu0 %v5651
    %v5653 = vand.u32 %v5545, 4294901760
    %v5654 = vsub.f32 %v5545, %v5653
    %v5655 = vand.u32 %v5654, 4294901760
    %v5656 = vsub.f32 %v5654, %v5655
    %v5657 = vand.u32 %v5656, 4294901760
    %5658 = vmatpush.msra.mxu0 %v5657
    %v5659 = vand.u32 %v5544, 4294901760
    %v5660 = vsub.f32 %v5544, %v5659
    %v5661 = vand.u32 %v5660, 4294901760
    %v5662 = vsub.f32 %v5660, %v5661
    %v5663 = vand.u32 %v5662, 4294901760
    %5664 = vmatpush.msra.mxu0 %v5663
    %v5665 = vand.u32 %v5543, 4294901760
    %v5666 = vsub.f32 %v5543, %v5665
    %v5667 = vand.u32 %v5666, 4294901760
    %v5668 = vsub.f32 %v5666, %v5667
    %v5669 = vand.u32 %v5668, 4294901760
    %5670 = vmatpush.msra.mxu0 %v5669
    %v5671 = vand.u32 %v5542, 4294901760
    %v5672 = vsub.f32 %v5542, %v5671
    %v5673 = vand.u32 %v5672, 4294901760
    %v5674 = vsub.f32 %v5672, %v5673
    %v5675 = vand.u32 %v5674, 4294901760
    %5676 = vmatpush.msra.mxu0 %v5675
    %v5677 = vand.u32 %v5541, 4294901760
    %v5678 = vsub.f32 %v5541, %v5677
    %v5679 = vand.u32 %v5678, 4294901760
    %v5680 = vsub.f32 %v5678, %v5679
    %v5681 = vand.u32 %v5680, 4294901760
    %5682 = vmatpush.msra.mxu0 %v5681
    %v5683 = vand.u32 %v5540, 4294901760
    %v5684 = vsub.f32 %v5540, %v5683
    %v5685 = vand.u32 %v5684, 4294901760
    %v5686 = vsub.f32 %v5684, %v5685
    %v5687 = vand.u32 %v5686, 4294901760
    %5688 = vmatpush.msra.mxu0 %v5687
    %v5689 = vand.u32 %v5539, 4294901760
    %v5690 = vsub.f32 %v5539, %v5689
    %v5691 = vand.u32 %v5690, 4294901760
    %v5692 = vsub.f32 %v5690, %v5691
    %v5693 = vand.u32 %v5692, 4294901760
    %5694 = vmatpush.msra.mxu0 %v5693
    %v5695 = vand.u32 %v5538, 4294901760
    %v5696 = vsub.f32 %v5538, %v5695
    %v5697 = vand.u32 %v5696, 4294901760
    %v5698 = vsub.f32 %v5696, %v5697
    %v5699 = vand.u32 %v5698, 4294901760
    %5700 = vmatpush.msra.mxu0 %v5699
    %v5701 = vand.u32 %v5537, 4294901760
    %v5702 = vsub.f32 %v5537, %v5701
    %v5703 = vand.u32 %v5702, 4294901760
    %v5704 = vsub.f32 %v5702, %v5703
    %v5705 = vand.u32 %v5704, 4294901760
    %5706 = vmatpush.msra.mxu0 %v5705
    %v5707 = vand.u32 %v5536, 4294901760
    %v5708 = vsub.f32 %v5536, %v5707
    %v5709 = vand.u32 %v5708, 4294901760
    %v5710 = vsub.f32 %v5708, %v5709
    %v5711 = vand.u32 %v5710, 4294901760
    %5712 = vmatpush.msra.mxu0 %v5711
    %v5713 = vand.u32 %v5081, 4294901760
    %5714 = vmatmul.f32.gmra.mxu0 %v5713
    %v5715 = vpop.f32.mrf.mxu0
    %v5716 = vadd.f32 %v5591, %v5715
    %v5717 = vand.u32 %v5082, 4294901760
    %5718 = vmatmul.f32.gmra.mxu0 %v5717
    %v5719 = vpop.f32.mrf.mxu0
    %v5720 = vadd.f32 %v5599, %v5719
    %v5721 = vand.u32 %v5083, 4294901760
    %5722 = vmatmul.f32.gmra.mxu0 %v5721
    %v5723 = vpop.f32.mrf.mxu0
    %v5724 = vadd.f32 %v5607, %v5723
    %v5725 = vand.u32 %v5084, 4294901760
    %5726 = vmatmul.f32.gmra.mxu0 %v5725
    %v5727 = vpop.f32.mrf.mxu0
    %v5728 = vadd.f32 %v5615, %v5727
    %5729 = vdwg.mxu0
    %v5730 = vand.u32 %v5551, 4294901760
    %v5731 = vsub.f32 %v5551, %v5730
    %5732 = vmatpush.msra.mxu0 %v5731
    %v5733 = vand.u32 %v5550, 4294901760
    %v5734 = vsub.f32 %v5550, %v5733
    %5735 = vmatpush.msra.mxu0 %v5734
    %v5736 = vand.u32 %v5549, 4294901760
    %v5737 = vsub.f32 %v5549, %v5736
    %5738 = vmatpush.msra.mxu0 %v5737
    %v5739 = vand.u32 %v5548, 4294901760
    %v5740 = vsub.f32 %v5548, %v5739
    %5741 = vmatpush.msra.mxu0 %v5740
    %v5742 = vand.u32 %v5547, 4294901760
    %v5743 = vsub.f32 %v5547, %v5742
    %5744 = vmatpush.msra.mxu0 %v5743
    %v5745 = vand.u32 %v5546, 4294901760
    %v5746 = vsub.f32 %v5546, %v5745
    %5747 = vmatpush.msra.mxu0 %v5746
    %v5748 = vand.u32 %v5545, 4294901760
    %v5749 = vsub.f32 %v5545, %v5748
    %5750 = vmatpush.msra.mxu0 %v5749
    %v5751 = vand.u32 %v5544, 4294901760
    %v5752 = vsub.f32 %v5544, %v5751
    %5753 = vmatpush.msra.mxu0 %v5752
    %v5754 = vand.u32 %v5543, 4294901760
    %v5755 = vsub.f32 %v5543, %v5754
    %5756 = vmatpush.msra.mxu0 %v5755
    %v5757 = vand.u32 %v5542, 4294901760
    %v5758 = vsub.f32 %v5542, %v5757
    %5759 = vmatpush.msra.mxu0 %v5758
    %v5760 = vand.u32 %v5541, 4294901760
    %v5761 = vsub.f32 %v5541, %v5760
    %5762 = vmatpush.msra.mxu0 %v5761
    %v5763 = vand.u32 %v5540, 4294901760
    %v5764 = vsub.f32 %v5540, %v5763
    %5765 = vmatpush.msra.mxu0 %v5764
    %v5766 = vand.u32 %v5539, 4294901760
    %v5767 = vsub.f32 %v5539, %v5766
    %5768 = vmatpush.msra.mxu0 %v5767
    %v5769 = vand.u32 %v5538, 4294901760
    %v5770 = vsub.f32 %v5538, %v5769
    %5771 = vmatpush.msra.mxu0 %v5770
    %v5772 = vand.u32 %v5537, 4294901760
    %v5773 = vsub.f32 %v5537, %v5772
    %5774 = vmatpush.msra.mxu0 %v5773
    %v5775 = vand.u32 %v5536, 4294901760
    %v5776 = vsub.f32 %v5536, %v5775
    %5777 = vmatpush.msra.mxu0 %v5776
    %v5778 = vand.u32 %v5081, 4294901760
    %v5779 = vsub.f32 %v5081, %v5778
    %5780 = vmatmul.f32.gmra.mxu0 %v5779
    %v5781 = vpop.f32.mrf.mxu0
    %v5782 = vadd.f32 %v5716, %v5781
    %v5783 = vand.u32 %v5082, 4294901760
    %v5784 = vsub.f32 %v5082, %v5783
    %5785 = vmatmul.f32.gmra.mxu0 %v5784
    %v5786 = vpop.f32.mrf.mxu0
    %v5787 = vadd.f32 %v5720, %v5786
    %v5788 = vand.u32 %v5083, 4294901760
    %v5789 = vsub.f32 %v5083, %v5788
    %5790 = vmatmul.f32.gmra.mxu0 %v5789
    %v5791 = vpop.f32.mrf.mxu0
    %v5792 = vadd.f32 %v5724, %v5791
    %v5793 = vand.u32 %v5084, 4294901760
    %v5794 = vsub.f32 %v5084, %v5793
    %5795 = vmatmul.f32.gmra.mxu0 %v5794
    %v5796 = vpop.f32.mrf.mxu0
    %v5797 = vadd.f32 %v5728, %v5796
    %5798 = vdwg.mxu0
    %v5799 = vand.u32 %v5551, 4294901760
    %5800 = vmatpush.msra.mxu0 %v5799
    %v5801 = vand.u32 %v5550, 4294901760
    %5802 = vmatpush.msra.mxu0 %v5801
    %v5803 = vand.u32 %v5549, 4294901760
    %5804 = vmatpush.msra.mxu0 %v5803
    %v5805 = vand.u32 %v5548, 4294901760
    %5806 = vmatpush.msra.mxu0 %v5805
    %v5807 = vand.u32 %v5547, 4294901760
    %5808 = vmatpush.msra.mxu0 %v5807
    %v5809 = vand.u32 %v5546, 4294901760
    %5810 = vmatpush.msra.mxu0 %v5809
    %v5811 = vand.u32 %v5545, 4294901760
    %5812 = vmatpush.msra.mxu0 %v5811
    %v5813 = vand.u32 %v5544, 4294901760
    %5814 = vmatpush.msra.mxu0 %v5813
    %v5815 = vand.u32 %v5543, 4294901760
    %5816 = vmatpush.msra.mxu0 %v5815
    %v5817 = vand.u32 %v5542, 4294901760
    %5818 = vmatpush.msra.mxu0 %v5817
    %v5819 = vand.u32 %v5541, 4294901760
    %5820 = vmatpush.msra.mxu0 %v5819
    %v5821 = vand.u32 %v5540, 4294901760
    %5822 = vmatpush.msra.mxu0 %v5821
    %v5823 = vand.u32 %v5539, 4294901760
    %5824 = vmatpush.msra.mxu0 %v5823
    %v5825 = vand.u32 %v5538, 4294901760
    %5826 = vmatpush.msra.mxu0 %v5825
    %v5827 = vand.u32 %v5537, 4294901760
    %5828 = vmatpush.msra.mxu0 %v5827
    %v5829 = vand.u32 %v5536, 4294901760
    %5830 = vmatpush.msra.mxu0 %v5829
    %v5831 = vand.u32 %v5081, 4294901760
    %v5832 = vsub.f32 %v5081, %v5831
    %v5833 = vand.u32 %v5832, 4294901760
    %5834 = vmatmul.f32.gmra.mxu0 %v5833
    %v5835 = vpop.f32.mrf.mxu0
    %v5836 = vadd.f32 %v5782, %v5835
    %v5837 = vand.u32 %v5082, 4294901760
    %v5838 = vsub.f32 %v5082, %v5837
    %v5839 = vand.u32 %v5838, 4294901760
    %5840 = vmatmul.f32.gmra.mxu0 %v5839
    %v5841 = vpop.f32.mrf.mxu0
    %v5842 = vadd.f32 %v5787, %v5841
    %v5843 = vand.u32 %v5083, 4294901760
    %v5844 = vsub.f32 %v5083, %v5843
    %v5845 = vand.u32 %v5844, 4294901760
    %5846 = vmatmul.f32.gmra.mxu0 %v5845
    %v5847 = vpop.f32.mrf.mxu0
    %v5848 = vadd.f32 %v5792, %v5847
    %v5849 = vand.u32 %v5084, 4294901760
    %v5850 = vsub.f32 %v5084, %v5849
    %v5851 = vand.u32 %v5850, 4294901760
    %5852 = vmatmul.f32.gmra.mxu0 %v5851
    %v5853 = vpop.f32.mrf.mxu0
    %v5854 = vadd.f32 %v5797, %v5853
    %5855 = vdwg.mxu0
    %v5856 = vand.u32 %v5551, 4294901760
    %v5857 = vsub.f32 %v5551, %v5856
    %v5858 = vand.u32 %v5857, 4294901760
    %5859 = vmatpush.msra.mxu0 %v5858
    %v5860 = vand.u32 %v5550, 4294901760
    %v5861 = vsub.f32 %v5550, %v5860
    %v5862 = vand.u32 %v5861, 4294901760
    %5863 = vmatpush.msra.mxu0 %v5862
    %v5864 = vand.u32 %v5549, 4294901760
    %v5865 = vsub.f32 %v5549, %v5864
    %v5866 = vand.u32 %v5865, 4294901760
    %5867 = vmatpush.msra.mxu0 %v5866
    %v5868 = vand.u32 %v5548, 4294901760
    %v5869 = vsub.f32 %v5548, %v5868
    %v5870 = vand.u32 %v5869, 4294901760
    %5871 = vmatpush.msra.mxu0 %v5870
    %v5872 = vand.u32 %v5547, 4294901760
    %v5873 = vsub.f32 %v5547, %v5872
    %v5874 = vand.u32 %v5873, 4294901760
    %5875 = vmatpush.msra.mxu0 %v5874
    %v5876 = vand.u32 %v5546, 4294901760
    %v5877 = vsub.f32 %v5546, %v5876
    %v5878 = vand.u32 %v5877, 4294901760
    %5879 = vmatpush.msra.mxu0 %v5878
    %v5880 = vand.u32 %v5545, 4294901760
    %v5881 = vsub.f32 %v5545, %v5880
    %v5882 = vand.u32 %v5881, 4294901760
    %5883 = vmatpush.msra.mxu0 %v5882
    %v5884 = vand.u32 %v5544, 4294901760
    %v5885 = vsub.f32 %v5544, %v5884
    %v5886 = vand.u32 %v5885, 4294901760
    %5887 = vmatpush.msra.mxu0 %v5886
    %v5888 = vand.u32 %v5543, 4294901760
    %v5889 = vsub.f32 %v5543, %v5888
    %v5890 = vand.u32 %v5889, 4294901760
    %5891 = vmatpush.msra.mxu0 %v5890
    %v5892 = vand.u32 %v5542, 4294901760
    %v5893 = vsub.f32 %v5542, %v5892
    %v5894 = vand.u32 %v5893, 4294901760
    %5895 = vmatpush.msra.mxu0 %v5894
    %v5896 = vand.u32 %v5541, 4294901760
    %v5897 = vsub.f32 %v5541, %v5896
    %v5898 = vand.u32 %v5897, 4294901760
    %5899 = vmatpush.msra.mxu0 %v5898
    %v5900 = vand.u32 %v5540, 4294901760
    %v5901 = vsub.f32 %v5540, %v5900
    %v5902 = vand.u32 %v5901, 4294901760
    %5903 = vmatpush.msra.mxu0 %v5902
    %v5904 = vand.u32 %v5539, 4294901760
    %v5905 = vsub.f32 %v5539, %v5904
    %v5906 = vand.u32 %v5905, 4294901760
    %5907 = vmatpush.msra.mxu0 %v5906
    %v5908 = vand.u32 %v5538, 4294901760
    %v5909 = vsub.f32 %v5538, %v5908
    %v5910 = vand.u32 %v5909, 4294901760
    %5911 = vmatpush.msra.mxu0 %v5910
    %v5912 = vand.u32 %v5537, 4294901760
    %v5913 = vsub.f32 %v5537, %v5912
    %v5914 = vand.u32 %v5913, 4294901760
    %5915 = vmatpush.msra.mxu0 %v5914
    %v5916 = vand.u32 %v5536, 4294901760
    %v5917 = vsub.f32 %v5536, %v5916
    %v5918 = vand.u32 %v5917, 4294901760
    %5919 = vmatpush.msra.mxu0 %v5918
    %v5920 = vand.u32 %v5081, 4294901760
    %5921 = vmatmul.f32.gmra.mxu0 %v5920
    %v5922 = vpop.f32.mrf.mxu0
    %v5923 = vadd.f32 %v5836, %v5922
    %v5924 = vand.u32 %v5082, 4294901760
    %5925 = vmatmul.f32.gmra.mxu0 %v5924
    %v5926 = vpop.f32.mrf.mxu0
    %v5927 = vadd.f32 %v5842, %v5926
    %v5928 = vand.u32 %v5083, 4294901760
    %5929 = vmatmul.f32.gmra.mxu0 %v5928
    %v5930 = vpop.f32.mrf.mxu0
    %v5931 = vadd.f32 %v5848, %v5930
    %v5932 = vand.u32 %v5084, 4294901760
    %5933 = vmatmul.f32.gmra.mxu0 %v5932
    %v5934 = vpop.f32.mrf.mxu0
    %v5935 = vadd.f32 %v5854, %v5934
    %5936 = vdwg.mxu0
    %v5937 = vand.u32 %v5551, 4294901760
    %5938 = vmatpush.msra.mxu0 %v5937
    %v5939 = vand.u32 %v5550, 4294901760
    %5940 = vmatpush.msra.mxu0 %v5939
    %v5941 = vand.u32 %v5549, 4294901760
    %5942 = vmatpush.msra.mxu0 %v5941
    %v5943 = vand.u32 %v5548, 4294901760
    %5944 = vmatpush.msra.mxu0 %v5943
    %v5945 = vand.u32 %v5547, 4294901760
    %5946 = vmatpush.msra.mxu0 %v5945
    %v5947 = vand.u32 %v5546, 4294901760
    %5948 = vmatpush.msra.mxu0 %v5947
    %v5949 = vand.u32 %v5545, 4294901760
    %5950 = vmatpush.msra.mxu0 %v5949
    %v5951 = vand.u32 %v5544, 4294901760
    %5952 = vmatpush.msra.mxu0 %v5951
    %v5953 = vand.u32 %v5543, 4294901760
    %5954 = vmatpush.msra.mxu0 %v5953
    %v5955 = vand.u32 %v5542, 4294901760
    %5956 = vmatpush.msra.mxu0 %v5955
    %v5957 = vand.u32 %v5541, 4294901760
    %5958 = vmatpush.msra.mxu0 %v5957
    %v5959 = vand.u32 %v5540, 4294901760
    %5960 = vmatpush.msra.mxu0 %v5959
    %v5961 = vand.u32 %v5539, 4294901760
    %5962 = vmatpush.msra.mxu0 %v5961
    %v5963 = vand.u32 %v5538, 4294901760
    %5964 = vmatpush.msra.mxu0 %v5963
    %v5965 = vand.u32 %v5537, 4294901760
    %5966 = vmatpush.msra.mxu0 %v5965
    %v5967 = vand.u32 %v5536, 4294901760
    %5968 = vmatpush.msra.mxu0 %v5967
    %v5969 = vand.u32 %v5081, 4294901760
    %5970 = vmatmul.f32.gmra.mxu0 %v5969
    %v5971 = vpop.f32.mrf.mxu0
    %v5972 = vadd.f32 %v5923, %v5971
    %v5973 = vand.u32 %v5082, 4294901760
    %5974 = vmatmul.f32.gmra.mxu0 %v5973
    %v5975 = vpop.f32.mrf.mxu0
    %v5976 = vadd.f32 %v5927, %v5975
    %v5977 = vand.u32 %v5083, 4294901760
    %5978 = vmatmul.f32.gmra.mxu0 %v5977
    %v5979 = vpop.f32.mrf.mxu0
    %v5980 = vadd.f32 %v5931, %v5979
    %v5981 = vand.u32 %v5084, 4294901760
    %5982 = vmatmul.f32.gmra.mxu0 %v5981
    %v5983 = vpop.f32.mrf.mxu0
    %v5984 = vadd.f32 %v5935, %v5983
    %5985 = vdwg.mxu0
    %v5986 = vadd.f32 %v5521, %v5972
    %v5987 = vadd.f32 %v5525, %v5976
    %v5988 = vadd.f32 %v5529, %v5980
    %v5989 = vadd.f32 %v5533, %v5984
    %v5990 = vmax.f32 %v5521, %v5972
    %v5991 = vmax.f32 %v5525, %v5976
    %v5992 = vmax.f32 %v5529, %v5980
    %v5993 = vmax.f32 %v5533, %v5984
    %s5994 = scalar_lea.vmem %s5, 256
    %v5995 = vld [vmem:[%s5994] sm:$0xff]
    %v5996 = vld [vmem:[%s5994 + $0x8] sm:$0xff]
    %v5997 = vld [vmem:[%s5994 + $0x10] sm:$0xff]
    %v5998 = vld [vmem:[%s5994 + $0x18] sm:$0xff]
    %v5999 = vld [vmem:[%s5994 + $0x20] sm:$0xff]
    %v6000 = vld [vmem:[%s5994 + $0x28] sm:$0xff]
    %v6001 = vld [vmem:[%s5994 + $0x30] sm:$0xff]
    %v6002 = vld [vmem:[%s5994 + $0x38] sm:$0xff]
    %v6003 = vld [vmem:[%s5994 + $0x40] sm:$0xff]
    %v6004 = vld [vmem:[%s5994 + $0x48] sm:$0xff]
    %v6005 = vld [vmem:[%s5994 + $0x50] sm:$0xff]
    %v6006 = vld [vmem:[%s5994 + $0x58] sm:$0xff]
    %v6007 = vld [vmem:[%s5994 + $0x60] sm:$0xff]
    %v6008 = vld [vmem:[%s5994 + $0x68] sm:$0xff]
    %v6009 = vld [vmem:[%s5994 + $0x70] sm:$0xff]
    %v6010 = vld [vmem:[%s5994 + $0x78] sm:$0xff]
    %v6011 = vand.u32 %v6010, 4294901760
    %6012 = vmatpush.msra.mxu0 %v6011
    %v6013 = vand.u32 %v6009, 4294901760
    %6014 = vmatpush.msra.mxu0 %v6013
    %v6015 = vand.u32 %v6008, 4294901760
    %6016 = vmatpush.msra.mxu0 %v6015
    %v6017 = vand.u32 %v6007, 4294901760
    %6018 = vmatpush.msra.mxu0 %v6017
    %v6019 = vand.u32 %v6006, 4294901760
    %6020 = vmatpush.msra.mxu0 %v6019
    %v6021 = vand.u32 %v6005, 4294901760
    %6022 = vmatpush.msra.mxu0 %v6021
    %v6023 = vand.u32 %v6004, 4294901760
    %6024 = vmatpush.msra.mxu0 %v6023
    %v6025 = vand.u32 %v6003, 4294901760
    %6026 = vmatpush.msra.mxu0 %v6025
    %v6027 = vand.u32 %v6002, 4294901760
    %6028 = vmatpush.msra.mxu0 %v6027
    %v6029 = vand.u32 %v6001, 4294901760
    %6030 = vmatpush.msra.mxu0 %v6029
    %v6031 = vand.u32 %v6000, 4294901760
    %6032 = vmatpush.msra.mxu0 %v6031
    %v6033 = vand.u32 %v5999, 4294901760
    %6034 = vmatpush.msra.mxu0 %v6033
    %v6035 = vand.u32 %v5998, 4294901760
    %6036 = vmatpush.msra.mxu0 %v6035
    %v6037 = vand.u32 %v5997, 4294901760
    %6038 = vmatpush.msra.mxu0 %v6037
    %v6039 = vand.u32 %v5996, 4294901760
    %6040 = vmatpush.msra.mxu0 %v6039
    %v6041 = vand.u32 %v5995, 4294901760
    %6042 = vmatpush.msra.mxu0 %v6041
    %v6043 = vand.u32 %v5081, 4294901760
    %v6044 = vsub.f32 %v5081, %v6043
    %v6045 = vand.u32 %v6044, 4294901760
    %v6046 = vsub.f32 %v6044, %v6045
    %v6047 = vand.u32 %v6046, 4294901760
    %6048 = vmatmul.f32.gmra.mxu0 %v6047
    %v6049 = vpop.f32.mrf.mxu0
    %v6050 = vadd.f32 0.0, %v6049
    %v6051 = vand.u32 %v5082, 4294901760
    %v6052 = vsub.f32 %v5082, %v6051
    %v6053 = vand.u32 %v6052, 4294901760
    %v6054 = vsub.f32 %v6052, %v6053
    %v6055 = vand.u32 %v6054, 4294901760
    %6056 = vmatmul.f32.gmra.mxu0 %v6055
    %v6057 = vpop.f32.mrf.mxu0
    %v6058 = vadd.f32 0.0, %v6057
    %v6059 = vand.u32 %v5083, 4294901760
    %v6060 = vsub.f32 %v5083, %v6059
    %v6061 = vand.u32 %v6060, 4294901760
    %v6062 = vsub.f32 %v6060, %v6061
    %v6063 = vand.u32 %v6062, 4294901760
    %6064 = vmatmul.f32.gmra.mxu0 %v6063
    %v6065 = vpop.f32.mrf.mxu0
    %v6066 = vadd.f32 0.0, %v6065
    %v6067 = vand.u32 %v5084, 4294901760
    %v6068 = vsub.f32 %v5084, %v6067
    %v6069 = vand.u32 %v6068, 4294901760
    %v6070 = vsub.f32 %v6068, %v6069
    %v6071 = vand.u32 %v6070, 4294901760
    %6072 = vmatmul.f32.gmra.mxu0 %v6071
    %v6073 = vpop.f32.mrf.mxu0
    %v6074 = vadd.f32 0.0, %v6073
    %6075 = vdwg.mxu0
    %v6076 = vand.u32 %v6010, 4294901760
    %v6077 = vsub.f32 %v6010, %v6076
    %v6078 = vand.u32 %v6077, 4294901760
    %v6079 = vsub.f32 %v6077, %v6078
    %v6080 = vand.u32 %v6079, 4294901760
    %6081 = vmatpush.msra.mxu0 %v6080
    %v6082 = vand.u32 %v6009, 4294901760
    %v6083 = vsub.f32 %v6009, %v6082
    %v6084 = vand.u32 %v6083, 4294901760
    %v6085 = vsub.f32 %v6083, %v6084
    %v6086 = vand.u32 %v6085, 4294901760
    %6087 = vmatpush.msra.mxu0 %v6086
    %v6088 = vand.u32 %v6008, 4294901760
    %v6089 = vsub.f32 %v6008, %v6088
    %v6090 = vand.u32 %v6089, 4294901760
    %v6091 = vsub.f32 %v6089, %v6090
    %v6092 = vand.u32 %v6091, 4294901760
    %6093 = vmatpush.msra.mxu0 %v6092
    %v6094 = vand.u32 %v6007, 4294901760
    %v6095 = vsub.f32 %v6007, %v6094
    %v6096 = vand.u32 %v6095, 4294901760
    %v6097 = vsub.f32 %v6095, %v6096
    %v6098 = vand.u32 %v6097, 4294901760
    %6099 = vmatpush.msra.mxu0 %v6098
    %v6100 = vand.u32 %v6006, 4294901760
    %v6101 = vsub.f32 %v6006, %v6100
    %v6102 = vand.u32 %v6101, 4294901760
    %v6103 = vsub.f32 %v6101, %v6102
    %v6104 = vand.u32 %v6103, 4294901760
    %6105 = vmatpush.msra.mxu0 %v6104
    %v6106 = vand.u32 %v6005, 4294901760
    %v6107 = vsub.f32 %v6005, %v6106
    %v6108 = vand.u32 %v6107, 4294901760
    %v6109 = vsub.f32 %v6107, %v6108
    %v6110 = vand.u32 %v6109, 4294901760
    %6111 = vmatpush.msra.mxu0 %v6110
    %v6112 = vand.u32 %v6004, 4294901760
    %v6113 = vsub.f32 %v6004, %v6112
    %v6114 = vand.u32 %v6113, 4294901760
    %v6115 = vsub.f32 %v6113, %v6114
    %v6116 = vand.u32 %v6115, 4294901760
    %6117 = vmatpush.msra.mxu0 %v6116
    %v6118 = vand.u32 %v6003, 4294901760
    %v6119 = vsub.f32 %v6003, %v6118
    %v6120 = vand.u32 %v6119, 4294901760
    %v6121 = vsub.f32 %v6119, %v6120
    %v6122 = vand.u32 %v6121, 4294901760
    %6123 = vmatpush.msra.mxu0 %v6122
    %v6124 = vand.u32 %v6002, 4294901760
    %v6125 = vsub.f32 %v6002, %v6124
    %v6126 = vand.u32 %v6125, 4294901760
    %v6127 = vsub.f32 %v6125, %v6126
    %v6128 = vand.u32 %v6127, 4294901760
    %6129 = vmatpush.msra.mxu0 %v6128
    %v6130 = vand.u32 %v6001, 4294901760
    %v6131 = vsub.f32 %v6001, %v6130
    %v6132 = vand.u32 %v6131, 4294901760
    %v6133 = vsub.f32 %v6131, %v6132
    %v6134 = vand.u32 %v6133, 4294901760
    %6135 = vmatpush.msra.mxu0 %v6134
    %v6136 = vand.u32 %v6000, 4294901760
    %v6137 = vsub.f32 %v6000, %v6136
    %v6138 = vand.u32 %v6137, 4294901760
    %v6139 = vsub.f32 %v6137, %v6138
    %v6140 = vand.u32 %v6139, 4294901760
    %6141 = vmatpush.msra.mxu0 %v6140
    %v6142 = vand.u32 %v5999, 4294901760
    %v6143 = vsub.f32 %v5999, %v6142
    %v6144 = vand.u32 %v6143, 4294901760
    %v6145 = vsub.f32 %v6143, %v6144
    %v6146 = vand.u32 %v6145, 4294901760
    %6147 = vmatpush.msra.mxu0 %v6146
    %v6148 = vand.u32 %v5998, 4294901760
    %v6149 = vsub.f32 %v5998, %v6148
    %v6150 = vand.u32 %v6149, 4294901760
    %v6151 = vsub.f32 %v6149, %v6150
    %v6152 = vand.u32 %v6151, 4294901760
    %6153 = vmatpush.msra.mxu0 %v6152
    %v6154 = vand.u32 %v5997, 4294901760
    %v6155 = vsub.f32 %v5997, %v6154
    %v6156 = vand.u32 %v6155, 4294901760
    %v6157 = vsub.f32 %v6155, %v6156
    %v6158 = vand.u32 %v6157, 4294901760
    %6159 = vmatpush.msra.mxu0 %v6158
    %v6160 = vand.u32 %v5996, 4294901760
    %v6161 = vsub.f32 %v5996, %v6160
    %v6162 = vand.u32 %v6161, 4294901760
    %v6163 = vsub.f32 %v6161, %v6162
    %v6164 = vand.u32 %v6163, 4294901760
    %6165 = vmatpush.msra.mxu0 %v6164
    %v6166 = vand.u32 %v5995, 4294901760
    %v6167 = vsub.f32 %v5995, %v6166
    %v6168 = vand.u32 %v6167, 4294901760
    %v6169 = vsub.f32 %v6167, %v6168
    %v6170 = vand.u32 %v6169, 4294901760
    %6171 = vmatpush.msra.mxu0 %v6170
    %v6172 = vand.u32 %v5081, 4294901760
    %6173 = vmatmul.f32.gmra.mxu0 %v6172
    %v6174 = vpop.f32.mrf.mxu0
    %v6175 = vadd.f32 %v6050, %v6174
    %v6176 = vand.u32 %v5082, 4294901760
    %6177 = vmatmul.f32.gmra.mxu0 %v6176
    %v6178 = vpop.f32.mrf.mxu0
    %v6179 = vadd.f32 %v6058, %v6178
    %v6180 = vand.u32 %v5083, 4294901760
    %6181 = vmatmul.f32.gmra.mxu0 %v6180
    %v6182 = vpop.f32.mrf.mxu0
    %v6183 = vadd.f32 %v6066, %v6182
    %v6184 = vand.u32 %v5084, 4294901760
    %6185 = vmatmul.f32.gmra.mxu0 %v6184
    %v6186 = vpop.f32.mrf.mxu0
    %v6187 = vadd.f32 %v6074, %v6186
    %6188 = vdwg.mxu0
    %v6189 = vand.u32 %v6010, 4294901760
    %v6190 = vsub.f32 %v6010, %v6189
    %6191 = vmatpush.msra.mxu0 %v6190
    %v6192 = vand.u32 %v6009, 4294901760
    %v6193 = vsub.f32 %v6009, %v6192
    %6194 = vmatpush.msra.mxu0 %v6193
    %v6195 = vand.u32 %v6008, 4294901760
    %v6196 = vsub.f32 %v6008, %v6195
    %6197 = vmatpush.msra.mxu0 %v6196
    %v6198 = vand.u32 %v6007, 4294901760
    %v6199 = vsub.f32 %v6007, %v6198
    %6200 = vmatpush.msra.mxu0 %v6199
    %v6201 = vand.u32 %v6006, 4294901760
    %v6202 = vsub.f32 %v6006, %v6201
    %6203 = vmatpush.msra.mxu0 %v6202
    %v6204 = vand.u32 %v6005, 4294901760
    %v6205 = vsub.f32 %v6005, %v6204
    %6206 = vmatpush.msra.mxu0 %v6205
    %v6207 = vand.u32 %v6004, 4294901760
    %v6208 = vsub.f32 %v6004, %v6207
    %6209 = vmatpush.msra.mxu0 %v6208
    %v6210 = vand.u32 %v6003, 4294901760
    %v6211 = vsub.f32 %v6003, %v6210
    %6212 = vmatpush.msra.mxu0 %v6211
    %v6213 = vand.u32 %v6002, 4294901760
    %v6214 = vsub.f32 %v6002, %v6213
    %6215 = vmatpush.msra.mxu0 %v6214
    %v6216 = vand.u32 %v6001, 4294901760
    %v6217 = vsub.f32 %v6001, %v6216
    %6218 = vmatpush.msra.mxu0 %v6217
    %v6219 = vand.u32 %v6000, 4294901760
    %v6220 = vsub.f32 %v6000, %v6219
    %6221 = vmatpush.msra.mxu0 %v6220
    %v6222 = vand.u32 %v5999, 4294901760
    %v6223 = vsub.f32 %v5999, %v6222
    %6224 = vmatpush.msra.mxu0 %v6223
    %v6225 = vand.u32 %v5998, 4294901760
    %v6226 = vsub.f32 %v5998, %v6225
    %6227 = vmatpush.msra.mxu0 %v6226
    %v6228 = vand.u32 %v5997, 4294901760
    %v6229 = vsub.f32 %v5997, %v6228
    %6230 = vmatpush.msra.mxu0 %v6229
    %v6231 = vand.u32 %v5996, 4294901760
    %v6232 = vsub.f32 %v5996, %v6231
    %6233 = vmatpush.msra.mxu0 %v6232
    %v6234 = vand.u32 %v5995, 4294901760
    %v6235 = vsub.f32 %v5995, %v6234
    %6236 = vmatpush.msra.mxu0 %v6235
    %v6237 = vand.u32 %v5081, 4294901760
    %v6238 = vsub.f32 %v5081, %v6237
    %6239 = vmatmul.f32.gmra.mxu0 %v6238
    %v6240 = vpop.f32.mrf.mxu0
    %v6241 = vadd.f32 %v6175, %v6240
    %v6242 = vand.u32 %v5082, 4294901760
    %v6243 = vsub.f32 %v5082, %v6242
    %6244 = vmatmul.f32.gmra.mxu0 %v6243
    %v6245 = vpop.f32.mrf.mxu0
    %v6246 = vadd.f32 %v6179, %v6245
    %v6247 = vand.u32 %v5083, 4294901760
    %v6248 = vsub.f32 %v5083, %v6247
    %6249 = vmatmul.f32.gmra.mxu0 %v6248
    %v6250 = vpop.f32.mrf.mxu0
    %v6251 = vadd.f32 %v6183, %v6250
    %v6252 = vand.u32 %v5084, 4294901760
    %v6253 = vsub.f32 %v5084, %v6252
    %6254 = vmatmul.f32.gmra.mxu0 %v6253
    %v6255 = vpop.f32.mrf.mxu0
    %v6256 = vadd.f32 %v6187, %v6255
    %6257 = vdwg.mxu0
    %v6258 = vand.u32 %v6010, 4294901760
    %6259 = vmatpush.msra.mxu0 %v6258
    %v6260 = vand.u32 %v6009, 4294901760
    %6261 = vmatpush.msra.mxu0 %v6260
    %v6262 = vand.u32 %v6008, 4294901760
    %6263 = vmatpush.msra.mxu0 %v6262
    %v6264 = vand.u32 %v6007, 4294901760
    %6265 = vmatpush.msra.mxu0 %v6264
    %v6266 = vand.u32 %v6006, 4294901760
    %6267 = vmatpush.msra.mxu0 %v6266
    %v6268 = vand.u32 %v6005, 4294901760
    %6269 = vmatpush.msra.mxu0 %v6268
    %v6270 = vand.u32 %v6004, 4294901760
    %6271 = vmatpush.msra.mxu0 %v6270
    %v6272 = vand.u32 %v6003, 4294901760
    %6273 = vmatpush.msra.mxu0 %v6272
    %v6274 = vand.u32 %v6002, 4294901760
    %6275 = vmatpush.msra.mxu0 %v6274
    %v6276 = vand.u32 %v6001, 4294901760
    %6277 = vmatpush.msra.mxu0 %v6276
    %v6278 = vand.u32 %v6000, 4294901760
    %6279 = vmatpush.msra.mxu0 %v6278
    %v6280 = vand.u32 %v5999, 4294901760
    %6281 = vmatpush.msra.mxu0 %v6280
    %v6282 = vand.u32 %v5998, 4294901760
    %6283 = vmatpush.msra.mxu0 %v6282
    %v6284 = vand.u32 %v5997, 4294901760
    %6285 = vmatpush.msra.mxu0 %v6284
    %v6286 = vand.u32 %v5996, 4294901760
    %6287 = vmatpush.msra.mxu0 %v6286
    %v6288 = vand.u32 %v5995, 4294901760
    %6289 = vmatpush.msra.mxu0 %v6288
    %v6290 = vand.u32 %v5081, 4294901760
    %v6291 = vsub.f32 %v5081, %v6290
    %v6292 = vand.u32 %v6291, 4294901760
    %6293 = vmatmul.f32.gmra.mxu0 %v6292
    %v6294 = vpop.f32.mrf.mxu0
    %v6295 = vadd.f32 %v6241, %v6294
    %v6296 = vand.u32 %v5082, 4294901760
    %v6297 = vsub.f32 %v5082, %v6296
    %v6298 = vand.u32 %v6297, 4294901760
    %6299 = vmatmul.f32.gmra.mxu0 %v6298
    %v6300 = vpop.f32.mrf.mxu0
    %v6301 = vadd.f32 %v6246, %v6300
    %v6302 = vand.u32 %v5083, 4294901760
    %v6303 = vsub.f32 %v5083, %v6302
    %v6304 = vand.u32 %v6303, 4294901760
    %6305 = vmatmul.f32.gmra.mxu0 %v6304
    %v6306 = vpop.f32.mrf.mxu0
    %v6307 = vadd.f32 %v6251, %v6306
    %v6308 = vand.u32 %v5084, 4294901760
    %v6309 = vsub.f32 %v5084, %v6308
    %v6310 = vand.u32 %v6309, 4294901760
    %6311 = vmatmul.f32.gmra.mxu0 %v6310
    %v6312 = vpop.f32.mrf.mxu0
    %v6313 = vadd.f32 %v6256, %v6312
    %6314 = vdwg.mxu0
    %v6315 = vand.u32 %v6010, 4294901760
    %v6316 = vsub.f32 %v6010, %v6315
    %v6317 = vand.u32 %v6316, 4294901760
    %6318 = vmatpush.msra.mxu0 %v6317
    %v6319 = vand.u32 %v6009, 4294901760
    %v6320 = vsub.f32 %v6009, %v6319
    %v6321 = vand.u32 %v6320, 4294901760
    %6322 = vmatpush.msra.mxu0 %v6321
    %v6323 = vand.u32 %v6008, 4294901760
    %v6324 = vsub.f32 %v6008, %v6323
    %v6325 = vand.u32 %v6324, 4294901760
    %6326 = vmatpush.msra.mxu0 %v6325
    %v6327 = vand.u32 %v6007, 4294901760
    %v6328 = vsub.f32 %v6007, %v6327
    %v6329 = vand.u32 %v6328, 4294901760
    %6330 = vmatpush.msra.mxu0 %v6329
    %v6331 = vand.u32 %v6006, 4294901760
    %v6332 = vsub.f32 %v6006, %v6331
    %v6333 = vand.u32 %v6332, 4294901760
    %6334 = vmatpush.msra.mxu0 %v6333
    %v6335 = vand.u32 %v6005, 4294901760
    %v6336 = vsub.f32 %v6005, %v6335
    %v6337 = vand.u32 %v6336, 4294901760
    %6338 = vmatpush.msra.mxu0 %v6337
    %v6339 = vand.u32 %v6004, 4294901760
    %v6340 = vsub.f32 %v6004, %v6339
    %v6341 = vand.u32 %v6340, 4294901760
    %6342 = vmatpush.msra.mxu0 %v6341
    %v6343 = vand.u32 %v6003, 4294901760
    %v6344 = vsub.f32 %v6003, %v6343
    %v6345 = vand.u32 %v6344, 4294901760
    %6346 = vmatpush.msra.mxu0 %v6345
    %v6347 = vand.u32 %v6002, 4294901760
    %v6348 = vsub.f32 %v6002, %v6347
    %v6349 = vand.u32 %v6348, 4294901760
    %6350 = vmatpush.msra.mxu0 %v6349
    %v6351 = vand.u32 %v6001, 4294901760
    %v6352 = vsub.f32 %v6001, %v6351
    %v6353 = vand.u32 %v6352, 4294901760
    %6354 = vmatpush.msra.mxu0 %v6353
    %v6355 = vand.u32 %v6000, 4294901760
    %v6356 = vsub.f32 %v6000, %v6355
    %v6357 = vand.u32 %v6356, 4294901760
    %6358 = vmatpush.msra.mxu0 %v6357
    %v6359 = vand.u32 %v5999, 4294901760
    %v6360 = vsub.f32 %v5999, %v6359
    %v6361 = vand.u32 %v6360, 4294901760
    %6362 = vmatpush.msra.mxu0 %v6361
    %v6363 = vand.u32 %v5998, 4294901760
    %v6364 = vsub.f32 %v5998, %v6363
    %v6365 = vand.u32 %v6364, 4294901760
    %6366 = vmatpush.msra.mxu0 %v6365
    %v6367 = vand.u32 %v5997, 4294901760
    %v6368 = vsub.f32 %v5997, %v6367
    %v6369 = vand.u32 %v6368, 4294901760
    %6370 = vmatpush.msra.mxu0 %v6369
    %v6371 = vand.u32 %v5996, 4294901760
    %v6372 = vsub.f32 %v5996, %v6371
    %v6373 = vand.u32 %v6372, 4294901760
    %6374 = vmatpush.msra.mxu0 %v6373
    %v6375 = vand.u32 %v5995, 4294901760
    %v6376 = vsub.f32 %v5995, %v6375
    %v6377 = vand.u32 %v6376, 4294901760
    %6378 = vmatpush.msra.mxu0 %v6377
    %v6379 = vand.u32 %v5081, 4294901760
    %6380 = vmatmul.f32.gmra.mxu0 %v6379
    %v6381 = vpop.f32.mrf.mxu0
    %v6382 = vadd.f32 %v6295, %v6381
    %v6383 = vand.u32 %v5082, 4294901760
    %6384 = vmatmul.f32.gmra.mxu0 %v6383
    %v6385 = vpop.f32.mrf.mxu0
    %v6386 = vadd.f32 %v6301, %v6385
    %v6387 = vand.u32 %v5083, 4294901760
    %6388 = vmatmul.f32.gmra.mxu0 %v6387
    %v6389 = vpop.f32.mrf.mxu0
    %v6390 = vadd.f32 %v6307, %v6389
    %v6391 = vand.u32 %v5084, 4294901760
    %6392 = vmatmul.f32.gmra.mxu0 %v6391
    %v6393 = vpop.f32.mrf.mxu0
    %v6394 = vadd.f32 %v6313, %v6393
    %6395 = vdwg.mxu0
    %v6396 = vand.u32 %v6010, 4294901760
    %6397 = vmatpush.msra.mxu0 %v6396
    %v6398 = vand.u32 %v6009, 4294901760
    %6399 = vmatpush.msra.mxu0 %v6398
    %v6400 = vand.u32 %v6008, 4294901760
    %6401 = vmatpush.msra.mxu0 %v6400
    %v6402 = vand.u32 %v6007, 4294901760
    %6403 = vmatpush.msra.mxu0 %v6402
    %v6404 = vand.u32 %v6006, 4294901760
    %6405 = vmatpush.msra.mxu0 %v6404
    %v6406 = vand.u32 %v6005, 4294901760
    %6407 = vmatpush.msra.mxu0 %v6406
    %v6408 = vand.u32 %v6004, 4294901760
    %6409 = vmatpush.msra.mxu0 %v6408
    %v6410 = vand.u32 %v6003, 4294901760
    %6411 = vmatpush.msra.mxu0 %v6410
    %v6412 = vand.u32 %v6002, 4294901760
    %6413 = vmatpush.msra.mxu0 %v6412
    %v6414 = vand.u32 %v6001, 4294901760
    %6415 = vmatpush.msra.mxu0 %v6414
    %v6416 = vand.u32 %v6000, 4294901760
    %6417 = vmatpush.msra.mxu0 %v6416
    %v6418 = vand.u32 %v5999, 4294901760
    %6419 = vmatpush.msra.mxu0 %v6418
    %v6420 = vand.u32 %v5998, 4294901760
    %6421 = vmatpush.msra.mxu0 %v6420
    %v6422 = vand.u32 %v5997, 4294901760
    %6423 = vmatpush.msra.mxu0 %v6422
    %v6424 = vand.u32 %v5996, 4294901760
    %6425 = vmatpush.msra.mxu0 %v6424
    %v6426 = vand.u32 %v5995, 4294901760
    %6427 = vmatpush.msra.mxu0 %v6426
    %v6428 = vand.u32 %v5081, 4294901760
    %6429 = vmatmul.f32.gmra.mxu0 %v6428
    %v6430 = vpop.f32.mrf.mxu0
    %v6431 = vadd.f32 %v6382, %v6430
    %v6432 = vand.u32 %v5082, 4294901760
    %6433 = vmatmul.f32.gmra.mxu0 %v6432
    %v6434 = vpop.f32.mrf.mxu0
    %v6435 = vadd.f32 %v6386, %v6434
    %v6436 = vand.u32 %v5083, 4294901760
    %6437 = vmatmul.f32.gmra.mxu0 %v6436
    %v6438 = vpop.f32.mrf.mxu0
    %v6439 = vadd.f32 %v6390, %v6438
    %v6440 = vand.u32 %v5084, 4294901760
    %6441 = vmatmul.f32.gmra.mxu0 %v6440
    %v6442 = vpop.f32.mrf.mxu0
    %v6443 = vadd.f32 %v6394, %v6442
    %6444 = vdwg.mxu0
    %v6445 = vadd.f32 %v5986, %v6431
    %v6446 = vadd.f32 %v5987, %v6435
    %v6447 = vadd.f32 %v5988, %v6439
    %v6448 = vadd.f32 %v5989, %v6443
    %v6449 = vmax.f32 %v5990, %v6431
    %v6450 = vmax.f32 %v5991, %v6435
    %v6451 = vmax.f32 %v5992, %v6439
    %v6452 = vmax.f32 %v5993, %v6443
    %s6453 = scalar_lea.vmem %s5, 384
    %v6454 = vld [vmem:[%s6453] sm:$0xff]
    %v6455 = vld [vmem:[%s6453 + $0x8] sm:$0xff]
    %v6456 = vld [vmem:[%s6453 + $0x10] sm:$0xff]
    %v6457 = vld [vmem:[%s6453 + $0x18] sm:$0xff]
    %v6458 = vld [vmem:[%s6453 + $0x20] sm:$0xff]
    %v6459 = vld [vmem:[%s6453 + $0x28] sm:$0xff]
    %v6460 = vld [vmem:[%s6453 + $0x30] sm:$0xff]
    %v6461 = vld [vmem:[%s6453 + $0x38] sm:$0xff]
    %v6462 = vld [vmem:[%s6453 + $0x40] sm:$0xff]
    %v6463 = vld [vmem:[%s6453 + $0x48] sm:$0xff]
    %v6464 = vld [vmem:[%s6453 + $0x50] sm:$0xff]
    %v6465 = vld [vmem:[%s6453 + $0x58] sm:$0xff]
    %v6466 = vld [vmem:[%s6453 + $0x60] sm:$0xff]
    %v6467 = vld [vmem:[%s6453 + $0x68] sm:$0xff]
    %v6468 = vld [vmem:[%s6453 + $0x70] sm:$0xff]
    %v6469 = vld [vmem:[%s6453 + $0x78] sm:$0xff]
    %v6470 = vand.u32 %v6469, 4294901760
    %6471 = vmatpush.msra.mxu0 %v6470
    %v6472 = vand.u32 %v6468, 4294901760
    %6473 = vmatpush.msra.mxu0 %v6472
    %v6474 = vand.u32 %v6467, 4294901760
    %6475 = vmatpush.msra.mxu0 %v6474
    %v6476 = vand.u32 %v6466, 4294901760
    %6477 = vmatpush.msra.mxu0 %v6476
    %v6478 = vand.u32 %v6465, 4294901760
    %6479 = vmatpush.msra.mxu0 %v6478
    %v6480 = vand.u32 %v6464, 4294901760
    %6481 = vmatpush.msra.mxu0 %v6480
    %v6482 = vand.u32 %v6463, 4294901760
    %6483 = vmatpush.msra.mxu0 %v6482
    %v6484 = vand.u32 %v6462, 4294901760
    %6485 = vmatpush.msra.mxu0 %v6484
    %v6486 = vand.u32 %v6461, 4294901760
    %6487 = vmatpush.msra.mxu0 %v6486
    %v6488 = vand.u32 %v6460, 4294901760
    %6489 = vmatpush.msra.mxu0 %v6488
    %v6490 = vand.u32 %v6459, 4294901760
    %6491 = vmatpush.msra.mxu0 %v6490
    %v6492 = vand.u32 %v6458, 4294901760
    %6493 = vmatpush.msra.mxu0 %v6492
    %v6494 = vand.u32 %v6457, 4294901760
    %6495 = vmatpush.msra.mxu0 %v6494
    %v6496 = vand.u32 %v6456, 4294901760
    %6497 = vmatpush.msra.mxu0 %v6496
    %v6498 = vand.u32 %v6455, 4294901760
    %6499 = vmatpush.msra.mxu0 %v6498
    %v6500 = vand.u32 %v6454, 4294901760
    %6501 = vmatpush.msra.mxu0 %v6500
    %v6502 = vand.u32 %v5081, 4294901760
    %v6503 = vsub.f32 %v5081, %v6502
    %v6504 = vand.u32 %v6503, 4294901760
    %v6505 = vsub.f32 %v6503, %v6504
    %v6506 = vand.u32 %v6505, 4294901760
    %6507 = vmatmul.f32.gmra.mxu0 %v6506
    %v6508 = vpop.f32.mrf.mxu0
    %v6509 = vadd.f32 0.0, %v6508
    %v6510 = vand.u32 %v5082, 4294901760
    %v6511 = vsub.f32 %v5082, %v6510
    %v6512 = vand.u32 %v6511, 4294901760
    %v6513 = vsub.f32 %v6511, %v6512
    %v6514 = vand.u32 %v6513, 4294901760
    %6515 = vmatmul.f32.gmra.mxu0 %v6514
    %v6516 = vpop.f32.mrf.mxu0
    %v6517 = vadd.f32 0.0, %v6516
    %v6518 = vand.u32 %v5083, 4294901760
    %v6519 = vsub.f32 %v5083, %v6518
    %v6520 = vand.u32 %v6519, 4294901760
    %v6521 = vsub.f32 %v6519, %v6520
    %v6522 = vand.u32 %v6521, 4294901760
    %6523 = vmatmul.f32.gmra.mxu0 %v6522
    %v6524 = vpop.f32.mrf.mxu0
    %v6525 = vadd.f32 0.0, %v6524
    %v6526 = vand.u32 %v5084, 4294901760
    %v6527 = vsub.f32 %v5084, %v6526
    %v6528 = vand.u32 %v6527, 4294901760
    %v6529 = vsub.f32 %v6527, %v6528
    %v6530 = vand.u32 %v6529, 4294901760
    %6531 = vmatmul.f32.gmra.mxu0 %v6530
    %v6532 = vpop.f32.mrf.mxu0
    %v6533 = vadd.f32 0.0, %v6532
    %6534 = vdwg.mxu0
    %v6535 = vand.u32 %v6469, 4294901760
    %v6536 = vsub.f32 %v6469, %v6535
    %v6537 = vand.u32 %v6536, 4294901760
    %v6538 = vsub.f32 %v6536, %v6537
    %v6539 = vand.u32 %v6538, 4294901760
    %6540 = vmatpush.msra.mxu0 %v6539
    %v6541 = vand.u32 %v6468, 4294901760
    %v6542 = vsub.f32 %v6468, %v6541
    %v6543 = vand.u32 %v6542, 4294901760
    %v6544 = vsub.f32 %v6542, %v6543
    %v6545 = vand.u32 %v6544, 4294901760
    %6546 = vmatpush.msra.mxu0 %v6545
    %v6547 = vand.u32 %v6467, 4294901760
    %v6548 = vsub.f32 %v6467, %v6547
    %v6549 = vand.u32 %v6548, 4294901760
    %v6550 = vsub.f32 %v6548, %v6549
    %v6551 = vand.u32 %v6550, 4294901760
    %6552 = vmatpush.msra.mxu0 %v6551
    %v6553 = vand.u32 %v6466, 4294901760
    %v6554 = vsub.f32 %v6466, %v6553
    %v6555 = vand.u32 %v6554, 4294901760
    %v6556 = vsub.f32 %v6554, %v6555
    %v6557 = vand.u32 %v6556, 4294901760
    %6558 = vmatpush.msra.mxu0 %v6557
    %v6559 = vand.u32 %v6465, 4294901760
    %v6560 = vsub.f32 %v6465, %v6559
    %v6561 = vand.u32 %v6560, 4294901760
    %v6562 = vsub.f32 %v6560, %v6561
    %v6563 = vand.u32 %v6562, 4294901760
    %6564 = vmatpush.msra.mxu0 %v6563
    %v6565 = vand.u32 %v6464, 4294901760
    %v6566 = vsub.f32 %v6464, %v6565
    %v6567 = vand.u32 %v6566, 4294901760
    %v6568 = vsub.f32 %v6566, %v6567
    %v6569 = vand.u32 %v6568, 4294901760
    %6570 = vmatpush.msra.mxu0 %v6569
    %v6571 = vand.u32 %v6463, 4294901760
    %v6572 = vsub.f32 %v6463, %v6571
    %v6573 = vand.u32 %v6572, 4294901760
    %v6574 = vsub.f32 %v6572, %v6573
    %v6575 = vand.u32 %v6574, 4294901760
    %6576 = vmatpush.msra.mxu0 %v6575
    %v6577 = vand.u32 %v6462, 4294901760
    %v6578 = vsub.f32 %v6462, %v6577
    %v6579 = vand.u32 %v6578, 4294901760
    %v6580 = vsub.f32 %v6578, %v6579
    %v6581 = vand.u32 %v6580, 4294901760
    %6582 = vmatpush.msra.mxu0 %v6581
    %v6583 = vand.u32 %v6461, 4294901760
    %v6584 = vsub.f32 %v6461, %v6583
    %v6585 = vand.u32 %v6584, 4294901760
    %v6586 = vsub.f32 %v6584, %v6585
    %v6587 = vand.u32 %v6586, 4294901760
    %6588 = vmatpush.msra.mxu0 %v6587
    %v6589 = vand.u32 %v6460, 4294901760
    %v6590 = vsub.f32 %v6460, %v6589
    %v6591 = vand.u32 %v6590, 4294901760
    %v6592 = vsub.f32 %v6590, %v6591
    %v6593 = vand.u32 %v6592, 4294901760
    %6594 = vmatpush.msra.mxu0 %v6593
    %v6595 = vand.u32 %v6459, 4294901760
    %v6596 = vsub.f32 %v6459, %v6595
    %v6597 = vand.u32 %v6596, 4294901760
    %v6598 = vsub.f32 %v6596, %v6597
    %v6599 = vand.u32 %v6598, 4294901760
    %6600 = vmatpush.msra.mxu0 %v6599
    %v6601 = vand.u32 %v6458, 4294901760
    %v6602 = vsub.f32 %v6458, %v6601
    %v6603 = vand.u32 %v6602, 4294901760
    %v6604 = vsub.f32 %v6602, %v6603
    %v6605 = vand.u32 %v6604, 4294901760
    %6606 = vmatpush.msra.mxu0 %v6605
    %v6607 = vand.u32 %v6457, 4294901760
    %v6608 = vsub.f32 %v6457, %v6607
    %v6609 = vand.u32 %v6608, 4294901760
    %v6610 = vsub.f32 %v6608, %v6609
    %v6611 = vand.u32 %v6610, 4294901760
    %6612 = vmatpush.msra.mxu0 %v6611
    %v6613 = vand.u32 %v6456, 4294901760
    %v6614 = vsub.f32 %v6456, %v6613
    %v6615 = vand.u32 %v6614, 4294901760
    %v6616 = vsub.f32 %v6614, %v6615
    %v6617 = vand.u32 %v6616, 4294901760
    %6618 = vmatpush.msra.mxu0 %v6617
    %v6619 = vand.u32 %v6455, 4294901760
    %v6620 = vsub.f32 %v6455, %v6619
    %v6621 = vand.u32 %v6620, 4294901760
    %v6622 = vsub.f32 %v6620, %v6621
    %v6623 = vand.u32 %v6622, 4294901760
    %6624 = vmatpush.msra.mxu0 %v6623
    %v6625 = vand.u32 %v6454, 4294901760
    %v6626 = vsub.f32 %v6454, %v6625
    %v6627 = vand.u32 %v6626, 4294901760
    %v6628 = vsub.f32 %v6626, %v6627
    %v6629 = vand.u32 %v6628, 4294901760
    %6630 = vmatpush.msra.mxu0 %v6629
    %v6631 = vand.u32 %v5081, 4294901760
    %6632 = vmatmul.f32.gmra.mxu0 %v6631
    %v6633 = vpop.f32.mrf.mxu0
    %v6634 = vadd.f32 %v6509, %v6633
    %v6635 = vand.u32 %v5082, 4294901760
    %6636 = vmatmul.f32.gmra.mxu0 %v6635
    %v6637 = vpop.f32.mrf.mxu0
    %v6638 = vadd.f32 %v6517, %v6637
    %v6639 = vand.u32 %v5083, 4294901760
    %6640 = vmatmul.f32.gmra.mxu0 %v6639
    %v6641 = vpop.f32.mrf.mxu0
    %v6642 = vadd.f32 %v6525, %v6641
    %v6643 = vand.u32 %v5084, 4294901760
    %6644 = vmatmul.f32.gmra.mxu0 %v6643
    %v6645 = vpop.f32.mrf.mxu0
    %v6646 = vadd.f32 %v6533, %v6645
    %6647 = vdwg.mxu0
    %v6648 = vand.u32 %v6469, 4294901760
    %v6649 = vsub.f32 %v6469, %v6648
    %6650 = vmatpush.msra.mxu0 %v6649
    %v6651 = vand.u32 %v6468, 4294901760
    %v6652 = vsub.f32 %v6468, %v6651
    %6653 = vmatpush.msra.mxu0 %v6652
    %v6654 = vand.u32 %v6467, 4294901760
    %v6655 = vsub.f32 %v6467, %v6654
    %6656 = vmatpush.msra.mxu0 %v6655
    %v6657 = vand.u32 %v6466, 4294901760
    %v6658 = vsub.f32 %v6466, %v6657
    %6659 = vmatpush.msra.mxu0 %v6658
    %v6660 = vand.u32 %v6465, 4294901760
    %v6661 = vsub.f32 %v6465, %v6660
    %6662 = vmatpush.msra.mxu0 %v6661
    %v6663 = vand.u32 %v6464, 4294901760
    %v6664 = vsub.f32 %v6464, %v6663
    %6665 = vmatpush.msra.mxu0 %v6664
    %v6666 = vand.u32 %v6463, 4294901760
    %v6667 = vsub.f32 %v6463, %v6666
    %6668 = vmatpush.msra.mxu0 %v6667
    %v6669 = vand.u32 %v6462, 4294901760
    %v6670 = vsub.f32 %v6462, %v6669
    %6671 = vmatpush.msra.mxu0 %v6670
    %v6672 = vand.u32 %v6461, 4294901760
    %v6673 = vsub.f32 %v6461, %v6672
    %6674 = vmatpush.msra.mxu0 %v6673
    %v6675 = vand.u32 %v6460, 4294901760
    %v6676 = vsub.f32 %v6460, %v6675
    %6677 = vmatpush.msra.mxu0 %v6676
    %v6678 = vand.u32 %v6459, 4294901760
    %v6679 = vsub.f32 %v6459, %v6678
    %6680 = vmatpush.msra.mxu0 %v6679
    %v6681 = vand.u32 %v6458, 4294901760
    %v6682 = vsub.f32 %v6458, %v6681
    %6683 = vmatpush.msra.mxu0 %v6682
    %v6684 = vand.u32 %v6457, 4294901760
    %v6685 = vsub.f32 %v6457, %v6684
    %6686 = vmatpush.msra.mxu0 %v6685
    %v6687 = vand.u32 %v6456, 4294901760
    %v6688 = vsub.f32 %v6456, %v6687
    %6689 = vmatpush.msra.mxu0 %v6688
    %v6690 = vand.u32 %v6455, 4294901760
    %v6691 = vsub.f32 %v6455, %v6690
    %6692 = vmatpush.msra.mxu0 %v6691
    %v6693 = vand.u32 %v6454, 4294901760
    %v6694 = vsub.f32 %v6454, %v6693
    %6695 = vmatpush.msra.mxu0 %v6694
    %v6696 = vand.u32 %v5081, 4294901760
    %v6697 = vsub.f32 %v5081, %v6696
    %6698 = vmatmul.f32.gmra.mxu0 %v6697
    %v6699 = vpop.f32.mrf.mxu0
    %v6700 = vadd.f32 %v6634, %v6699
    %v6701 = vand.u32 %v5082, 4294901760
    %v6702 = vsub.f32 %v5082, %v6701
    %6703 = vmatmul.f32.gmra.mxu0 %v6702
    %v6704 = vpop.f32.mrf.mxu0
    %v6705 = vadd.f32 %v6638, %v6704
    %v6706 = vand.u32 %v5083, 4294901760
    %v6707 = vsub.f32 %v5083, %v6706
    %6708 = vmatmul.f32.gmra.mxu0 %v6707
    %v6709 = vpop.f32.mrf.mxu0
    %v6710 = vadd.f32 %v6642, %v6709
    %v6711 = vand.u32 %v5084, 4294901760
    %v6712 = vsub.f32 %v5084, %v6711
    %6713 = vmatmul.f32.gmra.mxu0 %v6712
    %v6714 = vpop.f32.mrf.mxu0
    %v6715 = vadd.f32 %v6646, %v6714
    %6716 = vdwg.mxu0
    %v6717 = vand.u32 %v6469, 4294901760
    %6718 = vmatpush.msra.mxu0 %v6717
    %v6719 = vand.u32 %v6468, 4294901760
    %6720 = vmatpush.msra.mxu0 %v6719
    %v6721 = vand.u32 %v6467, 4294901760
    %6722 = vmatpush.msra.mxu0 %v6721
    %v6723 = vand.u32 %v6466, 4294901760
    %6724 = vmatpush.msra.mxu0 %v6723
    %v6725 = vand.u32 %v6465, 4294901760
    %6726 = vmatpush.msra.mxu0 %v6725
    %v6727 = vand.u32 %v6464, 4294901760
    %6728 = vmatpush.msra.mxu0 %v6727
    %v6729 = vand.u32 %v6463, 4294901760
    %6730 = vmatpush.msra.mxu0 %v6729
    %v6731 = vand.u32 %v6462, 4294901760
    %6732 = vmatpush.msra.mxu0 %v6731
    %v6733 = vand.u32 %v6461, 4294901760
    %6734 = vmatpush.msra.mxu0 %v6733
    %v6735 = vand.u32 %v6460, 4294901760
    %6736 = vmatpush.msra.mxu0 %v6735
    %v6737 = vand.u32 %v6459, 4294901760
    %6738 = vmatpush.msra.mxu0 %v6737
    %v6739 = vand.u32 %v6458, 4294901760
    %6740 = vmatpush.msra.mxu0 %v6739
    %v6741 = vand.u32 %v6457, 4294901760
    %6742 = vmatpush.msra.mxu0 %v6741
    %v6743 = vand.u32 %v6456, 4294901760
    %6744 = vmatpush.msra.mxu0 %v6743
    %v6745 = vand.u32 %v6455, 4294901760
    %6746 = vmatpush.msra.mxu0 %v6745
    %v6747 = vand.u32 %v6454, 4294901760
    %6748 = vmatpush.msra.mxu0 %v6747
    %v6749 = vand.u32 %v5081, 4294901760
    %v6750 = vsub.f32 %v5081, %v6749
    %v6751 = vand.u32 %v6750, 4294901760
    %6752 = vmatmul.f32.gmra.mxu0 %v6751
    %v6753 = vpop.f32.mrf.mxu0
    %v6754 = vadd.f32 %v6700, %v6753
    %v6755 = vand.u32 %v5082, 4294901760
    %v6756 = vsub.f32 %v5082, %v6755
    %v6757 = vand.u32 %v6756, 4294901760
    %6758 = vmatmul.f32.gmra.mxu0 %v6757
    %v6759 = vpop.f32.mrf.mxu0
    %v6760 = vadd.f32 %v6705, %v6759
    %v6761 = vand.u32 %v5083, 4294901760
    %v6762 = vsub.f32 %v5083, %v6761
    %v6763 = vand.u32 %v6762, 4294901760
    %6764 = vmatmul.f32.gmra.mxu0 %v6763
    %v6765 = vpop.f32.mrf.mxu0
    %v6766 = vadd.f32 %v6710, %v6765
    %v6767 = vand.u32 %v5084, 4294901760
    %v6768 = vsub.f32 %v5084, %v6767
    %v6769 = vand.u32 %v6768, 4294901760
    %6770 = vmatmul.f32.gmra.mxu0 %v6769
    %v6771 = vpop.f32.mrf.mxu0
    %v6772 = vadd.f32 %v6715, %v6771
    %6773 = vdwg.mxu0
    %v6774 = vand.u32 %v6469, 4294901760
    %v6775 = vsub.f32 %v6469, %v6774
    %v6776 = vand.u32 %v6775, 4294901760
    %6777 = vmatpush.msra.mxu0 %v6776
    %v6778 = vand.u32 %v6468, 4294901760
    %v6779 = vsub.f32 %v6468, %v6778
    %v6780 = vand.u32 %v6779, 4294901760
    %6781 = vmatpush.msra.mxu0 %v6780
    %v6782 = vand.u32 %v6467, 4294901760
    %v6783 = vsub.f32 %v6467, %v6782
    %v6784 = vand.u32 %v6783, 4294901760
    %6785 = vmatpush.msra.mxu0 %v6784
    %v6786 = vand.u32 %v6466, 4294901760
    %v6787 = vsub.f32 %v6466, %v6786
    %v6788 = vand.u32 %v6787, 4294901760
    %6789 = vmatpush.msra.mxu0 %v6788
    %v6790 = vand.u32 %v6465, 4294901760
    %v6791 = vsub.f32 %v6465, %v6790
    %v6792 = vand.u32 %v6791, 4294901760
    %6793 = vmatpush.msra.mxu0 %v6792
    %v6794 = vand.u32 %v6464, 4294901760
    %v6795 = vsub.f32 %v6464, %v6794
    %v6796 = vand.u32 %v6795, 4294901760
    %6797 = vmatpush.msra.mxu0 %v6796
    %v6798 = vand.u32 %v6463, 4294901760
    %v6799 = vsub.f32 %v6463, %v6798
    %v6800 = vand.u32 %v6799, 4294901760
    %6801 = vmatpush.msra.mxu0 %v6800
    %v6802 = vand.u32 %v6462, 4294901760
    %v6803 = vsub.f32 %v6462, %v6802
    %v6804 = vand.u32 %v6803, 4294901760
    %6805 = vmatpush.msra.mxu0 %v6804
    %v6806 = vand.u32 %v6461, 4294901760
    %v6807 = vsub.f32 %v6461, %v6806
    %v6808 = vand.u32 %v6807, 4294901760
    %6809 = vmatpush.msra.mxu0 %v6808
    %v6810 = vand.u32 %v6460, 4294901760
    %v6811 = vsub.f32 %v6460, %v6810
    %v6812 = vand.u32 %v6811, 4294901760
    %6813 = vmatpush.msra.mxu0 %v6812
    %v6814 = vand.u32 %v6459, 4294901760
    %v6815 = vsub.f32 %v6459, %v6814
    %v6816 = vand.u32 %v6815, 4294901760
    %6817 = vmatpush.msra.mxu0 %v6816
    %v6818 = vand.u32 %v6458, 4294901760
    %v6819 = vsub.f32 %v6458, %v6818
    %v6820 = vand.u32 %v6819, 4294901760
    %6821 = vmatpush.msra.mxu0 %v6820
    %v6822 = vand.u32 %v6457, 4294901760
    %v6823 = vsub.f32 %v6457, %v6822
    %v6824 = vand.u32 %v6823, 4294901760
    %6825 = vmatpush.msra.mxu0 %v6824
    %v6826 = vand.u32 %v6456, 4294901760
    %v6827 = vsub.f32 %v6456, %v6826
    %v6828 = vand.u32 %v6827, 4294901760
    %6829 = vmatpush.msra.mxu0 %v6828
    %v6830 = vand.u32 %v6455, 4294901760
    %v6831 = vsub.f32 %v6455, %v6830
    %v6832 = vand.u32 %v6831, 4294901760
    %6833 = vmatpush.msra.mxu0 %v6832
    %v6834 = vand.u32 %v6454, 4294901760
    %v6835 = vsub.f32 %v6454, %v6834
    %v6836 = vand.u32 %v6835, 4294901760
    %6837 = vmatpush.msra.mxu0 %v6836
    %v6838 = vand.u32 %v5081, 4294901760
    %6839 = vmatmul.f32.gmra.mxu0 %v6838
    %v6840 = vpop.f32.mrf.mxu0
    %v6841 = vadd.f32 %v6754, %v6840
    %v6842 = vand.u32 %v5082, 4294901760
    %6843 = vmatmul.f32.gmra.mxu0 %v6842
    %v6844 = vpop.f32.mrf.mxu0
    %v6845 = vadd.f32 %v6760, %v6844
    %v6846 = vand.u32 %v5083, 4294901760
    %6847 = vmatmul.f32.gmra.mxu0 %v6846
    %v6848 = vpop.f32.mrf.mxu0
    %v6849 = vadd.f32 %v6766, %v6848
    %v6850 = vand.u32 %v5084, 4294901760
    %6851 = vmatmul.f32.gmra.mxu0 %v6850
    %v6852 = vpop.f32.mrf.mxu0
    %v6853 = vadd.f32 %v6772, %v6852
    %6854 = vdwg.mxu0
    %v6855 = vand.u32 %v6469, 4294901760
    %6856 = vmatpush.msra.mxu0 %v6855
    %v6857 = vand.u32 %v6468, 4294901760
    %6858 = vmatpush.msra.mxu0 %v6857
    %v6859 = vand.u32 %v6467, 4294901760
    %6860 = vmatpush.msra.mxu0 %v6859
    %v6861 = vand.u32 %v6466, 4294901760
    %6862 = vmatpush.msra.mxu0 %v6861
    %v6863 = vand.u32 %v6465, 4294901760
    %6864 = vmatpush.msra.mxu0 %v6863
    %v6865 = vand.u32 %v6464, 4294901760
    %6866 = vmatpush.msra.mxu0 %v6865
    %v6867 = vand.u32 %v6463, 4294901760
    %6868 = vmatpush.msra.mxu0 %v6867
    %v6869 = vand.u32 %v6462, 4294901760
    %6870 = vmatpush.msra.mxu0 %v6869
    %v6871 = vand.u32 %v6461, 4294901760
    %6872 = vmatpush.msra.mxu0 %v6871
    %v6873 = vand.u32 %v6460, 4294901760
    %6874 = vmatpush.msra.mxu0 %v6873
    %v6875 = vand.u32 %v6459, 4294901760
    %6876 = vmatpush.msra.mxu0 %v6875
    %v6877 = vand.u32 %v6458, 4294901760
    %6878 = vmatpush.msra.mxu0 %v6877
    %v6879 = vand.u32 %v6457, 4294901760
    %6880 = vmatpush.msra.mxu0 %v6879
    %v6881 = vand.u32 %v6456, 4294901760
    %6882 = vmatpush.msra.mxu0 %v6881
    %v6883 = vand.u32 %v6455, 4294901760
    %6884 = vmatpush.msra.mxu0 %v6883
    %v6885 = vand.u32 %v6454, 4294901760
    %6886 = vmatpush.msra.mxu0 %v6885
    %v6887 = vand.u32 %v5081, 4294901760
    %6888 = vmatmul.f32.gmra.mxu0 %v6887
    %v6889 = vpop.f32.mrf.mxu0
    %v6890 = vadd.f32 %v6841, %v6889
    %v6891 = vand.u32 %v5082, 4294901760
    %6892 = vmatmul.f32.gmra.mxu0 %v6891
    %v6893 = vpop.f32.mrf.mxu0
    %v6894 = vadd.f32 %v6845, %v6893
    %v6895 = vand.u32 %v5083, 4294901760
    %6896 = vmatmul.f32.gmra.mxu0 %v6895
    %v6897 = vpop.f32.mrf.mxu0
    %v6898 = vadd.f32 %v6849, %v6897
    %v6899 = vand.u32 %v5084, 4294901760
    %6900 = vmatmul.f32.gmra.mxu0 %v6899
    %v6901 = vpop.f32.mrf.mxu0
    %v6902 = vadd.f32 %v6853, %v6901
    %6903 = vdwg.mxu0
    %v6904 = vadd.f32 %v6445, %v6890
    %v6905 = vadd.f32 %v6446, %v6894
    %v6906 = vadd.f32 %v6447, %v6898
    %v6907 = vadd.f32 %v6448, %v6902
    %v6908 = vmax.f32 %v6449, %v6890
    %v6909 = vmax.f32 %v6450, %v6894
    %v6910 = vmax.f32 %v6451, %v6898
    %v6911 = vmax.f32 %v6452, %v6902
    %s6912 = scalar_lea.vmem %s5, 512
    %v6913 = vld [vmem:[%s6912] sm:$0xff]
    %v6914 = vld [vmem:[%s6912 + $0x8] sm:$0xff]
    %v6915 = vld [vmem:[%s6912 + $0x10] sm:$0xff]
    %v6916 = vld [vmem:[%s6912 + $0x18] sm:$0xff]
    %v6917 = vld [vmem:[%s6912 + $0x20] sm:$0xff]
    %v6918 = vld [vmem:[%s6912 + $0x28] sm:$0xff]
    %v6919 = vld [vmem:[%s6912 + $0x30] sm:$0xff]
    %v6920 = vld [vmem:[%s6912 + $0x38] sm:$0xff]
    %v6921 = vld [vmem:[%s6912 + $0x40] sm:$0xff]
    %v6922 = vld [vmem:[%s6912 + $0x48] sm:$0xff]
    %v6923 = vld [vmem:[%s6912 + $0x50] sm:$0xff]
    %v6924 = vld [vmem:[%s6912 + $0x58] sm:$0xff]
    %v6925 = vld [vmem:[%s6912 + $0x60] sm:$0xff]
    %v6926 = vld [vmem:[%s6912 + $0x68] sm:$0xff]
    %v6927 = vld [vmem:[%s6912 + $0x70] sm:$0xff]
    %v6928 = vld [vmem:[%s6912 + $0x78] sm:$0xff]
    %v6929 = vand.u32 %v6928, 4294901760
    %6930 = vmatpush.msra.mxu0 %v6929
    %v6931 = vand.u32 %v6927, 4294901760
    %6932 = vmatpush.msra.mxu0 %v6931
    %v6933 = vand.u32 %v6926, 4294901760
    %6934 = vmatpush.msra.mxu0 %v6933
    %v6935 = vand.u32 %v6925, 4294901760
    %6936 = vmatpush.msra.mxu0 %v6935
    %v6937 = vand.u32 %v6924, 4294901760
    %6938 = vmatpush.msra.mxu0 %v6937
    %v6939 = vand.u32 %v6923, 4294901760
    %6940 = vmatpush.msra.mxu0 %v6939
    %v6941 = vand.u32 %v6922, 4294901760
    %6942 = vmatpush.msra.mxu0 %v6941
    %v6943 = vand.u32 %v6921, 4294901760
    %6944 = vmatpush.msra.mxu0 %v6943
    %v6945 = vand.u32 %v6920, 4294901760
    %6946 = vmatpush.msra.mxu0 %v6945
    %v6947 = vand.u32 %v6919, 4294901760
    %6948 = vmatpush.msra.mxu0 %v6947
    %v6949 = vand.u32 %v6918, 4294901760
    %6950 = vmatpush.msra.mxu0 %v6949
    %v6951 = vand.u32 %v6917, 4294901760
    %6952 = vmatpush.msra.mxu0 %v6951
    %v6953 = vand.u32 %v6916, 4294901760
    %6954 = vmatpush.msra.mxu0 %v6953
    %v6955 = vand.u32 %v6915, 4294901760
    %6956 = vmatpush.msra.mxu0 %v6955
    %v6957 = vand.u32 %v6914, 4294901760
    %6958 = vmatpush.msra.mxu0 %v6957
    %v6959 = vand.u32 %v6913, 4294901760
    %6960 = vmatpush.msra.mxu0 %v6959
    %v6961 = vand.u32 %v5081, 4294901760
    %v6962 = vsub.f32 %v5081, %v6961
    %v6963 = vand.u32 %v6962, 4294901760
    %v6964 = vsub.f32 %v6962, %v6963
    %v6965 = vand.u32 %v6964, 4294901760
    %6966 = vmatmul.f32.gmra.mxu0 %v6965
    %v6967 = vpop.f32.mrf.mxu0
    %v6968 = vadd.f32 0.0, %v6967
    %v6969 = vand.u32 %v5082, 4294901760
    %v6970 = vsub.f32 %v5082, %v6969
    %v6971 = vand.u32 %v6970, 4294901760
    %v6972 = vsub.f32 %v6970, %v6971
    %v6973 = vand.u32 %v6972, 4294901760
    %6974 = vmatmul.f32.gmra.mxu0 %v6973
    %v6975 = vpop.f32.mrf.mxu0
    %v6976 = vadd.f32 0.0, %v6975
    %v6977 = vand.u32 %v5083, 4294901760
    %v6978 = vsub.f32 %v5083, %v6977
    %v6979 = vand.u32 %v6978, 4294901760
    %v6980 = vsub.f32 %v6978, %v6979
    %v6981 = vand.u32 %v6980, 4294901760
    %6982 = vmatmul.f32.gmra.mxu0 %v6981
    %v6983 = vpop.f32.mrf.mxu0
    %v6984 = vadd.f32 0.0, %v6983
    %v6985 = vand.u32 %v5084, 4294901760
    %v6986 = vsub.f32 %v5084, %v6985
    %v6987 = vand.u32 %v6986, 4294901760
    %v6988 = vsub.f32 %v6986, %v6987
    %v6989 = vand.u32 %v6988, 4294901760
    %6990 = vmatmul.f32.gmra.mxu0 %v6989
    %v6991 = vpop.f32.mrf.mxu0
    %v6992 = vadd.f32 0.0, %v6991
    %6993 = vdwg.mxu0
    %v6994 = vand.u32 %v6928, 4294901760
    %v6995 = vsub.f32 %v6928, %v6994
    %v6996 = vand.u32 %v6995, 4294901760
    %v6997 = vsub.f32 %v6995, %v6996
    %v6998 = vand.u32 %v6997, 4294901760
    %6999 = vmatpush.msra.mxu0 %v6998
    %v7000 = vand.u32 %v6927, 4294901760
    %v7001 = vsub.f32 %v6927, %v7000
    %v7002 = vand.u32 %v7001, 4294901760
    %v7003 = vsub.f32 %v7001, %v7002
    %v7004 = vand.u32 %v7003, 4294901760
    %7005 = vmatpush.msra.mxu0 %v7004
    %v7006 = vand.u32 %v6926, 4294901760
    %v7007 = vsub.f32 %v6926, %v7006
    %v7008 = vand.u32 %v7007, 4294901760
    %v7009 = vsub.f32 %v7007, %v7008
    %v7010 = vand.u32 %v7009, 4294901760
    %7011 = vmatpush.msra.mxu0 %v7010
    %v7012 = vand.u32 %v6925, 4294901760
    %v7013 = vsub.f32 %v6925, %v7012
    %v7014 = vand.u32 %v7013, 4294901760
    %v7015 = vsub.f32 %v7013, %v7014
    %v7016 = vand.u32 %v7015, 4294901760
    %7017 = vmatpush.msra.mxu0 %v7016
    %v7018 = vand.u32 %v6924, 4294901760
    %v7019 = vsub.f32 %v6924, %v7018
    %v7020 = vand.u32 %v7019, 4294901760
    %v7021 = vsub.f32 %v7019, %v7020
    %v7022 = vand.u32 %v7021, 4294901760
    %7023 = vmatpush.msra.mxu0 %v7022
    %v7024 = vand.u32 %v6923, 4294901760
    %v7025 = vsub.f32 %v6923, %v7024
    %v7026 = vand.u32 %v7025, 4294901760
    %v7027 = vsub.f32 %v7025, %v7026
    %v7028 = vand.u32 %v7027, 4294901760
    %7029 = vmatpush.msra.mxu0 %v7028
    %v7030 = vand.u32 %v6922, 4294901760
    %v7031 = vsub.f32 %v6922, %v7030
    %v7032 = vand.u32 %v7031, 4294901760
    %v7033 = vsub.f32 %v7031, %v7032
    %v7034 = vand.u32 %v7033, 4294901760
    %7035 = vmatpush.msra.mxu0 %v7034
    %v7036 = vand.u32 %v6921, 4294901760
    %v7037 = vsub.f32 %v6921, %v7036
    %v7038 = vand.u32 %v7037, 4294901760
    %v7039 = vsub.f32 %v7037, %v7038
    %v7040 = vand.u32 %v7039, 4294901760
    %7041 = vmatpush.msra.mxu0 %v7040
    %v7042 = vand.u32 %v6920, 4294901760
    %v7043 = vsub.f32 %v6920, %v7042
    %v7044 = vand.u32 %v7043, 4294901760
    %v7045 = vsub.f32 %v7043, %v7044
    %v7046 = vand.u32 %v7045, 4294901760
    %7047 = vmatpush.msra.mxu0 %v7046
    %v7048 = vand.u32 %v6919, 4294901760
    %v7049 = vsub.f32 %v6919, %v7048
    %v7050 = vand.u32 %v7049, 4294901760
    %v7051 = vsub.f32 %v7049, %v7050
    %v7052 = vand.u32 %v7051, 4294901760
    %7053 = vmatpush.msra.mxu0 %v7052
    %v7054 = vand.u32 %v6918, 4294901760
    %v7055 = vsub.f32 %v6918, %v7054
    %v7056 = vand.u32 %v7055, 4294901760
    %v7057 = vsub.f32 %v7055, %v7056
    %v7058 = vand.u32 %v7057, 4294901760
    %7059 = vmatpush.msra.mxu0 %v7058
    %v7060 = vand.u32 %v6917, 4294901760
    %v7061 = vsub.f32 %v6917, %v7060
    %v7062 = vand.u32 %v7061, 4294901760
    %v7063 = vsub.f32 %v7061, %v7062
    %v7064 = vand.u32 %v7063, 4294901760
    %7065 = vmatpush.msra.mxu0 %v7064
    %v7066 = vand.u32 %v6916, 4294901760
    %v7067 = vsub.f32 %v6916, %v7066
    %v7068 = vand.u32 %v7067, 4294901760
    %v7069 = vsub.f32 %v7067, %v7068
    %v7070 = vand.u32 %v7069, 4294901760
    %7071 = vmatpush.msra.mxu0 %v7070
    %v7072 = vand.u32 %v6915, 4294901760
    %v7073 = vsub.f32 %v6915, %v7072
    %v7074 = vand.u32 %v7073, 4294901760
    %v7075 = vsub.f32 %v7073, %v7074
    %v7076 = vand.u32 %v7075, 4294901760
    %7077 = vmatpush.msra.mxu0 %v7076
    %v7078 = vand.u32 %v6914, 4294901760
    %v7079 = vsub.f32 %v6914, %v7078
    %v7080 = vand.u32 %v7079, 4294901760
    %v7081 = vsub.f32 %v7079, %v7080
    %v7082 = vand.u32 %v7081, 4294901760
    %7083 = vmatpush.msra.mxu0 %v7082
    %v7084 = vand.u32 %v6913, 4294901760
    %v7085 = vsub.f32 %v6913, %v7084
    %v7086 = vand.u32 %v7085, 4294901760
    %v7087 = vsub.f32 %v7085, %v7086
    %v7088 = vand.u32 %v7087, 4294901760
    %7089 = vmatpush.msra.mxu0 %v7088
    %v7090 = vand.u32 %v5081, 4294901760
    %7091 = vmatmul.f32.gmra.mxu0 %v7090
    %v7092 = vpop.f32.mrf.mxu0
    %v7093 = vadd.f32 %v6968, %v7092
    %v7094 = vand.u32 %v5082, 4294901760
    %7095 = vmatmul.f32.gmra.mxu0 %v7094
    %v7096 = vpop.f32.mrf.mxu0
    %v7097 = vadd.f32 %v6976, %v7096
    %v7098 = vand.u32 %v5083, 4294901760
    %7099 = vmatmul.f32.gmra.mxu0 %v7098
    %v7100 = vpop.f32.mrf.mxu0
    %v7101 = vadd.f32 %v6984, %v7100
    %v7102 = vand.u32 %v5084, 4294901760
    %7103 = vmatmul.f32.gmra.mxu0 %v7102
    %v7104 = vpop.f32.mrf.mxu0
    %v7105 = vadd.f32 %v6992, %v7104
    %7106 = vdwg.mxu0
    %v7107 = vand.u32 %v6928, 4294901760
    %v7108 = vsub.f32 %v6928, %v7107
    %7109 = vmatpush.msra.mxu0 %v7108
    %v7110 = vand.u32 %v6927, 4294901760
    %v7111 = vsub.f32 %v6927, %v7110
    %7112 = vmatpush.msra.mxu0 %v7111
    %v7113 = vand.u32 %v6926, 4294901760
    %v7114 = vsub.f32 %v6926, %v7113
    %7115 = vmatpush.msra.mxu0 %v7114
    %v7116 = vand.u32 %v6925, 4294901760
    %v7117 = vsub.f32 %v6925, %v7116
    %7118 = vmatpush.msra.mxu0 %v7117
    %v7119 = vand.u32 %v6924, 4294901760
    %v7120 = vsub.f32 %v6924, %v7119
    %7121 = vmatpush.msra.mxu0 %v7120
    %v7122 = vand.u32 %v6923, 4294901760
    %v7123 = vsub.f32 %v6923, %v7122
    %7124 = vmatpush.msra.mxu0 %v7123
    %v7125 = vand.u32 %v6922, 4294901760
    %v7126 = vsub.f32 %v6922, %v7125
    %7127 = vmatpush.msra.mxu0 %v7126
    %v7128 = vand.u32 %v6921, 4294901760
    %v7129 = vsub.f32 %v6921, %v7128
    %7130 = vmatpush.msra.mxu0 %v7129
    %v7131 = vand.u32 %v6920, 4294901760
    %v7132 = vsub.f32 %v6920, %v7131
    %7133 = vmatpush.msra.mxu0 %v7132
    %v7134 = vand.u32 %v6919, 4294901760
    %v7135 = vsub.f32 %v6919, %v7134
    %7136 = vmatpush.msra.mxu0 %v7135
    %v7137 = vand.u32 %v6918, 4294901760
    %v7138 = vsub.f32 %v6918, %v7137
    %7139 = vmatpush.msra.mxu0 %v7138
    %v7140 = vand.u32 %v6917, 4294901760
    %v7141 = vsub.f32 %v6917, %v7140
    %7142 = vmatpush.msra.mxu0 %v7141
    %v7143 = vand.u32 %v6916, 4294901760
    %v7144 = vsub.f32 %v6916, %v7143
    %7145 = vmatpush.msra.mxu0 %v7144
    %v7146 = vand.u32 %v6915, 4294901760
    %v7147 = vsub.f32 %v6915, %v7146
    %7148 = vmatpush.msra.mxu0 %v7147
    %v7149 = vand.u32 %v6914, 4294901760
    %v7150 = vsub.f32 %v6914, %v7149
    %7151 = vmatpush.msra.mxu0 %v7150
    %v7152 = vand.u32 %v6913, 4294901760
    %v7153 = vsub.f32 %v6913, %v7152
    %7154 = vmatpush.msra.mxu0 %v7153
    %v7155 = vand.u32 %v5081, 4294901760
    %v7156 = vsub.f32 %v5081, %v7155
    %7157 = vmatmul.f32.gmra.mxu0 %v7156
    %v7158 = vpop.f32.mrf.mxu0
    %v7159 = vadd.f32 %v7093, %v7158
    %v7160 = vand.u32 %v5082, 4294901760
    %v7161 = vsub.f32 %v5082, %v7160
    %7162 = vmatmul.f32.gmra.mxu0 %v7161
    %v7163 = vpop.f32.mrf.mxu0
    %v7164 = vadd.f32 %v7097, %v7163
    %v7165 = vand.u32 %v5083, 4294901760
    %v7166 = vsub.f32 %v5083, %v7165
    %7167 = vmatmul.f32.gmra.mxu0 %v7166
    %v7168 = vpop.f32.mrf.mxu0
    %v7169 = vadd.f32 %v7101, %v7168
    %v7170 = vand.u32 %v5084, 4294901760
    %v7171 = vsub.f32 %v5084, %v7170
    %7172 = vmatmul.f32.gmra.mxu0 %v7171
    %v7173 = vpop.f32.mrf.mxu0
    %v7174 = vadd.f32 %v7105, %v7173
    %7175 = vdwg.mxu0
    %v7176 = vand.u32 %v6928, 4294901760
    %7177 = vmatpush.msra.mxu0 %v7176
    %v7178 = vand.u32 %v6927, 4294901760
    %7179 = vmatpush.msra.mxu0 %v7178
    %v7180 = vand.u32 %v6926, 4294901760
    %7181 = vmatpush.msra.mxu0 %v7180
    %v7182 = vand.u32 %v6925, 4294901760
    %7183 = vmatpush.msra.mxu0 %v7182
    %v7184 = vand.u32 %v6924, 4294901760
    %7185 = vmatpush.msra.mxu0 %v7184
    %v7186 = vand.u32 %v6923, 4294901760
    %7187 = vmatpush.msra.mxu0 %v7186
    %v7188 = vand.u32 %v6922, 4294901760
    %7189 = vmatpush.msra.mxu0 %v7188
    %v7190 = vand.u32 %v6921, 4294901760
    %7191 = vmatpush.msra.mxu0 %v7190
    %v7192 = vand.u32 %v6920, 4294901760
    %7193 = vmatpush.msra.mxu0 %v7192
    %v7194 = vand.u32 %v6919, 4294901760
    %7195 = vmatpush.msra.mxu0 %v7194
    %v7196 = vand.u32 %v6918, 4294901760
    %7197 = vmatpush.msra.mxu0 %v7196
    %v7198 = vand.u32 %v6917, 4294901760
    %7199 = vmatpush.msra.mxu0 %v7198
    %v7200 = vand.u32 %v6916, 4294901760
    %7201 = vmatpush.msra.mxu0 %v7200
    %v7202 = vand.u32 %v6915, 4294901760
    %7203 = vmatpush.msra.mxu0 %v7202
    %v7204 = vand.u32 %v6914, 4294901760
    %7205 = vmatpush.msra.mxu0 %v7204
    %v7206 = vand.u32 %v6913, 4294901760
    %7207 = vmatpush.msra.mxu0 %v7206
    %v7208 = vand.u32 %v5081, 4294901760
    %v7209 = vsub.f32 %v5081, %v7208
    %v7210 = vand.u32 %v7209, 4294901760
    %7211 = vmatmul.f32.gmra.mxu0 %v7210
    %v7212 = vpop.f32.mrf.mxu0
    %v7213 = vadd.f32 %v7159, %v7212
    %v7214 = vand.u32 %v5082, 4294901760
    %v7215 = vsub.f32 %v5082, %v7214
    %v7216 = vand.u32 %v7215, 4294901760
    %7217 = vmatmul.f32.gmra.mxu0 %v7216
    %v7218 = vpop.f32.mrf.mxu0
    %v7219 = vadd.f32 %v7164, %v7218
    %v7220 = vand.u32 %v5083, 4294901760
    %v7221 = vsub.f32 %v5083, %v7220
    %v7222 = vand.u32 %v7221, 4294901760
    %7223 = vmatmul.f32.gmra.mxu0 %v7222
    %v7224 = vpop.f32.mrf.mxu0
    %v7225 = vadd.f32 %v7169, %v7224
    %v7226 = vand.u32 %v5084, 4294901760
    %v7227 = vsub.f32 %v5084, %v7226
    %v7228 = vand.u32 %v7227, 4294901760
    %7229 = vmatmul.f32.gmra.mxu0 %v7228
    %v7230 = vpop.f32.mrf.mxu0
    %v7231 = vadd.f32 %v7174, %v7230
    %7232 = vdwg.mxu0
    %v7233 = vand.u32 %v6928, 4294901760
    %v7234 = vsub.f32 %v6928, %v7233
    %v7235 = vand.u32 %v7234, 4294901760
    %7236 = vmatpush.msra.mxu0 %v7235
    %v7237 = vand.u32 %v6927, 4294901760
    %v7238 = vsub.f32 %v6927, %v7237
    %v7239 = vand.u32 %v7238, 4294901760
    %7240 = vmatpush.msra.mxu0 %v7239
    %v7241 = vand.u32 %v6926, 4294901760
    %v7242 = vsub.f32 %v6926, %v7241
    %v7243 = vand.u32 %v7242, 4294901760
    %7244 = vmatpush.msra.mxu0 %v7243
    %v7245 = vand.u32 %v6925, 4294901760
    %v7246 = vsub.f32 %v6925, %v7245
    %v7247 = vand.u32 %v7246, 4294901760
    %7248 = vmatpush.msra.mxu0 %v7247
    %v7249 = vand.u32 %v6924, 4294901760
    %v7250 = vsub.f32 %v6924, %v7249
    %v7251 = vand.u32 %v7250, 4294901760
    %7252 = vmatpush.msra.mxu0 %v7251
    %v7253 = vand.u32 %v6923, 4294901760
    %v7254 = vsub.f32 %v6923, %v7253
    %v7255 = vand.u32 %v7254, 4294901760
    %7256 = vmatpush.msra.mxu0 %v7255
    %v7257 = vand.u32 %v6922, 4294901760
    %v7258 = vsub.f32 %v6922, %v7257
    %v7259 = vand.u32 %v7258, 4294901760
    %7260 = vmatpush.msra.mxu0 %v7259
    %v7261 = vand.u32 %v6921, 4294901760
    %v7262 = vsub.f32 %v6921, %v7261
    %v7263 = vand.u32 %v7262, 4294901760
    %7264 = vmatpush.msra.mxu0 %v7263
    %v7265 = vand.u32 %v6920, 4294901760
    %v7266 = vsub.f32 %v6920, %v7265
    %v7267 = vand.u32 %v7266, 4294901760
    %7268 = vmatpush.msra.mxu0 %v7267
    %v7269 = vand.u32 %v6919, 4294901760
    %v7270 = vsub.f32 %v6919, %v7269
    %v7271 = vand.u32 %v7270, 4294901760
    %7272 = vmatpush.msra.mxu0 %v7271
    %v7273 = vand.u32 %v6918, 4294901760
    %v7274 = vsub.f32 %v6918, %v7273
    %v7275 = vand.u32 %v7274, 4294901760
    %7276 = vmatpush.msra.mxu0 %v7275
    %v7277 = vand.u32 %v6917, 4294901760
    %v7278 = vsub.f32 %v6917, %v7277
    %v7279 = vand.u32 %v7278, 4294901760
    %7280 = vmatpush.msra.mxu0 %v7279
    %v7281 = vand.u32 %v6916, 4294901760
    %v7282 = vsub.f32 %v6916, %v7281
    %v7283 = vand.u32 %v7282, 4294901760
    %7284 = vmatpush.msra.mxu0 %v7283
    %v7285 = vand.u32 %v6915, 4294901760
    %v7286 = vsub.f32 %v6915, %v7285
    %v7287 = vand.u32 %v7286, 4294901760
    %7288 = vmatpush.msra.mxu0 %v7287
    %v7289 = vand.u32 %v6914, 4294901760
    %v7290 = vsub.f32 %v6914, %v7289
    %v7291 = vand.u32 %v7290, 4294901760
    %7292 = vmatpush.msra.mxu0 %v7291
    %v7293 = vand.u32 %v6913, 4294901760
    %v7294 = vsub.f32 %v6913, %v7293
    %v7295 = vand.u32 %v7294, 4294901760
    %7296 = vmatpush.msra.mxu0 %v7295
    %v7297 = vand.u32 %v5081, 4294901760
    %7298 = vmatmul.f32.gmra.mxu0 %v7297
    %v7299 = vpop.f32.mrf.mxu0
    %v7300 = vadd.f32 %v7213, %v7299
    %v7301 = vand.u32 %v5082, 4294901760
    %7302 = vmatmul.f32.gmra.mxu0 %v7301
    %v7303 = vpop.f32.mrf.mxu0
    %v7304 = vadd.f32 %v7219, %v7303
    %v7305 = vand.u32 %v5083, 4294901760
    %7306 = vmatmul.f32.gmra.mxu0 %v7305
    %v7307 = vpop.f32.mrf.mxu0
    %v7308 = vadd.f32 %v7225, %v7307
    %v7309 = vand.u32 %v5084, 4294901760
    %7310 = vmatmul.f32.gmra.mxu0 %v7309
    %v7311 = vpop.f32.mrf.mxu0
    %v7312 = vadd.f32 %v7231, %v7311
    %7313 = vdwg.mxu0
    %v7314 = vand.u32 %v6928, 4294901760
    %7315 = vmatpush.msra.mxu0 %v7314
    %v7316 = vand.u32 %v6927, 4294901760
    %7317 = vmatpush.msra.mxu0 %v7316
    %v7318 = vand.u32 %v6926, 4294901760
    %7319 = vmatpush.msra.mxu0 %v7318
    %v7320 = vand.u32 %v6925, 4294901760
    %7321 = vmatpush.msra.mxu0 %v7320
    %v7322 = vand.u32 %v6924, 4294901760
    %7323 = vmatpush.msra.mxu0 %v7322
    %v7324 = vand.u32 %v6923, 4294901760
    %7325 = vmatpush.msra.mxu0 %v7324
    %v7326 = vand.u32 %v6922, 4294901760
    %7327 = vmatpush.msra.mxu0 %v7326
    %v7328 = vand.u32 %v6921, 4294901760
    %7329 = vmatpush.msra.mxu0 %v7328
    %v7330 = vand.u32 %v6920, 4294901760
    %7331 = vmatpush.msra.mxu0 %v7330
    %v7332 = vand.u32 %v6919, 4294901760
    %7333 = vmatpush.msra.mxu0 %v7332
    %v7334 = vand.u32 %v6918, 4294901760
    %7335 = vmatpush.msra.mxu0 %v7334
    %v7336 = vand.u32 %v6917, 4294901760
    %7337 = vmatpush.msra.mxu0 %v7336
    %v7338 = vand.u32 %v6916, 4294901760
    %7339 = vmatpush.msra.mxu0 %v7338
    %v7340 = vand.u32 %v6915, 4294901760
    %7341 = vmatpush.msra.mxu0 %v7340
    %v7342 = vand.u32 %v6914, 4294901760
    %7343 = vmatpush.msra.mxu0 %v7342
    %v7344 = vand.u32 %v6913, 4294901760
    %7345 = vmatpush.msra.mxu0 %v7344
    %v7346 = vand.u32 %v5081, 4294901760
    %7347 = vmatmul.f32.gmra.mxu0 %v7346
    %v7348 = vpop.f32.mrf.mxu0
    %v7349 = vadd.f32 %v7300, %v7348
    %v7350 = vand.u32 %v5082, 4294901760
    %7351 = vmatmul.f32.gmra.mxu0 %v7350
    %v7352 = vpop.f32.mrf.mxu0
    %v7353 = vadd.f32 %v7304, %v7352
    %v7354 = vand.u32 %v5083, 4294901760
    %7355 = vmatmul.f32.gmra.mxu0 %v7354
    %v7356 = vpop.f32.mrf.mxu0
    %v7357 = vadd.f32 %v7308, %v7356
    %v7358 = vand.u32 %v5084, 4294901760
    %7359 = vmatmul.f32.gmra.mxu0 %v7358
    %v7360 = vpop.f32.mrf.mxu0
    %v7361 = vadd.f32 %v7312, %v7360
    %7362 = vdwg.mxu0
    %v7363 = vadd.f32 %v6904, %v7349
    %v7364 = vadd.f32 %v6905, %v7353
    %v7365 = vadd.f32 %v6906, %v7357
    %v7366 = vadd.f32 %v6907, %v7361
    %v7367 = vmax.f32 %v6908, %v7349
    %v7368 = vmax.f32 %v6909, %v7353
    %v7369 = vmax.f32 %v6910, %v7357
    %v7370 = vmax.f32 %v6911, %v7361
    %s7371 = scalar_lea.vmem %s5, 640
    %v7372 = vld [vmem:[%s7371] sm:$0xff]
    %v7373 = vld [vmem:[%s7371 + $0x8] sm:$0xff]
    %v7374 = vld [vmem:[%s7371 + $0x10] sm:$0xff]
    %v7375 = vld [vmem:[%s7371 + $0x18] sm:$0xff]
    %v7376 = vld [vmem:[%s7371 + $0x20] sm:$0xff]
    %v7377 = vld [vmem:[%s7371 + $0x28] sm:$0xff]
    %v7378 = vld [vmem:[%s7371 + $0x30] sm:$0xff]
    %v7379 = vld [vmem:[%s7371 + $0x38] sm:$0xff]
    %v7380 = vld [vmem:[%s7371 + $0x40] sm:$0xff]
    %v7381 = vld [vmem:[%s7371 + $0x48] sm:$0xff]
    %v7382 = vld [vmem:[%s7371 + $0x50] sm:$0xff]
    %v7383 = vld [vmem:[%s7371 + $0x58] sm:$0xff]
    %v7384 = vld [vmem:[%s7371 + $0x60] sm:$0xff]
    %v7385 = vld [vmem:[%s7371 + $0x68] sm:$0xff]
    %v7386 = vld [vmem:[%s7371 + $0x70] sm:$0xff]
    %v7387 = vld [vmem:[%s7371 + $0x78] sm:$0xff]
    %v7388 = vand.u32 %v7387, 4294901760
    %7389 = vmatpush.msra.mxu0 %v7388
    %v7390 = vand.u32 %v7386, 4294901760
    %7391 = vmatpush.msra.mxu0 %v7390
    %v7392 = vand.u32 %v7385, 4294901760
    %7393 = vmatpush.msra.mxu0 %v7392
    %v7394 = vand.u32 %v7384, 4294901760
    %7395 = vmatpush.msra.mxu0 %v7394
    %v7396 = vand.u32 %v7383, 4294901760
    %7397 = vmatpush.msra.mxu0 %v7396
    %v7398 = vand.u32 %v7382, 4294901760
    %7399 = vmatpush.msra.mxu0 %v7398
    %v7400 = vand.u32 %v7381, 4294901760
    %7401 = vmatpush.msra.mxu0 %v7400
    %v7402 = vand.u32 %v7380, 4294901760
    %7403 = vmatpush.msra.mxu0 %v7402
    %v7404 = vand.u32 %v7379, 4294901760
    %7405 = vmatpush.msra.mxu0 %v7404
    %v7406 = vand.u32 %v7378, 4294901760
    %7407 = vmatpush.msra.mxu0 %v7406
    %v7408 = vand.u32 %v7377, 4294901760
    %7409 = vmatpush.msra.mxu0 %v7408
    %v7410 = vand.u32 %v7376, 4294901760
    %7411 = vmatpush.msra.mxu0 %v7410
    %v7412 = vand.u32 %v7375, 4294901760
    %7413 = vmatpush.msra.mxu0 %v7412
    %v7414 = vand.u32 %v7374, 4294901760
    %7415 = vmatpush.msra.mxu0 %v7414
    %v7416 = vand.u32 %v7373, 4294901760
    %7417 = vmatpush.msra.mxu0 %v7416
    %v7418 = vand.u32 %v7372, 4294901760
    %7419 = vmatpush.msra.mxu0 %v7418
    %v7420 = vand.u32 %v5081, 4294901760
    %v7421 = vsub.f32 %v5081, %v7420
    %v7422 = vand.u32 %v7421, 4294901760
    %v7423 = vsub.f32 %v7421, %v7422
    %v7424 = vand.u32 %v7423, 4294901760
    %7425 = vmatmul.f32.gmra.mxu0 %v7424
    %v7426 = vpop.f32.mrf.mxu0
    %v7427 = vadd.f32 0.0, %v7426
    %v7428 = vand.u32 %v5082, 4294901760
    %v7429 = vsub.f32 %v5082, %v7428
    %v7430 = vand.u32 %v7429, 4294901760
    %v7431 = vsub.f32 %v7429, %v7430
    %v7432 = vand.u32 %v7431, 4294901760
    %7433 = vmatmul.f32.gmra.mxu0 %v7432
    %v7434 = vpop.f32.mrf.mxu0
    %v7435 = vadd.f32 0.0, %v7434
    %v7436 = vand.u32 %v5083, 4294901760
    %v7437 = vsub.f32 %v5083, %v7436
    %v7438 = vand.u32 %v7437, 4294901760
    %v7439 = vsub.f32 %v7437, %v7438
    %v7440 = vand.u32 %v7439, 4294901760
    %7441 = vmatmul.f32.gmra.mxu0 %v7440
    %v7442 = vpop.f32.mrf.mxu0
    %v7443 = vadd.f32 0.0, %v7442
    %v7444 = vand.u32 %v5084, 4294901760
    %v7445 = vsub.f32 %v5084, %v7444
    %v7446 = vand.u32 %v7445, 4294901760
    %v7447 = vsub.f32 %v7445, %v7446
    %v7448 = vand.u32 %v7447, 4294901760
    %7449 = vmatmul.f32.gmra.mxu0 %v7448
    %v7450 = vpop.f32.mrf.mxu0
    %v7451 = vadd.f32 0.0, %v7450
    %7452 = vdwg.mxu0
    %v7453 = vand.u32 %v7387, 4294901760
    %v7454 = vsub.f32 %v7387, %v7453
    %v7455 = vand.u32 %v7454, 4294901760
    %v7456 = vsub.f32 %v7454, %v7455
    %v7457 = vand.u32 %v7456, 4294901760
    %7458 = vmatpush.msra.mxu0 %v7457
    %v7459 = vand.u32 %v7386, 4294901760
    %v7460 = vsub.f32 %v7386, %v7459
    %v7461 = vand.u32 %v7460, 4294901760
    %v7462 = vsub.f32 %v7460, %v7461
    %v7463 = vand.u32 %v7462, 4294901760
    %7464 = vmatpush.msra.mxu0 %v7463
    %v7465 = vand.u32 %v7385, 4294901760
    %v7466 = vsub.f32 %v7385, %v7465
    %v7467 = vand.u32 %v7466, 4294901760
    %v7468 = vsub.f32 %v7466, %v7467
    %v7469 = vand.u32 %v7468, 4294901760
    %7470 = vmatpush.msra.mxu0 %v7469
    %v7471 = vand.u32 %v7384, 4294901760
    %v7472 = vsub.f32 %v7384, %v7471
    %v7473 = vand.u32 %v7472, 4294901760
    %v7474 = vsub.f32 %v7472, %v7473
    %v7475 = vand.u32 %v7474, 4294901760
    %7476 = vmatpush.msra.mxu0 %v7475
    %v7477 = vand.u32 %v7383, 4294901760
    %v7478 = vsub.f32 %v7383, %v7477
    %v7479 = vand.u32 %v7478, 4294901760
    %v7480 = vsub.f32 %v7478, %v7479
    %v7481 = vand.u32 %v7480, 4294901760
    %7482 = vmatpush.msra.mxu0 %v7481
    %v7483 = vand.u32 %v7382, 4294901760
    %v7484 = vsub.f32 %v7382, %v7483
    %v7485 = vand.u32 %v7484, 4294901760
    %v7486 = vsub.f32 %v7484, %v7485
    %v7487 = vand.u32 %v7486, 4294901760
    %7488 = vmatpush.msra.mxu0 %v7487
    %v7489 = vand.u32 %v7381, 4294901760
    %v7490 = vsub.f32 %v7381, %v7489
    %v7491 = vand.u32 %v7490, 4294901760
    %v7492 = vsub.f32 %v7490, %v7491
    %v7493 = vand.u32 %v7492, 4294901760
    %7494 = vmatpush.msra.mxu0 %v7493
    %v7495 = vand.u32 %v7380, 4294901760
    %v7496 = vsub.f32 %v7380, %v7495
    %v7497 = vand.u32 %v7496, 4294901760
    %v7498 = vsub.f32 %v7496, %v7497
    %v7499 = vand.u32 %v7498, 4294901760
    %7500 = vmatpush.msra.mxu0 %v7499
    %v7501 = vand.u32 %v7379, 4294901760
    %v7502 = vsub.f32 %v7379, %v7501
    %v7503 = vand.u32 %v7502, 4294901760
    %v7504 = vsub.f32 %v7502, %v7503
    %v7505 = vand.u32 %v7504, 4294901760
    %7506 = vmatpush.msra.mxu0 %v7505
    %v7507 = vand.u32 %v7378, 4294901760
    %v7508 = vsub.f32 %v7378, %v7507
    %v7509 = vand.u32 %v7508, 4294901760
    %v7510 = vsub.f32 %v7508, %v7509
    %v7511 = vand.u32 %v7510, 4294901760
    %7512 = vmatpush.msra.mxu0 %v7511
    %v7513 = vand.u32 %v7377, 4294901760
    %v7514 = vsub.f32 %v7377, %v7513
    %v7515 = vand.u32 %v7514, 4294901760
    %v7516 = vsub.f32 %v7514, %v7515
    %v7517 = vand.u32 %v7516, 4294901760
    %7518 = vmatpush.msra.mxu0 %v7517
    %v7519 = vand.u32 %v7376, 4294901760
    %v7520 = vsub.f32 %v7376, %v7519
    %v7521 = vand.u32 %v7520, 4294901760
    %v7522 = vsub.f32 %v7520, %v7521
    %v7523 = vand.u32 %v7522, 4294901760
    %7524 = vmatpush.msra.mxu0 %v7523
    %v7525 = vand.u32 %v7375, 4294901760
    %v7526 = vsub.f32 %v7375, %v7525
    %v7527 = vand.u32 %v7526, 4294901760
    %v7528 = vsub.f32 %v7526, %v7527
    %v7529 = vand.u32 %v7528, 4294901760
    %7530 = vmatpush.msra.mxu0 %v7529
    %v7531 = vand.u32 %v7374, 4294901760
    %v7532 = vsub.f32 %v7374, %v7531
    %v7533 = vand.u32 %v7532, 4294901760
    %v7534 = vsub.f32 %v7532, %v7533
    %v7535 = vand.u32 %v7534, 4294901760
    %7536 = vmatpush.msra.mxu0 %v7535
    %v7537 = vand.u32 %v7373, 4294901760
    %v7538 = vsub.f32 %v7373, %v7537
    %v7539 = vand.u32 %v7538, 4294901760
    %v7540 = vsub.f32 %v7538, %v7539
    %v7541 = vand.u32 %v7540, 4294901760
    %7542 = vmatpush.msra.mxu0 %v7541
    %v7543 = vand.u32 %v7372, 4294901760
    %v7544 = vsub.f32 %v7372, %v7543
    %v7545 = vand.u32 %v7544, 4294901760
    %v7546 = vsub.f32 %v7544, %v7545
    %v7547 = vand.u32 %v7546, 4294901760
    %7548 = vmatpush.msra.mxu0 %v7547
    %v7549 = vand.u32 %v5081, 4294901760
    %7550 = vmatmul.f32.gmra.mxu0 %v7549
    %v7551 = vpop.f32.mrf.mxu0
    %v7552 = vadd.f32 %v7427, %v7551
    %v7553 = vand.u32 %v5082, 4294901760
    %7554 = vmatmul.f32.gmra.mxu0 %v7553
    %v7555 = vpop.f32.mrf.mxu0
    %v7556 = vadd.f32 %v7435, %v7555
    %v7557 = vand.u32 %v5083, 4294901760
    %7558 = vmatmul.f32.gmra.mxu0 %v7557
    %v7559 = vpop.f32.mrf.mxu0
    %v7560 = vadd.f32 %v7443, %v7559
    %v7561 = vand.u32 %v5084, 4294901760
    %7562 = vmatmul.f32.gmra.mxu0 %v7561
    %v7563 = vpop.f32.mrf.mxu0
    %v7564 = vadd.f32 %v7451, %v7563
    %7565 = vdwg.mxu0
    %v7566 = vand.u32 %v7387, 4294901760
    %v7567 = vsub.f32 %v7387, %v7566
    %7568 = vmatpush.msra.mxu0 %v7567
    %v7569 = vand.u32 %v7386, 4294901760
    %v7570 = vsub.f32 %v7386, %v7569
    %7571 = vmatpush.msra.mxu0 %v7570
    %v7572 = vand.u32 %v7385, 4294901760
    %v7573 = vsub.f32 %v7385, %v7572
    %7574 = vmatpush.msra.mxu0 %v7573
    %v7575 = vand.u32 %v7384, 4294901760
    %v7576 = vsub.f32 %v7384, %v7575
    %7577 = vmatpush.msra.mxu0 %v7576
    %v7578 = vand.u32 %v7383, 4294901760
    %v7579 = vsub.f32 %v7383, %v7578
    %7580 = vmatpush.msra.mxu0 %v7579
    %v7581 = vand.u32 %v7382, 4294901760
    %v7582 = vsub.f32 %v7382, %v7581
    %7583 = vmatpush.msra.mxu0 %v7582
    %v7584 = vand.u32 %v7381, 4294901760
    %v7585 = vsub.f32 %v7381, %v7584
    %7586 = vmatpush.msra.mxu0 %v7585
    %v7587 = vand.u32 %v7380, 4294901760
    %v7588 = vsub.f32 %v7380, %v7587
    %7589 = vmatpush.msra.mxu0 %v7588
    %v7590 = vand.u32 %v7379, 4294901760
    %v7591 = vsub.f32 %v7379, %v7590
    %7592 = vmatpush.msra.mxu0 %v7591
    %v7593 = vand.u32 %v7378, 4294901760
    %v7594 = vsub.f32 %v7378, %v7593
    %7595 = vmatpush.msra.mxu0 %v7594
    %v7596 = vand.u32 %v7377, 4294901760
    %v7597 = vsub.f32 %v7377, %v7596
    %7598 = vmatpush.msra.mxu0 %v7597
    %v7599 = vand.u32 %v7376, 4294901760
    %v7600 = vsub.f32 %v7376, %v7599
    %7601 = vmatpush.msra.mxu0 %v7600
    %v7602 = vand.u32 %v7375, 4294901760
    %v7603 = vsub.f32 %v7375, %v7602
    %7604 = vmatpush.msra.mxu0 %v7603
    %v7605 = vand.u32 %v7374, 4294901760
    %v7606 = vsub.f32 %v7374, %v7605
    %7607 = vmatpush.msra.mxu0 %v7606
    %v7608 = vand.u32 %v7373, 4294901760
    %v7609 = vsub.f32 %v7373, %v7608
    %7610 = vmatpush.msra.mxu0 %v7609
    %v7611 = vand.u32 %v7372, 4294901760
    %v7612 = vsub.f32 %v7372, %v7611
    %7613 = vmatpush.msra.mxu0 %v7612
    %v7614 = vand.u32 %v5081, 4294901760
    %v7615 = vsub.f32 %v5081, %v7614
    %7616 = vmatmul.f32.gmra.mxu0 %v7615
    %v7617 = vpop.f32.mrf.mxu0
    %v7618 = vadd.f32 %v7552, %v7617
    %v7619 = vand.u32 %v5082, 4294901760
    %v7620 = vsub.f32 %v5082, %v7619
    %7621 = vmatmul.f32.gmra.mxu0 %v7620
    %v7622 = vpop.f32.mrf.mxu0
    %v7623 = vadd.f32 %v7556, %v7622
    %v7624 = vand.u32 %v5083, 4294901760
    %v7625 = vsub.f32 %v5083, %v7624
    %7626 = vmatmul.f32.gmra.mxu0 %v7625
    %v7627 = vpop.f32.mrf.mxu0
    %v7628 = vadd.f32 %v7560, %v7627
    %v7629 = vand.u32 %v5084, 4294901760
    %v7630 = vsub.f32 %v5084, %v7629
    %7631 = vmatmul.f32.gmra.mxu0 %v7630
    %v7632 = vpop.f32.mrf.mxu0
    %v7633 = vadd.f32 %v7564, %v7632
    %7634 = vdwg.mxu0
    %v7635 = vand.u32 %v7387, 4294901760
    %7636 = vmatpush.msra.mxu0 %v7635
    %v7637 = vand.u32 %v7386, 4294901760
    %7638 = vmatpush.msra.mxu0 %v7637
    %v7639 = vand.u32 %v7385, 4294901760
    %7640 = vmatpush.msra.mxu0 %v7639
    %v7641 = vand.u32 %v7384, 4294901760
    %7642 = vmatpush.msra.mxu0 %v7641
    %v7643 = vand.u32 %v7383, 4294901760
    %7644 = vmatpush.msra.mxu0 %v7643
    %v7645 = vand.u32 %v7382, 4294901760
    %7646 = vmatpush.msra.mxu0 %v7645
    %v7647 = vand.u32 %v7381, 4294901760
    %7648 = vmatpush.msra.mxu0 %v7647
    %v7649 = vand.u32 %v7380, 4294901760
    %7650 = vmatpush.msra.mxu0 %v7649
    %v7651 = vand.u32 %v7379, 4294901760
    %7652 = vmatpush.msra.mxu0 %v7651
    %v7653 = vand.u32 %v7378, 4294901760
    %7654 = vmatpush.msra.mxu0 %v7653
    %v7655 = vand.u32 %v7377, 4294901760
    %7656 = vmatpush.msra.mxu0 %v7655
    %v7657 = vand.u32 %v7376, 4294901760
    %7658 = vmatpush.msra.mxu0 %v7657
    %v7659 = vand.u32 %v7375, 4294901760
    %7660 = vmatpush.msra.mxu0 %v7659
    %v7661 = vand.u32 %v7374, 4294901760
    %7662 = vmatpush.msra.mxu0 %v7661
    %v7663 = vand.u32 %v7373, 4294901760
    %7664 = vmatpush.msra.mxu0 %v7663
    %v7665 = vand.u32 %v7372, 4294901760
    %7666 = vmatpush.msra.mxu0 %v7665
    %v7667 = vand.u32 %v5081, 4294901760
    %v7668 = vsub.f32 %v5081, %v7667
    %v7669 = vand.u32 %v7668, 4294901760
    %7670 = vmatmul.f32.gmra.mxu0 %v7669
    %v7671 = vpop.f32.mrf.mxu0
    %v7672 = vadd.f32 %v7618, %v7671
    %v7673 = vand.u32 %v5082, 4294901760
    %v7674 = vsub.f32 %v5082, %v7673
    %v7675 = vand.u32 %v7674, 4294901760
    %7676 = vmatmul.f32.gmra.mxu0 %v7675
    %v7677 = vpop.f32.mrf.mxu0
    %v7678 = vadd.f32 %v7623, %v7677
    %v7679 = vand.u32 %v5083, 4294901760
    %v7680 = vsub.f32 %v5083, %v7679
    %v7681 = vand.u32 %v7680, 4294901760
    %7682 = vmatmul.f32.gmra.mxu0 %v7681
    %v7683 = vpop.f32.mrf.mxu0
    %v7684 = vadd.f32 %v7628, %v7683
    %v7685 = vand.u32 %v5084, 4294901760
    %v7686 = vsub.f32 %v5084, %v7685
    %v7687 = vand.u32 %v7686, 4294901760
    %7688 = vmatmul.f32.gmra.mxu0 %v7687
    %v7689 = vpop.f32.mrf.mxu0
    %v7690 = vadd.f32 %v7633, %v7689
    %7691 = vdwg.mxu0
    %v7692 = vand.u32 %v7387, 4294901760
    %v7693 = vsub.f32 %v7387, %v7692
    %v7694 = vand.u32 %v7693, 4294901760
    %7695 = vmatpush.msra.mxu0 %v7694
    %v7696 = vand.u32 %v7386, 4294901760
    %v7697 = vsub.f32 %v7386, %v7696
    %v7698 = vand.u32 %v7697, 4294901760
    %7699 = vmatpush.msra.mxu0 %v7698
    %v7700 = vand.u32 %v7385, 4294901760
    %v7701 = vsub.f32 %v7385, %v7700
    %v7702 = vand.u32 %v7701, 4294901760
    %7703 = vmatpush.msra.mxu0 %v7702
    %v7704 = vand.u32 %v7384, 4294901760
    %v7705 = vsub.f32 %v7384, %v7704
    %v7706 = vand.u32 %v7705, 4294901760
    %7707 = vmatpush.msra.mxu0 %v7706
    %v7708 = vand.u32 %v7383, 4294901760
    %v7709 = vsub.f32 %v7383, %v7708
    %v7710 = vand.u32 %v7709, 4294901760
    %7711 = vmatpush.msra.mxu0 %v7710
    %v7712 = vand.u32 %v7382, 4294901760
    %v7713 = vsub.f32 %v7382, %v7712
    %v7714 = vand.u32 %v7713, 4294901760
    %7715 = vmatpush.msra.mxu0 %v7714
    %v7716 = vand.u32 %v7381, 4294901760
    %v7717 = vsub.f32 %v7381, %v7716
    %v7718 = vand.u32 %v7717, 4294901760
    %7719 = vmatpush.msra.mxu0 %v7718
    %v7720 = vand.u32 %v7380, 4294901760
    %v7721 = vsub.f32 %v7380, %v7720
    %v7722 = vand.u32 %v7721, 4294901760
    %7723 = vmatpush.msra.mxu0 %v7722
    %v7724 = vand.u32 %v7379, 4294901760
    %v7725 = vsub.f32 %v7379, %v7724
    %v7726 = vand.u32 %v7725, 4294901760
    %7727 = vmatpush.msra.mxu0 %v7726
    %v7728 = vand.u32 %v7378, 4294901760
    %v7729 = vsub.f32 %v7378, %v7728
    %v7730 = vand.u32 %v7729, 4294901760
    %7731 = vmatpush.msra.mxu0 %v7730
    %v7732 = vand.u32 %v7377, 4294901760
    %v7733 = vsub.f32 %v7377, %v7732
    %v7734 = vand.u32 %v7733, 4294901760
    %7735 = vmatpush.msra.mxu0 %v7734
    %v7736 = vand.u32 %v7376, 4294901760
    %v7737 = vsub.f32 %v7376, %v7736
    %v7738 = vand.u32 %v7737, 4294901760
    %7739 = vmatpush.msra.mxu0 %v7738
    %v7740 = vand.u32 %v7375, 4294901760
    %v7741 = vsub.f32 %v7375, %v7740
    %v7742 = vand.u32 %v7741, 4294901760
    %7743 = vmatpush.msra.mxu0 %v7742
    %v7744 = vand.u32 %v7374, 4294901760
    %v7745 = vsub.f32 %v7374, %v7744
    %v7746 = vand.u32 %v7745, 4294901760
    %7747 = vmatpush.msra.mxu0 %v7746
    %v7748 = vand.u32 %v7373, 4294901760
    %v7749 = vsub.f32 %v7373, %v7748
    %v7750 = vand.u32 %v7749, 4294901760
    %7751 = vmatpush.msra.mxu0 %v7750
    %v7752 = vand.u32 %v7372, 4294901760
    %v7753 = vsub.f32 %v7372, %v7752
    %v7754 = vand.u32 %v7753, 4294901760
    %7755 = vmatpush.msra.mxu0 %v7754
    %v7756 = vand.u32 %v5081, 4294901760
    %7757 = vmatmul.f32.gmra.mxu0 %v7756
    %v7758 = vpop.f32.mrf.mxu0
    %v7759 = vadd.f32 %v7672, %v7758
    %v7760 = vand.u32 %v5082, 4294901760
    %7761 = vmatmul.f32.gmra.mxu0 %v7760
    %v7762 = vpop.f32.mrf.mxu0
    %v7763 = vadd.f32 %v7678, %v7762
    %v7764 = vand.u32 %v5083, 4294901760
    %7765 = vmatmul.f32.gmra.mxu0 %v7764
    %v7766 = vpop.f32.mrf.mxu0
    %v7767 = vadd.f32 %v7684, %v7766
    %v7768 = vand.u32 %v5084, 4294901760
    %7769 = vmatmul.f32.gmra.mxu0 %v7768
    %v7770 = vpop.f32.mrf.mxu0
    %v7771 = vadd.f32 %v7690, %v7770
    %7772 = vdwg.mxu0
    %v7773 = vand.u32 %v7387, 4294901760
    %7774 = vmatpush.msra.mxu0 %v7773
    %v7775 = vand.u32 %v7386, 4294901760
    %7776 = vmatpush.msra.mxu0 %v7775
    %v7777 = vand.u32 %v7385, 4294901760
    %7778 = vmatpush.msra.mxu0 %v7777
    %v7779 = vand.u32 %v7384, 4294901760
    %7780 = vmatpush.msra.mxu0 %v7779
    %v7781 = vand.u32 %v7383, 4294901760
    %7782 = vmatpush.msra.mxu0 %v7781
    %v7783 = vand.u32 %v7382, 4294901760
    %7784 = vmatpush.msra.mxu0 %v7783
    %v7785 = vand.u32 %v7381, 4294901760
    %7786 = vmatpush.msra.mxu0 %v7785
    %v7787 = vand.u32 %v7380, 4294901760
    %7788 = vmatpush.msra.mxu0 %v7787
    %v7789 = vand.u32 %v7379, 4294901760
    %7790 = vmatpush.msra.mxu0 %v7789
    %v7791 = vand.u32 %v7378, 4294901760
    %7792 = vmatpush.msra.mxu0 %v7791
    %v7793 = vand.u32 %v7377, 4294901760
    %7794 = vmatpush.msra.mxu0 %v7793
    %v7795 = vand.u32 %v7376, 4294901760
    %7796 = vmatpush.msra.mxu0 %v7795
    %v7797 = vand.u32 %v7375, 4294901760
    %7798 = vmatpush.msra.mxu0 %v7797
    %v7799 = vand.u32 %v7374, 4294901760
    %7800 = vmatpush.msra.mxu0 %v7799
    %v7801 = vand.u32 %v7373, 4294901760
    %7802 = vmatpush.msra.mxu0 %v7801
    %v7803 = vand.u32 %v7372, 4294901760
    %7804 = vmatpush.msra.mxu0 %v7803
    %v7805 = vand.u32 %v5081, 4294901760
    %7806 = vmatmul.f32.gmra.mxu0 %v7805
    %v7807 = vpop.f32.mrf.mxu0
    %v7808 = vadd.f32 %v7759, %v7807
    %v7809 = vand.u32 %v5082, 4294901760
    %7810 = vmatmul.f32.gmra.mxu0 %v7809
    %v7811 = vpop.f32.mrf.mxu0
    %v7812 = vadd.f32 %v7763, %v7811
    %v7813 = vand.u32 %v5083, 4294901760
    %7814 = vmatmul.f32.gmra.mxu0 %v7813
    %v7815 = vpop.f32.mrf.mxu0
    %v7816 = vadd.f32 %v7767, %v7815
    %v7817 = vand.u32 %v5084, 4294901760
    %7818 = vmatmul.f32.gmra.mxu0 %v7817
    %v7819 = vpop.f32.mrf.mxu0
    %v7820 = vadd.f32 %v7771, %v7819
    %7821 = vdwg.mxu0
    %v7822 = vadd.f32 %v7363, %v7808
    %v7823 = vadd.f32 %v7364, %v7812
    %v7824 = vadd.f32 %v7365, %v7816
    %v7825 = vadd.f32 %v7366, %v7820
    %v7826 = vmax.f32 %v7367, %v7808
    %v7827 = vmax.f32 %v7368, %v7812
    %v7828 = vmax.f32 %v7369, %v7816
    %v7829 = vmax.f32 %v7370, %v7820
    %s7830 = scalar_lea.vmem %s5, 768
    %v7831 = vld [vmem:[%s7830] sm:$0xff]
    %v7832 = vld [vmem:[%s7830 + $0x8] sm:$0xff]
    %v7833 = vld [vmem:[%s7830 + $0x10] sm:$0xff]
    %v7834 = vld [vmem:[%s7830 + $0x18] sm:$0xff]
    %v7835 = vld [vmem:[%s7830 + $0x20] sm:$0xff]
    %v7836 = vld [vmem:[%s7830 + $0x28] sm:$0xff]
    %v7837 = vld [vmem:[%s7830 + $0x30] sm:$0xff]
    %v7838 = vld [vmem:[%s7830 + $0x38] sm:$0xff]
    %v7839 = vld [vmem:[%s7830 + $0x40] sm:$0xff]
    %v7840 = vld [vmem:[%s7830 + $0x48] sm:$0xff]
    %v7841 = vld [vmem:[%s7830 + $0x50] sm:$0xff]
    %v7842 = vld [vmem:[%s7830 + $0x58] sm:$0xff]
    %v7843 = vld [vmem:[%s7830 + $0x60] sm:$0xff]
    %v7844 = vld [vmem:[%s7830 + $0x68] sm:$0xff]
    %v7845 = vld [vmem:[%s7830 + $0x70] sm:$0xff]
    %v7846 = vld [vmem:[%s7830 + $0x78] sm:$0xff]
    %v7847 = vand.u32 %v7846, 4294901760
    %7848 = vmatpush.msra.mxu0 %v7847
    %v7849 = vand.u32 %v7845, 4294901760
    %7850 = vmatpush.msra.mxu0 %v7849
    %v7851 = vand.u32 %v7844, 4294901760
    %7852 = vmatpush.msra.mxu0 %v7851
    %v7853 = vand.u32 %v7843, 4294901760
    %7854 = vmatpush.msra.mxu0 %v7853
    %v7855 = vand.u32 %v7842, 4294901760
    %7856 = vmatpush.msra.mxu0 %v7855
    %v7857 = vand.u32 %v7841, 4294901760
    %7858 = vmatpush.msra.mxu0 %v7857
    %v7859 = vand.u32 %v7840, 4294901760
    %7860 = vmatpush.msra.mxu0 %v7859
    %v7861 = vand.u32 %v7839, 4294901760
    %7862 = vmatpush.msra.mxu0 %v7861
    %v7863 = vand.u32 %v7838, 4294901760
    %7864 = vmatpush.msra.mxu0 %v7863
    %v7865 = vand.u32 %v7837, 4294901760
    %7866 = vmatpush.msra.mxu0 %v7865
    %v7867 = vand.u32 %v7836, 4294901760
    %7868 = vmatpush.msra.mxu0 %v7867
    %v7869 = vand.u32 %v7835, 4294901760
    %7870 = vmatpush.msra.mxu0 %v7869
    %v7871 = vand.u32 %v7834, 4294901760
    %7872 = vmatpush.msra.mxu0 %v7871
    %v7873 = vand.u32 %v7833, 4294901760
    %7874 = vmatpush.msra.mxu0 %v7873
    %v7875 = vand.u32 %v7832, 4294901760
    %7876 = vmatpush.msra.mxu0 %v7875
    %v7877 = vand.u32 %v7831, 4294901760
    %7878 = vmatpush.msra.mxu0 %v7877
    %v7879 = vand.u32 %v5081, 4294901760
    %v7880 = vsub.f32 %v5081, %v7879
    %v7881 = vand.u32 %v7880, 4294901760
    %v7882 = vsub.f32 %v7880, %v7881
    %v7883 = vand.u32 %v7882, 4294901760
    %7884 = vmatmul.f32.gmra.mxu0 %v7883
    %v7885 = vpop.f32.mrf.mxu0
    %v7886 = vadd.f32 0.0, %v7885
    %v7887 = vand.u32 %v5082, 4294901760
    %v7888 = vsub.f32 %v5082, %v7887
    %v7889 = vand.u32 %v7888, 4294901760
    %v7890 = vsub.f32 %v7888, %v7889
    %v7891 = vand.u32 %v7890, 4294901760
    %7892 = vmatmul.f32.gmra.mxu0 %v7891
    %v7893 = vpop.f32.mrf.mxu0
    %v7894 = vadd.f32 0.0, %v7893
    %v7895 = vand.u32 %v5083, 4294901760
    %v7896 = vsub.f32 %v5083, %v7895
    %v7897 = vand.u32 %v7896, 4294901760
    %v7898 = vsub.f32 %v7896, %v7897
    %v7899 = vand.u32 %v7898, 4294901760
    %7900 = vmatmul.f32.gmra.mxu0 %v7899
    %v7901 = vpop.f32.mrf.mxu0
    %v7902 = vadd.f32 0.0, %v7901
    %v7903 = vand.u32 %v5084, 4294901760
    %v7904 = vsub.f32 %v5084, %v7903
    %v7905 = vand.u32 %v7904, 4294901760
    %v7906 = vsub.f32 %v7904, %v7905
    %v7907 = vand.u32 %v7906, 4294901760
    %7908 = vmatmul.f32.gmra.mxu0 %v7907
    %v7909 = vpop.f32.mrf.mxu0
    %v7910 = vadd.f32 0.0, %v7909
    %7911 = vdwg.mxu0
    %v7912 = vand.u32 %v7846, 4294901760
    %v7913 = vsub.f32 %v7846, %v7912
    %v7914 = vand.u32 %v7913, 4294901760
    %v7915 = vsub.f32 %v7913, %v7914
    %v7916 = vand.u32 %v7915, 4294901760
    %7917 = vmatpush.msra.mxu0 %v7916
    %v7918 = vand.u32 %v7845, 4294901760
    %v7919 = vsub.f32 %v7845, %v7918
    %v7920 = vand.u32 %v7919, 4294901760
    %v7921 = vsub.f32 %v7919, %v7920
    %v7922 = vand.u32 %v7921, 4294901760
    %7923 = vmatpush.msra.mxu0 %v7922
    %v7924 = vand.u32 %v7844, 4294901760
    %v7925 = vsub.f32 %v7844, %v7924
    %v7926 = vand.u32 %v7925, 4294901760
    %v7927 = vsub.f32 %v7925, %v7926
    %v7928 = vand.u32 %v7927, 4294901760
    %7929 = vmatpush.msra.mxu0 %v7928
    %v7930 = vand.u32 %v7843, 4294901760
    %v7931 = vsub.f32 %v7843, %v7930
    %v7932 = vand.u32 %v7931, 4294901760
    %v7933 = vsub.f32 %v7931, %v7932
    %v7934 = vand.u32 %v7933, 4294901760
    %7935 = vmatpush.msra.mxu0 %v7934
    %v7936 = vand.u32 %v7842, 4294901760
    %v7937 = vsub.f32 %v7842, %v7936
    %v7938 = vand.u32 %v7937, 4294901760
    %v7939 = vsub.f32 %v7937, %v7938
    %v7940 = vand.u32 %v7939, 4294901760
    %7941 = vmatpush.msra.mxu0 %v7940
    %v7942 = vand.u32 %v7841, 4294901760
    %v7943 = vsub.f32 %v7841, %v7942
    %v7944 = vand.u32 %v7943, 4294901760
    %v7945 = vsub.f32 %v7943, %v7944
    %v7946 = vand.u32 %v7945, 4294901760
    %7947 = vmatpush.msra.mxu0 %v7946
    %v7948 = vand.u32 %v7840, 4294901760
    %v7949 = vsub.f32 %v7840, %v7948
    %v7950 = vand.u32 %v7949, 4294901760
    %v7951 = vsub.f32 %v7949, %v7950
    %v7952 = vand.u32 %v7951, 4294901760
    %7953 = vmatpush.msra.mxu0 %v7952
    %v7954 = vand.u32 %v7839, 4294901760
    %v7955 = vsub.f32 %v7839, %v7954
    %v7956 = vand.u32 %v7955, 4294901760
    %v7957 = vsub.f32 %v7955, %v7956
    %v7958 = vand.u32 %v7957, 4294901760
    %7959 = vmatpush.msra.mxu0 %v7958
    %v7960 = vand.u32 %v7838, 4294901760
    %v7961 = vsub.f32 %v7838, %v7960
    %v7962 = vand.u32 %v7961, 4294901760
    %v7963 = vsub.f32 %v7961, %v7962
    %v7964 = vand.u32 %v7963, 4294901760
    %7965 = vmatpush.msra.mxu0 %v7964
    %v7966 = vand.u32 %v7837, 4294901760
    %v7967 = vsub.f32 %v7837, %v7966
    %v7968 = vand.u32 %v7967, 4294901760
    %v7969 = vsub.f32 %v7967, %v7968
    %v7970 = vand.u32 %v7969, 4294901760
    %7971 = vmatpush.msra.mxu0 %v7970
    %v7972 = vand.u32 %v7836, 4294901760
    %v7973 = vsub.f32 %v7836, %v7972
    %v7974 = vand.u32 %v7973, 4294901760
    %v7975 = vsub.f32 %v7973, %v7974
    %v7976 = vand.u32 %v7975, 4294901760
    %7977 = vmatpush.msra.mxu0 %v7976
    %v7978 = vand.u32 %v7835, 4294901760
    %v7979 = vsub.f32 %v7835, %v7978
    %v7980 = vand.u32 %v7979, 4294901760
    %v7981 = vsub.f32 %v7979, %v7980
    %v7982 = vand.u32 %v7981, 4294901760
    %7983 = vmatpush.msra.mxu0 %v7982
    %v7984 = vand.u32 %v7834, 4294901760
    %v7985 = vsub.f32 %v7834, %v7984
    %v7986 = vand.u32 %v7985, 4294901760
    %v7987 = vsub.f32 %v7985, %v7986
    %v7988 = vand.u32 %v7987, 4294901760
    %7989 = vmatpush.msra.mxu0 %v7988
    %v7990 = vand.u32 %v7833, 4294901760
    %v7991 = vsub.f32 %v7833, %v7990
    %v7992 = vand.u32 %v7991, 4294901760
    %v7993 = vsub.f32 %v7991, %v7992
    %v7994 = vand.u32 %v7993, 4294901760
    %7995 = vmatpush.msra.mxu0 %v7994
    %v7996 = vand.u32 %v7832, 4294901760
    %v7997 = vsub.f32 %v7832, %v7996
    %v7998 = vand.u32 %v7997, 4294901760
    %v7999 = vsub.f32 %v7997, %v7998
    %v8000 = vand.u32 %v7999, 4294901760
    %8001 = vmatpush.msra.mxu0 %v8000
    %v8002 = vand.u32 %v7831, 4294901760
    %v8003 = vsub.f32 %v7831, %v8002
    %v8004 = vand.u32 %v8003, 4294901760
    %v8005 = vsub.f32 %v8003, %v8004
    %v8006 = vand.u32 %v8005, 4294901760
    %8007 = vmatpush.msra.mxu0 %v8006
    %v8008 = vand.u32 %v5081, 4294901760
    %8009 = vmatmul.f32.gmra.mxu0 %v8008
    %v8010 = vpop.f32.mrf.mxu0
    %v8011 = vadd.f32 %v7886, %v8010
    %v8012 = vand.u32 %v5082, 4294901760
    %8013 = vmatmul.f32.gmra.mxu0 %v8012
    %v8014 = vpop.f32.mrf.mxu0
    %v8015 = vadd.f32 %v7894, %v8014
    %v8016 = vand.u32 %v5083, 4294901760
    %8017 = vmatmul.f32.gmra.mxu0 %v8016
    %v8018 = vpop.f32.mrf.mxu0
    %v8019 = vadd.f32 %v7902, %v8018
    %v8020 = vand.u32 %v5084, 4294901760
    %8021 = vmatmul.f32.gmra.mxu0 %v8020
    %v8022 = vpop.f32.mrf.mxu0
    %v8023 = vadd.f32 %v7910, %v8022
    %8024 = vdwg.mxu0
    %v8025 = vand.u32 %v7846, 4294901760
    %v8026 = vsub.f32 %v7846, %v8025
    %8027 = vmatpush.msra.mxu0 %v8026
    %v8028 = vand.u32 %v7845, 4294901760
    %v8029 = vsub.f32 %v7845, %v8028
    %8030 = vmatpush.msra.mxu0 %v8029
    %v8031 = vand.u32 %v7844, 4294901760
    %v8032 = vsub.f32 %v7844, %v8031
    %8033 = vmatpush.msra.mxu0 %v8032
    %v8034 = vand.u32 %v7843, 4294901760
    %v8035 = vsub.f32 %v7843, %v8034
    %8036 = vmatpush.msra.mxu0 %v8035
    %v8037 = vand.u32 %v7842, 4294901760
    %v8038 = vsub.f32 %v7842, %v8037
    %8039 = vmatpush.msra.mxu0 %v8038
    %v8040 = vand.u32 %v7841, 4294901760
    %v8041 = vsub.f32 %v7841, %v8040
    %8042 = vmatpush.msra.mxu0 %v8041
    %v8043 = vand.u32 %v7840, 4294901760
    %v8044 = vsub.f32 %v7840, %v8043
    %8045 = vmatpush.msra.mxu0 %v8044
    %v8046 = vand.u32 %v7839, 4294901760
    %v8047 = vsub.f32 %v7839, %v8046
    %8048 = vmatpush.msra.mxu0 %v8047
    %v8049 = vand.u32 %v7838, 4294901760
    %v8050 = vsub.f32 %v7838, %v8049
    %8051 = vmatpush.msra.mxu0 %v8050
    %v8052 = vand.u32 %v7837, 4294901760
    %v8053 = vsub.f32 %v7837, %v8052
    %8054 = vmatpush.msra.mxu0 %v8053
    %v8055 = vand.u32 %v7836, 4294901760
    %v8056 = vsub.f32 %v7836, %v8055
    %8057 = vmatpush.msra.mxu0 %v8056
    %v8058 = vand.u32 %v7835, 4294901760
    %v8059 = vsub.f32 %v7835, %v8058
    %8060 = vmatpush.msra.mxu0 %v8059
    %v8061 = vand.u32 %v7834, 4294901760
    %v8062 = vsub.f32 %v7834, %v8061
    %8063 = vmatpush.msra.mxu0 %v8062
    %v8064 = vand.u32 %v7833, 4294901760
    %v8065 = vsub.f32 %v7833, %v8064
    %8066 = vmatpush.msra.mxu0 %v8065
    %v8067 = vand.u32 %v7832, 4294901760
    %v8068 = vsub.f32 %v7832, %v8067
    %8069 = vmatpush.msra.mxu0 %v8068
    %v8070 = vand.u32 %v7831, 4294901760
    %v8071 = vsub.f32 %v7831, %v8070
    %8072 = vmatpush.msra.mxu0 %v8071
    %v8073 = vand.u32 %v5081, 4294901760
    %v8074 = vsub.f32 %v5081, %v8073
    %8075 = vmatmul.f32.gmra.mxu0 %v8074
    %v8076 = vpop.f32.mrf.mxu0
    %v8077 = vadd.f32 %v8011, %v8076
    %v8078 = vand.u32 %v5082, 4294901760
    %v8079 = vsub.f32 %v5082, %v8078
    %8080 = vmatmul.f32.gmra.mxu0 %v8079
    %v8081 = vpop.f32.mrf.mxu0
    %v8082 = vadd.f32 %v8015, %v8081
    %v8083 = vand.u32 %v5083, 4294901760
    %v8084 = vsub.f32 %v5083, %v8083
    %8085 = vmatmul.f32.gmra.mxu0 %v8084
    %v8086 = vpop.f32.mrf.mxu0
    %v8087 = vadd.f32 %v8019, %v8086
    %v8088 = vand.u32 %v5084, 4294901760
    %v8089 = vsub.f32 %v5084, %v8088
    %8090 = vmatmul.f32.gmra.mxu0 %v8089
    %v8091 = vpop.f32.mrf.mxu0
    %v8092 = vadd.f32 %v8023, %v8091
    %8093 = vdwg.mxu0
    %v8094 = vand.u32 %v7846, 4294901760
    %8095 = vmatpush.msra.mxu0 %v8094
    %v8096 = vand.u32 %v7845, 4294901760
    %8097 = vmatpush.msra.mxu0 %v8096
    %v8098 = vand.u32 %v7844, 4294901760
    %8099 = vmatpush.msra.mxu0 %v8098
    %v8100 = vand.u32 %v7843, 4294901760
    %8101 = vmatpush.msra.mxu0 %v8100
    %v8102 = vand.u32 %v7842, 4294901760
    %8103 = vmatpush.msra.mxu0 %v8102
    %v8104 = vand.u32 %v7841, 4294901760
    %8105 = vmatpush.msra.mxu0 %v8104
    %v8106 = vand.u32 %v7840, 4294901760
    %8107 = vmatpush.msra.mxu0 %v8106
    %v8108 = vand.u32 %v7839, 4294901760
    %8109 = vmatpush.msra.mxu0 %v8108
    %v8110 = vand.u32 %v7838, 4294901760
    %8111 = vmatpush.msra.mxu0 %v8110
    %v8112 = vand.u32 %v7837, 4294901760
    %8113 = vmatpush.msra.mxu0 %v8112
    %v8114 = vand.u32 %v7836, 4294901760
    %8115 = vmatpush.msra.mxu0 %v8114
    %v8116 = vand.u32 %v7835, 4294901760
    %8117 = vmatpush.msra.mxu0 %v8116
    %v8118 = vand.u32 %v7834, 4294901760
    %8119 = vmatpush.msra.mxu0 %v8118
    %v8120 = vand.u32 %v7833, 4294901760
    %8121 = vmatpush.msra.mxu0 %v8120
    %v8122 = vand.u32 %v7832, 4294901760
    %8123 = vmatpush.msra.mxu0 %v8122
    %v8124 = vand.u32 %v7831, 4294901760
    %8125 = vmatpush.msra.mxu0 %v8124
    %v8126 = vand.u32 %v5081, 4294901760
    %v8127 = vsub.f32 %v5081, %v8126
    %v8128 = vand.u32 %v8127, 4294901760
    %8129 = vmatmul.f32.gmra.mxu0 %v8128
    %v8130 = vpop.f32.mrf.mxu0
    %v8131 = vadd.f32 %v8077, %v8130
    %v8132 = vand.u32 %v5082, 4294901760
    %v8133 = vsub.f32 %v5082, %v8132
    %v8134 = vand.u32 %v8133, 4294901760
    %8135 = vmatmul.f32.gmra.mxu0 %v8134
    %v8136 = vpop.f32.mrf.mxu0
    %v8137 = vadd.f32 %v8082, %v8136
    %v8138 = vand.u32 %v5083, 4294901760
    %v8139 = vsub.f32 %v5083, %v8138
    %v8140 = vand.u32 %v8139, 4294901760
    %8141 = vmatmul.f32.gmra.mxu0 %v8140
    %v8142 = vpop.f32.mrf.mxu0
    %v8143 = vadd.f32 %v8087, %v8142
    %v8144 = vand.u32 %v5084, 4294901760
    %v8145 = vsub.f32 %v5084, %v8144
    %v8146 = vand.u32 %v8145, 4294901760
    %8147 = vmatmul.f32.gmra.mxu0 %v8146
    %v8148 = vpop.f32.mrf.mxu0
    %v8149 = vadd.f32 %v8092, %v8148
    %8150 = vdwg.mxu0
    %v8151 = vand.u32 %v7846, 4294901760
    %v8152 = vsub.f32 %v7846, %v8151
    %v8153 = vand.u32 %v8152, 4294901760
    %8154 = vmatpush.msra.mxu0 %v8153
    %v8155 = vand.u32 %v7845, 4294901760
    %v8156 = vsub.f32 %v7845, %v8155
    %v8157 = vand.u32 %v8156, 4294901760
    %8158 = vmatpush.msra.mxu0 %v8157
    %v8159 = vand.u32 %v7844, 4294901760
    %v8160 = vsub.f32 %v7844, %v8159
    %v8161 = vand.u32 %v8160, 4294901760
    %8162 = vmatpush.msra.mxu0 %v8161
    %v8163 = vand.u32 %v7843, 4294901760
    %v8164 = vsub.f32 %v7843, %v8163
    %v8165 = vand.u32 %v8164, 4294901760
    %8166 = vmatpush.msra.mxu0 %v8165
    %v8167 = vand.u32 %v7842, 4294901760
    %v8168 = vsub.f32 %v7842, %v8167
    %v8169 = vand.u32 %v8168, 4294901760
    %8170 = vmatpush.msra.mxu0 %v8169
    %v8171 = vand.u32 %v7841, 4294901760
    %v8172 = vsub.f32 %v7841, %v8171
    %v8173 = vand.u32 %v8172, 4294901760
    %8174 = vmatpush.msra.mxu0 %v8173
    %v8175 = vand.u32 %v7840, 4294901760
    %v8176 = vsub.f32 %v7840, %v8175
    %v8177 = vand.u32 %v8176, 4294901760
    %8178 = vmatpush.msra.mxu0 %v8177
    %v8179 = vand.u32 %v7839, 4294901760
    %v8180 = vsub.f32 %v7839, %v8179
    %v8181 = vand.u32 %v8180, 4294901760
    %8182 = vmatpush.msra.mxu0 %v8181
    %v8183 = vand.u32 %v7838, 4294901760
    %v8184 = vsub.f32 %v7838, %v8183
    %v8185 = vand.u32 %v8184, 4294901760
    %8186 = vmatpush.msra.mxu0 %v8185
    %v8187 = vand.u32 %v7837, 4294901760
    %v8188 = vsub.f32 %v7837, %v8187
    %v8189 = vand.u32 %v8188, 4294901760
    %8190 = vmatpush.msra.mxu0 %v8189
    %v8191 = vand.u32 %v7836, 4294901760
    %v8192 = vsub.f32 %v7836, %v8191
    %v8193 = vand.u32 %v8192, 4294901760
    %8194 = vmatpush.msra.mxu0 %v8193
    %v8195 = vand.u32 %v7835, 4294901760
    %v8196 = vsub.f32 %v7835, %v8195
    %v8197 = vand.u32 %v8196, 4294901760
    %8198 = vmatpush.msra.mxu0 %v8197
    %v8199 = vand.u32 %v7834, 4294901760
    %v8200 = vsub.f32 %v7834, %v8199
    %v8201 = vand.u32 %v8200, 4294901760
    %8202 = vmatpush.msra.mxu0 %v8201
    %v8203 = vand.u32 %v7833, 4294901760
    %v8204 = vsub.f32 %v7833, %v8203
    %v8205 = vand.u32 %v8204, 4294901760
    %8206 = vmatpush.msra.mxu0 %v8205
    %v8207 = vand.u32 %v7832, 4294901760
    %v8208 = vsub.f32 %v7832, %v8207
    %v8209 = vand.u32 %v8208, 4294901760
    %8210 = vmatpush.msra.mxu0 %v8209
    %v8211 = vand.u32 %v7831, 4294901760
    %v8212 = vsub.f32 %v7831, %v8211
    %v8213 = vand.u32 %v8212, 4294901760
    %8214 = vmatpush.msra.mxu0 %v8213
    %v8215 = vand.u32 %v5081, 4294901760
    %8216 = vmatmul.f32.gmra.mxu0 %v8215
    %v8217 = vpop.f32.mrf.mxu0
    %v8218 = vadd.f32 %v8131, %v8217
    %v8219 = vand.u32 %v5082, 4294901760
    %8220 = vmatmul.f32.gmra.mxu0 %v8219
    %v8221 = vpop.f32.mrf.mxu0
    %v8222 = vadd.f32 %v8137, %v8221
    %v8223 = vand.u32 %v5083, 4294901760
    %8224 = vmatmul.f32.gmra.mxu0 %v8223
    %v8225 = vpop.f32.mrf.mxu0
    %v8226 = vadd.f32 %v8143, %v8225
    %v8227 = vand.u32 %v5084, 4294901760
    %8228 = vmatmul.f32.gmra.mxu0 %v8227
    %v8229 = vpop.f32.mrf.mxu0
    %v8230 = vadd.f32 %v8149, %v8229
    %8231 = vdwg.mxu0
    %v8232 = vand.u32 %v7846, 4294901760
    %8233 = vmatpush.msra.mxu0 %v8232
    %v8234 = vand.u32 %v7845, 4294901760
    %8235 = vmatpush.msra.mxu0 %v8234
    %v8236 = vand.u32 %v7844, 4294901760
    %8237 = vmatpush.msra.mxu0 %v8236
    %v8238 = vand.u32 %v7843, 4294901760
    %8239 = vmatpush.msra.mxu0 %v8238
    %v8240 = vand.u32 %v7842, 4294901760
    %8241 = vmatpush.msra.mxu0 %v8240
    %v8242 = vand.u32 %v7841, 4294901760
    %8243 = vmatpush.msra.mxu0 %v8242
    %v8244 = vand.u32 %v7840, 4294901760
    %8245 = vmatpush.msra.mxu0 %v8244
    %v8246 = vand.u32 %v7839, 4294901760
    %8247 = vmatpush.msra.mxu0 %v8246
    %v8248 = vand.u32 %v7838, 4294901760
    %8249 = vmatpush.msra.mxu0 %v8248
    %v8250 = vand.u32 %v7837, 4294901760
    %8251 = vmatpush.msra.mxu0 %v8250
    %v8252 = vand.u32 %v7836, 4294901760
    %8253 = vmatpush.msra.mxu0 %v8252
    %v8254 = vand.u32 %v7835, 4294901760
    %8255 = vmatpush.msra.mxu0 %v8254
    %v8256 = vand.u32 %v7834, 4294901760
    %8257 = vmatpush.msra.mxu0 %v8256
    %v8258 = vand.u32 %v7833, 4294901760
    %8259 = vmatpush.msra.mxu0 %v8258
    %v8260 = vand.u32 %v7832, 4294901760
    %8261 = vmatpush.msra.mxu0 %v8260
    %v8262 = vand.u32 %v7831, 4294901760
    %8263 = vmatpush.msra.mxu0 %v8262
    %v8264 = vand.u32 %v5081, 4294901760
    %8265 = vmatmul.f32.gmra.mxu0 %v8264
    %v8266 = vpop.f32.mrf.mxu0
    %v8267 = vadd.f32 %v8218, %v8266
    %v8268 = vand.u32 %v5082, 4294901760
    %8269 = vmatmul.f32.gmra.mxu0 %v8268
    %v8270 = vpop.f32.mrf.mxu0
    %v8271 = vadd.f32 %v8222, %v8270
    %v8272 = vand.u32 %v5083, 4294901760
    %8273 = vmatmul.f32.gmra.mxu0 %v8272
    %v8274 = vpop.f32.mrf.mxu0
    %v8275 = vadd.f32 %v8226, %v8274
    %v8276 = vand.u32 %v5084, 4294901760
    %8277 = vmatmul.f32.gmra.mxu0 %v8276
    %v8278 = vpop.f32.mrf.mxu0
    %v8279 = vadd.f32 %v8230, %v8278
    %8280 = vdwg.mxu0
    %v8281 = vadd.f32 %v7822, %v8267
    %v8282 = vadd.f32 %v7823, %v8271
    %v8283 = vadd.f32 %v7824, %v8275
    %v8284 = vadd.f32 %v7825, %v8279
    %v8285 = vmax.f32 %v7826, %v8267
    %v8286 = vmax.f32 %v7827, %v8271
    %v8287 = vmax.f32 %v7828, %v8275
    %v8288 = vmax.f32 %v7829, %v8279
    %s8289 = scalar_lea.vmem %s5, 896
    %v8290 = vld [vmem:[%s8289] sm:$0xff]
    %v8291 = vld [vmem:[%s8289 + $0x8] sm:$0xff]
    %v8292 = vld [vmem:[%s8289 + $0x10] sm:$0xff]
    %v8293 = vld [vmem:[%s8289 + $0x18] sm:$0xff]
    %v8294 = vld [vmem:[%s8289 + $0x20] sm:$0xff]
    %v8295 = vld [vmem:[%s8289 + $0x28] sm:$0xff]
    %v8296 = vld [vmem:[%s8289 + $0x30] sm:$0xff]
    %v8297 = vld [vmem:[%s8289 + $0x38] sm:$0xff]
    %v8298 = vld [vmem:[%s8289 + $0x40] sm:$0xff]
    %v8299 = vld [vmem:[%s8289 + $0x48] sm:$0xff]
    %v8300 = vld [vmem:[%s8289 + $0x50] sm:$0xff]
    %v8301 = vld [vmem:[%s8289 + $0x58] sm:$0xff]
    %v8302 = vld [vmem:[%s8289 + $0x60] sm:$0xff]
    %v8303 = vld [vmem:[%s8289 + $0x68] sm:$0xff]
    %v8304 = vld [vmem:[%s8289 + $0x70] sm:$0xff]
    %v8305 = vld [vmem:[%s8289 + $0x78] sm:$0xff]
    %v8306 = vand.u32 %v8305, 4294901760
    %8307 = vmatpush.msra.mxu0 %v8306
    %v8308 = vand.u32 %v8304, 4294901760
    %8309 = vmatpush.msra.mxu0 %v8308
    %v8310 = vand.u32 %v8303, 4294901760
    %8311 = vmatpush.msra.mxu0 %v8310
    %v8312 = vand.u32 %v8302, 4294901760
    %8313 = vmatpush.msra.mxu0 %v8312
    %v8314 = vand.u32 %v8301, 4294901760
    %8315 = vmatpush.msra.mxu0 %v8314
    %v8316 = vand.u32 %v8300, 4294901760
    %8317 = vmatpush.msra.mxu0 %v8316
    %v8318 = vand.u32 %v8299, 4294901760
    %8319 = vmatpush.msra.mxu0 %v8318
    %v8320 = vand.u32 %v8298, 4294901760
    %8321 = vmatpush.msra.mxu0 %v8320
    %v8322 = vand.u32 %v8297, 4294901760
    %8323 = vmatpush.msra.mxu0 %v8322
    %v8324 = vand.u32 %v8296, 4294901760
    %8325 = vmatpush.msra.mxu0 %v8324
    %v8326 = vand.u32 %v8295, 4294901760
    %8327 = vmatpush.msra.mxu0 %v8326
    %v8328 = vand.u32 %v8294, 4294901760
    %8329 = vmatpush.msra.mxu0 %v8328
    %v8330 = vand.u32 %v8293, 4294901760
    %8331 = vmatpush.msra.mxu0 %v8330
    %v8332 = vand.u32 %v8292, 4294901760
    %8333 = vmatpush.msra.mxu0 %v8332
    %v8334 = vand.u32 %v8291, 4294901760
    %8335 = vmatpush.msra.mxu0 %v8334
    %v8336 = vand.u32 %v8290, 4294901760
    %8337 = vmatpush.msra.mxu0 %v8336
    %v8338 = vand.u32 %v5081, 4294901760
    %v8339 = vsub.f32 %v5081, %v8338
    %v8340 = vand.u32 %v8339, 4294901760
    %v8341 = vsub.f32 %v8339, %v8340
    %v8342 = vand.u32 %v8341, 4294901760
    %8343 = vmatmul.f32.gmra.mxu0 %v8342
    %v8344 = vpop.f32.mrf.mxu0
    %v8345 = vadd.f32 0.0, %v8344
    %v8346 = vand.u32 %v5082, 4294901760
    %v8347 = vsub.f32 %v5082, %v8346
    %v8348 = vand.u32 %v8347, 4294901760
    %v8349 = vsub.f32 %v8347, %v8348
    %v8350 = vand.u32 %v8349, 4294901760
    %8351 = vmatmul.f32.gmra.mxu0 %v8350
    %v8352 = vpop.f32.mrf.mxu0
    %v8353 = vadd.f32 0.0, %v8352
    %v8354 = vand.u32 %v5083, 4294901760
    %v8355 = vsub.f32 %v5083, %v8354
    %v8356 = vand.u32 %v8355, 4294901760
    %v8357 = vsub.f32 %v8355, %v8356
    %v8358 = vand.u32 %v8357, 4294901760
    %8359 = vmatmul.f32.gmra.mxu0 %v8358
    %v8360 = vpop.f32.mrf.mxu0
    %v8361 = vadd.f32 0.0, %v8360
    %v8362 = vand.u32 %v5084, 4294901760
    %v8363 = vsub.f32 %v5084, %v8362
    %v8364 = vand.u32 %v8363, 4294901760
    %v8365 = vsub.f32 %v8363, %v8364
    %v8366 = vand.u32 %v8365, 4294901760
    %8367 = vmatmul.f32.gmra.mxu0 %v8366
    %v8368 = vpop.f32.mrf.mxu0
    %v8369 = vadd.f32 0.0, %v8368
    %8370 = vdwg.mxu0
    %v8371 = vand.u32 %v8305, 4294901760
    %v8372 = vsub.f32 %v8305, %v8371
    %v8373 = vand.u32 %v8372, 4294901760
    %v8374 = vsub.f32 %v8372, %v8373
    %v8375 = vand.u32 %v8374, 4294901760
    %8376 = vmatpush.msra.mxu0 %v8375
    %v8377 = vand.u32 %v8304, 4294901760
    %v8378 = vsub.f32 %v8304, %v8377
    %v8379 = vand.u32 %v8378, 4294901760
    %v8380 = vsub.f32 %v8378, %v8379
    %v8381 = vand.u32 %v8380, 4294901760
    %8382 = vmatpush.msra.mxu0 %v8381
    %v8383 = vand.u32 %v8303, 4294901760
    %v8384 = vsub.f32 %v8303, %v8383
    %v8385 = vand.u32 %v8384, 4294901760
    %v8386 = vsub.f32 %v8384, %v8385
    %v8387 = vand.u32 %v8386, 4294901760
    %8388 = vmatpush.msra.mxu0 %v8387
    %v8389 = vand.u32 %v8302, 4294901760
    %v8390 = vsub.f32 %v8302, %v8389
    %v8391 = vand.u32 %v8390, 4294901760
    %v8392 = vsub.f32 %v8390, %v8391
    %v8393 = vand.u32 %v8392, 4294901760
    %8394 = vmatpush.msra.mxu0 %v8393
    %v8395 = vand.u32 %v8301, 4294901760
    %v8396 = vsub.f32 %v8301, %v8395
    %v8397 = vand.u32 %v8396, 4294901760
    %v8398 = vsub.f32 %v8396, %v8397
    %v8399 = vand.u32 %v8398, 4294901760
    %8400 = vmatpush.msra.mxu0 %v8399
    %v8401 = vand.u32 %v8300, 4294901760
    %v8402 = vsub.f32 %v8300, %v8401
    %v8403 = vand.u32 %v8402, 4294901760
    %v8404 = vsub.f32 %v8402, %v8403
    %v8405 = vand.u32 %v8404, 4294901760
    %8406 = vmatpush.msra.mxu0 %v8405
    %v8407 = vand.u32 %v8299, 4294901760
    %v8408 = vsub.f32 %v8299, %v8407
    %v8409 = vand.u32 %v8408, 4294901760
    %v8410 = vsub.f32 %v8408, %v8409
    %v8411 = vand.u32 %v8410, 4294901760
    %8412 = vmatpush.msra.mxu0 %v8411
    %v8413 = vand.u32 %v8298, 4294901760
    %v8414 = vsub.f32 %v8298, %v8413
    %v8415 = vand.u32 %v8414, 4294901760
    %v8416 = vsub.f32 %v8414, %v8415
    %v8417 = vand.u32 %v8416, 4294901760
    %8418 = vmatpush.msra.mxu0 %v8417
    %v8419 = vand.u32 %v8297, 4294901760
    %v8420 = vsub.f32 %v8297, %v8419
    %v8421 = vand.u32 %v8420, 4294901760
    %v8422 = vsub.f32 %v8420, %v8421
    %v8423 = vand.u32 %v8422, 4294901760
    %8424 = vmatpush.msra.mxu0 %v8423
    %v8425 = vand.u32 %v8296, 4294901760
    %v8426 = vsub.f32 %v8296, %v8425
    %v8427 = vand.u32 %v8426, 4294901760
    %v8428 = vsub.f32 %v8426, %v8427
    %v8429 = vand.u32 %v8428, 4294901760
    %8430 = vmatpush.msra.mxu0 %v8429
    %v8431 = vand.u32 %v8295, 4294901760
    %v8432 = vsub.f32 %v8295, %v8431
    %v8433 = vand.u32 %v8432, 4294901760
    %v8434 = vsub.f32 %v8432, %v8433
    %v8435 = vand.u32 %v8434, 4294901760
    %8436 = vmatpush.msra.mxu0 %v8435
    %v8437 = vand.u32 %v8294, 4294901760
    %v8438 = vsub.f32 %v8294, %v8437
    %v8439 = vand.u32 %v8438, 4294901760
    %v8440 = vsub.f32 %v8438, %v8439
    %v8441 = vand.u32 %v8440, 4294901760
    %8442 = vmatpush.msra.mxu0 %v8441
    %v8443 = vand.u32 %v8293, 4294901760
    %v8444 = vsub.f32 %v8293, %v8443
    %v8445 = vand.u32 %v8444, 4294901760
    %v8446 = vsub.f32 %v8444, %v8445
    %v8447 = vand.u32 %v8446, 4294901760
    %8448 = vmatpush.msra.mxu0 %v8447
    %v8449 = vand.u32 %v8292, 4294901760
    %v8450 = vsub.f32 %v8292, %v8449
    %v8451 = vand.u32 %v8450, 4294901760
    %v8452 = vsub.f32 %v8450, %v8451
    %v8453 = vand.u32 %v8452, 4294901760
    %8454 = vmatpush.msra.mxu0 %v8453
    %v8455 = vand.u32 %v8291, 4294901760
    %v8456 = vsub.f32 %v8291, %v8455
    %v8457 = vand.u32 %v8456, 4294901760
    %v8458 = vsub.f32 %v8456, %v8457
    %v8459 = vand.u32 %v8458, 4294901760
    %8460 = vmatpush.msra.mxu0 %v8459
    %v8461 = vand.u32 %v8290, 4294901760
    %v8462 = vsub.f32 %v8290, %v8461
    %v8463 = vand.u32 %v8462, 4294901760
    %v8464 = vsub.f32 %v8462, %v8463
    %v8465 = vand.u32 %v8464, 4294901760
    %8466 = vmatpush.msra.mxu0 %v8465
    %v8467 = vand.u32 %v5081, 4294901760
    %8468 = vmatmul.f32.gmra.mxu0 %v8467
    %v8469 = vpop.f32.mrf.mxu0
    %v8470 = vadd.f32 %v8345, %v8469
    %v8471 = vand.u32 %v5082, 4294901760
    %8472 = vmatmul.f32.gmra.mxu0 %v8471
    %v8473 = vpop.f32.mrf.mxu0
    %v8474 = vadd.f32 %v8353, %v8473
    %v8475 = vand.u32 %v5083, 4294901760
    %8476 = vmatmul.f32.gmra.mxu0 %v8475
    %v8477 = vpop.f32.mrf.mxu0
    %v8478 = vadd.f32 %v8361, %v8477
    %v8479 = vand.u32 %v5084, 4294901760
    %8480 = vmatmul.f32.gmra.mxu0 %v8479
    %v8481 = vpop.f32.mrf.mxu0
    %v8482 = vadd.f32 %v8369, %v8481
    %8483 = vdwg.mxu0
    %v8484 = vand.u32 %v8305, 4294901760
    %v8485 = vsub.f32 %v8305, %v8484
    %8486 = vmatpush.msra.mxu0 %v8485
    %v8487 = vand.u32 %v8304, 4294901760
    %v8488 = vsub.f32 %v8304, %v8487
    %8489 = vmatpush.msra.mxu0 %v8488
    %v8490 = vand.u32 %v8303, 4294901760
    %v8491 = vsub.f32 %v8303, %v8490
    %8492 = vmatpush.msra.mxu0 %v8491
    %v8493 = vand.u32 %v8302, 4294901760
    %v8494 = vsub.f32 %v8302, %v8493
    %8495 = vmatpush.msra.mxu0 %v8494
    %v8496 = vand.u32 %v8301, 4294901760
    %v8497 = vsub.f32 %v8301, %v8496
    %8498 = vmatpush.msra.mxu0 %v8497
    %v8499 = vand.u32 %v8300, 4294901760
    %v8500 = vsub.f32 %v8300, %v8499
    %8501 = vmatpush.msra.mxu0 %v8500
    %v8502 = vand.u32 %v8299, 4294901760
    %v8503 = vsub.f32 %v8299, %v8502
    %8504 = vmatpush.msra.mxu0 %v8503
    %v8505 = vand.u32 %v8298, 4294901760
    %v8506 = vsub.f32 %v8298, %v8505
    %8507 = vmatpush.msra.mxu0 %v8506
    %v8508 = vand.u32 %v8297, 4294901760
    %v8509 = vsub.f32 %v8297, %v8508
    %8510 = vmatpush.msra.mxu0 %v8509
    %v8511 = vand.u32 %v8296, 4294901760
    %v8512 = vsub.f32 %v8296, %v8511
    %8513 = vmatpush.msra.mxu0 %v8512
    %v8514 = vand.u32 %v8295, 4294901760
    %v8515 = vsub.f32 %v8295, %v8514
    %8516 = vmatpush.msra.mxu0 %v8515
    %v8517 = vand.u32 %v8294, 4294901760
    %v8518 = vsub.f32 %v8294, %v8517
    %8519 = vmatpush.msra.mxu0 %v8518
    %v8520 = vand.u32 %v8293, 4294901760
    %v8521 = vsub.f32 %v8293, %v8520
    %8522 = vmatpush.msra.mxu0 %v8521
    %v8523 = vand.u32 %v8292, 4294901760
    %v8524 = vsub.f32 %v8292, %v8523
    %8525 = vmatpush.msra.mxu0 %v8524
    %v8526 = vand.u32 %v8291, 4294901760
    %v8527 = vsub.f32 %v8291, %v8526
    %8528 = vmatpush.msra.mxu0 %v8527
    %v8529 = vand.u32 %v8290, 4294901760
    %v8530 = vsub.f32 %v8290, %v8529
    %8531 = vmatpush.msra.mxu0 %v8530
    %v8532 = vand.u32 %v5081, 4294901760
    %v8533 = vsub.f32 %v5081, %v8532
    %8534 = vmatmul.f32.gmra.mxu0 %v8533
    %v8535 = vpop.f32.mrf.mxu0
    %v8536 = vadd.f32 %v8470, %v8535
    %v8537 = vand.u32 %v5082, 4294901760
    %v8538 = vsub.f32 %v5082, %v8537
    %8539 = vmatmul.f32.gmra.mxu0 %v8538
    %v8540 = vpop.f32.mrf.mxu0
    %v8541 = vadd.f32 %v8474, %v8540
    %v8542 = vand.u32 %v5083, 4294901760
    %v8543 = vsub.f32 %v5083, %v8542
    %8544 = vmatmul.f32.gmra.mxu0 %v8543
    %v8545 = vpop.f32.mrf.mxu0
    %v8546 = vadd.f32 %v8478, %v8545
    %v8547 = vand.u32 %v5084, 4294901760
    %v8548 = vsub.f32 %v5084, %v8547
    %8549 = vmatmul.f32.gmra.mxu0 %v8548
    %v8550 = vpop.f32.mrf.mxu0
    %v8551 = vadd.f32 %v8482, %v8550
    %8552 = vdwg.mxu0
    %v8553 = vand.u32 %v8305, 4294901760
    %8554 = vmatpush.msra.mxu0 %v8553
    %v8555 = vand.u32 %v8304, 4294901760
    %8556 = vmatpush.msra.mxu0 %v8555
    %v8557 = vand.u32 %v8303, 4294901760
    %8558 = vmatpush.msra.mxu0 %v8557
    %v8559 = vand.u32 %v8302, 4294901760
    %8560 = vmatpush.msra.mxu0 %v8559
    %v8561 = vand.u32 %v8301, 4294901760
    %8562 = vmatpush.msra.mxu0 %v8561
    %v8563 = vand.u32 %v8300, 4294901760
    %8564 = vmatpush.msra.mxu0 %v8563
    %v8565 = vand.u32 %v8299, 4294901760
    %8566 = vmatpush.msra.mxu0 %v8565
    %v8567 = vand.u32 %v8298, 4294901760
    %8568 = vmatpush.msra.mxu0 %v8567
    %v8569 = vand.u32 %v8297, 4294901760
    %8570 = vmatpush.msra.mxu0 %v8569
    %v8571 = vand.u32 %v8296, 4294901760
    %8572 = vmatpush.msra.mxu0 %v8571
    %v8573 = vand.u32 %v8295, 4294901760
    %8574 = vmatpush.msra.mxu0 %v8573
    %v8575 = vand.u32 %v8294, 4294901760
    %8576 = vmatpush.msra.mxu0 %v8575
    %v8577 = vand.u32 %v8293, 4294901760
    %8578 = vmatpush.msra.mxu0 %v8577
    %v8579 = vand.u32 %v8292, 4294901760
    %8580 = vmatpush.msra.mxu0 %v8579
    %v8581 = vand.u32 %v8291, 4294901760
    %8582 = vmatpush.msra.mxu0 %v8581
    %v8583 = vand.u32 %v8290, 4294901760
    %8584 = vmatpush.msra.mxu0 %v8583
    %v8585 = vand.u32 %v5081, 4294901760
    %v8586 = vsub.f32 %v5081, %v8585
    %v8587 = vand.u32 %v8586, 4294901760
    %8588 = vmatmul.f32.gmra.mxu0 %v8587
    %v8589 = vpop.f32.mrf.mxu0
    %v8590 = vadd.f32 %v8536, %v8589
    %v8591 = vand.u32 %v5082, 4294901760
    %v8592 = vsub.f32 %v5082, %v8591
    %v8593 = vand.u32 %v8592, 4294901760
    %8594 = vmatmul.f32.gmra.mxu0 %v8593
    %v8595 = vpop.f32.mrf.mxu0
    %v8596 = vadd.f32 %v8541, %v8595
    %v8597 = vand.u32 %v5083, 4294901760
    %v8598 = vsub.f32 %v5083, %v8597
    %v8599 = vand.u32 %v8598, 4294901760
    %8600 = vmatmul.f32.gmra.mxu0 %v8599
    %v8601 = vpop.f32.mrf.mxu0
    %v8602 = vadd.f32 %v8546, %v8601
    %v8603 = vand.u32 %v5084, 4294901760
    %v8604 = vsub.f32 %v5084, %v8603
    %v8605 = vand.u32 %v8604, 4294901760
    %8606 = vmatmul.f32.gmra.mxu0 %v8605
    %v8607 = vpop.f32.mrf.mxu0
    %v8608 = vadd.f32 %v8551, %v8607
    %8609 = vdwg.mxu0
    %v8610 = vand.u32 %v8305, 4294901760
    %v8611 = vsub.f32 %v8305, %v8610
    %v8612 = vand.u32 %v8611, 4294901760
    %8613 = vmatpush.msra.mxu0 %v8612
    %v8614 = vand.u32 %v8304, 4294901760
    %v8615 = vsub.f32 %v8304, %v8614
    %v8616 = vand.u32 %v8615, 4294901760
    %8617 = vmatpush.msra.mxu0 %v8616
    %v8618 = vand.u32 %v8303, 4294901760
    %v8619 = vsub.f32 %v8303, %v8618
    %v8620 = vand.u32 %v8619, 4294901760
    %8621 = vmatpush.msra.mxu0 %v8620
    %v8622 = vand.u32 %v8302, 4294901760
    %v8623 = vsub.f32 %v8302, %v8622
    %v8624 = vand.u32 %v8623, 4294901760
    %8625 = vmatpush.msra.mxu0 %v8624
    %v8626 = vand.u32 %v8301, 4294901760
    %v8627 = vsub.f32 %v8301, %v8626
    %v8628 = vand.u32 %v8627, 4294901760
    %8629 = vmatpush.msra.mxu0 %v8628
    %v8630 = vand.u32 %v8300, 4294901760
    %v8631 = vsub.f32 %v8300, %v8630
    %v8632 = vand.u32 %v8631, 4294901760
    %8633 = vmatpush.msra.mxu0 %v8632
    %v8634 = vand.u32 %v8299, 4294901760
    %v8635 = vsub.f32 %v8299, %v8634
    %v8636 = vand.u32 %v8635, 4294901760
    %8637 = vmatpush.msra.mxu0 %v8636
    %v8638 = vand.u32 %v8298, 4294901760
    %v8639 = vsub.f32 %v8298, %v8638
    %v8640 = vand.u32 %v8639, 4294901760
    %8641 = vmatpush.msra.mxu0 %v8640
    %v8642 = vand.u32 %v8297, 4294901760
    %v8643 = vsub.f32 %v8297, %v8642
    %v8644 = vand.u32 %v8643, 4294901760
    %8645 = vmatpush.msra.mxu0 %v8644
    %v8646 = vand.u32 %v8296, 4294901760
    %v8647 = vsub.f32 %v8296, %v8646
    %v8648 = vand.u32 %v8647, 4294901760
    %8649 = vmatpush.msra.mxu0 %v8648
    %v8650 = vand.u32 %v8295, 4294901760
    %v8651 = vsub.f32 %v8295, %v8650
    %v8652 = vand.u32 %v8651, 4294901760
    %8653 = vmatpush.msra.mxu0 %v8652
    %v8654 = vand.u32 %v8294, 4294901760
    %v8655 = vsub.f32 %v8294, %v8654
    %v8656 = vand.u32 %v8655, 4294901760
    %8657 = vmatpush.msra.mxu0 %v8656
    %v8658 = vand.u32 %v8293, 4294901760
    %v8659 = vsub.f32 %v8293, %v8658
    %v8660 = vand.u32 %v8659, 4294901760
    %8661 = vmatpush.msra.mxu0 %v8660
    %v8662 = vand.u32 %v8292, 4294901760
    %v8663 = vsub.f32 %v8292, %v8662
    %v8664 = vand.u32 %v8663, 4294901760
    %8665 = vmatpush.msra.mxu0 %v8664
    %v8666 = vand.u32 %v8291, 4294901760
    %v8667 = vsub.f32 %v8291, %v8666
    %v8668 = vand.u32 %v8667, 4294901760
    %8669 = vmatpush.msra.mxu0 %v8668
    %v8670 = vand.u32 %v8290, 4294901760
    %v8671 = vsub.f32 %v8290, %v8670
    %v8672 = vand.u32 %v8671, 4294901760
    %8673 = vmatpush.msra.mxu0 %v8672
    %v8674 = vand.u32 %v5081, 4294901760
    %8675 = vmatmul.f32.gmra.mxu0 %v8674
    %v8676 = vpop.f32.mrf.mxu0
    %v8677 = vadd.f32 %v8590, %v8676
    %v8678 = vand.u32 %v5082, 4294901760
    %8679 = vmatmul.f32.gmra.mxu0 %v8678
    %v8680 = vpop.f32.mrf.mxu0
    %v8681 = vadd.f32 %v8596, %v8680
    %v8682 = vand.u32 %v5083, 4294901760
    %8683 = vmatmul.f32.gmra.mxu0 %v8682
    %v8684 = vpop.f32.mrf.mxu0
    %v8685 = vadd.f32 %v8602, %v8684
    %v8686 = vand.u32 %v5084, 4294901760
    %8687 = vmatmul.f32.gmra.mxu0 %v8686
    %v8688 = vpop.f32.mrf.mxu0
    %v8689 = vadd.f32 %v8608, %v8688
    %8690 = vdwg.mxu0
    %v8691 = vand.u32 %v8305, 4294901760
    %8692 = vmatpush.msra.mxu0 %v8691
    %v8693 = vand.u32 %v8304, 4294901760
    %8694 = vmatpush.msra.mxu0 %v8693
    %v8695 = vand.u32 %v8303, 4294901760
    %8696 = vmatpush.msra.mxu0 %v8695
    %v8697 = vand.u32 %v8302, 4294901760
    %8698 = vmatpush.msra.mxu0 %v8697
    %v8699 = vand.u32 %v8301, 4294901760
    %8700 = vmatpush.msra.mxu0 %v8699
    %v8701 = vand.u32 %v8300, 4294901760
    %8702 = vmatpush.msra.mxu0 %v8701
    %v8703 = vand.u32 %v8299, 4294901760
    %8704 = vmatpush.msra.mxu0 %v8703
    %v8705 = vand.u32 %v8298, 4294901760
    %8706 = vmatpush.msra.mxu0 %v8705
    %v8707 = vand.u32 %v8297, 4294901760
    %8708 = vmatpush.msra.mxu0 %v8707
    %v8709 = vand.u32 %v8296, 4294901760
    %8710 = vmatpush.msra.mxu0 %v8709
    %v8711 = vand.u32 %v8295, 4294901760
    %8712 = vmatpush.msra.mxu0 %v8711
    %v8713 = vand.u32 %v8294, 4294901760
    %8714 = vmatpush.msra.mxu0 %v8713
    %v8715 = vand.u32 %v8293, 4294901760
    %8716 = vmatpush.msra.mxu0 %v8715
    %v8717 = vand.u32 %v8292, 4294901760
    %8718 = vmatpush.msra.mxu0 %v8717
    %v8719 = vand.u32 %v8291, 4294901760
    %8720 = vmatpush.msra.mxu0 %v8719
    %v8721 = vand.u32 %v8290, 4294901760
    %8722 = vmatpush.msra.mxu0 %v8721
    %v8723 = vand.u32 %v5081, 4294901760
    %8724 = vmatmul.f32.gmra.mxu0 %v8723
    %v8725 = vpop.f32.mrf.mxu0
    %v8726 = vadd.f32 %v8677, %v8725
    %v8727 = vand.u32 %v5082, 4294901760
    %8728 = vmatmul.f32.gmra.mxu0 %v8727
    %v8729 = vpop.f32.mrf.mxu0
    %v8730 = vadd.f32 %v8681, %v8729
    %v8731 = vand.u32 %v5083, 4294901760
    %8732 = vmatmul.f32.gmra.mxu0 %v8731
    %v8733 = vpop.f32.mrf.mxu0
    %v8734 = vadd.f32 %v8685, %v8733
    %v8735 = vand.u32 %v5084, 4294901760
    %8736 = vmatmul.f32.gmra.mxu0 %v8735
    %v8737 = vpop.f32.mrf.mxu0
    %v8738 = vadd.f32 %v8689, %v8737
    %8739 = vdwg.mxu0
    %v8740 = vadd.f32 %v8281, %v8726
    %v8741 = vadd.f32 %v8282, %v8730
    %v8742 = vadd.f32 %v8283, %v8734
    %v8743 = vadd.f32 %v8284, %v8738
    %v8744 = vmax.f32 %v8285, %v8726
    %v8745 = vmax.f32 %v8286, %v8730
    %v8746 = vmax.f32 %v8287, %v8734
    %v8747 = vmax.f32 %v8288, %v8738
    %v8748 = vmul.f32 %v8740, 0.125
    %v8749 = vmul.f32 %v8741, 0.125
    %v8750 = vmul.f32 %v8742, 0.125
    %v8751 = vmul.f32 %v8743, 0.125
    %8756 = vrot.lane.b32.xlu0 %v8744, 16
    %v8757 = vpop.permute.xlu0 %8756
    %8758 = vrot.lane.b32.xlu0 %v8745, 16
    %v8759 = vpop.permute.xlu0 %8758
    %8760 = vrot.lane.b32.xlu0 %v8746, 16
    %v8761 = vpop.permute.xlu0 %8760
    %8762 = vrot.lane.b32.xlu0 %v8747, 16
    %v8763 = vpop.permute.xlu0 %8762
    %vm8768 = vcmask 130048
    %v8769 = vsel %vm8768, %v8748, %v8757
    %v8770 = vsel %vm8768, %v8749, %v8759
    %v8771 = vsel %vm8768, %v8750, %v8761
    %v8772 = vsel %vm8768, %v8751, %v8763
    %vm8777 = vcmask 1042432
    %v8778 = vrot.slane %v8769, 5
    %v8779 = vrot.slane %v8770, 5
    %v8780 = vsel %vm8777, %v8778, %v8779
    %v8781 = vrot.slane %v8771, 5
    %v8782 = vrot.slane %v8772, 5
    %v8783 = vsel %vm8777, %v8781, %v8782
    %v8786 = vsel %vm8777, 0.0, %v8778
    %v8787 = vsel %vm8777, 0.0, %v8781
    %v8788 = vld [vmem:[%s4] sm:$0xff]
    %v8789 = vld [vmem:[%s4 + $0x8] sm:$0xff]
    %v8790 = vld [vmem:[%s4 + $0x10] sm:$0xff]
    %v8791 = vld [vmem:[%s4 + $0x18] sm:$0xff]
    %vm8792 = vcmask 1041408
    %v8793 = vrot.slane %v8769, 6
    %v8794 = vrot.slane %v8770, 6
    %v8795 = vsel %vm8792, %v8793, %v8794
    %v8796 = vrot.slane %v8771, 6
    %v8797 = vrot.slane %v8772, 6
    %v8798 = vsel %vm8792, %v8796, %v8797
    %v8801 = vsel %vm8792, 0.0, %v8793
    %v8802 = vsel %vm8792, 0.0, %v8796
    %s8803 = scalar_lea.vmem %s4, 32
    %v8804 = vld [vmem:[%s8803] sm:$0xff]
    %v8805 = vld [vmem:[%s8803 + $0x8] sm:$0xff]
    %v8806 = vld [vmem:[%s8803 + $0x10] sm:$0xff]
    %v8807 = vld [vmem:[%s8803 + $0x18] sm:$0xff]
    %vm8808 = vcmask 261120
    %v8810 = vsel %vm8808, %v8801, 0
    %v8812 = vsel %vm8808, %v8795, 0
    %v8815 = vsel %vm8808, %v8802, 0
    %v8817 = vsel %vm8808, %v8798, 0
    %8819 = vmatpush.msra.mxu0 0.0
    %8820 = vmatpush.msra.mxu0 0.0
    %8821 = vmatpush.msra.mxu0 0.0
    %8822 = vmatpush.msra.mxu0 0.0
    %8823 = vmatpush.msra.mxu0 0.0
    %8824 = vmatpush.msra.mxu0 0.0
    %8825 = vmatpush.msra.mxu0 0.0
    %8826 = vmatpush.msra.mxu0 0.0
    %8827 = vmatpush.msra.mxu0 0.0
    %8828 = vmatpush.msra.mxu0 0.0
    %8829 = vmatpush.msra.mxu0 0.0
    %8830 = vmatpush.msra.mxu0 0.0
    %v8831 = vand.u32 %v8807, 4294901760
    %8832 = vmatpush.msra.mxu0 %v8831
    %v8833 = vand.u32 %v8806, 4294901760
    %8834 = vmatpush.msra.mxu0 %v8833
    %v8835 = vand.u32 %v8805, 4294901760
    %8836 = vmatpush.msra.mxu0 %v8835
    %v8837 = vand.u32 %v8804, 4294901760
    %8838 = vmatpush.msra.mxu0 %v8837
    %v8839 = vand.u32 %v8810, 4294901760
    %v8840 = vsub.f32 %v8810, %v8839
    %v8841 = vand.u32 %v8840, 4294901760
    %v8842 = vsub.f32 %v8840, %v8841
    %v8843 = vand.u32 %v8842, 4294901760
    %8844 = vmatmul.f32.gmra.mxu0 %v8843
    %v8845 = vpop.f32.mrf.mxu0
    %v8846 = vadd.f32 0.0, %v8845
    %v8847 = vand.u32 %v8812, 4294901760
    %v8848 = vsub.f32 %v8812, %v8847
    %v8849 = vand.u32 %v8848, 4294901760
    %v8850 = vsub.f32 %v8848, %v8849
    %v8851 = vand.u32 %v8850, 4294901760
    %8852 = vmatmul.f32.gmra.mxu0 %v8851
    %v8853 = vpop.f32.mrf.mxu0
    %v8854 = vadd.f32 0.0, %v8853
    %v8855 = vand.u32 %v8815, 4294901760
    %v8856 = vsub.f32 %v8815, %v8855
    %v8857 = vand.u32 %v8856, 4294901760
    %v8858 = vsub.f32 %v8856, %v8857
    %v8859 = vand.u32 %v8858, 4294901760
    %8860 = vmatmul.f32.gmra.mxu0 %v8859
    %v8861 = vpop.f32.mrf.mxu0
    %v8862 = vadd.f32 0.0, %v8861
    %v8863 = vand.u32 %v8817, 4294901760
    %v8864 = vsub.f32 %v8817, %v8863
    %v8865 = vand.u32 %v8864, 4294901760
    %v8866 = vsub.f32 %v8864, %v8865
    %v8867 = vand.u32 %v8866, 4294901760
    %8868 = vmatmul.f32.gmra.mxu0 %v8867
    %v8869 = vpop.f32.mrf.mxu0
    %v8870 = vadd.f32 0.0, %v8869
    %8871 = vdwg.mxu0
    %8872 = vmatpush.msra.mxu0 0.0
    %8873 = vmatpush.msra.mxu0 0.0
    %8874 = vmatpush.msra.mxu0 0.0
    %8875 = vmatpush.msra.mxu0 0.0
    %8876 = vmatpush.msra.mxu0 0.0
    %8877 = vmatpush.msra.mxu0 0.0
    %8878 = vmatpush.msra.mxu0 0.0
    %8879 = vmatpush.msra.mxu0 0.0
    %8880 = vmatpush.msra.mxu0 0.0
    %8881 = vmatpush.msra.mxu0 0.0
    %8882 = vmatpush.msra.mxu0 0.0
    %8883 = vmatpush.msra.mxu0 0.0
    %v8884 = vand.u32 %v8807, 4294901760
    %v8885 = vsub.f32 %v8807, %v8884
    %v8886 = vand.u32 %v8885, 4294901760
    %v8887 = vsub.f32 %v8885, %v8886
    %v8888 = vand.u32 %v8887, 4294901760
    %8889 = vmatpush.msra.mxu0 %v8888
    %v8890 = vand.u32 %v8806, 4294901760
    %v8891 = vsub.f32 %v8806, %v8890
    %v8892 = vand.u32 %v8891, 4294901760
    %v8893 = vsub.f32 %v8891, %v8892
    %v8894 = vand.u32 %v8893, 4294901760
    %8895 = vmatpush.msra.mxu0 %v8894
    %v8896 = vand.u32 %v8805, 4294901760
    %v8897 = vsub.f32 %v8805, %v8896
    %v8898 = vand.u32 %v8897, 4294901760
    %v8899 = vsub.f32 %v8897, %v8898
    %v8900 = vand.u32 %v8899, 4294901760
    %8901 = vmatpush.msra.mxu0 %v8900
    %v8902 = vand.u32 %v8804, 4294901760
    %v8903 = vsub.f32 %v8804, %v8902
    %v8904 = vand.u32 %v8903, 4294901760
    %v8905 = vsub.f32 %v8903, %v8904
    %v8906 = vand.u32 %v8905, 4294901760
    %8907 = vmatpush.msra.mxu0 %v8906
    %v8908 = vand.u32 %v8810, 4294901760
    %8909 = vmatmul.f32.gmra.mxu0 %v8908
    %v8910 = vpop.f32.mrf.mxu0
    %v8911 = vadd.f32 %v8846, %v8910
    %v8912 = vand.u32 %v8812, 4294901760
    %8913 = vmatmul.f32.gmra.mxu0 %v8912
    %v8914 = vpop.f32.mrf.mxu0
    %v8915 = vadd.f32 %v8854, %v8914
    %v8916 = vand.u32 %v8815, 4294901760
    %8917 = vmatmul.f32.gmra.mxu0 %v8916
    %v8918 = vpop.f32.mrf.mxu0
    %v8919 = vadd.f32 %v8862, %v8918
    %v8920 = vand.u32 %v8817, 4294901760
    %8921 = vmatmul.f32.gmra.mxu0 %v8920
    %v8922 = vpop.f32.mrf.mxu0
    %v8923 = vadd.f32 %v8870, %v8922
    %8924 = vdwg.mxu0
    %8925 = vmatpush.msra.mxu0 0.0
    %8926 = vmatpush.msra.mxu0 0.0
    %8927 = vmatpush.msra.mxu0 0.0
    %8928 = vmatpush.msra.mxu0 0.0
    %8929 = vmatpush.msra.mxu0 0.0
    %8930 = vmatpush.msra.mxu0 0.0
    %8931 = vmatpush.msra.mxu0 0.0
    %8932 = vmatpush.msra.mxu0 0.0
    %8933 = vmatpush.msra.mxu0 0.0
    %8934 = vmatpush.msra.mxu0 0.0
    %8935 = vmatpush.msra.mxu0 0.0
    %8936 = vmatpush.msra.mxu0 0.0
    %v8937 = vand.u32 %v8807, 4294901760
    %v8938 = vsub.f32 %v8807, %v8937
    %8939 = vmatpush.msra.mxu0 %v8938
    %v8940 = vand.u32 %v8806, 4294901760
    %v8941 = vsub.f32 %v8806, %v8940
    %8942 = vmatpush.msra.mxu0 %v8941
    %v8943 = vand.u32 %v8805, 4294901760
    %v8944 = vsub.f32 %v8805, %v8943
    %8945 = vmatpush.msra.mxu0 %v8944
    %v8946 = vand.u32 %v8804, 4294901760
    %v8947 = vsub.f32 %v8804, %v8946
    %8948 = vmatpush.msra.mxu0 %v8947
    %v8949 = vand.u32 %v8810, 4294901760
    %v8950 = vsub.f32 %v8810, %v8949
    %8951 = vmatmul.f32.gmra.mxu0 %v8950
    %v8952 = vpop.f32.mrf.mxu0
    %v8953 = vadd.f32 %v8911, %v8952
    %v8954 = vand.u32 %v8812, 4294901760
    %v8955 = vsub.f32 %v8812, %v8954
    %8956 = vmatmul.f32.gmra.mxu0 %v8955
    %v8957 = vpop.f32.mrf.mxu0
    %v8958 = vadd.f32 %v8915, %v8957
    %v8959 = vand.u32 %v8815, 4294901760
    %v8960 = vsub.f32 %v8815, %v8959
    %8961 = vmatmul.f32.gmra.mxu0 %v8960
    %v8962 = vpop.f32.mrf.mxu0
    %v8963 = vadd.f32 %v8919, %v8962
    %v8964 = vand.u32 %v8817, 4294901760
    %v8965 = vsub.f32 %v8817, %v8964
    %8966 = vmatmul.f32.gmra.mxu0 %v8965
    %v8967 = vpop.f32.mrf.mxu0
    %v8968 = vadd.f32 %v8923, %v8967
    %8969 = vdwg.mxu0
    %8970 = vmatpush.msra.mxu0 0.0
    %8971 = vmatpush.msra.mxu0 0.0
    %8972 = vmatpush.msra.mxu0 0.0
    %8973 = vmatpush.msra.mxu0 0.0
    %8974 = vmatpush.msra.mxu0 0.0
    %8975 = vmatpush.msra.mxu0 0.0
    %8976 = vmatpush.msra.mxu0 0.0
    %8977 = vmatpush.msra.mxu0 0.0
    %8978 = vmatpush.msra.mxu0 0.0
    %8979 = vmatpush.msra.mxu0 0.0
    %8980 = vmatpush.msra.mxu0 0.0
    %8981 = vmatpush.msra.mxu0 0.0
    %v8982 = vand.u32 %v8807, 4294901760
    %8983 = vmatpush.msra.mxu0 %v8982
    %v8984 = vand.u32 %v8806, 4294901760
    %8985 = vmatpush.msra.mxu0 %v8984
    %v8986 = vand.u32 %v8805, 4294901760
    %8987 = vmatpush.msra.mxu0 %v8986
    %v8988 = vand.u32 %v8804, 4294901760
    %8989 = vmatpush.msra.mxu0 %v8988
    %v8990 = vand.u32 %v8810, 4294901760
    %v8991 = vsub.f32 %v8810, %v8990
    %v8992 = vand.u32 %v8991, 4294901760
    %8993 = vmatmul.f32.gmra.mxu0 %v8992
    %v8994 = vpop.f32.mrf.mxu0
    %v8995 = vadd.f32 %v8953, %v8994
    %v8996 = vand.u32 %v8812, 4294901760
    %v8997 = vsub.f32 %v8812, %v8996
    %v8998 = vand.u32 %v8997, 4294901760
    %8999 = vmatmul.f32.gmra.mxu0 %v8998
    %v9000 = vpop.f32.mrf.mxu0
    %v9001 = vadd.f32 %v8958, %v9000
    %v9002 = vand.u32 %v8815, 4294901760
    %v9003 = vsub.f32 %v8815, %v9002
    %v9004 = vand.u32 %v9003, 4294901760
    %9005 = vmatmul.f32.gmra.mxu0 %v9004
    %v9006 = vpop.f32.mrf.mxu0
    %v9007 = vadd.f32 %v8963, %v9006
    %v9008 = vand.u32 %v8817, 4294901760
    %v9009 = vsub.f32 %v8817, %v9008
    %v9010 = vand.u32 %v9009, 4294901760
    %9011 = vmatmul.f32.gmra.mxu0 %v9010
    %v9012 = vpop.f32.mrf.mxu0
    %v9013 = vadd.f32 %v8968, %v9012
    %9014 = vdwg.mxu0
    %9015 = vmatpush.msra.mxu0 0.0
    %9016 = vmatpush.msra.mxu0 0.0
    %9017 = vmatpush.msra.mxu0 0.0
    %9018 = vmatpush.msra.mxu0 0.0
    %9019 = vmatpush.msra.mxu0 0.0
    %9020 = vmatpush.msra.mxu0 0.0
    %9021 = vmatpush.msra.mxu0 0.0
    %9022 = vmatpush.msra.mxu0 0.0
    %9023 = vmatpush.msra.mxu0 0.0
    %9024 = vmatpush.msra.mxu0 0.0
    %9025 = vmatpush.msra.mxu0 0.0
    %9026 = vmatpush.msra.mxu0 0.0
    %v9027 = vand.u32 %v8807, 4294901760
    %v9028 = vsub.f32 %v8807, %v9027
    %v9029 = vand.u32 %v9028, 4294901760
    %9030 = vmatpush.msra.mxu0 %v9029
    %v9031 = vand.u32 %v8806, 4294901760
    %v9032 = vsub.f32 %v8806, %v9031
    %v9033 = vand.u32 %v9032, 4294901760
    %9034 = vmatpush.msra.mxu0 %v9033
    %v9035 = vand.u32 %v8805, 4294901760
    %v9036 = vsub.f32 %v8805, %v9035
    %v9037 = vand.u32 %v9036, 4294901760
    %9038 = vmatpush.msra.mxu0 %v9037
    %v9039 = vand.u32 %v8804, 4294901760
    %v9040 = vsub.f32 %v8804, %v9039
    %v9041 = vand.u32 %v9040, 4294901760
    %9042 = vmatpush.msra.mxu0 %v9041
    %v9043 = vand.u32 %v8810, 4294901760
    %9044 = vmatmul.f32.gmra.mxu0 %v9043
    %v9045 = vpop.f32.mrf.mxu0
    %v9046 = vadd.f32 %v8995, %v9045
    %v9047 = vand.u32 %v8812, 4294901760
    %9048 = vmatmul.f32.gmra.mxu0 %v9047
    %v9049 = vpop.f32.mrf.mxu0
    %v9050 = vadd.f32 %v9001, %v9049
    %v9051 = vand.u32 %v8815, 4294901760
    %9052 = vmatmul.f32.gmra.mxu0 %v9051
    %v9053 = vpop.f32.mrf.mxu0
    %v9054 = vadd.f32 %v9007, %v9053
    %v9055 = vand.u32 %v8817, 4294901760
    %9056 = vmatmul.f32.gmra.mxu0 %v9055
    %v9057 = vpop.f32.mrf.mxu0
    %v9058 = vadd.f32 %v9013, %v9057
    %9059 = vdwg.mxu0
    %9060 = vmatpush.msra.mxu0 0.0
    %9061 = vmatpush.msra.mxu0 0.0
    %9062 = vmatpush.msra.mxu0 0.0
    %9063 = vmatpush.msra.mxu0 0.0
    %9064 = vmatpush.msra.mxu0 0.0
    %9065 = vmatpush.msra.mxu0 0.0
    %9066 = vmatpush.msra.mxu0 0.0
    %9067 = vmatpush.msra.mxu0 0.0
    %9068 = vmatpush.msra.mxu0 0.0
    %9069 = vmatpush.msra.mxu0 0.0
    %9070 = vmatpush.msra.mxu0 0.0
    %9071 = vmatpush.msra.mxu0 0.0
    %v9072 = vand.u32 %v8807, 4294901760
    %9073 = vmatpush.msra.mxu0 %v9072
    %v9074 = vand.u32 %v8806, 4294901760
    %9075 = vmatpush.msra.mxu0 %v9074
    %v9076 = vand.u32 %v8805, 4294901760
    %9077 = vmatpush.msra.mxu0 %v9076
    %v9078 = vand.u32 %v8804, 4294901760
    %9079 = vmatpush.msra.mxu0 %v9078
    %v9080 = vand.u32 %v8810, 4294901760
    %9081 = vmatmul.f32.gmra.mxu0 %v9080
    %v9082 = vpop.f32.mrf.mxu0
    %v9083 = vadd.f32 %v9046, %v9082
    %v9084 = vand.u32 %v8812, 4294901760
    %9085 = vmatmul.f32.gmra.mxu0 %v9084
    %v9086 = vpop.f32.mrf.mxu0
    %v9087 = vadd.f32 %v9050, %v9086
    %v9088 = vand.u32 %v8815, 4294901760
    %9089 = vmatmul.f32.gmra.mxu0 %v9088
    %v9090 = vpop.f32.mrf.mxu0
    %v9091 = vadd.f32 %v9054, %v9090
    %v9092 = vand.u32 %v8817, 4294901760
    %9093 = vmatmul.f32.gmra.mxu0 %v9092
    %v9094 = vpop.f32.mrf.mxu0
    %v9095 = vadd.f32 %v9058, %v9094
    %9096 = vdwg.mxu0
    %v9098 = vsel %vm8808, %v8786, 0
    %v9100 = vsel %vm8808, %v8780, 0
    %v9103 = vsel %vm8808, %v8787, 0
    %v9105 = vsel %vm8808, %v8783, 0
    %9107 = vmatpush.msra.mxu0 0.0
    %9108 = vmatpush.msra.mxu0 0.0
    %9109 = vmatpush.msra.mxu0 0.0
    %9110 = vmatpush.msra.mxu0 0.0
    %9111 = vmatpush.msra.mxu0 0.0
    %9112 = vmatpush.msra.mxu0 0.0
    %9113 = vmatpush.msra.mxu0 0.0
    %9114 = vmatpush.msra.mxu0 0.0
    %9115 = vmatpush.msra.mxu0 0.0
    %9116 = vmatpush.msra.mxu0 0.0
    %9117 = vmatpush.msra.mxu0 0.0
    %9118 = vmatpush.msra.mxu0 0.0
    %v9119 = vand.u32 %v8791, 4294901760
    %9120 = vmatpush.msra.mxu0 %v9119
    %v9121 = vand.u32 %v8790, 4294901760
    %9122 = vmatpush.msra.mxu0 %v9121
    %v9123 = vand.u32 %v8789, 4294901760
    %9124 = vmatpush.msra.mxu0 %v9123
    %v9125 = vand.u32 %v8788, 4294901760
    %9126 = vmatpush.msra.mxu0 %v9125
    %v9127 = vand.u32 %v9098, 4294901760
    %v9128 = vsub.f32 %v9098, %v9127
    %v9129 = vand.u32 %v9128, 4294901760
    %v9130 = vsub.f32 %v9128, %v9129
    %v9131 = vand.u32 %v9130, 4294901760
    %9132 = vmatmul.f32.gmra.mxu0 %v9131
    %v9133 = vpop.f32.mrf.mxu0
    %v9134 = vadd.f32 %v9083, %v9133
    %v9135 = vand.u32 %v9100, 4294901760
    %v9136 = vsub.f32 %v9100, %v9135
    %v9137 = vand.u32 %v9136, 4294901760
    %v9138 = vsub.f32 %v9136, %v9137
    %v9139 = vand.u32 %v9138, 4294901760
    %9140 = vmatmul.f32.gmra.mxu0 %v9139
    %v9141 = vpop.f32.mrf.mxu0
    %v9142 = vadd.f32 %v9087, %v9141
    %v9143 = vand.u32 %v9103, 4294901760
    %v9144 = vsub.f32 %v9103, %v9143
    %v9145 = vand.u32 %v9144, 4294901760
    %v9146 = vsub.f32 %v9144, %v9145
    %v9147 = vand.u32 %v9146, 4294901760
    %9148 = vmatmul.f32.gmra.mxu0 %v9147
    %v9149 = vpop.f32.mrf.mxu0
    %v9150 = vadd.f32 %v9091, %v9149
    %v9151 = vand.u32 %v9105, 4294901760
    %v9152 = vsub.f32 %v9105, %v9151
    %v9153 = vand.u32 %v9152, 4294901760
    %v9154 = vsub.f32 %v9152, %v9153
    %v9155 = vand.u32 %v9154, 4294901760
    %9156 = vmatmul.f32.gmra.mxu0 %v9155
    %v9157 = vpop.f32.mrf.mxu0
    %v9158 = vadd.f32 %v9095, %v9157
    %9159 = vdwg.mxu0
    %9160 = vmatpush.msra.mxu0 0.0
    %9161 = vmatpush.msra.mxu0 0.0
    %9162 = vmatpush.msra.mxu0 0.0
    %9163 = vmatpush.msra.mxu0 0.0
    %9164 = vmatpush.msra.mxu0 0.0
    %9165 = vmatpush.msra.mxu0 0.0
    %9166 = vmatpush.msra.mxu0 0.0
    %9167 = vmatpush.msra.mxu0 0.0
    %9168 = vmatpush.msra.mxu0 0.0
    %9169 = vmatpush.msra.mxu0 0.0
    %9170 = vmatpush.msra.mxu0 0.0
    %9171 = vmatpush.msra.mxu0 0.0
    %v9172 = vand.u32 %v8791, 4294901760
    %v9173 = vsub.f32 %v8791, %v9172
    %v9174 = vand.u32 %v9173, 4294901760
    %v9175 = vsub.f32 %v9173, %v9174
    %v9176 = vand.u32 %v9175, 4294901760
    %9177 = vmatpush.msra.mxu0 %v9176
    %v9178 = vand.u32 %v8790, 4294901760
    %v9179 = vsub.f32 %v8790, %v9178
    %v9180 = vand.u32 %v9179, 4294901760
    %v9181 = vsub.f32 %v9179, %v9180
    %v9182 = vand.u32 %v9181, 4294901760
    %9183 = vmatpush.msra.mxu0 %v9182
    %v9184 = vand.u32 %v8789, 4294901760
    %v9185 = vsub.f32 %v8789, %v9184
    %v9186 = vand.u32 %v9185, 4294901760
    %v9187 = vsub.f32 %v9185, %v9186
    %v9188 = vand.u32 %v9187, 4294901760
    %9189 = vmatpush.msra.mxu0 %v9188
    %v9190 = vand.u32 %v8788, 4294901760
    %v9191 = vsub.f32 %v8788, %v9190
    %v9192 = vand.u32 %v9191, 4294901760
    %v9193 = vsub.f32 %v9191, %v9192
    %v9194 = vand.u32 %v9193, 4294901760
    %9195 = vmatpush.msra.mxu0 %v9194
    %v9196 = vand.u32 %v9098, 4294901760
    %9197 = vmatmul.f32.gmra.mxu0 %v9196
    %v9198 = vpop.f32.mrf.mxu0
    %v9199 = vadd.f32 %v9134, %v9198
    %v9200 = vand.u32 %v9100, 4294901760
    %9201 = vmatmul.f32.gmra.mxu0 %v9200
    %v9202 = vpop.f32.mrf.mxu0
    %v9203 = vadd.f32 %v9142, %v9202
    %v9204 = vand.u32 %v9103, 4294901760
    %9205 = vmatmul.f32.gmra.mxu0 %v9204
    %v9206 = vpop.f32.mrf.mxu0
    %v9207 = vadd.f32 %v9150, %v9206
    %v9208 = vand.u32 %v9105, 4294901760
    %9209 = vmatmul.f32.gmra.mxu0 %v9208
    %v9210 = vpop.f32.mrf.mxu0
    %v9211 = vadd.f32 %v9158, %v9210
    %9212 = vdwg.mxu0
    %9213 = vmatpush.msra.mxu0 0.0
    %9214 = vmatpush.msra.mxu0 0.0
    %9215 = vmatpush.msra.mxu0 0.0
    %9216 = vmatpush.msra.mxu0 0.0
    %9217 = vmatpush.msra.mxu0 0.0
    %9218 = vmatpush.msra.mxu0 0.0
    %9219 = vmatpush.msra.mxu0 0.0
    %9220 = vmatpush.msra.mxu0 0.0
    %9221 = vmatpush.msra.mxu0 0.0
    %9222 = vmatpush.msra.mxu0 0.0
    %9223 = vmatpush.msra.mxu0 0.0
    %9224 = vmatpush.msra.mxu0 0.0
    %v9225 = vand.u32 %v8791, 4294901760
    %v9226 = vsub.f32 %v8791, %v9225
    %9227 = vmatpush.msra.mxu0 %v9226
    %v9228 = vand.u32 %v8790, 4294901760
    %v9229 = vsub.f32 %v8790, %v9228
    %9230 = vmatpush.msra.mxu0 %v9229
    %v9231 = vand.u32 %v8789, 4294901760
    %v9232 = vsub.f32 %v8789, %v9231
    %9233 = vmatpush.msra.mxu0 %v9232
    %v9234 = vand.u32 %v8788, 4294901760
    %v9235 = vsub.f32 %v8788, %v9234
    %9236 = vmatpush.msra.mxu0 %v9235
    %v9237 = vand.u32 %v9098, 4294901760
    %v9238 = vsub.f32 %v9098, %v9237
    %9239 = vmatmul.f32.gmra.mxu0 %v9238
    %v9240 = vpop.f32.mrf.mxu0
    %v9241 = vadd.f32 %v9199, %v9240
    %v9242 = vand.u32 %v9100, 4294901760
    %v9243 = vsub.f32 %v9100, %v9242
    %9244 = vmatmul.f32.gmra.mxu0 %v9243
    %v9245 = vpop.f32.mrf.mxu0
    %v9246 = vadd.f32 %v9203, %v9245
    %v9247 = vand.u32 %v9103, 4294901760
    %v9248 = vsub.f32 %v9103, %v9247
    %9249 = vmatmul.f32.gmra.mxu0 %v9248
    %v9250 = vpop.f32.mrf.mxu0
    %v9251 = vadd.f32 %v9207, %v9250
    %v9252 = vand.u32 %v9105, 4294901760
    %v9253 = vsub.f32 %v9105, %v9252
    %9254 = vmatmul.f32.gmra.mxu0 %v9253
    %v9255 = vpop.f32.mrf.mxu0
    %v9256 = vadd.f32 %v9211, %v9255
    %9257 = vdwg.mxu0
    %9258 = vmatpush.msra.mxu0 0.0
    %9259 = vmatpush.msra.mxu0 0.0
    %9260 = vmatpush.msra.mxu0 0.0
    %9261 = vmatpush.msra.mxu0 0.0
    %9262 = vmatpush.msra.mxu0 0.0
    %9263 = vmatpush.msra.mxu0 0.0
    %9264 = vmatpush.msra.mxu0 0.0
    %9265 = vmatpush.msra.mxu0 0.0
    %9266 = vmatpush.msra.mxu0 0.0
    %9267 = vmatpush.msra.mxu0 0.0
    %9268 = vmatpush.msra.mxu0 0.0
    %9269 = vmatpush.msra.mxu0 0.0
    %v9270 = vand.u32 %v8791, 4294901760
    %9271 = vmatpush.msra.mxu0 %v9270
    %v9272 = vand.u32 %v8790, 4294901760
    %9273 = vmatpush.msra.mxu0 %v9272
    %v9274 = vand.u32 %v8789, 4294901760
    %9275 = vmatpush.msra.mxu0 %v9274
    %v9276 = vand.u32 %v8788, 4294901760
    %9277 = vmatpush.msra.mxu0 %v9276
    %v9278 = vand.u32 %v9098, 4294901760
    %v9279 = vsub.f32 %v9098, %v9278
    %v9280 = vand.u32 %v9279, 4294901760
    %9281 = vmatmul.f32.gmra.mxu0 %v9280
    %v9282 = vpop.f32.mrf.mxu0
    %v9283 = vadd.f32 %v9241, %v9282
    %v9284 = vand.u32 %v9100, 4294901760
    %v9285 = vsub.f32 %v9100, %v9284
    %v9286 = vand.u32 %v9285, 4294901760
    %9287 = vmatmul.f32.gmra.mxu0 %v9286
    %v9288 = vpop.f32.mrf.mxu0
    %v9289 = vadd.f32 %v9246, %v9288
    %v9290 = vand.u32 %v9103, 4294901760
    %v9291 = vsub.f32 %v9103, %v9290
    %v9292 = vand.u32 %v9291, 4294901760
    %9293 = vmatmul.f32.gmra.mxu0 %v9292
    %v9294 = vpop.f32.mrf.mxu0
    %v9295 = vadd.f32 %v9251, %v9294
    %v9296 = vand.u32 %v9105, 4294901760
    %v9297 = vsub.f32 %v9105, %v9296
    %v9298 = vand.u32 %v9297, 4294901760
    %9299 = vmatmul.f32.gmra.mxu0 %v9298
    %v9300 = vpop.f32.mrf.mxu0
    %v9301 = vadd.f32 %v9256, %v9300
    %9302 = vdwg.mxu0
    %9303 = vmatpush.msra.mxu0 0.0
    %9304 = vmatpush.msra.mxu0 0.0
    %9305 = vmatpush.msra.mxu0 0.0
    %9306 = vmatpush.msra.mxu0 0.0
    %9307 = vmatpush.msra.mxu0 0.0
    %9308 = vmatpush.msra.mxu0 0.0
    %9309 = vmatpush.msra.mxu0 0.0
    %9310 = vmatpush.msra.mxu0 0.0
    %9311 = vmatpush.msra.mxu0 0.0
    %9312 = vmatpush.msra.mxu0 0.0
    %9313 = vmatpush.msra.mxu0 0.0
    %9314 = vmatpush.msra.mxu0 0.0
    %v9315 = vand.u32 %v8791, 4294901760
    %v9316 = vsub.f32 %v8791, %v9315
    %v9317 = vand.u32 %v9316, 4294901760
    %9318 = vmatpush.msra.mxu0 %v9317
    %v9319 = vand.u32 %v8790, 4294901760
    %v9320 = vsub.f32 %v8790, %v9319
    %v9321 = vand.u32 %v9320, 4294901760
    %9322 = vmatpush.msra.mxu0 %v9321
    %v9323 = vand.u32 %v8789, 4294901760
    %v9324 = vsub.f32 %v8789, %v9323
    %v9325 = vand.u32 %v9324, 4294901760
    %9326 = vmatpush.msra.mxu0 %v9325
    %v9327 = vand.u32 %v8788, 4294901760
    %v9328 = vsub.f32 %v8788, %v9327
    %v9329 = vand.u32 %v9328, 4294901760
    %9330 = vmatpush.msra.mxu0 %v9329
    %v9331 = vand.u32 %v9098, 4294901760
    %9332 = vmatmul.f32.gmra.mxu0 %v9331
    %v9333 = vpop.f32.mrf.mxu0
    %v9334 = vadd.f32 %v9283, %v9333
    %v9335 = vand.u32 %v9100, 4294901760
    %9336 = vmatmul.f32.gmra.mxu0 %v9335
    %v9337 = vpop.f32.mrf.mxu0
    %v9338 = vadd.f32 %v9289, %v9337
    %v9339 = vand.u32 %v9103, 4294901760
    %9340 = vmatmul.f32.gmra.mxu0 %v9339
    %v9341 = vpop.f32.mrf.mxu0
    %v9342 = vadd.f32 %v9295, %v9341
    %v9343 = vand.u32 %v9105, 4294901760
    %9344 = vmatmul.f32.gmra.mxu0 %v9343
    %v9345 = vpop.f32.mrf.mxu0
    %v9346 = vadd.f32 %v9301, %v9345
    %9347 = vdwg.mxu0
    %9348 = vmatpush.msra.mxu0 0.0
    %9349 = vmatpush.msra.mxu0 0.0
    %9350 = vmatpush.msra.mxu0 0.0
    %9351 = vmatpush.msra.mxu0 0.0
    %9352 = vmatpush.msra.mxu0 0.0
    %9353 = vmatpush.msra.mxu0 0.0
    %9354 = vmatpush.msra.mxu0 0.0
    %9355 = vmatpush.msra.mxu0 0.0
    %9356 = vmatpush.msra.mxu0 0.0
    %9357 = vmatpush.msra.mxu0 0.0
    %9358 = vmatpush.msra.mxu0 0.0
    %9359 = vmatpush.msra.mxu0 0.0
    %v9360 = vand.u32 %v8791, 4294901760
    %9361 = vmatpush.msra.mxu0 %v9360
    %v9362 = vand.u32 %v8790, 4294901760
    %9363 = vmatpush.msra.mxu0 %v9362
    %v9364 = vand.u32 %v8789, 4294901760
    %9365 = vmatpush.msra.mxu0 %v9364
    %v9366 = vand.u32 %v8788, 4294901760
    %9367 = vmatpush.msra.mxu0 %v9366
    %v9368 = vand.u32 %v9098, 4294901760
    %9369 = vmatmul.f32.gmra.mxu0 %v9368
    %v9370 = vpop.f32.mrf.mxu0
    %v9371 = vadd.f32 %v9334, %v9370
    %v9372 = vand.u32 %v9100, 4294901760
    %9373 = vmatmul.f32.gmra.mxu0 %v9372
    %v9374 = vpop.f32.mrf.mxu0
    %v9375 = vadd.f32 %v9338, %v9374
    %v9376 = vand.u32 %v9103, 4294901760
    %9377 = vmatmul.f32.gmra.mxu0 %v9376
    %v9378 = vpop.f32.mrf.mxu0
    %v9379 = vadd.f32 %v9342, %v9378
    %v9380 = vand.u32 %v9105, 4294901760
    %9381 = vmatmul.f32.gmra.mxu0 %v9380
    %v9382 = vpop.f32.mrf.mxu0
    %v9383 = vadd.f32 %v9346, %v9382
    %9384 = vdwg.mxu0
    %v9385 = vrot.slane %v8769, 7
    %v9386 = vrot.slane %v8770, 7
    %v9387 = vsel %vm1159, %v9385, %v9386
    %v9388 = vrot.slane %v8771, 7
    %v9389 = vrot.slane %v8772, 7
    %v9390 = vsel %vm1159, %v9388, %v9389
    %v9393 = vsel %vm1159, 0.0, %v9385
    %v9394 = vsel %vm1159, 0.0, %v9388
    %s9395 = scalar_lea.vmem %s4, 64
    %v9396 = vld [vmem:[%s9395] sm:$0xff]
    %v9397 = vld [vmem:[%s9395 + $0x8] sm:$0xff]
    %v9398 = vld [vmem:[%s9395 + $0x10] sm:$0xff]
    %v9399 = vld [vmem:[%s9395 + $0x18] sm:$0xff]
    %v9401 = vsel %vm8808, %v9393, 0
    %v9403 = vsel %vm8808, %v9387, 0
    %v9406 = vsel %vm8808, %v9394, 0
    %v9408 = vsel %vm8808, %v9390, 0
    %9410 = vmatpush.msra.mxu0 0.0
    %9411 = vmatpush.msra.mxu0 0.0
    %9412 = vmatpush.msra.mxu0 0.0
    %9413 = vmatpush.msra.mxu0 0.0
    %9414 = vmatpush.msra.mxu0 0.0
    %9415 = vmatpush.msra.mxu0 0.0
    %9416 = vmatpush.msra.mxu0 0.0
    %9417 = vmatpush.msra.mxu0 0.0
    %9418 = vmatpush.msra.mxu0 0.0
    %9419 = vmatpush.msra.mxu0 0.0
    %9420 = vmatpush.msra.mxu0 0.0
    %9421 = vmatpush.msra.mxu0 0.0
    %v9422 = vand.u32 %v9399, 4294901760
    %9423 = vmatpush.msra.mxu0 %v9422
    %v9424 = vand.u32 %v9398, 4294901760
    %9425 = vmatpush.msra.mxu0 %v9424
    %v9426 = vand.u32 %v9397, 4294901760
    %9427 = vmatpush.msra.mxu0 %v9426
    %v9428 = vand.u32 %v9396, 4294901760
    %9429 = vmatpush.msra.mxu0 %v9428
    %v9430 = vand.u32 %v9401, 4294901760
    %v9431 = vsub.f32 %v9401, %v9430
    %v9432 = vand.u32 %v9431, 4294901760
    %v9433 = vsub.f32 %v9431, %v9432
    %v9434 = vand.u32 %v9433, 4294901760
    %9435 = vmatmul.f32.gmra.mxu0 %v9434
    %v9436 = vpop.f32.mrf.mxu0
    %v9437 = vadd.f32 0.0, %v9436
    %v9438 = vand.u32 %v9403, 4294901760
    %v9439 = vsub.f32 %v9403, %v9438
    %v9440 = vand.u32 %v9439, 4294901760
    %v9441 = vsub.f32 %v9439, %v9440
    %v9442 = vand.u32 %v9441, 4294901760
    %9443 = vmatmul.f32.gmra.mxu0 %v9442
    %v9444 = vpop.f32.mrf.mxu0
    %v9445 = vadd.f32 0.0, %v9444
    %v9446 = vand.u32 %v9406, 4294901760
    %v9447 = vsub.f32 %v9406, %v9446
    %v9448 = vand.u32 %v9447, 4294901760
    %v9449 = vsub.f32 %v9447, %v9448
    %v9450 = vand.u32 %v9449, 4294901760
    %9451 = vmatmul.f32.gmra.mxu0 %v9450
    %v9452 = vpop.f32.mrf.mxu0
    %v9453 = vadd.f32 0.0, %v9452
    %v9454 = vand.u32 %v9408, 4294901760
    %v9455 = vsub.f32 %v9408, %v9454
    %v9456 = vand.u32 %v9455, 4294901760
    %v9457 = vsub.f32 %v9455, %v9456
    %v9458 = vand.u32 %v9457, 4294901760
    %9459 = vmatmul.f32.gmra.mxu0 %v9458
    %v9460 = vpop.f32.mrf.mxu0
    %v9461 = vadd.f32 0.0, %v9460
    %9462 = vdwg.mxu0
    %9463 = vmatpush.msra.mxu0 0.0
    %9464 = vmatpush.msra.mxu0 0.0
    %9465 = vmatpush.msra.mxu0 0.0
    %9466 = vmatpush.msra.mxu0 0.0
    %9467 = vmatpush.msra.mxu0 0.0
    %9468 = vmatpush.msra.mxu0 0.0
    %9469 = vmatpush.msra.mxu0 0.0
    %9470 = vmatpush.msra.mxu0 0.0
    %9471 = vmatpush.msra.mxu0 0.0
    %9472 = vmatpush.msra.mxu0 0.0
    %9473 = vmatpush.msra.mxu0 0.0
    %9474 = vmatpush.msra.mxu0 0.0
    %v9475 = vand.u32 %v9399, 4294901760
    %v9476 = vsub.f32 %v9399, %v9475
    %v9477 = vand.u32 %v9476, 4294901760
    %v9478 = vsub.f32 %v9476, %v9477
    %v9479 = vand.u32 %v9478, 4294901760
    %9480 = vmatpush.msra.mxu0 %v9479
    %v9481 = vand.u32 %v9398, 4294901760
    %v9482 = vsub.f32 %v9398, %v9481
    %v9483 = vand.u32 %v9482, 4294901760
    %v9484 = vsub.f32 %v9482, %v9483
    %v9485 = vand.u32 %v9484, 4294901760
    %9486 = vmatpush.msra.mxu0 %v9485
    %v9487 = vand.u32 %v9397, 4294901760
    %v9488 = vsub.f32 %v9397, %v9487
    %v9489 = vand.u32 %v9488, 4294901760
    %v9490 = vsub.f32 %v9488, %v9489
    %v9491 = vand.u32 %v9490, 4294901760
    %9492 = vmatpush.msra.mxu0 %v9491
    %v9493 = vand.u32 %v9396, 4294901760
    %v9494 = vsub.f32 %v9396, %v9493
    %v9495 = vand.u32 %v9494, 4294901760
    %v9496 = vsub.f32 %v9494, %v9495
    %v9497 = vand.u32 %v9496, 4294901760
    %9498 = vmatpush.msra.mxu0 %v9497
    %v9499 = vand.u32 %v9401, 4294901760
    %9500 = vmatmul.f32.gmra.mxu0 %v9499
    %v9501 = vpop.f32.mrf.mxu0
    %v9502 = vadd.f32 %v9437, %v9501
    %v9503 = vand.u32 %v9403, 4294901760
    %9504 = vmatmul.f32.gmra.mxu0 %v9503
    %v9505 = vpop.f32.mrf.mxu0
    %v9506 = vadd.f32 %v9445, %v9505
    %v9507 = vand.u32 %v9406, 4294901760
    %9508 = vmatmul.f32.gmra.mxu0 %v9507
    %v9509 = vpop.f32.mrf.mxu0
    %v9510 = vadd.f32 %v9453, %v9509
    %v9511 = vand.u32 %v9408, 4294901760
    %9512 = vmatmul.f32.gmra.mxu0 %v9511
    %v9513 = vpop.f32.mrf.mxu0
    %v9514 = vadd.f32 %v9461, %v9513
    %9515 = vdwg.mxu0
    %9516 = vmatpush.msra.mxu0 0.0
    %9517 = vmatpush.msra.mxu0 0.0
    %9518 = vmatpush.msra.mxu0 0.0
    %9519 = vmatpush.msra.mxu0 0.0
    %9520 = vmatpush.msra.mxu0 0.0
    %9521 = vmatpush.msra.mxu0 0.0
    %9522 = vmatpush.msra.mxu0 0.0
    %9523 = vmatpush.msra.mxu0 0.0
    %9524 = vmatpush.msra.mxu0 0.0
    %9525 = vmatpush.msra.mxu0 0.0
    %9526 = vmatpush.msra.mxu0 0.0
    %9527 = vmatpush.msra.mxu0 0.0
    %v9528 = vand.u32 %v9399, 4294901760
    %v9529 = vsub.f32 %v9399, %v9528
    %9530 = vmatpush.msra.mxu0 %v9529
    %v9531 = vand.u32 %v9398, 4294901760
    %v9532 = vsub.f32 %v9398, %v9531
    %9533 = vmatpush.msra.mxu0 %v9532
    %v9534 = vand.u32 %v9397, 4294901760
    %v9535 = vsub.f32 %v9397, %v9534
    %9536 = vmatpush.msra.mxu0 %v9535
    %v9537 = vand.u32 %v9396, 4294901760
    %v9538 = vsub.f32 %v9396, %v9537
    %9539 = vmatpush.msra.mxu0 %v9538
    %v9540 = vand.u32 %v9401, 4294901760
    %v9541 = vsub.f32 %v9401, %v9540
    %9542 = vmatmul.f32.gmra.mxu0 %v9541
    %v9543 = vpop.f32.mrf.mxu0
    %v9544 = vadd.f32 %v9502, %v9543
    %v9545 = vand.u32 %v9403, 4294901760
    %v9546 = vsub.f32 %v9403, %v9545
    %9547 = vmatmul.f32.gmra.mxu0 %v9546
    %v9548 = vpop.f32.mrf.mxu0
    %v9549 = vadd.f32 %v9506, %v9548
    %v9550 = vand.u32 %v9406, 4294901760
    %v9551 = vsub.f32 %v9406, %v9550
    %9552 = vmatmul.f32.gmra.mxu0 %v9551
    %v9553 = vpop.f32.mrf.mxu0
    %v9554 = vadd.f32 %v9510, %v9553
    %v9555 = vand.u32 %v9408, 4294901760
    %v9556 = vsub.f32 %v9408, %v9555
    %9557 = vmatmul.f32.gmra.mxu0 %v9556
    %v9558 = vpop.f32.mrf.mxu0
    %v9559 = vadd.f32 %v9514, %v9558
    %9560 = vdwg.mxu0
    %9561 = vmatpush.msra.mxu0 0.0
    %9562 = vmatpush.msra.mxu0 0.0
    %9563 = vmatpush.msra.mxu0 0.0
    %9564 = vmatpush.msra.mxu0 0.0
    %9565 = vmatpush.msra.mxu0 0.0
    %9566 = vmatpush.msra.mxu0 0.0
    %9567 = vmatpush.msra.mxu0 0.0
    %9568 = vmatpush.msra.mxu0 0.0
    %9569 = vmatpush.msra.mxu0 0.0
    %9570 = vmatpush.msra.mxu0 0.0
    %9571 = vmatpush.msra.mxu0 0.0
    %9572 = vmatpush.msra.mxu0 0.0
    %v9573 = vand.u32 %v9399, 4294901760
    %9574 = vmatpush.msra.mxu0 %v9573
    %v9575 = vand.u32 %v9398, 4294901760
    %9576 = vmatpush.msra.mxu0 %v9575
    %v9577 = vand.u32 %v9397, 4294901760
    %9578 = vmatpush.msra.mxu0 %v9577
    %v9579 = vand.u32 %v9396, 4294901760
    %9580 = vmatpush.msra.mxu0 %v9579
    %v9581 = vand.u32 %v9401, 4294901760
    %v9582 = vsub.f32 %v9401, %v9581
    %v9583 = vand.u32 %v9582, 4294901760
    %9584 = vmatmul.f32.gmra.mxu0 %v9583
    %v9585 = vpop.f32.mrf.mxu0
    %v9586 = vadd.f32 %v9544, %v9585
    %v9587 = vand.u32 %v9403, 4294901760
    %v9588 = vsub.f32 %v9403, %v9587
    %v9589 = vand.u32 %v9588, 4294901760
    %9590 = vmatmul.f32.gmra.mxu0 %v9589
    %v9591 = vpop.f32.mrf.mxu0
    %v9592 = vadd.f32 %v9549, %v9591
    %v9593 = vand.u32 %v9406, 4294901760
    %v9594 = vsub.f32 %v9406, %v9593
    %v9595 = vand.u32 %v9594, 4294901760
    %9596 = vmatmul.f32.gmra.mxu0 %v9595
    %v9597 = vpop.f32.mrf.mxu0
    %v9598 = vadd.f32 %v9554, %v9597
    %v9599 = vand.u32 %v9408, 4294901760
    %v9600 = vsub.f32 %v9408, %v9599
    %v9601 = vand.u32 %v9600, 4294901760
    %9602 = vmatmul.f32.gmra.mxu0 %v9601
    %v9603 = vpop.f32.mrf.mxu0
    %v9604 = vadd.f32 %v9559, %v9603
    %9605 = vdwg.mxu0
    %9606 = vmatpush.msra.mxu0 0.0
    %9607 = vmatpush.msra.mxu0 0.0
    %9608 = vmatpush.msra.mxu0 0.0
    %9609 = vmatpush.msra.mxu0 0.0
    %9610 = vmatpush.msra.mxu0 0.0
    %9611 = vmatpush.msra.mxu0 0.0
    %9612 = vmatpush.msra.mxu0 0.0
    %9613 = vmatpush.msra.mxu0 0.0
    %9614 = vmatpush.msra.mxu0 0.0
    %9615 = vmatpush.msra.mxu0 0.0
    %9616 = vmatpush.msra.mxu0 0.0
    %9617 = vmatpush.msra.mxu0 0.0
    %v9618 = vand.u32 %v9399, 4294901760
    %v9619 = vsub.f32 %v9399, %v9618
    %v9620 = vand.u32 %v9619, 4294901760
    %9621 = vmatpush.msra.mxu0 %v9620
    %v9622 = vand.u32 %v9398, 4294901760
    %v9623 = vsub.f32 %v9398, %v9622
    %v9624 = vand.u32 %v9623, 4294901760
    %9625 = vmatpush.msra.mxu0 %v9624
    %v9626 = vand.u32 %v9397, 4294901760
    %v9627 = vsub.f32 %v9397, %v9626
    %v9628 = vand.u32 %v9627, 4294901760
    %9629 = vmatpush.msra.mxu0 %v9628
    %v9630 = vand.u32 %v9396, 4294901760
    %v9631 = vsub.f32 %v9396, %v9630
    %v9632 = vand.u32 %v9631, 4294901760
    %9633 = vmatpush.msra.mxu0 %v9632
    %v9634 = vand.u32 %v9401, 4294901760
    %9635 = vmatmul.f32.gmra.mxu0 %v9634
    %v9636 = vpop.f32.mrf.mxu0
    %v9637 = vadd.f32 %v9586, %v9636
    %v9638 = vand.u32 %v9403, 4294901760
    %9639 = vmatmul.f32.gmra.mxu0 %v9638
    %v9640 = vpop.f32.mrf.mxu0
    %v9641 = vadd.f32 %v9592, %v9640
    %v9642 = vand.u32 %v9406, 4294901760
    %9643 = vmatmul.f32.gmra.mxu0 %v9642
    %v9644 = vpop.f32.mrf.mxu0
    %v9645 = vadd.f32 %v9598, %v9644
    %v9646 = vand.u32 %v9408, 4294901760
    %9647 = vmatmul.f32.gmra.mxu0 %v9646
    %v9648 = vpop.f32.mrf.mxu0
    %v9649 = vadd.f32 %v9604, %v9648
    %9650 = vdwg.mxu0
    %9651 = vmatpush.msra.mxu0 0.0
    %9652 = vmatpush.msra.mxu0 0.0
    %9653 = vmatpush.msra.mxu0 0.0
    %9654 = vmatpush.msra.mxu0 0.0
    %9655 = vmatpush.msra.mxu0 0.0
    %9656 = vmatpush.msra.mxu0 0.0
    %9657 = vmatpush.msra.mxu0 0.0
    %9658 = vmatpush.msra.mxu0 0.0
    %9659 = vmatpush.msra.mxu0 0.0
    %9660 = vmatpush.msra.mxu0 0.0
    %9661 = vmatpush.msra.mxu0 0.0
    %9662 = vmatpush.msra.mxu0 0.0
    %v9663 = vand.u32 %v9399, 4294901760
    %9664 = vmatpush.msra.mxu0 %v9663
    %v9665 = vand.u32 %v9398, 4294901760
    %9666 = vmatpush.msra.mxu0 %v9665
    %v9667 = vand.u32 %v9397, 4294901760
    %9668 = vmatpush.msra.mxu0 %v9667
    %v9669 = vand.u32 %v9396, 4294901760
    %9670 = vmatpush.msra.mxu0 %v9669
    %v9671 = vand.u32 %v9401, 4294901760
    %9672 = vmatmul.f32.gmra.mxu0 %v9671
    %v9673 = vpop.f32.mrf.mxu0
    %v9674 = vadd.f32 %v9637, %v9673
    %v9675 = vand.u32 %v9403, 4294901760
    %9676 = vmatmul.f32.gmra.mxu0 %v9675
    %v9677 = vpop.f32.mrf.mxu0
    %v9678 = vadd.f32 %v9641, %v9677
    %v9679 = vand.u32 %v9406, 4294901760
    %9680 = vmatmul.f32.gmra.mxu0 %v9679
    %v9681 = vpop.f32.mrf.mxu0
    %v9682 = vadd.f32 %v9645, %v9681
    %v9683 = vand.u32 %v9408, 4294901760
    %9684 = vmatmul.f32.gmra.mxu0 %v9683
    %v9685 = vpop.f32.mrf.mxu0
    %v9686 = vadd.f32 %v9649, %v9685
    %9687 = vdwg.mxu0
    %v9688 = vadd.f32 %v9371, %v9674
    %v9689 = vadd.f32 %v9375, %v9678
    %v9690 = vadd.f32 %v9379, %v9682
    %v9691 = vadd.f32 %v9383, %v9686
    %s9692 = scalar_lea.vmem %s4, 96
    %v9693 = vld [vmem:[%s9692] sm:$0xff]
    %v9694 = vld [vmem:[%s9692 + $0x8] sm:$0xff]
    %v9695 = vld [vmem:[%s9692 + $0x10] sm:$0xff]
    %v9696 = vld [vmem:[%s9692 + $0x18] sm:$0xff]
    %v9697 = vsel %vm8808, %v8769, 0
    %v9699 = vsel %vm8808, %v8770, 0
    %v9701 = vsel %vm8808, %v8771, 0
    %v9703 = vsel %vm8808, %v8772, 0
    %9705 = vmatpush.msra.mxu0 0.0
    %9706 = vmatpush.msra.mxu0 0.0
    %9707 = vmatpush.msra.mxu0 0.0
    %9708 = vmatpush.msra.mxu0 0.0
    %9709 = vmatpush.msra.mxu0 0.0
    %9710 = vmatpush.msra.mxu0 0.0
    %9711 = vmatpush.msra.mxu0 0.0
    %9712 = vmatpush.msra.mxu0 0.0
    %9713 = vmatpush.msra.mxu0 0.0
    %9714 = vmatpush.msra.mxu0 0.0
    %9715 = vmatpush.msra.mxu0 0.0
    %9716 = vmatpush.msra.mxu0 0.0
    %v9717 = vand.u32 %v9696, 4294901760
    %9718 = vmatpush.msra.mxu0 %v9717
    %v9719 = vand.u32 %v9695, 4294901760
    %9720 = vmatpush.msra.mxu0 %v9719
    %v9721 = vand.u32 %v9694, 4294901760
    %9722 = vmatpush.msra.mxu0 %v9721
    %v9723 = vand.u32 %v9693, 4294901760
    %9724 = vmatpush.msra.mxu0 %v9723
    %v9725 = vand.u32 %v9697, 4294901760
    %v9726 = vsub.f32 %v9697, %v9725
    %v9727 = vand.u32 %v9726, 4294901760
    %v9728 = vsub.f32 %v9726, %v9727
    %v9729 = vand.u32 %v9728, 4294901760
    %9730 = vmatmul.f32.gmra.mxu0 %v9729
    %v9731 = vpop.f32.mrf.mxu0
    %v9732 = vadd.f32 0.0, %v9731
    %v9733 = vand.u32 %v9699, 4294901760
    %v9734 = vsub.f32 %v9699, %v9733
    %v9735 = vand.u32 %v9734, 4294901760
    %v9736 = vsub.f32 %v9734, %v9735
    %v9737 = vand.u32 %v9736, 4294901760
    %9738 = vmatmul.f32.gmra.mxu0 %v9737
    %v9739 = vpop.f32.mrf.mxu0
    %v9740 = vadd.f32 0.0, %v9739
    %v9741 = vand.u32 %v9701, 4294901760
    %v9742 = vsub.f32 %v9701, %v9741
    %v9743 = vand.u32 %v9742, 4294901760
    %v9744 = vsub.f32 %v9742, %v9743
    %v9745 = vand.u32 %v9744, 4294901760
    %9746 = vmatmul.f32.gmra.mxu0 %v9745
    %v9747 = vpop.f32.mrf.mxu0
    %v9748 = vadd.f32 0.0, %v9747
    %v9749 = vand.u32 %v9703, 4294901760
    %v9750 = vsub.f32 %v9703, %v9749
    %v9751 = vand.u32 %v9750, 4294901760
    %v9752 = vsub.f32 %v9750, %v9751
    %v9753 = vand.u32 %v9752, 4294901760
    %9754 = vmatmul.f32.gmra.mxu0 %v9753
    %v9755 = vpop.f32.mrf.mxu0
    %v9756 = vadd.f32 0.0, %v9755
    %9757 = vdwg.mxu0
    %9758 = vmatpush.msra.mxu0 0.0
    %9759 = vmatpush.msra.mxu0 0.0
    %9760 = vmatpush.msra.mxu0 0.0
    %9761 = vmatpush.msra.mxu0 0.0
    %9762 = vmatpush.msra.mxu0 0.0
    %9763 = vmatpush.msra.mxu0 0.0
    %9764 = vmatpush.msra.mxu0 0.0
    %9765 = vmatpush.msra.mxu0 0.0
    %9766 = vmatpush.msra.mxu0 0.0
    %9767 = vmatpush.msra.mxu0 0.0
    %9768 = vmatpush.msra.mxu0 0.0
    %9769 = vmatpush.msra.mxu0 0.0
    %v9770 = vand.u32 %v9696, 4294901760
    %v9771 = vsub.f32 %v9696, %v9770
    %v9772 = vand.u32 %v9771, 4294901760
    %v9773 = vsub.f32 %v9771, %v9772
    %v9774 = vand.u32 %v9773, 4294901760
    %9775 = vmatpush.msra.mxu0 %v9774
    %v9776 = vand.u32 %v9695, 4294901760
    %v9777 = vsub.f32 %v9695, %v9776
    %v9778 = vand.u32 %v9777, 4294901760
    %v9779 = vsub.f32 %v9777, %v9778
    %v9780 = vand.u32 %v9779, 4294901760
    %9781 = vmatpush.msra.mxu0 %v9780
    %v9782 = vand.u32 %v9694, 4294901760
    %v9783 = vsub.f32 %v9694, %v9782
    %v9784 = vand.u32 %v9783, 4294901760
    %v9785 = vsub.f32 %v9783, %v9784
    %v9786 = vand.u32 %v9785, 4294901760
    %9787 = vmatpush.msra.mxu0 %v9786
    %v9788 = vand.u32 %v9693, 4294901760
    %v9789 = vsub.f32 %v9693, %v9788
    %v9790 = vand.u32 %v9789, 4294901760
    %v9791 = vsub.f32 %v9789, %v9790
    %v9792 = vand.u32 %v9791, 4294901760
    %9793 = vmatpush.msra.mxu0 %v9792
    %v9794 = vand.u32 %v9697, 4294901760
    %9795 = vmatmul.f32.gmra.mxu0 %v9794
    %v9796 = vpop.f32.mrf.mxu0
    %v9797 = vadd.f32 %v9732, %v9796
    %v9798 = vand.u32 %v9699, 4294901760
    %9799 = vmatmul.f32.gmra.mxu0 %v9798
    %v9800 = vpop.f32.mrf.mxu0
    %v9801 = vadd.f32 %v9740, %v9800
    %v9802 = vand.u32 %v9701, 4294901760
    %9803 = vmatmul.f32.gmra.mxu0 %v9802
    %v9804 = vpop.f32.mrf.mxu0
    %v9805 = vadd.f32 %v9748, %v9804
    %v9806 = vand.u32 %v9703, 4294901760
    %9807 = vmatmul.f32.gmra.mxu0 %v9806
    %v9808 = vpop.f32.mrf.mxu0
    %v9809 = vadd.f32 %v9756, %v9808
    %9810 = vdwg.mxu0
    %9811 = vmatpush.msra.mxu0 0.0
    %9812 = vmatpush.msra.mxu0 0.0
    %9813 = vmatpush.msra.mxu0 0.0
    %9814 = vmatpush.msra.mxu0 0.0
    %9815 = vmatpush.msra.mxu0 0.0
    %9816 = vmatpush.msra.mxu0 0.0
    %9817 = vmatpush.msra.mxu0 0.0
    %9818 = vmatpush.msra.mxu0 0.0
    %9819 = vmatpush.msra.mxu0 0.0
    %9820 = vmatpush.msra.mxu0 0.0
    %9821 = vmatpush.msra.mxu0 0.0
    %9822 = vmatpush.msra.mxu0 0.0
    %v9823 = vand.u32 %v9696, 4294901760
    %v9824 = vsub.f32 %v9696, %v9823
    %9825 = vmatpush.msra.mxu0 %v9824
    %v9826 = vand.u32 %v9695, 4294901760
    %v9827 = vsub.f32 %v9695, %v9826
    %9828 = vmatpush.msra.mxu0 %v9827
    %v9829 = vand.u32 %v9694, 4294901760
    %v9830 = vsub.f32 %v9694, %v9829
    %9831 = vmatpush.msra.mxu0 %v9830
    %v9832 = vand.u32 %v9693, 4294901760
    %v9833 = vsub.f32 %v9693, %v9832
    %9834 = vmatpush.msra.mxu0 %v9833
    %v9835 = vand.u32 %v9697, 4294901760
    %v9836 = vsub.f32 %v9697, %v9835
    %9837 = vmatmul.f32.gmra.mxu0 %v9836
    %v9838 = vpop.f32.mrf.mxu0
    %v9839 = vadd.f32 %v9797, %v9838
    %v9840 = vand.u32 %v9699, 4294901760
    %v9841 = vsub.f32 %v9699, %v9840
    %9842 = vmatmul.f32.gmra.mxu0 %v9841
    %v9843 = vpop.f32.mrf.mxu0
    %v9844 = vadd.f32 %v9801, %v9843
    %v9845 = vand.u32 %v9701, 4294901760
    %v9846 = vsub.f32 %v9701, %v9845
    %9847 = vmatmul.f32.gmra.mxu0 %v9846
    %v9848 = vpop.f32.mrf.mxu0
    %v9849 = vadd.f32 %v9805, %v9848
    %v9850 = vand.u32 %v9703, 4294901760
    %v9851 = vsub.f32 %v9703, %v9850
    %9852 = vmatmul.f32.gmra.mxu0 %v9851
    %v9853 = vpop.f32.mrf.mxu0
    %v9854 = vadd.f32 %v9809, %v9853
    %9855 = vdwg.mxu0
    %9856 = vmatpush.msra.mxu0 0.0
    %9857 = vmatpush.msra.mxu0 0.0
    %9858 = vmatpush.msra.mxu0 0.0
    %9859 = vmatpush.msra.mxu0 0.0
    %9860 = vmatpush.msra.mxu0 0.0
    %9861 = vmatpush.msra.mxu0 0.0
    %9862 = vmatpush.msra.mxu0 0.0
    %9863 = vmatpush.msra.mxu0 0.0
    %9864 = vmatpush.msra.mxu0 0.0
    %9865 = vmatpush.msra.mxu0 0.0
    %9866 = vmatpush.msra.mxu0 0.0
    %9867 = vmatpush.msra.mxu0 0.0
    %v9868 = vand.u32 %v9696, 4294901760
    %9869 = vmatpush.msra.mxu0 %v9868
    %v9870 = vand.u32 %v9695, 4294901760
    %9871 = vmatpush.msra.mxu0 %v9870
    %v9872 = vand.u32 %v9694, 4294901760
    %9873 = vmatpush.msra.mxu0 %v9872
    %v9874 = vand.u32 %v9693, 4294901760
    %9875 = vmatpush.msra.mxu0 %v9874
    %v9876 = vand.u32 %v9697, 4294901760
    %v9877 = vsub.f32 %v9697, %v9876
    %v9878 = vand.u32 %v9877, 4294901760
    %9879 = vmatmul.f32.gmra.mxu0 %v9878
    %v9880 = vpop.f32.mrf.mxu0
    %v9881 = vadd.f32 %v9839, %v9880
    %v9882 = vand.u32 %v9699, 4294901760
    %v9883 = vsub.f32 %v9699, %v9882
    %v9884 = vand.u32 %v9883, 4294901760
    %9885 = vmatmul.f32.gmra.mxu0 %v9884
    %v9886 = vpop.f32.mrf.mxu0
    %v9887 = vadd.f32 %v9844, %v9886
    %v9888 = vand.u32 %v9701, 4294901760
    %v9889 = vsub.f32 %v9701, %v9888
    %v9890 = vand.u32 %v9889, 4294901760
    %9891 = vmatmul.f32.gmra.mxu0 %v9890
    %v9892 = vpop.f32.mrf.mxu0
    %v9893 = vadd.f32 %v9849, %v9892
    %v9894 = vand.u32 %v9703, 4294901760
    %v9895 = vsub.f32 %v9703, %v9894
    %v9896 = vand.u32 %v9895, 4294901760
    %9897 = vmatmul.f32.gmra.mxu0 %v9896
    %v9898 = vpop.f32.mrf.mxu0
    %v9899 = vadd.f32 %v9854, %v9898
    %9900 = vdwg.mxu0
    %9901 = vmatpush.msra.mxu0 0.0
    %9902 = vmatpush.msra.mxu0 0.0
    %9903 = vmatpush.msra.mxu0 0.0
    %9904 = vmatpush.msra.mxu0 0.0
    %9905 = vmatpush.msra.mxu0 0.0
    %9906 = vmatpush.msra.mxu0 0.0
    %9907 = vmatpush.msra.mxu0 0.0
    %9908 = vmatpush.msra.mxu0 0.0
    %9909 = vmatpush.msra.mxu0 0.0
    %9910 = vmatpush.msra.mxu0 0.0
    %9911 = vmatpush.msra.mxu0 0.0
    %9912 = vmatpush.msra.mxu0 0.0
    %v9913 = vand.u32 %v9696, 4294901760
    %v9914 = vsub.f32 %v9696, %v9913
    %v9915 = vand.u32 %v9914, 4294901760
    %9916 = vmatpush.msra.mxu0 %v9915
    %v9917 = vand.u32 %v9695, 4294901760
    %v9918 = vsub.f32 %v9695, %v9917
    %v9919 = vand.u32 %v9918, 4294901760
    %9920 = vmatpush.msra.mxu0 %v9919
    %v9921 = vand.u32 %v9694, 4294901760
    %v9922 = vsub.f32 %v9694, %v9921
    %v9923 = vand.u32 %v9922, 4294901760
    %9924 = vmatpush.msra.mxu0 %v9923
    %v9925 = vand.u32 %v9693, 4294901760
    %v9926 = vsub.f32 %v9693, %v9925
    %v9927 = vand.u32 %v9926, 4294901760
    %9928 = vmatpush.msra.mxu0 %v9927
    %v9929 = vand.u32 %v9697, 4294901760
    %9930 = vmatmul.f32.gmra.mxu0 %v9929
    %v9931 = vpop.f32.mrf.mxu0
    %v9932 = vadd.f32 %v9881, %v9931
    %v9933 = vand.u32 %v9699, 4294901760
    %9934 = vmatmul.f32.gmra.mxu0 %v9933
    %v9935 = vpop.f32.mrf.mxu0
    %v9936 = vadd.f32 %v9887, %v9935
    %v9937 = vand.u32 %v9701, 4294901760
    %9938 = vmatmul.f32.gmra.mxu0 %v9937
    %v9939 = vpop.f32.mrf.mxu0
    %v9940 = vadd.f32 %v9893, %v9939
    %v9941 = vand.u32 %v9703, 4294901760
    %9942 = vmatmul.f32.gmra.mxu0 %v9941
    %v9943 = vpop.f32.mrf.mxu0
    %v9944 = vadd.f32 %v9899, %v9943
    %9945 = vdwg.mxu0
    %9946 = vmatpush.msra.mxu0 0.0
    %9947 = vmatpush.msra.mxu0 0.0
    %9948 = vmatpush.msra.mxu0 0.0
    %9949 = vmatpush.msra.mxu0 0.0
    %9950 = vmatpush.msra.mxu0 0.0
    %9951 = vmatpush.msra.mxu0 0.0
    %9952 = vmatpush.msra.mxu0 0.0
    %9953 = vmatpush.msra.mxu0 0.0
    %9954 = vmatpush.msra.mxu0 0.0
    %9955 = vmatpush.msra.mxu0 0.0
    %9956 = vmatpush.msra.mxu0 0.0
    %9957 = vmatpush.msra.mxu0 0.0
    %v9958 = vand.u32 %v9696, 4294901760
    %9959 = vmatpush.msra.mxu0 %v9958
    %v9960 = vand.u32 %v9695, 4294901760
    %9961 = vmatpush.msra.mxu0 %v9960
    %v9962 = vand.u32 %v9694, 4294901760
    %9963 = vmatpush.msra.mxu0 %v9962
    %v9964 = vand.u32 %v9693, 4294901760
    %9965 = vmatpush.msra.mxu0 %v9964
    %v9966 = vand.u32 %v9697, 4294901760
    %9967 = vmatmul.f32.gmra.mxu0 %v9966
    %v9968 = vpop.f32.mrf.mxu0
    %v9969 = vadd.f32 %v9932, %v9968
    %v9970 = vand.u32 %v9699, 4294901760
    %9971 = vmatmul.f32.gmra.mxu0 %v9970
    %v9972 = vpop.f32.mrf.mxu0
    %v9973 = vadd.f32 %v9936, %v9972
    %v9974 = vand.u32 %v9701, 4294901760
    %9975 = vmatmul.f32.gmra.mxu0 %v9974
    %v9976 = vpop.f32.mrf.mxu0
    %v9977 = vadd.f32 %v9940, %v9976
    %v9978 = vand.u32 %v9703, 4294901760
    %9979 = vmatmul.f32.gmra.mxu0 %v9978
    %v9980 = vpop.f32.mrf.mxu0
    %v9981 = vadd.f32 %v9944, %v9980
    %9982 = vdwg.mxu0
    %v9983 = vadd.f32 %v9688, %v9969
    %v9984 = vadd.f32 %v9689, %v9973
    %v9985 = vadd.f32 %v9690, %v9977
    %v9986 = vadd.f32 %v9691, %v9981
    %v9987 = vrot.slane %v8769, 1
    %v9988 = vrot.slane %v8770, 1
    %v9989 = vsel %vm1170, %v9987, %v9988
    %v9990 = vrot.slane %v8771, 1
    %v9991 = vrot.slane %v8772, 1
    %v9992 = vsel %vm1170, %v9990, %v9991
    %v9995 = vsel %vm1170, %v9988, 0.0
    %v9996 = vsel %vm1170, %v9991, 0.0
    %s9997 = scalar_lea.vmem %s4, 128
    %v9998 = vld [vmem:[%s9997] sm:$0xff]
    %v9999 = vld [vmem:[%s9997 + $0x8] sm:$0xff]
    %v10000 = vld [vmem:[%s9997 + $0x10] sm:$0xff]
    %v10001 = vld [vmem:[%s9997 + $0x18] sm:$0xff]
    %v10002 = vsel %vm8808, %v9989, 0
    %v10005 = vsel %vm8808, %v9995, 0
    %v10007 = vsel %vm8808, %v9992, 0
    %v10010 = vsel %vm8808, %v9996, 0
    %10012 = vmatpush.msra.mxu0 0.0
    %10013 = vmatpush.msra.mxu0 0.0
    %10014 = vmatpush.msra.mxu0 0.0
    %10015 = vmatpush.msra.mxu0 0.0
    %10016 = vmatpush.msra.mxu0 0.0
    %10017 = vmatpush.msra.mxu0 0.0
    %10018 = vmatpush.msra.mxu0 0.0
    %10019 = vmatpush.msra.mxu0 0.0
    %10020 = vmatpush.msra.mxu0 0.0
    %10021 = vmatpush.msra.mxu0 0.0
    %10022 = vmatpush.msra.mxu0 0.0
    %10023 = vmatpush.msra.mxu0 0.0
    %v10024 = vand.u32 %v10001, 4294901760
    %10025 = vmatpush.msra.mxu0 %v10024
    %v10026 = vand.u32 %v10000, 4294901760
    %10027 = vmatpush.msra.mxu0 %v10026
    %v10028 = vand.u32 %v9999, 4294901760
    %10029 = vmatpush.msra.mxu0 %v10028
    %v10030 = vand.u32 %v9998, 4294901760
    %10031 = vmatpush.msra.mxu0 %v10030
    %v10032 = vand.u32 %v10002, 4294901760
    %v10033 = vsub.f32 %v10002, %v10032
    %v10034 = vand.u32 %v10033, 4294901760
    %v10035 = vsub.f32 %v10033, %v10034
    %v10036 = vand.u32 %v10035, 4294901760
    %10037 = vmatmul.f32.gmra.mxu0 %v10036
    %v10038 = vpop.f32.mrf.mxu0
    %v10039 = vadd.f32 0.0, %v10038
    %v10040 = vand.u32 %v10005, 4294901760
    %v10041 = vsub.f32 %v10005, %v10040
    %v10042 = vand.u32 %v10041, 4294901760
    %v10043 = vsub.f32 %v10041, %v10042
    %v10044 = vand.u32 %v10043, 4294901760
    %10045 = vmatmul.f32.gmra.mxu0 %v10044
    %v10046 = vpop.f32.mrf.mxu0
    %v10047 = vadd.f32 0.0, %v10046
    %v10048 = vand.u32 %v10007, 4294901760
    %v10049 = vsub.f32 %v10007, %v10048
    %v10050 = vand.u32 %v10049, 4294901760
    %v10051 = vsub.f32 %v10049, %v10050
    %v10052 = vand.u32 %v10051, 4294901760
    %10053 = vmatmul.f32.gmra.mxu0 %v10052
    %v10054 = vpop.f32.mrf.mxu0
    %v10055 = vadd.f32 0.0, %v10054
    %v10056 = vand.u32 %v10010, 4294901760
    %v10057 = vsub.f32 %v10010, %v10056
    %v10058 = vand.u32 %v10057, 4294901760
    %v10059 = vsub.f32 %v10057, %v10058
    %v10060 = vand.u32 %v10059, 4294901760
    %10061 = vmatmul.f32.gmra.mxu0 %v10060
    %v10062 = vpop.f32.mrf.mxu0
    %v10063 = vadd.f32 0.0, %v10062
    %10064 = vdwg.mxu0
    %10065 = vmatpush.msra.mxu0 0.0
    %10066 = vmatpush.msra.mxu0 0.0
    %10067 = vmatpush.msra.mxu0 0.0
    %10068 = vmatpush.msra.mxu0 0.0
    %10069 = vmatpush.msra.mxu0 0.0
    %10070 = vmatpush.msra.mxu0 0.0
    %10071 = vmatpush.msra.mxu0 0.0
    %10072 = vmatpush.msra.mxu0 0.0
    %10073 = vmatpush.msra.mxu0 0.0
    %10074 = vmatpush.msra.mxu0 0.0
    %10075 = vmatpush.msra.mxu0 0.0
    %10076 = vmatpush.msra.mxu0 0.0
    %v10077 = vand.u32 %v10001, 4294901760
    %v10078 = vsub.f32 %v10001, %v10077
    %v10079 = vand.u32 %v10078, 4294901760
    %v10080 = vsub.f32 %v10078, %v10079
    %v10081 = vand.u32 %v10080, 4294901760
    %10082 = vmatpush.msra.mxu0 %v10081
    %v10083 = vand.u32 %v10000, 4294901760
    %v10084 = vsub.f32 %v10000, %v10083
    %v10085 = vand.u32 %v10084, 4294901760
    %v10086 = vsub.f32 %v10084, %v10085
    %v10087 = vand.u32 %v10086, 4294901760
    %10088 = vmatpush.msra.mxu0 %v10087
    %v10089 = vand.u32 %v9999, 4294901760
    %v10090 = vsub.f32 %v9999, %v10089
    %v10091 = vand.u32 %v10090, 4294901760
    %v10092 = vsub.f32 %v10090, %v10091
    %v10093 = vand.u32 %v10092, 4294901760
    %10094 = vmatpush.msra.mxu0 %v10093
    %v10095 = vand.u32 %v9998, 4294901760
    %v10096 = vsub.f32 %v9998, %v10095
    %v10097 = vand.u32 %v10096, 4294901760
    %v10098 = vsub.f32 %v10096, %v10097
    %v10099 = vand.u32 %v10098, 4294901760
    %10100 = vmatpush.msra.mxu0 %v10099
    %v10101 = vand.u32 %v10002, 4294901760
    %10102 = vmatmul.f32.gmra.mxu0 %v10101
    %v10103 = vpop.f32.mrf.mxu0
    %v10104 = vadd.f32 %v10039, %v10103
    %v10105 = vand.u32 %v10005, 4294901760
    %10106 = vmatmul.f32.gmra.mxu0 %v10105
    %v10107 = vpop.f32.mrf.mxu0
    %v10108 = vadd.f32 %v10047, %v10107
    %v10109 = vand.u32 %v10007, 4294901760
    %10110 = vmatmul.f32.gmra.mxu0 %v10109
    %v10111 = vpop.f32.mrf.mxu0
    %v10112 = vadd.f32 %v10055, %v10111
    %v10113 = vand.u32 %v10010, 4294901760
    %10114 = vmatmul.f32.gmra.mxu0 %v10113
    %v10115 = vpop.f32.mrf.mxu0
    %v10116 = vadd.f32 %v10063, %v10115
    %10117 = vdwg.mxu0
    %10118 = vmatpush.msra.mxu0 0.0
    %10119 = vmatpush.msra.mxu0 0.0
    %10120 = vmatpush.msra.mxu0 0.0
    %10121 = vmatpush.msra.mxu0 0.0
    %10122 = vmatpush.msra.mxu0 0.0
    %10123 = vmatpush.msra.mxu0 0.0
    %10124 = vmatpush.msra.mxu0 0.0
    %10125 = vmatpush.msra.mxu0 0.0
    %10126 = vmatpush.msra.mxu0 0.0
    %10127 = vmatpush.msra.mxu0 0.0
    %10128 = vmatpush.msra.mxu0 0.0
    %10129 = vmatpush.msra.mxu0 0.0
    %v10130 = vand.u32 %v10001, 4294901760
    %v10131 = vsub.f32 %v10001, %v10130
    %10132 = vmatpush.msra.mxu0 %v10131
    %v10133 = vand.u32 %v10000, 4294901760
    %v10134 = vsub.f32 %v10000, %v10133
    %10135 = vmatpush.msra.mxu0 %v10134
    %v10136 = vand.u32 %v9999, 4294901760
    %v10137 = vsub.f32 %v9999, %v10136
    %10138 = vmatpush.msra.mxu0 %v10137
    %v10139 = vand.u32 %v9998, 4294901760
    %v10140 = vsub.f32 %v9998, %v10139
    %10141 = vmatpush.msra.mxu0 %v10140
    %v10142 = vand.u32 %v10002, 4294901760
    %v10143 = vsub.f32 %v10002, %v10142
    %10144 = vmatmul.f32.gmra.mxu0 %v10143
    %v10145 = vpop.f32.mrf.mxu0
    %v10146 = vadd.f32 %v10104, %v10145
    %v10147 = vand.u32 %v10005, 4294901760
    %v10148 = vsub.f32 %v10005, %v10147
    %10149 = vmatmul.f32.gmra.mxu0 %v10148
    %v10150 = vpop.f32.mrf.mxu0
    %v10151 = vadd.f32 %v10108, %v10150
    %v10152 = vand.u32 %v10007, 4294901760
    %v10153 = vsub.f32 %v10007, %v10152
    %10154 = vmatmul.f32.gmra.mxu0 %v10153
    %v10155 = vpop.f32.mrf.mxu0
    %v10156 = vadd.f32 %v10112, %v10155
    %v10157 = vand.u32 %v10010, 4294901760
    %v10158 = vsub.f32 %v10010, %v10157
    %10159 = vmatmul.f32.gmra.mxu0 %v10158
    %v10160 = vpop.f32.mrf.mxu0
    %v10161 = vadd.f32 %v10116, %v10160
    %10162 = vdwg.mxu0
    %10163 = vmatpush.msra.mxu0 0.0
    %10164 = vmatpush.msra.mxu0 0.0
    %10165 = vmatpush.msra.mxu0 0.0
    %10166 = vmatpush.msra.mxu0 0.0
    %10167 = vmatpush.msra.mxu0 0.0
    %10168 = vmatpush.msra.mxu0 0.0
    %10169 = vmatpush.msra.mxu0 0.0
    %10170 = vmatpush.msra.mxu0 0.0
    %10171 = vmatpush.msra.mxu0 0.0
    %10172 = vmatpush.msra.mxu0 0.0
    %10173 = vmatpush.msra.mxu0 0.0
    %10174 = vmatpush.msra.mxu0 0.0
    %v10175 = vand.u32 %v10001, 4294901760
    %10176 = vmatpush.msra.mxu0 %v10175
    %v10177 = vand.u32 %v10000, 4294901760
    %10178 = vmatpush.msra.mxu0 %v10177
    %v10179 = vand.u32 %v9999, 4294901760
    %10180 = vmatpush.msra.mxu0 %v10179
    %v10181 = vand.u32 %v9998, 4294901760
    %10182 = vmatpush.msra.mxu0 %v10181
    %v10183 = vand.u32 %v10002, 4294901760
    %v10184 = vsub.f32 %v10002, %v10183
    %v10185 = vand.u32 %v10184, 4294901760
    %10186 = vmatmul.f32.gmra.mxu0 %v10185
    %v10187 = vpop.f32.mrf.mxu0
    %v10188 = vadd.f32 %v10146, %v10187
    %v10189 = vand.u32 %v10005, 4294901760
    %v10190 = vsub.f32 %v10005, %v10189
    %v10191 = vand.u32 %v10190, 4294901760
    %10192 = vmatmul.f32.gmra.mxu0 %v10191
    %v10193 = vpop.f32.mrf.mxu0
    %v10194 = vadd.f32 %v10151, %v10193
    %v10195 = vand.u32 %v10007, 4294901760
    %v10196 = vsub.f32 %v10007, %v10195
    %v10197 = vand.u32 %v10196, 4294901760
    %10198 = vmatmul.f32.gmra.mxu0 %v10197
    %v10199 = vpop.f32.mrf.mxu0
    %v10200 = vadd.f32 %v10156, %v10199
    %v10201 = vand.u32 %v10010, 4294901760
    %v10202 = vsub.f32 %v10010, %v10201
    %v10203 = vand.u32 %v10202, 4294901760
    %10204 = vmatmul.f32.gmra.mxu0 %v10203
    %v10205 = vpop.f32.mrf.mxu0
    %v10206 = vadd.f32 %v10161, %v10205
    %10207 = vdwg.mxu0
    %10208 = vmatpush.msra.mxu0 0.0
    %10209 = vmatpush.msra.mxu0 0.0
    %10210 = vmatpush.msra.mxu0 0.0
    %10211 = vmatpush.msra.mxu0 0.0
    %10212 = vmatpush.msra.mxu0 0.0
    %10213 = vmatpush.msra.mxu0 0.0
    %10214 = vmatpush.msra.mxu0 0.0
    %10215 = vmatpush.msra.mxu0 0.0
    %10216 = vmatpush.msra.mxu0 0.0
    %10217 = vmatpush.msra.mxu0 0.0
    %10218 = vmatpush.msra.mxu0 0.0
    %10219 = vmatpush.msra.mxu0 0.0
    %v10220 = vand.u32 %v10001, 4294901760
    %v10221 = vsub.f32 %v10001, %v10220
    %v10222 = vand.u32 %v10221, 4294901760
    %10223 = vmatpush.msra.mxu0 %v10222
    %v10224 = vand.u32 %v10000, 4294901760
    %v10225 = vsub.f32 %v10000, %v10224
    %v10226 = vand.u32 %v10225, 4294901760
    %10227 = vmatpush.msra.mxu0 %v10226
    %v10228 = vand.u32 %v9999, 4294901760
    %v10229 = vsub.f32 %v9999, %v10228
    %v10230 = vand.u32 %v10229, 4294901760
    %10231 = vmatpush.msra.mxu0 %v10230
    %v10232 = vand.u32 %v9998, 4294901760
    %v10233 = vsub.f32 %v9998, %v10232
    %v10234 = vand.u32 %v10233, 4294901760
    %10235 = vmatpush.msra.mxu0 %v10234
    %v10236 = vand.u32 %v10002, 4294901760
    %10237 = vmatmul.f32.gmra.mxu0 %v10236
    %v10238 = vpop.f32.mrf.mxu0
    %v10239 = vadd.f32 %v10188, %v10238
    %v10240 = vand.u32 %v10005, 4294901760
    %10241 = vmatmul.f32.gmra.mxu0 %v10240
    %v10242 = vpop.f32.mrf.mxu0
    %v10243 = vadd.f32 %v10194, %v10242
    %v10244 = vand.u32 %v10007, 4294901760
    %10245 = vmatmul.f32.gmra.mxu0 %v10244
    %v10246 = vpop.f32.mrf.mxu0
    %v10247 = vadd.f32 %v10200, %v10246
    %v10248 = vand.u32 %v10010, 4294901760
    %10249 = vmatmul.f32.gmra.mxu0 %v10248
    %v10250 = vpop.f32.mrf.mxu0
    %v10251 = vadd.f32 %v10206, %v10250
    %10252 = vdwg.mxu0
    %10253 = vmatpush.msra.mxu0 0.0
    %10254 = vmatpush.msra.mxu0 0.0
    %10255 = vmatpush.msra.mxu0 0.0
    %10256 = vmatpush.msra.mxu0 0.0
    %10257 = vmatpush.msra.mxu0 0.0
    %10258 = vmatpush.msra.mxu0 0.0
    %10259 = vmatpush.msra.mxu0 0.0
    %10260 = vmatpush.msra.mxu0 0.0
    %10261 = vmatpush.msra.mxu0 0.0
    %10262 = vmatpush.msra.mxu0 0.0
    %10263 = vmatpush.msra.mxu0 0.0
    %10264 = vmatpush.msra.mxu0 0.0
    %v10265 = vand.u32 %v10001, 4294901760
    %10266 = vmatpush.msra.mxu0 %v10265
    %v10267 = vand.u32 %v10000, 4294901760
    %10268 = vmatpush.msra.mxu0 %v10267
    %v10269 = vand.u32 %v9999, 4294901760
    %10270 = vmatpush.msra.mxu0 %v10269
    %v10271 = vand.u32 %v9998, 4294901760
    %10272 = vmatpush.msra.mxu0 %v10271
    %v10273 = vand.u32 %v10002, 4294901760
    %10274 = vmatmul.f32.gmra.mxu0 %v10273
    %v10275 = vpop.f32.mrf.mxu0
    %v10276 = vadd.f32 %v10239, %v10275
    %v10277 = vand.u32 %v10005, 4294901760
    %10278 = vmatmul.f32.gmra.mxu0 %v10277
    %v10279 = vpop.f32.mrf.mxu0
    %v10280 = vadd.f32 %v10243, %v10279
    %v10281 = vand.u32 %v10007, 4294901760
    %10282 = vmatmul.f32.gmra.mxu0 %v10281
    %v10283 = vpop.f32.mrf.mxu0
    %v10284 = vadd.f32 %v10247, %v10283
    %v10285 = vand.u32 %v10010, 4294901760
    %10286 = vmatmul.f32.gmra.mxu0 %v10285
    %v10287 = vpop.f32.mrf.mxu0
    %v10288 = vadd.f32 %v10251, %v10287
    %10289 = vdwg.mxu0
    %v10290 = vadd.f32 %v9983, %v10276
    %v10291 = vadd.f32 %v9984, %v10280
    %v10292 = vadd.f32 %v9985, %v10284
    %v10293 = vadd.f32 %v9986, %v10288
    %vm10294 = vcmask 1045504
    %v10295 = vrot.slane %v8769, 2
    %v10296 = vrot.slane %v8770, 2
    %v10297 = vsel %vm10294, %v10295, %v10296
    %v10298 = vrot.slane %v8771, 2
    %v10299 = vrot.slane %v8772, 2
    %v10300 = vsel %vm10294, %v10298, %v10299
    %v10303 = vsel %vm10294, %v10296, 0.0
    %v10304 = vsel %vm10294, %v10299, 0.0
    %s10305 = scalar_lea.vmem %s4, 160
    %v10306 = vld [vmem:[%s10305] sm:$0xff]
    %v10307 = vld [vmem:[%s10305 + $0x8] sm:$0xff]
    %v10308 = vld [vmem:[%s10305 + $0x10] sm:$0xff]
    %v10309 = vld [vmem:[%s10305 + $0x18] sm:$0xff]
    %v10310 = vsel %vm8808, %v10297, 0
    %v10313 = vsel %vm8808, %v10303, 0
    %v10315 = vsel %vm8808, %v10300, 0
    %v10318 = vsel %vm8808, %v10304, 0
    %10320 = vmatpush.msra.mxu0 0.0
    %10321 = vmatpush.msra.mxu0 0.0
    %10322 = vmatpush.msra.mxu0 0.0
    %10323 = vmatpush.msra.mxu0 0.0
    %10324 = vmatpush.msra.mxu0 0.0
    %10325 = vmatpush.msra.mxu0 0.0
    %10326 = vmatpush.msra.mxu0 0.0
    %10327 = vmatpush.msra.mxu0 0.0
    %10328 = vmatpush.msra.mxu0 0.0
    %10329 = vmatpush.msra.mxu0 0.0
    %10330 = vmatpush.msra.mxu0 0.0
    %10331 = vmatpush.msra.mxu0 0.0
    %v10332 = vand.u32 %v10309, 4294901760
    %10333 = vmatpush.msra.mxu0 %v10332
    %v10334 = vand.u32 %v10308, 4294901760
    %10335 = vmatpush.msra.mxu0 %v10334
    %v10336 = vand.u32 %v10307, 4294901760
    %10337 = vmatpush.msra.mxu0 %v10336
    %v10338 = vand.u32 %v10306, 4294901760
    %10339 = vmatpush.msra.mxu0 %v10338
    %v10340 = vand.u32 %v10310, 4294901760
    %v10341 = vsub.f32 %v10310, %v10340
    %v10342 = vand.u32 %v10341, 4294901760
    %v10343 = vsub.f32 %v10341, %v10342
    %v10344 = vand.u32 %v10343, 4294901760
    %10345 = vmatmul.f32.gmra.mxu0 %v10344
    %v10346 = vpop.f32.mrf.mxu0
    %v10347 = vadd.f32 0.0, %v10346
    %v10348 = vand.u32 %v10313, 4294901760
    %v10349 = vsub.f32 %v10313, %v10348
    %v10350 = vand.u32 %v10349, 4294901760
    %v10351 = vsub.f32 %v10349, %v10350
    %v10352 = vand.u32 %v10351, 4294901760
    %10353 = vmatmul.f32.gmra.mxu0 %v10352
    %v10354 = vpop.f32.mrf.mxu0
    %v10355 = vadd.f32 0.0, %v10354
    %v10356 = vand.u32 %v10315, 4294901760
    %v10357 = vsub.f32 %v10315, %v10356
    %v10358 = vand.u32 %v10357, 4294901760
    %v10359 = vsub.f32 %v10357, %v10358
    %v10360 = vand.u32 %v10359, 4294901760
    %10361 = vmatmul.f32.gmra.mxu0 %v10360
    %v10362 = vpop.f32.mrf.mxu0
    %v10363 = vadd.f32 0.0, %v10362
    %v10364 = vand.u32 %v10318, 4294901760
    %v10365 = vsub.f32 %v10318, %v10364
    %v10366 = vand.u32 %v10365, 4294901760
    %v10367 = vsub.f32 %v10365, %v10366
    %v10368 = vand.u32 %v10367, 4294901760
    %10369 = vmatmul.f32.gmra.mxu0 %v10368
    %v10370 = vpop.f32.mrf.mxu0
    %v10371 = vadd.f32 0.0, %v10370
    %10372 = vdwg.mxu0
    %10373 = vmatpush.msra.mxu0 0.0
    %10374 = vmatpush.msra.mxu0 0.0
    %10375 = vmatpush.msra.mxu0 0.0
    %10376 = vmatpush.msra.mxu0 0.0
    %10377 = vmatpush.msra.mxu0 0.0
    %10378 = vmatpush.msra.mxu0 0.0
    %10379 = vmatpush.msra.mxu0 0.0
    %10380 = vmatpush.msra.mxu0 0.0
    %10381 = vmatpush.msra.mxu0 0.0
    %10382 = vmatpush.msra.mxu0 0.0
    %10383 = vmatpush.msra.mxu0 0.0
    %10384 = vmatpush.msra.mxu0 0.0
    %v10385 = vand.u32 %v10309, 4294901760
    %v10386 = vsub.f32 %v10309, %v10385
    %v10387 = vand.u32 %v10386, 4294901760
    %v10388 = vsub.f32 %v10386, %v10387
    %v10389 = vand.u32 %v10388, 4294901760
    %10390 = vmatpush.msra.mxu0 %v10389
    %v10391 = vand.u32 %v10308, 4294901760
    %v10392 = vsub.f32 %v10308, %v10391
    %v10393 = vand.u32 %v10392, 4294901760
    %v10394 = vsub.f32 %v10392, %v10393
    %v10395 = vand.u32 %v10394, 4294901760
    %10396 = vmatpush.msra.mxu0 %v10395
    %v10397 = vand.u32 %v10307, 4294901760
    %v10398 = vsub.f32 %v10307, %v10397
    %v10399 = vand.u32 %v10398, 4294901760
    %v10400 = vsub.f32 %v10398, %v10399
    %v10401 = vand.u32 %v10400, 4294901760
    %10402 = vmatpush.msra.mxu0 %v10401
    %v10403 = vand.u32 %v10306, 4294901760
    %v10404 = vsub.f32 %v10306, %v10403
    %v10405 = vand.u32 %v10404, 4294901760
    %v10406 = vsub.f32 %v10404, %v10405
    %v10407 = vand.u32 %v10406, 4294901760
    %10408 = vmatpush.msra.mxu0 %v10407
    %v10409 = vand.u32 %v10310, 4294901760
    %10410 = vmatmul.f32.gmra.mxu0 %v10409
    %v10411 = vpop.f32.mrf.mxu0
    %v10412 = vadd.f32 %v10347, %v10411
    %v10413 = vand.u32 %v10313, 4294901760
    %10414 = vmatmul.f32.gmra.mxu0 %v10413
    %v10415 = vpop.f32.mrf.mxu0
    %v10416 = vadd.f32 %v10355, %v10415
    %v10417 = vand.u32 %v10315, 4294901760
    %10418 = vmatmul.f32.gmra.mxu0 %v10417
    %v10419 = vpop.f32.mrf.mxu0
    %v10420 = vadd.f32 %v10363, %v10419
    %v10421 = vand.u32 %v10318, 4294901760
    %10422 = vmatmul.f32.gmra.mxu0 %v10421
    %v10423 = vpop.f32.mrf.mxu0
    %v10424 = vadd.f32 %v10371, %v10423
    %10425 = vdwg.mxu0
    %10426 = vmatpush.msra.mxu0 0.0
    %10427 = vmatpush.msra.mxu0 0.0
    %10428 = vmatpush.msra.mxu0 0.0
    %10429 = vmatpush.msra.mxu0 0.0
    %10430 = vmatpush.msra.mxu0 0.0
    %10431 = vmatpush.msra.mxu0 0.0
    %10432 = vmatpush.msra.mxu0 0.0
    %10433 = vmatpush.msra.mxu0 0.0
    %10434 = vmatpush.msra.mxu0 0.0
    %10435 = vmatpush.msra.mxu0 0.0
    %10436 = vmatpush.msra.mxu0 0.0
    %10437 = vmatpush.msra.mxu0 0.0
    %v10438 = vand.u32 %v10309, 4294901760
    %v10439 = vsub.f32 %v10309, %v10438
    %10440 = vmatpush.msra.mxu0 %v10439
    %v10441 = vand.u32 %v10308, 4294901760
    %v10442 = vsub.f32 %v10308, %v10441
    %10443 = vmatpush.msra.mxu0 %v10442
    %v10444 = vand.u32 %v10307, 4294901760
    %v10445 = vsub.f32 %v10307, %v10444
    %10446 = vmatpush.msra.mxu0 %v10445
    %v10447 = vand.u32 %v10306, 4294901760
    %v10448 = vsub.f32 %v10306, %v10447
    %10449 = vmatpush.msra.mxu0 %v10448
    %v10450 = vand.u32 %v10310, 4294901760
    %v10451 = vsub.f32 %v10310, %v10450
    %10452 = vmatmul.f32.gmra.mxu0 %v10451
    %v10453 = vpop.f32.mrf.mxu0
    %v10454 = vadd.f32 %v10412, %v10453
    %v10455 = vand.u32 %v10313, 4294901760
    %v10456 = vsub.f32 %v10313, %v10455
    %10457 = vmatmul.f32.gmra.mxu0 %v10456
    %v10458 = vpop.f32.mrf.mxu0
    %v10459 = vadd.f32 %v10416, %v10458
    %v10460 = vand.u32 %v10315, 4294901760
    %v10461 = vsub.f32 %v10315, %v10460
    %10462 = vmatmul.f32.gmra.mxu0 %v10461
    %v10463 = vpop.f32.mrf.mxu0
    %v10464 = vadd.f32 %v10420, %v10463
    %v10465 = vand.u32 %v10318, 4294901760
    %v10466 = vsub.f32 %v10318, %v10465
    %10467 = vmatmul.f32.gmra.mxu0 %v10466
    %v10468 = vpop.f32.mrf.mxu0
    %v10469 = vadd.f32 %v10424, %v10468
    %10470 = vdwg.mxu0
    %10471 = vmatpush.msra.mxu0 0.0
    %10472 = vmatpush.msra.mxu0 0.0
    %10473 = vmatpush.msra.mxu0 0.0
    %10474 = vmatpush.msra.mxu0 0.0
    %10475 = vmatpush.msra.mxu0 0.0
    %10476 = vmatpush.msra.mxu0 0.0
    %10477 = vmatpush.msra.mxu0 0.0
    %10478 = vmatpush.msra.mxu0 0.0
    %10479 = vmatpush.msra.mxu0 0.0
    %10480 = vmatpush.msra.mxu0 0.0
    %10481 = vmatpush.msra.mxu0 0.0
    %10482 = vmatpush.msra.mxu0 0.0
    %v10483 = vand.u32 %v10309, 4294901760
    %10484 = vmatpush.msra.mxu0 %v10483
    %v10485 = vand.u32 %v10308, 4294901760
    %10486 = vmatpush.msra.mxu0 %v10485
    %v10487 = vand.u32 %v10307, 4294901760
    %10488 = vmatpush.msra.mxu0 %v10487
    %v10489 = vand.u32 %v10306, 4294901760
    %10490 = vmatpush.msra.mxu0 %v10489
    %v10491 = vand.u32 %v10310, 4294901760
    %v10492 = vsub.f32 %v10310, %v10491
    %v10493 = vand.u32 %v10492, 4294901760
    %10494 = vmatmul.f32.gmra.mxu0 %v10493
    %v10495 = vpop.f32.mrf.mxu0
    %v10496 = vadd.f32 %v10454, %v10495
    %v10497 = vand.u32 %v10313, 4294901760
    %v10498 = vsub.f32 %v10313, %v10497
    %v10499 = vand.u32 %v10498, 4294901760
    %10500 = vmatmul.f32.gmra.mxu0 %v10499
    %v10501 = vpop.f32.mrf.mxu0
    %v10502 = vadd.f32 %v10459, %v10501
    %v10503 = vand.u32 %v10315, 4294901760
    %v10504 = vsub.f32 %v10315, %v10503
    %v10505 = vand.u32 %v10504, 4294901760
    %10506 = vmatmul.f32.gmra.mxu0 %v10505
    %v10507 = vpop.f32.mrf.mxu0
    %v10508 = vadd.f32 %v10464, %v10507
    %v10509 = vand.u32 %v10318, 4294901760
    %v10510 = vsub.f32 %v10318, %v10509
    %v10511 = vand.u32 %v10510, 4294901760
    %10512 = vmatmul.f32.gmra.mxu0 %v10511
    %v10513 = vpop.f32.mrf.mxu0
    %v10514 = vadd.f32 %v10469, %v10513
    %10515 = vdwg.mxu0
    %10516 = vmatpush.msra.mxu0 0.0
    %10517 = vmatpush.msra.mxu0 0.0
    %10518 = vmatpush.msra.mxu0 0.0
    %10519 = vmatpush.msra.mxu0 0.0
    %10520 = vmatpush.msra.mxu0 0.0
    %10521 = vmatpush.msra.mxu0 0.0
    %10522 = vmatpush.msra.mxu0 0.0
    %10523 = vmatpush.msra.mxu0 0.0
    %10524 = vmatpush.msra.mxu0 0.0
    %10525 = vmatpush.msra.mxu0 0.0
    %10526 = vmatpush.msra.mxu0 0.0
    %10527 = vmatpush.msra.mxu0 0.0
    %v10528 = vand.u32 %v10309, 4294901760
    %v10529 = vsub.f32 %v10309, %v10528
    %v10530 = vand.u32 %v10529, 4294901760
    %10531 = vmatpush.msra.mxu0 %v10530
    %v10532 = vand.u32 %v10308, 4294901760
    %v10533 = vsub.f32 %v10308, %v10532
    %v10534 = vand.u32 %v10533, 4294901760
    %10535 = vmatpush.msra.mxu0 %v10534
    %v10536 = vand.u32 %v10307, 4294901760
    %v10537 = vsub.f32 %v10307, %v10536
    %v10538 = vand.u32 %v10537, 4294901760
    %10539 = vmatpush.msra.mxu0 %v10538
    %v10540 = vand.u32 %v10306, 4294901760
    %v10541 = vsub.f32 %v10306, %v10540
    %v10542 = vand.u32 %v10541, 4294901760
    %10543 = vmatpush.msra.mxu0 %v10542
    %v10544 = vand.u32 %v10310, 4294901760
    %10545 = vmatmul.f32.gmra.mxu0 %v10544
    %v10546 = vpop.f32.mrf.mxu0
    %v10547 = vadd.f32 %v10496, %v10546
    %v10548 = vand.u32 %v10313, 4294901760
    %10549 = vmatmul.f32.gmra.mxu0 %v10548
    %v10550 = vpop.f32.mrf.mxu0
    %v10551 = vadd.f32 %v10502, %v10550
    %v10552 = vand.u32 %v10315, 4294901760
    %10553 = vmatmul.f32.gmra.mxu0 %v10552
    %v10554 = vpop.f32.mrf.mxu0
    %v10555 = vadd.f32 %v10508, %v10554
    %v10556 = vand.u32 %v10318, 4294901760
    %10557 = vmatmul.f32.gmra.mxu0 %v10556
    %v10558 = vpop.f32.mrf.mxu0
    %v10559 = vadd.f32 %v10514, %v10558
    %10560 = vdwg.mxu0
    %10561 = vmatpush.msra.mxu0 0.0
    %10562 = vmatpush.msra.mxu0 0.0
    %10563 = vmatpush.msra.mxu0 0.0
    %10564 = vmatpush.msra.mxu0 0.0
    %10565 = vmatpush.msra.mxu0 0.0
    %10566 = vmatpush.msra.mxu0 0.0
    %10567 = vmatpush.msra.mxu0 0.0
    %10568 = vmatpush.msra.mxu0 0.0
    %10569 = vmatpush.msra.mxu0 0.0
    %10570 = vmatpush.msra.mxu0 0.0
    %10571 = vmatpush.msra.mxu0 0.0
    %10572 = vmatpush.msra.mxu0 0.0
    %v10573 = vand.u32 %v10309, 4294901760
    %10574 = vmatpush.msra.mxu0 %v10573
    %v10575 = vand.u32 %v10308, 4294901760
    %10576 = vmatpush.msra.mxu0 %v10575
    %v10577 = vand.u32 %v10307, 4294901760
    %10578 = vmatpush.msra.mxu0 %v10577
    %v10579 = vand.u32 %v10306, 4294901760
    %10580 = vmatpush.msra.mxu0 %v10579
    %v10581 = vand.u32 %v10310, 4294901760
    %10582 = vmatmul.f32.gmra.mxu0 %v10581
    %v10583 = vpop.f32.mrf.mxu0
    %v10584 = vadd.f32 %v10547, %v10583
    %v10585 = vand.u32 %v10313, 4294901760
    %10586 = vmatmul.f32.gmra.mxu0 %v10585
    %v10587 = vpop.f32.mrf.mxu0
    %v10588 = vadd.f32 %v10551, %v10587
    %v10589 = vand.u32 %v10315, 4294901760
    %10590 = vmatmul.f32.gmra.mxu0 %v10589
    %v10591 = vpop.f32.mrf.mxu0
    %v10592 = vadd.f32 %v10555, %v10591
    %v10593 = vand.u32 %v10318, 4294901760
    %10594 = vmatmul.f32.gmra.mxu0 %v10593
    %v10595 = vpop.f32.mrf.mxu0
    %v10596 = vadd.f32 %v10559, %v10595
    %10597 = vdwg.mxu0
    %v10598 = vadd.f32 %v10290, %v10584
    %v10599 = vadd.f32 %v10291, %v10588
    %v10600 = vadd.f32 %v10292, %v10592
    %v10601 = vadd.f32 %v10293, %v10596
    %vm10602 = vcmask 1044480
    %v10603 = vrot.slane %v8769, 3
    %v10604 = vrot.slane %v8770, 3
    %v10605 = vsel %vm10602, %v10603, %v10604
    %v10606 = vrot.slane %v8771, 3
    %v10607 = vrot.slane %v8772, 3
    %v10608 = vsel %vm10602, %v10606, %v10607
    %v10611 = vsel %vm10602, %v10604, 0.0
    %v10612 = vsel %vm10602, %v10607, 0.0
    %s10613 = scalar_lea.vmem %s4, 192
    %v10614 = vld [vmem:[%s10613] sm:$0xff]
    %v10615 = vld [vmem:[%s10613 + $0x8] sm:$0xff]
    %v10616 = vld [vmem:[%s10613 + $0x10] sm:$0xff]
    %v10617 = vld [vmem:[%s10613 + $0x18] sm:$0xff]
    %v10618 = vsel %vm8808, %v10605, 0
    %v10621 = vsel %vm8808, %v10611, 0
    %v10623 = vsel %vm8808, %v10608, 0
    %v10626 = vsel %vm8808, %v10612, 0
    %10628 = vmatpush.msra.mxu0 0.0
    %10629 = vmatpush.msra.mxu0 0.0
    %10630 = vmatpush.msra.mxu0 0.0
    %10631 = vmatpush.msra.mxu0 0.0
    %10632 = vmatpush.msra.mxu0 0.0
    %10633 = vmatpush.msra.mxu0 0.0
    %10634 = vmatpush.msra.mxu0 0.0
    %10635 = vmatpush.msra.mxu0 0.0
    %10636 = vmatpush.msra.mxu0 0.0
    %10637 = vmatpush.msra.mxu0 0.0
    %10638 = vmatpush.msra.mxu0 0.0
    %10639 = vmatpush.msra.mxu0 0.0
    %v10640 = vand.u32 %v10617, 4294901760
    %10641 = vmatpush.msra.mxu0 %v10640
    %v10642 = vand.u32 %v10616, 4294901760
    %10643 = vmatpush.msra.mxu0 %v10642
    %v10644 = vand.u32 %v10615, 4294901760
    %10645 = vmatpush.msra.mxu0 %v10644
    %v10646 = vand.u32 %v10614, 4294901760
    %10647 = vmatpush.msra.mxu0 %v10646
    %v10648 = vand.u32 %v10618, 4294901760
    %v10649 = vsub.f32 %v10618, %v10648
    %v10650 = vand.u32 %v10649, 4294901760
    %v10651 = vsub.f32 %v10649, %v10650
    %v10652 = vand.u32 %v10651, 4294901760
    %10653 = vmatmul.f32.gmra.mxu0 %v10652
    %v10654 = vpop.f32.mrf.mxu0
    %v10655 = vadd.f32 0.0, %v10654
    %v10656 = vand.u32 %v10621, 4294901760
    %v10657 = vsub.f32 %v10621, %v10656
    %v10658 = vand.u32 %v10657, 4294901760
    %v10659 = vsub.f32 %v10657, %v10658
    %v10660 = vand.u32 %v10659, 4294901760
    %10661 = vmatmul.f32.gmra.mxu0 %v10660
    %v10662 = vpop.f32.mrf.mxu0
    %v10663 = vadd.f32 0.0, %v10662
    %v10664 = vand.u32 %v10623, 4294901760
    %v10665 = vsub.f32 %v10623, %v10664
    %v10666 = vand.u32 %v10665, 4294901760
    %v10667 = vsub.f32 %v10665, %v10666
    %v10668 = vand.u32 %v10667, 4294901760
    %10669 = vmatmul.f32.gmra.mxu0 %v10668
    %v10670 = vpop.f32.mrf.mxu0
    %v10671 = vadd.f32 0.0, %v10670
    %v10672 = vand.u32 %v10626, 4294901760
    %v10673 = vsub.f32 %v10626, %v10672
    %v10674 = vand.u32 %v10673, 4294901760
    %v10675 = vsub.f32 %v10673, %v10674
    %v10676 = vand.u32 %v10675, 4294901760
    %10677 = vmatmul.f32.gmra.mxu0 %v10676
    %v10678 = vpop.f32.mrf.mxu0
    %v10679 = vadd.f32 0.0, %v10678
    %10680 = vdwg.mxu0
    %10681 = vmatpush.msra.mxu0 0.0
    %10682 = vmatpush.msra.mxu0 0.0
    %10683 = vmatpush.msra.mxu0 0.0
    %10684 = vmatpush.msra.mxu0 0.0
    %10685 = vmatpush.msra.mxu0 0.0
    %10686 = vmatpush.msra.mxu0 0.0
    %10687 = vmatpush.msra.mxu0 0.0
    %10688 = vmatpush.msra.mxu0 0.0
    %10689 = vmatpush.msra.mxu0 0.0
    %10690 = vmatpush.msra.mxu0 0.0
    %10691 = vmatpush.msra.mxu0 0.0
    %10692 = vmatpush.msra.mxu0 0.0
    %v10693 = vand.u32 %v10617, 4294901760
    %v10694 = vsub.f32 %v10617, %v10693
    %v10695 = vand.u32 %v10694, 4294901760
    %v10696 = vsub.f32 %v10694, %v10695
    %v10697 = vand.u32 %v10696, 4294901760
    %10698 = vmatpush.msra.mxu0 %v10697
    %v10699 = vand.u32 %v10616, 4294901760
    %v10700 = vsub.f32 %v10616, %v10699
    %v10701 = vand.u32 %v10700, 4294901760
    %v10702 = vsub.f32 %v10700, %v10701
    %v10703 = vand.u32 %v10702, 4294901760
    %10704 = vmatpush.msra.mxu0 %v10703
    %v10705 = vand.u32 %v10615, 4294901760
    %v10706 = vsub.f32 %v10615, %v10705
    %v10707 = vand.u32 %v10706, 4294901760
    %v10708 = vsub.f32 %v10706, %v10707
    %v10709 = vand.u32 %v10708, 4294901760
    %10710 = vmatpush.msra.mxu0 %v10709
    %v10711 = vand.u32 %v10614, 4294901760
    %v10712 = vsub.f32 %v10614, %v10711
    %v10713 = vand.u32 %v10712, 4294901760
    %v10714 = vsub.f32 %v10712, %v10713
    %v10715 = vand.u32 %v10714, 4294901760
    %10716 = vmatpush.msra.mxu0 %v10715
    %v10717 = vand.u32 %v10618, 4294901760
    %10718 = vmatmul.f32.gmra.mxu0 %v10717
    %v10719 = vpop.f32.mrf.mxu0
    %v10720 = vadd.f32 %v10655, %v10719
    %v10721 = vand.u32 %v10621, 4294901760
    %10722 = vmatmul.f32.gmra.mxu0 %v10721
    %v10723 = vpop.f32.mrf.mxu0
    %v10724 = vadd.f32 %v10663, %v10723
    %v10725 = vand.u32 %v10623, 4294901760
    %10726 = vmatmul.f32.gmra.mxu0 %v10725
    %v10727 = vpop.f32.mrf.mxu0
    %v10728 = vadd.f32 %v10671, %v10727
    %v10729 = vand.u32 %v10626, 4294901760
    %10730 = vmatmul.f32.gmra.mxu0 %v10729
    %v10731 = vpop.f32.mrf.mxu0
    %v10732 = vadd.f32 %v10679, %v10731
    %10733 = vdwg.mxu0
    %10734 = vmatpush.msra.mxu0 0.0
    %10735 = vmatpush.msra.mxu0 0.0
    %10736 = vmatpush.msra.mxu0 0.0
    %10737 = vmatpush.msra.mxu0 0.0
    %10738 = vmatpush.msra.mxu0 0.0
    %10739 = vmatpush.msra.mxu0 0.0
    %10740 = vmatpush.msra.mxu0 0.0
    %10741 = vmatpush.msra.mxu0 0.0
    %10742 = vmatpush.msra.mxu0 0.0
    %10743 = vmatpush.msra.mxu0 0.0
    %10744 = vmatpush.msra.mxu0 0.0
    %10745 = vmatpush.msra.mxu0 0.0
    %v10746 = vand.u32 %v10617, 4294901760
    %v10747 = vsub.f32 %v10617, %v10746
    %10748 = vmatpush.msra.mxu0 %v10747
    %v10749 = vand.u32 %v10616, 4294901760
    %v10750 = vsub.f32 %v10616, %v10749
    %10751 = vmatpush.msra.mxu0 %v10750
    %v10752 = vand.u32 %v10615, 4294901760
    %v10753 = vsub.f32 %v10615, %v10752
    %10754 = vmatpush.msra.mxu0 %v10753
    %v10755 = vand.u32 %v10614, 4294901760
    %v10756 = vsub.f32 %v10614, %v10755
    %10757 = vmatpush.msra.mxu0 %v10756
    %v10758 = vand.u32 %v10618, 4294901760
    %v10759 = vsub.f32 %v10618, %v10758
    %10760 = vmatmul.f32.gmra.mxu0 %v10759
    %v10761 = vpop.f32.mrf.mxu0
    %v10762 = vadd.f32 %v10720, %v10761
    %v10763 = vand.u32 %v10621, 4294901760
    %v10764 = vsub.f32 %v10621, %v10763
    %10765 = vmatmul.f32.gmra.mxu0 %v10764
    %v10766 = vpop.f32.mrf.mxu0
    %v10767 = vadd.f32 %v10724, %v10766
    %v10768 = vand.u32 %v10623, 4294901760
    %v10769 = vsub.f32 %v10623, %v10768
    %10770 = vmatmul.f32.gmra.mxu0 %v10769
    %v10771 = vpop.f32.mrf.mxu0
    %v10772 = vadd.f32 %v10728, %v10771
    %v10773 = vand.u32 %v10626, 4294901760
    %v10774 = vsub.f32 %v10626, %v10773
    %10775 = vmatmul.f32.gmra.mxu0 %v10774
    %v10776 = vpop.f32.mrf.mxu0
    %v10777 = vadd.f32 %v10732, %v10776
    %10778 = vdwg.mxu0
    %10779 = vmatpush.msra.mxu0 0.0
    %10780 = vmatpush.msra.mxu0 0.0
    %10781 = vmatpush.msra.mxu0 0.0
    %10782 = vmatpush.msra.mxu0 0.0
    %10783 = vmatpush.msra.mxu0 0.0
    %10784 = vmatpush.msra.mxu0 0.0
    %10785 = vmatpush.msra.mxu0 0.0
    %10786 = vmatpush.msra.mxu0 0.0
    %10787 = vmatpush.msra.mxu0 0.0
    %10788 = vmatpush.msra.mxu0 0.0
    %10789 = vmatpush.msra.mxu0 0.0
    %10790 = vmatpush.msra.mxu0 0.0
    %v10791 = vand.u32 %v10617, 4294901760
    %10792 = vmatpush.msra.mxu0 %v10791
    %v10793 = vand.u32 %v10616, 4294901760
    %10794 = vmatpush.msra.mxu0 %v10793
    %v10795 = vand.u32 %v10615, 4294901760
    %10796 = vmatpush.msra.mxu0 %v10795
    %v10797 = vand.u32 %v10614, 4294901760
    %10798 = vmatpush.msra.mxu0 %v10797
    %v10799 = vand.u32 %v10618, 4294901760
    %v10800 = vsub.f32 %v10618, %v10799
    %v10801 = vand.u32 %v10800, 4294901760
    %10802 = vmatmul.f32.gmra.mxu0 %v10801
    %v10803 = vpop.f32.mrf.mxu0
    %v10804 = vadd.f32 %v10762, %v10803
    %v10805 = vand.u32 %v10621, 4294901760
    %v10806 = vsub.f32 %v10621, %v10805
    %v10807 = vand.u32 %v10806, 4294901760
    %10808 = vmatmul.f32.gmra.mxu0 %v10807
    %v10809 = vpop.f32.mrf.mxu0
    %v10810 = vadd.f32 %v10767, %v10809
    %v10811 = vand.u32 %v10623, 4294901760
    %v10812 = vsub.f32 %v10623, %v10811
    %v10813 = vand.u32 %v10812, 4294901760
    %10814 = vmatmul.f32.gmra.mxu0 %v10813
    %v10815 = vpop.f32.mrf.mxu0
    %v10816 = vadd.f32 %v10772, %v10815
    %v10817 = vand.u32 %v10626, 4294901760
    %v10818 = vsub.f32 %v10626, %v10817
    %v10819 = vand.u32 %v10818, 4294901760
    %10820 = vmatmul.f32.gmra.mxu0 %v10819
    %v10821 = vpop.f32.mrf.mxu0
    %v10822 = vadd.f32 %v10777, %v10821
    %10823 = vdwg.mxu0
    %10824 = vmatpush.msra.mxu0 0.0
    %10825 = vmatpush.msra.mxu0 0.0
    %10826 = vmatpush.msra.mxu0 0.0
    %10827 = vmatpush.msra.mxu0 0.0
    %10828 = vmatpush.msra.mxu0 0.0
    %10829 = vmatpush.msra.mxu0 0.0
    %10830 = vmatpush.msra.mxu0 0.0
    %10831 = vmatpush.msra.mxu0 0.0
    %10832 = vmatpush.msra.mxu0 0.0
    %10833 = vmatpush.msra.mxu0 0.0
    %10834 = vmatpush.msra.mxu0 0.0
    %10835 = vmatpush.msra.mxu0 0.0
    %v10836 = vand.u32 %v10617, 4294901760
    %v10837 = vsub.f32 %v10617, %v10836
    %v10838 = vand.u32 %v10837, 4294901760
    %10839 = vmatpush.msra.mxu0 %v10838
    %v10840 = vand.u32 %v10616, 4294901760
    %v10841 = vsub.f32 %v10616, %v10840
    %v10842 = vand.u32 %v10841, 4294901760
    %10843 = vmatpush.msra.mxu0 %v10842
    %v10844 = vand.u32 %v10615, 4294901760
    %v10845 = vsub.f32 %v10615, %v10844
    %v10846 = vand.u32 %v10845, 4294901760
    %10847 = vmatpush.msra.mxu0 %v10846
    %v10848 = vand.u32 %v10614, 4294901760
    %v10849 = vsub.f32 %v10614, %v10848
    %v10850 = vand.u32 %v10849, 4294901760
    %10851 = vmatpush.msra.mxu0 %v10850
    %v10852 = vand.u32 %v10618, 4294901760
    %10853 = vmatmul.f32.gmra.mxu0 %v10852
    %v10854 = vpop.f32.mrf.mxu0
    %v10855 = vadd.f32 %v10804, %v10854
    %v10856 = vand.u32 %v10621, 4294901760
    %10857 = vmatmul.f32.gmra.mxu0 %v10856
    %v10858 = vpop.f32.mrf.mxu0
    %v10859 = vadd.f32 %v10810, %v10858
    %v10860 = vand.u32 %v10623, 4294901760
    %10861 = vmatmul.f32.gmra.mxu0 %v10860
    %v10862 = vpop.f32.mrf.mxu0
    %v10863 = vadd.f32 %v10816, %v10862
    %v10864 = vand.u32 %v10626, 4294901760
    %10865 = vmatmul.f32.gmra.mxu0 %v10864
    %v10866 = vpop.f32.mrf.mxu0
    %v10867 = vadd.f32 %v10822, %v10866
    %10868 = vdwg.mxu0
    %10869 = vmatpush.msra.mxu0 0.0
    %10870 = vmatpush.msra.mxu0 0.0
    %10871 = vmatpush.msra.mxu0 0.0
    %10872 = vmatpush.msra.mxu0 0.0
    %10873 = vmatpush.msra.mxu0 0.0
    %10874 = vmatpush.msra.mxu0 0.0
    %10875 = vmatpush.msra.mxu0 0.0
    %10876 = vmatpush.msra.mxu0 0.0
    %10877 = vmatpush.msra.mxu0 0.0
    %10878 = vmatpush.msra.mxu0 0.0
    %10879 = vmatpush.msra.mxu0 0.0
    %10880 = vmatpush.msra.mxu0 0.0
    %v10881 = vand.u32 %v10617, 4294901760
    %10882 = vmatpush.msra.mxu0 %v10881
    %v10883 = vand.u32 %v10616, 4294901760
    %10884 = vmatpush.msra.mxu0 %v10883
    %v10885 = vand.u32 %v10615, 4294901760
    %10886 = vmatpush.msra.mxu0 %v10885
    %v10887 = vand.u32 %v10614, 4294901760
    %10888 = vmatpush.msra.mxu0 %v10887
    %v10889 = vand.u32 %v10618, 4294901760
    %10890 = vmatmul.f32.gmra.mxu0 %v10889
    %v10891 = vpop.f32.mrf.mxu0
    %v10892 = vadd.f32 %v10855, %v10891
    %v10893 = vand.u32 %v10621, 4294901760
    %10894 = vmatmul.f32.gmra.mxu0 %v10893
    %v10895 = vpop.f32.mrf.mxu0
    %v10896 = vadd.f32 %v10859, %v10895
    %v10897 = vand.u32 %v10623, 4294901760
    %10898 = vmatmul.f32.gmra.mxu0 %v10897
    %v10899 = vpop.f32.mrf.mxu0
    %v10900 = vadd.f32 %v10863, %v10899
    %v10901 = vand.u32 %v10626, 4294901760
    %10902 = vmatmul.f32.gmra.mxu0 %v10901
    %v10903 = vpop.f32.mrf.mxu0
    %v10904 = vadd.f32 %v10867, %v10903
    %10905 = vdwg.mxu0
    %v10906 = vadd.f32 %v10598, %v10892
    %v10907 = vadd.f32 %v10599, %v10896
    %v10908 = vadd.f32 %v10600, %v10900
    %v10909 = vadd.f32 %v10601, %v10904
    %v10910 = vmul.f32 %v10906, 0.5
    %v10911 = vmul.f32 %v10907, 0.5
    %v10912 = vmul.f32 %v10908, 0.5
    %v10913 = vmul.f32 %v10909, 0.5
    %v10914 = vtanh.pop %v10910
    %v10915 = vtanh.pop %v10911
    %v10916 = vtanh.pop %v10912
    %v10917 = vtanh.pop %v10913
    %v10918 = vadd.f32 %v10914, 1.0
    %v10919 = vadd.f32 %v10915, 1.0
    %v10920 = vadd.f32 %v10916, 1.0
    %v10921 = vadd.f32 %v10917, 1.0
    %v10922 = vmul.f32 %v10918, 0.5
    %v10923 = vmul.f32 %v10919, 0.5
    %v10924 = vmul.f32 %v10920, 0.5
    %v10925 = vmul.f32 %v10921, 0.5
    %v10926 = vld [vmem:[%s6] sm:$0xff]
    %v10927 = vld [vmem:[%s6 + $0x8] sm:$0xff]
    %v10929 = vsel %vm8768, %v10922, 0
    %v10932 = vsel %vm8768, %v10923, 0
    %v10935 = vsel %vm8768, %v10924, 0
    %v10938 = vsel %vm8768, %v10925, 0
    %10940 = vmatpush.msra.mxu0 0.0
    %10941 = vmatpush.msra.mxu0 0.0
    %10942 = vmatpush.msra.mxu0 0.0
    %10943 = vmatpush.msra.mxu0 0.0
    %10944 = vmatpush.msra.mxu0 0.0
    %10945 = vmatpush.msra.mxu0 0.0
    %10946 = vmatpush.msra.mxu0 0.0
    %10947 = vmatpush.msra.mxu0 0.0
    %10948 = vmatpush.msra.mxu0 0.0
    %10949 = vmatpush.msra.mxu0 0.0
    %10950 = vmatpush.msra.mxu0 0.0
    %10951 = vmatpush.msra.mxu0 0.0
    %10952 = vmatpush.msra.mxu0 0.0
    %10953 = vmatpush.msra.mxu0 0.0
    %v10954 = vand.u32 %v10927, 4294901760
    %10955 = vmatpush.msra.mxu0 %v10954
    %v10956 = vand.u32 %v10926, 4294901760
    %10957 = vmatpush.msra.mxu0 %v10956
    %v10958 = vand.u32 %v10929, 4294901760
    %v10959 = vsub.f32 %v10929, %v10958
    %v10960 = vand.u32 %v10959, 4294901760
    %v10961 = vsub.f32 %v10959, %v10960
    %v10962 = vand.u32 %v10961, 4294901760
    %10963 = vmatmul.f32.gmra.mxu0 %v10962
    %v10964 = vpop.f32.mrf.mxu0
    %v10965 = vadd.f32 0.0, %v10964
    %v10966 = vand.u32 %v10932, 4294901760
    %v10967 = vsub.f32 %v10932, %v10966
    %v10968 = vand.u32 %v10967, 4294901760
    %v10969 = vsub.f32 %v10967, %v10968
    %v10970 = vand.u32 %v10969, 4294901760
    %10971 = vmatmul.f32.gmra.mxu0 %v10970
    %v10972 = vpop.f32.mrf.mxu0
    %v10973 = vadd.f32 0.0, %v10972
    %v10974 = vand.u32 %v10935, 4294901760
    %v10975 = vsub.f32 %v10935, %v10974
    %v10976 = vand.u32 %v10975, 4294901760
    %v10977 = vsub.f32 %v10975, %v10976
    %v10978 = vand.u32 %v10977, 4294901760
    %10979 = vmatmul.f32.gmra.mxu0 %v10978
    %v10980 = vpop.f32.mrf.mxu0
    %v10981 = vadd.f32 0.0, %v10980
    %v10982 = vand.u32 %v10938, 4294901760
    %v10983 = vsub.f32 %v10938, %v10982
    %v10984 = vand.u32 %v10983, 4294901760
    %v10985 = vsub.f32 %v10983, %v10984
    %v10986 = vand.u32 %v10985, 4294901760
    %10987 = vmatmul.f32.gmra.mxu0 %v10986
    %v10988 = vpop.f32.mrf.mxu0
    %v10989 = vadd.f32 0.0, %v10988
    %10990 = vdwg.mxu0
    %10991 = vmatpush.msra.mxu0 0.0
    %10992 = vmatpush.msra.mxu0 0.0
    %10993 = vmatpush.msra.mxu0 0.0
    %10994 = vmatpush.msra.mxu0 0.0
    %10995 = vmatpush.msra.mxu0 0.0
    %10996 = vmatpush.msra.mxu0 0.0
    %10997 = vmatpush.msra.mxu0 0.0
    %10998 = vmatpush.msra.mxu0 0.0
    %10999 = vmatpush.msra.mxu0 0.0
    %11000 = vmatpush.msra.mxu0 0.0
    %11001 = vmatpush.msra.mxu0 0.0
    %11002 = vmatpush.msra.mxu0 0.0
    %11003 = vmatpush.msra.mxu0 0.0
    %11004 = vmatpush.msra.mxu0 0.0
    %v11005 = vand.u32 %v10927, 4294901760
    %v11006 = vsub.f32 %v10927, %v11005
    %v11007 = vand.u32 %v11006, 4294901760
    %v11008 = vsub.f32 %v11006, %v11007
    %v11009 = vand.u32 %v11008, 4294901760
    %11010 = vmatpush.msra.mxu0 %v11009
    %v11011 = vand.u32 %v10926, 4294901760
    %v11012 = vsub.f32 %v10926, %v11011
    %v11013 = vand.u32 %v11012, 4294901760
    %v11014 = vsub.f32 %v11012, %v11013
    %v11015 = vand.u32 %v11014, 4294901760
    %11016 = vmatpush.msra.mxu0 %v11015
    %v11017 = vand.u32 %v10929, 4294901760
    %11018 = vmatmul.f32.gmra.mxu0 %v11017
    %v11019 = vpop.f32.mrf.mxu0
    %v11020 = vadd.f32 %v10965, %v11019
    %v11021 = vand.u32 %v10932, 4294901760
    %11022 = vmatmul.f32.gmra.mxu0 %v11021
    %v11023 = vpop.f32.mrf.mxu0
    %v11024 = vadd.f32 %v10973, %v11023
    %v11025 = vand.u32 %v10935, 4294901760
    %11026 = vmatmul.f32.gmra.mxu0 %v11025
    %v11027 = vpop.f32.mrf.mxu0
    %v11028 = vadd.f32 %v10981, %v11027
    %v11029 = vand.u32 %v10938, 4294901760
    %11030 = vmatmul.f32.gmra.mxu0 %v11029
    %v11031 = vpop.f32.mrf.mxu0
    %v11032 = vadd.f32 %v10989, %v11031
    %11033 = vdwg.mxu0
    %11034 = vmatpush.msra.mxu0 0.0
    %11035 = vmatpush.msra.mxu0 0.0
    %11036 = vmatpush.msra.mxu0 0.0
    %11037 = vmatpush.msra.mxu0 0.0
    %11038 = vmatpush.msra.mxu0 0.0
    %11039 = vmatpush.msra.mxu0 0.0
    %11040 = vmatpush.msra.mxu0 0.0
    %11041 = vmatpush.msra.mxu0 0.0
    %11042 = vmatpush.msra.mxu0 0.0
    %11043 = vmatpush.msra.mxu0 0.0
    %11044 = vmatpush.msra.mxu0 0.0
    %11045 = vmatpush.msra.mxu0 0.0
    %11046 = vmatpush.msra.mxu0 0.0
    %11047 = vmatpush.msra.mxu0 0.0
    %v11048 = vand.u32 %v10927, 4294901760
    %v11049 = vsub.f32 %v10927, %v11048
    %11050 = vmatpush.msra.mxu0 %v11049
    %v11051 = vand.u32 %v10926, 4294901760
    %v11052 = vsub.f32 %v10926, %v11051
    %11053 = vmatpush.msra.mxu0 %v11052
    %v11054 = vand.u32 %v10929, 4294901760
    %v11055 = vsub.f32 %v10929, %v11054
    %11056 = vmatmul.f32.gmra.mxu0 %v11055
    %v11057 = vpop.f32.mrf.mxu0
    %v11058 = vadd.f32 %v11020, %v11057
    %v11059 = vand.u32 %v10932, 4294901760
    %v11060 = vsub.f32 %v10932, %v11059
    %11061 = vmatmul.f32.gmra.mxu0 %v11060
    %v11062 = vpop.f32.mrf.mxu0
    %v11063 = vadd.f32 %v11024, %v11062
    %v11064 = vand.u32 %v10935, 4294901760
    %v11065 = vsub.f32 %v10935, %v11064
    %11066 = vmatmul.f32.gmra.mxu0 %v11065
    %v11067 = vpop.f32.mrf.mxu0
    %v11068 = vadd.f32 %v11028, %v11067
    %v11069 = vand.u32 %v10938, 4294901760
    %v11070 = vsub.f32 %v10938, %v11069
    %11071 = vmatmul.f32.gmra.mxu0 %v11070
    %v11072 = vpop.f32.mrf.mxu0
    %v11073 = vadd.f32 %v11032, %v11072
    %11074 = vdwg.mxu0
    %11075 = vmatpush.msra.mxu0 0.0
    %11076 = vmatpush.msra.mxu0 0.0
    %11077 = vmatpush.msra.mxu0 0.0
    %11078 = vmatpush.msra.mxu0 0.0
    %11079 = vmatpush.msra.mxu0 0.0
    %11080 = vmatpush.msra.mxu0 0.0
    %11081 = vmatpush.msra.mxu0 0.0
    %11082 = vmatpush.msra.mxu0 0.0
    %11083 = vmatpush.msra.mxu0 0.0
    %11084 = vmatpush.msra.mxu0 0.0
    %11085 = vmatpush.msra.mxu0 0.0
    %11086 = vmatpush.msra.mxu0 0.0
    %11087 = vmatpush.msra.mxu0 0.0
    %11088 = vmatpush.msra.mxu0 0.0
    %v11089 = vand.u32 %v10927, 4294901760
    %11090 = vmatpush.msra.mxu0 %v11089
    %v11091 = vand.u32 %v10926, 4294901760
    %11092 = vmatpush.msra.mxu0 %v11091
    %v11093 = vand.u32 %v10929, 4294901760
    %v11094 = vsub.f32 %v10929, %v11093
    %v11095 = vand.u32 %v11094, 4294901760
    %11096 = vmatmul.f32.gmra.mxu0 %v11095
    %v11097 = vpop.f32.mrf.mxu0
    %v11098 = vadd.f32 %v11058, %v11097
    %v11099 = vand.u32 %v10932, 4294901760
    %v11100 = vsub.f32 %v10932, %v11099
    %v11101 = vand.u32 %v11100, 4294901760
    %11102 = vmatmul.f32.gmra.mxu0 %v11101
    %v11103 = vpop.f32.mrf.mxu0
    %v11104 = vadd.f32 %v11063, %v11103
    %v11105 = vand.u32 %v10935, 4294901760
    %v11106 = vsub.f32 %v10935, %v11105
    %v11107 = vand.u32 %v11106, 4294901760
    %11108 = vmatmul.f32.gmra.mxu0 %v11107
    %v11109 = vpop.f32.mrf.mxu0
    %v11110 = vadd.f32 %v11068, %v11109
    %v11111 = vand.u32 %v10938, 4294901760
    %v11112 = vsub.f32 %v10938, %v11111
    %v11113 = vand.u32 %v11112, 4294901760
    %11114 = vmatmul.f32.gmra.mxu0 %v11113
    %v11115 = vpop.f32.mrf.mxu0
    %v11116 = vadd.f32 %v11073, %v11115
    %11117 = vdwg.mxu0
    %11118 = vmatpush.msra.mxu0 0.0
    %11119 = vmatpush.msra.mxu0 0.0
    %11120 = vmatpush.msra.mxu0 0.0
    %11121 = vmatpush.msra.mxu0 0.0
    %11122 = vmatpush.msra.mxu0 0.0
    %11123 = vmatpush.msra.mxu0 0.0
    %11124 = vmatpush.msra.mxu0 0.0
    %11125 = vmatpush.msra.mxu0 0.0
    %11126 = vmatpush.msra.mxu0 0.0
    %11127 = vmatpush.msra.mxu0 0.0
    %11128 = vmatpush.msra.mxu0 0.0
    %11129 = vmatpush.msra.mxu0 0.0
    %11130 = vmatpush.msra.mxu0 0.0
    %11131 = vmatpush.msra.mxu0 0.0
    %v11132 = vand.u32 %v10927, 4294901760
    %v11133 = vsub.f32 %v10927, %v11132
    %v11134 = vand.u32 %v11133, 4294901760
    %11135 = vmatpush.msra.mxu0 %v11134
    %v11136 = vand.u32 %v10926, 4294901760
    %v11137 = vsub.f32 %v10926, %v11136
    %v11138 = vand.u32 %v11137, 4294901760
    %11139 = vmatpush.msra.mxu0 %v11138
    %v11140 = vand.u32 %v10929, 4294901760
    %11141 = vmatmul.f32.gmra.mxu0 %v11140
    %v11142 = vpop.f32.mrf.mxu0
    %v11143 = vadd.f32 %v11098, %v11142
    %v11144 = vand.u32 %v10932, 4294901760
    %11145 = vmatmul.f32.gmra.mxu0 %v11144
    %v11146 = vpop.f32.mrf.mxu0
    %v11147 = vadd.f32 %v11104, %v11146
    %v11148 = vand.u32 %v10935, 4294901760
    %11149 = vmatmul.f32.gmra.mxu0 %v11148
    %v11150 = vpop.f32.mrf.mxu0
    %v11151 = vadd.f32 %v11110, %v11150
    %v11152 = vand.u32 %v10938, 4294901760
    %11153 = vmatmul.f32.gmra.mxu0 %v11152
    %v11154 = vpop.f32.mrf.mxu0
    %v11155 = vadd.f32 %v11116, %v11154
    %11156 = vdwg.mxu0
    %11157 = vmatpush.msra.mxu0 0.0
    %11158 = vmatpush.msra.mxu0 0.0
    %11159 = vmatpush.msra.mxu0 0.0
    %11160 = vmatpush.msra.mxu0 0.0
    %11161 = vmatpush.msra.mxu0 0.0
    %11162 = vmatpush.msra.mxu0 0.0
    %11163 = vmatpush.msra.mxu0 0.0
    %11164 = vmatpush.msra.mxu0 0.0
    %11165 = vmatpush.msra.mxu0 0.0
    %11166 = vmatpush.msra.mxu0 0.0
    %11167 = vmatpush.msra.mxu0 0.0
    %11168 = vmatpush.msra.mxu0 0.0
    %11169 = vmatpush.msra.mxu0 0.0
    %11170 = vmatpush.msra.mxu0 0.0
    %v11171 = vand.u32 %v10927, 4294901760
    %11172 = vmatpush.msra.mxu0 %v11171
    %v11173 = vand.u32 %v10926, 4294901760
    %11174 = vmatpush.msra.mxu0 %v11173
    %v11175 = vand.u32 %v10929, 4294901760
    %11176 = vmatmul.f32.gmra.mxu0 %v11175
    %v11177 = vpop.f32.mrf.mxu0
    %v11178 = vadd.f32 %v11143, %v11177
    %v11179 = vand.u32 %v10932, 4294901760
    %11180 = vmatmul.f32.gmra.mxu0 %v11179
    %v11181 = vpop.f32.mrf.mxu0
    %v11182 = vadd.f32 %v11147, %v11181
    %v11183 = vand.u32 %v10935, 4294901760
    %11184 = vmatmul.f32.gmra.mxu0 %v11183
    %v11185 = vpop.f32.mrf.mxu0
    %v11186 = vadd.f32 %v11151, %v11185
    %v11187 = vand.u32 %v10938, 4294901760
    %11188 = vmatmul.f32.gmra.mxu0 %v11187
    %v11189 = vpop.f32.mrf.mxu0
    %v11190 = vadd.f32 %v11155, %v11189
    %11191 = vdwg.mxu0
    %v11192 = vmul.f32 %v5081, %v11178
    %v11193 = vmul.f32 %v5082, %v11182
    %v11194 = vmul.f32 %v5083, %v11186
    %v11195 = vmul.f32 %v5084, %v11190
    %v11196 = vadd.f32 %v11192, %v1151
    %v11197 = vadd.f32 %v11193, %v1152
    %v11198 = vadd.f32 %v11194, %v1153
    %v11199 = vadd.f32 %v11195, %v1154
    %v11200 = vmax.f32 %v11196, 0.0
    %v11201 = vmax.f32 %v11197, 0.0
    %v11202 = vmax.f32 %v11198, 0.0
    %v11203 = vmax.f32 %v11199, 0.0
    %11204 = vst [vmem:[#allocation2] sm:$0xff] %v11200
    %11205 = vst [vmem:[#allocation2 + $0x8] sm:$0xff] %v11201
    %11206 = vst [vmem:[#allocation2 + $0x10] sm:$0xff] %v11202
    %11207 = vst [vmem:[#allocation2 + $0x18] sm:$0xff] %v11203
    // Predicated region
    $region58: #{tpu_custom_call.1} parent=1 // pred_check
      _
    $region59: #{tpu_custom_call.1} parent=1 // pred_check_branch
      %11209 = sbr.rel (0) target = $region61
    $region60: #{tpu_custom_call.1} parent=1 // pred_region
      %11211 = vsyncadd [#allocation3], 0
      %s11212 = sshll.u32 [#allocation2], 4
      %s11213 = int_to_ptr.vmem [resolvable:$true] %s11212
      %s11214 = sshll.u32 %s14, 4
      %s11215 = int_to_ptr.hbm [resolvable:$true] %s11214
      %11220 = dma.vmem_to_hbm [thread:$0]  %s11213, 512, %s11215, [#allocation3], 128, 128, 8
    $region61: #{tpu_custom_call.1} parent=1 // pred_fallthru
      _
    // Predicated region
    $region62: #{tpu_custom_call.1} parent=1 // pred_check
      _
    $region63: #{tpu_custom_call.1} parent=1 // pred_check_branch
      %11222 = sbr.rel (0) target = $region65
    $region64: #{tpu_custom_call.1} parent=1 // pred_region
      %11224 = dma.done [#allocation3], 512
    $region65: #{tpu_custom_call.1} parent=1 // pred_fallthru
      _
    %11225 = vsyncpa [#allocation3], 1

</llo_original>
